<compile_context>
chip_gen: v7x
topology: tpu7x:2x2x1
jax: 0.10.0
libtpu: 0.0.40
codegen_flags: <defaults>
</compile_context>

<pallas_src>
import functools

import numpy as np
import jax
import jax.numpy as jnp
from jax.experimental import pallas as pl
from jax.experimental.pallas import tpu as pltpu

HP = 128  # lane-padded hidden width


def _round_up(n, m):
    return ((n + m - 1) // m) * m


def transformer_classifier_kernel(
        x_ref, pe_ref, emb_wT_ref, emb_b_ref,
        wq_ref, bq_ref, wk_ref, bk_ref, wv_ref, bv_ref, wo_ref, bo_ref,
        w1_ref, b1_ref, w2_ref, b2_ref,
        n1w_ref, n1b_ref, n2w_ref, n2b_ref,
        fc_wT_ref, fc_b_ref, out_ref, *, num_heads, hidden):
    B = pe_ref.shape[0]
    BS = x_ref.shape[0]
    S = BS // B
    H, NH = hidden, num_heads
    HD = H // NH
    HPl = emb_wT_ref.shape[1]
    L = wq_ref.shape[0]
    inv_h = 1.0 / H

    # Lane masks: real hidden columns (for LayerNorm statistics) and per-head
    # column blocks (heads are head-major in the first H columns).
    col = jax.lax.broadcasted_iota(jnp.int32, (1, HPl), 1)
    cmask = (col < H).astype(jnp.float32)                                   # (1, HP)
    hcol = jax.lax.broadcasted_iota(jnp.int32, (NH, HPl), 1)
    hrow = jax.lax.broadcasted_iota(jnp.int32, (NH, HPl), 0)
    hmask = ((hcol >= hrow * HD) & (hcol < (hrow + 1) * HD)).astype(jnp.float32)  # (NH, HP)

    def layer_norm(v, w, b, eps=1e-5):
        # v is (BS, HP) with zero pad columns; stats over the H real columns.
        mu = jnp.sum(v, axis=-1, keepdims=True) * inv_h
        d = (v - mu) * cmask
        var = jnp.sum(d * d, axis=-1, keepdims=True) * inv_h
        return d * jax.lax.rsqrt(var + eps) * w + b      # w,b zero-padded -> pads stay 0

    # ---- embedding + positional encoding ------------------------------------
    # TODO(synk): dropout(p=0.1) after the positional add is identity in eval.
    e = jnp.dot(x_ref[...].astype(jnp.bfloat16), emb_wT_ref[...],
                preferred_element_type=jnp.float32) + emb_b_ref[...]        # (BS, HP)
    h0 = (e.reshape(B, S, HPl) + pe_ref[...]).reshape(BS, HPl)

    # ---- encoder layers (post-norm, ReLU FFN) -------------------------------
    def layer_body(l, h):
        hb = h.astype(jnp.bfloat16)
        # 1/sqrt(HD) is pre-folded into wq/bq at param-prep time.
        q = jnp.dot(hb, wq_ref[l], preferred_element_type=jnp.float32) + bq_ref[l]
        k = jnp.dot(hb, wk_ref[l], preferred_element_type=jnp.float32) + bk_ref[l]
        v = jnp.dot(hb, wv_ref[l], preferred_element_type=jnp.float32) + bv_ref[l]

        # Head-batched attention without 8-lane slices/stacks: K/V are masked
        # per head (zero columns contribute nothing to the contraction) and the
        # score/context matmuls run with one leading batch dim of size B*NH.
        q4 = jnp.broadcast_to(q.reshape(B, S, HPl)[:, None],
                              (B, NH, S, HPl)).reshape(B * NH, S, HPl)
        k4 = (k.reshape(B, S, HPl)[:, None] * hmask[None, :, None, :]
              ).reshape(B * NH, S, HPl)
        v4 = (v.reshape(B, S, HPl)[:, None] * hmask[None, :, None, :]
              ).reshape(B * NH, S, HPl)
        s = jnp.einsum('nqd,nkd->nqk', q4, k4,
                       preferred_element_type=jnp.float32)                  # (B*NH, S, S)
        s = s - jnp.max(s, axis=-1, keepdims=True)
        p = jnp.exp(s)
        p = p * pl.reciprocal(jnp.sum(p, axis=-1, keepdims=True), approx=True)
        ctx = jnp.einsum('nqk,nkd->nqd', p, v4,
                         preferred_element_type=jnp.float32)                # (B*NH, S, HP)
        # Heads occupy disjoint column blocks -> summing over heads == concat.
        ctx = ctx.reshape(B, NH, S, HPl).sum(axis=1).reshape(BS, HPl)
        attn = jnp.dot(ctx.astype(jnp.bfloat16), wo_ref[l],
                       preferred_element_type=jnp.float32) + bo_ref[l]
        y = layer_norm(h + attn, n1w_ref[l], n1b_ref[l])

        ff = jnp.dot(y.astype(jnp.bfloat16), w1_ref[l],
                     preferred_element_type=jnp.float32) + b1_ref[l]        # (BS, FF)
        ff = jnp.maximum(ff, 0.0).astype(jnp.bfloat16)      # fused ReLU + bf16 cast
        ff = jnp.dot(ff, w2_ref[l], preferred_element_type=jnp.float32) + b2_ref[l]
        return layer_norm(y + ff, n2w_ref[l], n2b_ref[l])

    h = jax.lax.fori_loop(0, L, layer_body, h0, unroll=True)

    # ---- mean over sequence + classifier head (lane-padded output) ----------
    pooled = jnp.mean(h.reshape(B, S, HPl), axis=1)                          # (B, HP)
    out_ref[...] = jnp.dot(pooled, fc_wT_ref[...],
                           preferred_element_type=jnp.float32) + fc_b_ref[...]


def transformer_classifier_forward(x, kp, *, num_heads, hidden_dim, num_classes):
    B, S, I = x.shape
    L, _, FF = kp['w1'].shape
    CP = kp['fc_wT'].shape[1]
    max_len = kp['pe'].shape[0]
    assert B <= max_len, (
        f"PositionalEncoding buffer has max_len={max_len} (== input_dim) but "
        f"batch={B}; the original module indexes pe[:batch].")

    x2d = x.reshape(B * S, I)                 # batch folded into the matmul M dim
    pe_b = kp['pe'][:B][:, None, :]           # (B, 1, HP); broadcast over seq in-kernel

    c2 = lambda i: (0, 0)
    c3 = lambda i: (0, 0, 0)

    in_specs = [
        pl.BlockSpec((B * S, I), c2),         # x (flattened)
        pl.BlockSpec((B, 1, HP), c3),         # pe rows
        pl.BlockSpec((I, HP), c2),            # emb_wT (bf16)
        pl.BlockSpec((1, HP), c2),            # emb_b
        pl.BlockSpec((L, HP, HP), c3),        # wq (bf16, Q pre-scaled)
        pl.BlockSpec((L, 1, HP), c3),         # bq
        pl.BlockSpec((L, HP, HP), c3),        # wk
        pl.BlockSpec((L, 1, HP), c3),         # bk
        pl.BlockSpec((L, HP, HP), c3),        # wv
        pl.BlockSpec((L, 1, HP), c3),         # bv
        pl.BlockSpec((L, HP, HP), c3),        # wo
        pl.BlockSpec((L, 1, HP), c3),         # bo
        pl.BlockSpec((L, HP, FF), c3),        # w1 (bf16)
        pl.BlockSpec((L, 1, FF), c3),         # b1
        pl.BlockSpec((L, FF, HP), c3),        # w2 (bf16)
        pl.BlockSpec((L, 1, HP), c3),         # b2
        pl.BlockSpec((L, 1, HP), c3),         # n1_w
        pl.BlockSpec((L, 1, HP), c3),         # n1_b
        pl.BlockSpec((L, 1, HP), c3),         # n2_w
        pl.BlockSpec((L, 1, HP), c3),         # n2_b
        pl.BlockSpec((HP, CP), c2),           # fc_wT (lane-padded classes)
        pl.BlockSpec((1, CP), c2),            # fc_b
    ]

    out = pl.pallas_call(
        functools.partial(transformer_classifier_kernel,
                          num_heads=num_heads, hidden=hidden_dim),
        out_shape=jax.ShapeDtypeStruct((B, CP), jnp.float32),
        grid_spec=pltpu.PrefetchScalarGridSpec(
            num_scalar_prefetch=0,
            grid=(1,),                        # single step: all weights resident
            in_specs=in_specs,
            out_specs=pl.BlockSpec((B, CP), c2),
        ),
        compiler_params=pltpu.CompilerParams(
            dimension_semantics=("arbitrary",),
            vmem_limit_bytes=32 * 1024 * 1024),
    )(x2d, pe_b,
      kp['emb_wT'], kp['emb_b'],
      kp['wq'], kp['bq'], kp['wk'], kp['bk'], kp['wv'], kp['bv'],
      kp['wo'], kp['bo'],
      kp['w1'], kp['b1'], kp['w2'], kp['b2'],
      kp['n1w'], kp['n1b'], kp['n2w'], kp['n2b'],
      kp['fc_wT'], kp['fc_b'])
    return out[:, :num_classes]


def init_raw_params(key, I, H, NH, L, C, FF):
    """Parameters in PyTorch layout ((out, in) weights, 1-D biases)."""
    assert H % NH == 0
    ks = jax.random.split(key, 2 + L)

    def lin(k, out_d, in_d, scale=0.05):
        kw, kb = jax.random.split(k)
        w = jax.random.normal(kw, (out_d, in_d), jnp.float32) * scale
        b = jax.random.normal(kb, (out_d,), jnp.float32) * scale
        return w, b

    emb_w, emb_b = lin(ks[0], H, I)
    fc_w, fc_b = lin(ks[1], C, H)

    layers = {k: [] for k in ['in_proj_w', 'in_proj_b', 'out_proj_w', 'out_proj_b',
                              'lin1_w', 'lin1_b', 'lin2_w', 'lin2_b']}
    for l in range(L):
        lk = jax.random.split(ks[2 + l], 4)
        w, b = lin(lk[0], 3 * H, H); layers['in_proj_w'].append(w); layers['in_proj_b'].append(b)
        w, b = lin(lk[1], H, H);     layers['out_proj_w'].append(w); layers['out_proj_b'].append(b)
        w, b = lin(lk[2], FF, H);    layers['lin1_w'].append(w);    layers['lin1_b'].append(b)
        w, b = lin(lk[3], H, FF);    layers['lin2_w'].append(w);    layers['lin2_b'].append(b)

    # PositionalEncoding buffer exactly as in the PyTorch __init__
    # (max_len = input_dim, d_model = hidden_dim).
    max_len = I
    position = jnp.arange(max_len, dtype=jnp.float32)[:, None]
    div_term = jnp.exp(jnp.arange(0, H, 2, dtype=jnp.float32) * (-np.log(10000.0) / H))
    pe = jnp.zeros((max_len, H), jnp.float32)
    pe = pe.at[:, 0::2].set(jnp.sin(position * div_term))
    pe = pe.at[:, 1::2].set(jnp.cos(position * div_term))

    raw = {k: jnp.stack(v) for k, v in layers.items()}
    raw.update(
        emb_w=emb_w, emb_b=emb_b, fc_w=fc_w, fc_b=fc_b, pe=pe,
        norm1_w=jnp.ones((L, H), jnp.float32), norm1_b=jnp.zeros((L, H), jnp.float32),
        norm2_w=jnp.ones((L, H), jnp.float32), norm2_b=jnp.zeros((L, H), jnp.float32),
    )
    return raw


def prepare_kernel_params(raw, *, num_heads):
    """Wrapper-side layout plumbing: transpose to (in,out), fold the attention
    scale into Q, pad hidden/class lanes to 128, cast weights to bf16."""
    H, I = raw['emb_w'].shape
    L = raw['in_proj_w'].shape[0]
    FF = raw['lin1_w'].shape[1]
    C = raw['fc_w'].shape[0]
    HD = H // num_heads
    scale = 1.0 / float(np.sqrt(HD))
    CP = _round_up(C, 128)

    def pad2(a, rows, cols):
        return jnp.pad(a, ((0, rows - a.shape[0]), (0, cols - a.shape[1])))

    def pad_row(a, cols):
        return jnp.pad(a, ((0, cols - a.shape[0]),))[None, :]

    wq, wk, wv, wo, w1, w2 = [], [], [], [], [], []
    bq, bk, bv, bo, b1, b2 = [], [], [], [], [], []
    n1w, n1b, n2w, n2b = [], [], [], []
    for l in range(L):
        ipw, ipb = raw['in_proj_w'][l], raw['in_proj_b'][l]
        wq.append(pad2(ipw[:H].T * scale, HP, HP))
        wk.append(pad2(ipw[H:2 * H].T, HP, HP))
        wv.append(pad2(ipw[2 * H:].T, HP, HP))
        bq.append(pad_row(ipb[:H] * scale, HP))
        bk.append(pad_row(ipb[H:2 * H], HP))
        bv.append(pad_row(ipb[2 * H:], HP))
        wo.append(pad2(raw['out_proj_w'][l].T, HP, HP))
        bo.append(pad_row(raw['out_proj_b'][l], HP))
        w1.append(pad2(raw['lin1_w'][l].T, HP, FF))
        b1.append(raw['lin1_b'][l][None, :])
        w2.append(pad2(raw['lin2_w'][l].T, FF, HP))
        b2.append(pad_row(raw['lin2_b'][l], HP))
        n1w.append(pad_row(raw['norm1_w'][l], HP))
        n1b.append(pad_row(raw['norm1_b'][l], HP))
        n2w.append(pad_row(raw['norm2_w'][l], HP))
        n2b.append(pad_row(raw['norm2_b'][l], HP))

    stack = lambda xs, dt=jnp.float32: jnp.stack(xs).astype(dt)
    return dict(
        emb_wT=pad2(raw['emb_w'].T, I, HP).astype(jnp.bfloat16),   # (I, HP)
        emb_b=pad_row(raw['emb_b'], HP),                           # (1, HP)
        pe=pad2(raw['pe'], raw['pe'].shape[0], HP),                # (max_len, HP)
        wq=stack(wq, jnp.bfloat16), bq=stack(bq),
        wk=stack(wk, jnp.bfloat16), bk=stack(bk),
        wv=stack(wv, jnp.bfloat16), bv=stack(bv),
        wo=stack(wo, jnp.bfloat16), bo=stack(bo),
        w1=stack(w1, jnp.bfloat16), b1=stack(b1),
        w2=stack(w2, jnp.bfloat16), b2=stack(b2),
        n1w=stack(n1w), n1b=stack(n1b), n2w=stack(n2w), n2b=stack(n2b),
        fc_wT=pad2(raw['fc_w'].T, HP, CP),                         # (HP, CP) f32
        fc_b=pad_row(raw['fc_b'], CP),                             # (1, CP)
    )


def reference_forward(x, raw, *, num_heads):
    """Plain-JAX f32 mirror of the PyTorch forward (eval mode), for checking."""
    B, S, I = x.shape
    H = raw['emb_w'].shape[0]
    L = raw['in_proj_w'].shape[0]
    HD = H // num_heads
    hp = jax.lax.Precision.HIGHEST

    def ln(v, w, b):
        mu = v.mean(-1, keepdims=True)
        var = ((v - mu) ** 2).mean(-1, keepdims=True)
        return (v - mu) / jnp.sqrt(var + 1e-5) * w + b

    h = jnp.einsum('bsi,hi->bsh', x, raw['emb_w'], precision=hp) + raw['emb_b']
    h = h + raw['pe'][:B][:, None, :]
    for l in range(L):
        qkv = jnp.einsum('bsh,kh->bsk', h, raw['in_proj_w'][l], precision=hp) + raw['in_proj_b'][l]
        heads = []
        for n in range(num_heads):
            qh = qkv[:, :, n * HD:(n + 1) * HD] / np.sqrt(HD)
            kh = qkv[:, :, H + n * HD:H + (n + 1) * HD]
            vh = qkv[:, :, 2 * H + n * HD:2 * H + (n + 1) * HD]
            s = jnp.einsum('bqd,bkd->bqk', qh, kh, precision=hp)
            p = jax.nn.softmax(s, axis=-1)
            heads.append(jnp.einsum('bqk,bkd->bqd', p, vh, precision=hp))
        attn = jnp.concatenate(heads, axis=-1)
        attn = jnp.einsum('bsh,oh->bso', attn, raw['out_proj_w'][l], precision=hp) + raw['out_proj_b'][l]
        y = ln(h + attn, raw['norm1_w'][l], raw['norm1_b'][l])
        ff = jax.nn.relu(jnp.einsum('bsh,fh->bsf', y, raw['lin1_w'][l], precision=hp) + raw['lin1_b'][l])
        ff = jnp.einsum('bsf,hf->bsh', ff, raw['lin2_w'][l], precision=hp) + raw['lin2_b'][l]
        h = ln(y + ff, raw['norm2_w'][l], raw['norm2_b'][l])
    pooled = h.mean(axis=1)
    return jnp.einsum('bh,ch->bc', pooled, raw['fc_w'], precision=hp) + raw['fc_b']


if __name__ == "__main__":
    INPUT_DIM, HIDDEN_DIM, NUM_HEADS, NUM_LAYERS, NUM_CLASSES = 16, 32, 4, 2, 5
    DIM_FEEDFORWARD = 2048  # PyTorch TransformerEncoderLayer default
    B, S = 2, 8

    key = jax.random.PRNGKey(0)
    kx, kp = jax.random.split(key)
    x = jax.random.normal(kx, (B, S, INPUT_DIM), jnp.float32)
    raw = init_raw_params(kp, INPUT_DIM, HIDDEN_DIM, NUM_HEADS, NUM_LAYERS,
                          NUM_CLASSES, DIM_FEEDFORWARD)
    kparams = prepare_kernel_params(raw, num_heads=NUM_HEADS)

    out = transformer_classifier_forward(x, kparams, num_heads=NUM_HEADS,
                                         hidden_dim=HIDDEN_DIM,
                                         num_classes=NUM_CLASSES)
    out = jax.block_until_ready(out)

    ref = reference_forward(x, raw, num_heads=NUM_HEADS)
    np.testing.assert_allclose(np.asarray(out), np.asarray(ref), rtol=2e-2, atol=2e-2)

    print("KERNEL_OK")
</pallas_src>

<mosaic_0001>
module attributes {stable_mosaic.version = 11 : i64} {
  func.func @transformer_classifier_kernel(%arg0: i32, %arg1: memref<16x16xf32, #tpu.memory_space<vmem>>, %arg2: memref<2x1x128xf32, #tpu.memory_space<vmem>>, %arg3: memref<16x128xbf16, #tpu.memory_space<vmem>>, %arg4: memref<1x128xf32, #tpu.memory_space<vmem>>, %arg5: memref<2x128x128xbf16, #tpu.memory_space<vmem>>, %arg6: memref<2x1x128xf32, #tpu.memory_space<vmem>>, %arg7: memref<2x128x128xbf16, #tpu.memory_space<vmem>>, %arg8: memref<2x1x128xf32, #tpu.memory_space<vmem>>, %arg9: memref<2x128x128xbf16, #tpu.memory_space<vmem>>, %arg10: memref<2x1x128xf32, #tpu.memory_space<vmem>>, %arg11: memref<2x128x128xbf16, #tpu.memory_space<vmem>>, %arg12: memref<2x1x128xf32, #tpu.memory_space<vmem>>, %arg13: memref<2x128x2048xbf16, #tpu.memory_space<vmem>>, %arg14: memref<2x1x2048xf32, #tpu.memory_space<vmem>>, %arg15: memref<2x2048x128xbf16, #tpu.memory_space<vmem>>, %arg16: memref<2x1x128xf32, #tpu.memory_space<vmem>>, %arg17: memref<2x1x128xf32, #tpu.memory_space<vmem>>, %arg18: memref<2x1x128xf32, #tpu.memory_space<vmem>>, %arg19: memref<2x1x128xf32, #tpu.memory_space<vmem>>, %arg20: memref<2x1x128xf32, #tpu.memory_space<vmem>>, %arg21: memref<128x128xf32, #tpu.memory_space<vmem>>, %arg22: memref<1x128xf32, #tpu.memory_space<vmem>>, %arg23: memref<2x128xf32, #tpu.memory_space<vmem>>) attributes {dimension_semantics = [#tpu.dimension_semantics<arbitrary>], iteration_bounds = array<i64: 1>, scalar_prefetch = 0 : i64, scratch_operands = 0 : i64, tpu.core_type = #tpu.core_type<tc>, window_params = [{pipeline_mode = #tpu.pipeline_mode<synchronous>, transform_indices = @transform_0, window_bounds = array<i64: 16, 16>}, {pipeline_mode = #tpu.pipeline_mode<synchronous>, transform_indices = @transform_1, window_bounds = array<i64: 2, 1, 128>}, {pipeline_mode = #tpu.pipeline_mode<synchronous>, transform_indices = @transform_2, window_bounds = array<i64: 16, 128>}, {pipeline_mode = #tpu.pipeline_mode<synchronous>, transform_indices = @transform_3, window_bounds = array<i64: 1, 128>}, {pipeline_mode = #tpu.pipeline_mode<synchronous>, transform_indices = @transform_4, window_bounds = array<i64: 2, 128, 128>}, {pipeline_mode = #tpu.pipeline_mode<synchronous>, transform_indices = @transform_5, window_bounds = array<i64: 2, 1, 128>}, {pipeline_mode = #tpu.pipeline_mode<synchronous>, transform_indices = @transform_6, window_bounds = array<i64: 2, 128, 128>}, {pipeline_mode = #tpu.pipeline_mode<synchronous>, transform_indices = @transform_7, window_bounds = array<i64: 2, 1, 128>}, {pipeline_mode = #tpu.pipeline_mode<synchronous>, transform_indices = @transform_8, window_bounds = array<i64: 2, 128, 128>}, {pipeline_mode = #tpu.pipeline_mode<synchronous>, transform_indices = @transform_9, window_bounds = array<i64: 2, 1, 128>}, {pipeline_mode = #tpu.pipeline_mode<synchronous>, transform_indices = @transform_10, window_bounds = array<i64: 2, 128, 128>}, {pipeline_mode = #tpu.pipeline_mode<synchronous>, transform_indices = @transform_11, window_bounds = array<i64: 2, 1, 128>}, {pipeline_mode = #tpu.pipeline_mode<synchronous>, transform_indices = @transform_12, window_bounds = array<i64: 2, 128, 2048>}, {pipeline_mode = #tpu.pipeline_mode<synchronous>, transform_indices = @transform_13, window_bounds = array<i64: 2, 1, 2048>}, {pipeline_mode = #tpu.pipeline_mode<synchronous>, transform_indices = @transform_14, window_bounds = array<i64: 2, 2048, 128>}, {pipeline_mode = #tpu.pipeline_mode<synchronous>, transform_indices = @transform_15, window_bounds = array<i64: 2, 1, 128>}, {pipeline_mode = #tpu.pipeline_mode<synchronous>, transform_indices = @transform_16, window_bounds = array<i64: 2, 1, 128>}, {pipeline_mode = #tpu.pipeline_mode<synchronous>, transform_indices = @transform_17, window_bounds = array<i64: 2, 1, 128>}, {pipeline_mode = #tpu.pipeline_mode<synchronous>, transform_indices = @transform_18, window_bounds = array<i64: 2, 1, 128>}, {pipeline_mode = #tpu.pipeline_mode<synchronous>, transform_indices = @transform_19, window_bounds = array<i64: 2, 1, 128>}, {pipeline_mode = #tpu.pipeline_mode<synchronous>, transform_indices = @transform_20, window_bounds = array<i64: 128, 128>}, {pipeline_mode = #tpu.pipeline_mode<synchronous>, transform_indices = @transform_21, window_bounds = array<i64: 1, 128>}, {pipeline_mode = #tpu.pipeline_mode<synchronous>, transform_indices = @transform_22, window_bounds = array<i64: 2, 128>}]} {
    %0 = tpu.iota {dimensions = array<i32: 1>} : vector<1x128xi32>
    %c32_i32 = arith.constant 32 : i32
    %1 = vector.broadcast %c32_i32 : i32 to vector<1x128xi32>
    %2 = arith.cmpi slt, %0, %1 : vector<1x128xi32>
    %3 = arith.extui %2 : vector<1x128xi1> to vector<1x128xi32>
    %4 = arith.sitofp %3 : vector<1x128xi32> to vector<1x128xf32>
    %5 = tpu.iota {dimensions = array<i32: 1>} : vector<4x128xi32>
    %6 = tpu.iota {dimensions = array<i32: 0>} : vector<4x128xi32>
    %c8_i32 = arith.constant 8 : i32
    %7 = vector.broadcast %c8_i32 : i32 to vector<4x128xi32>
    %8 = arith.muli %6, %7 : vector<4x128xi32>
    %9 = arith.cmpi sge, %5, %8 : vector<4x128xi32>
    %c1_i32 = arith.constant 1 : i32
    %10 = vector.broadcast %c1_i32 : i32 to vector<4x128xi32>
    %11 = arith.addi %6, %10 : vector<4x128xi32>
    %c8_i32_0 = arith.constant 8 : i32
    %12 = vector.broadcast %c8_i32_0 : i32 to vector<4x128xi32>
    %13 = arith.muli %11, %12 : vector<4x128xi32>
    %14 = arith.cmpi slt, %5, %13 : vector<4x128xi32>
    %15 = arith.andi %9, %14 : vector<4x128xi1>
    %16 = arith.extui %15 : vector<4x128xi1> to vector<4x128xi32>
    %17 = arith.sitofp %16 : vector<4x128xi32> to vector<4x128xf32>
    %c0 = arith.constant 0 : index
    %c0_1 = arith.constant 0 : index
    %18 = vector.load %arg1[%c0, %c0_1] : memref<16x16xf32, #tpu.memory_space<vmem>>, vector<16x16xf32>
    %19 = arith.truncf %18 : vector<16x16xf32> to vector<16x16xbf16>
    %c0_2 = arith.constant 0 : index
    %c0_3 = arith.constant 0 : index
    %20 = vector.load %arg3[%c0_2, %c0_3] : memref<16x128xbf16, #tpu.memory_space<vmem>>, vector<16x128xbf16>
    %cst = arith.constant dense<0.000000e+00> : vector<16x128xf32>
    %21 = tpu.matmul %19, %20, %cst {dimension_numbers = #tpu.dot_dimension_numbers<[1], [0], [0], [1], [0, 0, 1, 1], [], []>} : vector<16x16xbf16>, vector<16x128xbf16>, vector<16x128xf32> -> vector<16x128xf32>
    %c0_4 = arith.constant 0 : index
    %c0_5 = arith.constant 0 : index
    %22 = vector.load %arg4[%c0_4, %c0_5] : memref<1x128xf32, #tpu.memory_space<vmem>>, vector<1x128xf32>
    %23 = vector.broadcast %22 : vector<1x128xf32> to vector<16x128xf32>
    %24 = arith.addf %21, %23 : vector<16x128xf32>
    %25 = vector.shape_cast %24 : vector<16x128xf32> to vector<2x8x128xf32>
    %c0_6 = arith.constant 0 : index
    %c0_7 = arith.constant 0 : index
    %c0_8 = arith.constant 0 : index
    %26 = vector.load %arg2[%c0_6, %c0_7, %c0_8] : memref<2x1x128xf32, #tpu.memory_space<vmem>>, vector<2x1x128xf32>
    %27 = vector.broadcast %26 : vector<2x1x128xf32> to vector<2x8x128xf32>
    %28 = arith.addf %25, %27 : vector<2x8x128xf32>
    %29 = vector.shape_cast %28 : vector<2x8x128xf32> to vector<16x128xf32>
    %c0_i32 = arith.constant 0 : i32
    %30 = arith.truncf %29 : vector<16x128xf32> to vector<16x128xbf16>
    %31 = arith.index_cast %c0_i32 : i32 to index
    %c0_9 = arith.constant 0 : index
    %c0_10 = arith.constant 0 : index
    %32 = vector.load %arg5[%31, %c0_9, %c0_10] : memref<2x128x128xbf16, #tpu.memory_space<vmem>>, vector<1x128x128xbf16>
    %33 = vector.shape_cast %32 : vector<1x128x128xbf16> to vector<128x128xbf16>
    %cst_11 = arith.constant dense<0.000000e+00> : vector<16x128xf32>
    %34 = tpu.matmul %30, %33, %cst_11 {dimension_numbers = #tpu.dot_dimension_numbers<[1], [0], [0], [1], [0, 0, 1, 1], [], []>} : vector<16x128xbf16>, vector<128x128xbf16>, vector<16x128xf32> -> vector<16x128xf32>
    %35 = arith.index_cast %c0_i32 : i32 to index
    %c0_12 = arith.constant 0 : index
    %c0_13 = arith.constant 0 : index
    %36 = vector.load %arg6[%35, %c0_12, %c0_13] : memref<2x1x128xf32, #tpu.memory_space<vmem>>, vector<1x1x128xf32>
    %37 = vector.shape_cast %36 : vector<1x1x128xf32> to vector<1x128xf32>
    %38 = vector.broadcast %37 : vector<1x128xf32> to vector<16x128xf32>
    %39 = arith.addf %34, %38 : vector<16x128xf32>
    %40 = arith.index_cast %c0_i32 : i32 to index
    %c0_14 = arith.constant 0 : index
    %c0_15 = arith.constant 0 : index
    %41 = vector.load %arg7[%40, %c0_14, %c0_15] : memref<2x128x128xbf16, #tpu.memory_space<vmem>>, vector<1x128x128xbf16>
    %42 = vector.shape_cast %41 : vector<1x128x128xbf16> to vector<128x128xbf16>
    %cst_16 = arith.constant dense<0.000000e+00> : vector<16x128xf32>
    %43 = tpu.matmul %30, %42, %cst_16 {dimension_numbers = #tpu.dot_dimension_numbers<[1], [0], [0], [1], [0, 0, 1, 1], [], []>} : vector<16x128xbf16>, vector<128x128xbf16>, vector<16x128xf32> -> vector<16x128xf32>
    %44 = arith.index_cast %c0_i32 : i32 to index
    %c0_17 = arith.constant 0 : index
    %c0_18 = arith.constant 0 : index
    %45 = vector.load %arg8[%44, %c0_17, %c0_18] : memref<2x1x128xf32, #tpu.memory_space<vmem>>, vector<1x1x128xf32>
    %46 = vector.shape_cast %45 : vector<1x1x128xf32> to vector<1x128xf32>
    %47 = vector.broadcast %46 : vector<1x128xf32> to vector<16x128xf32>
    %48 = arith.addf %43, %47 : vector<16x128xf32>
    %49 = arith.index_cast %c0_i32 : i32 to index
    %c0_19 = arith.constant 0 : index
    %c0_20 = arith.constant 0 : index
    %50 = vector.load %arg9[%49, %c0_19, %c0_20] : memref<2x128x128xbf16, #tpu.memory_space<vmem>>, vector<1x128x128xbf16>
    %51 = vector.shape_cast %50 : vector<1x128x128xbf16> to vector<128x128xbf16>
    %cst_21 = arith.constant dense<0.000000e+00> : vector<16x128xf32>
    %52 = tpu.matmul %30, %51, %cst_21 {dimension_numbers = #tpu.dot_dimension_numbers<[1], [0], [0], [1], [0, 0, 1, 1], [], []>} : vector<16x128xbf16>, vector<128x128xbf16>, vector<16x128xf32> -> vector<16x128xf32>
    %53 = arith.index_cast %c0_i32 : i32 to index
    %c0_22 = arith.constant 0 : index
    %c0_23 = arith.constant 0 : index
    %54 = vector.load %arg10[%53, %c0_22, %c0_23] : memref<2x1x128xf32, #tpu.memory_space<vmem>>, vector<1x1x128xf32>
    %55 = vector.shape_cast %54 : vector<1x1x128xf32> to vector<1x128xf32>
    %56 = vector.broadcast %55 : vector<1x128xf32> to vector<16x128xf32>
    %57 = arith.addf %52, %56 : vector<16x128xf32>
    %58 = vector.shape_cast %39 : vector<16x128xf32> to vector<2x8x128xf32>
    %59 = vector.shape_cast %58 : vector<2x8x128xf32> to vector<2x1x8x128xf32>
    %60 = vector.shape_cast %59 : vector<2x1x8x128xf32> to vector<2x1x8x128xf32>
    %61 = vector.broadcast %60 : vector<2x1x8x128xf32> to vector<2x4x8x128xf32>
    %62 = vector.shape_cast %61 : vector<2x4x8x128xf32> to vector<8x8x128xf32>
    %63 = vector.shape_cast %48 : vector<16x128xf32> to vector<2x8x128xf32>
    %64 = vector.shape_cast %63 : vector<2x8x128xf32> to vector<2x1x8x128xf32>
    %65 = vector.shape_cast %17 : vector<4x128xf32> to vector<1x4x1x128xf32>
    %66 = vector.broadcast %64 : vector<2x1x8x128xf32> to vector<2x4x8x128xf32>
    %67 = vector.broadcast %65 : vector<1x4x1x128xf32> to vector<2x4x8x128xf32>
    %68 = arith.mulf %66, %67 : vector<2x4x8x128xf32>
    %69 = vector.shape_cast %68 : vector<2x4x8x128xf32> to vector<8x8x128xf32>
    %70 = vector.shape_cast %57 : vector<16x128xf32> to vector<2x8x128xf32>
    %71 = vector.shape_cast %70 : vector<2x8x128xf32> to vector<2x1x8x128xf32>
    %72 = vector.shape_cast %17 : vector<4x128xf32> to vector<1x4x1x128xf32>
    %73 = vector.broadcast %71 : vector<2x1x8x128xf32> to vector<2x4x8x128xf32>
    %74 = vector.broadcast %72 : vector<1x4x1x128xf32> to vector<2x4x8x128xf32>
    %75 = arith.mulf %73, %74 : vector<2x4x8x128xf32>
    %76 = vector.shape_cast %75 : vector<2x4x8x128xf32> to vector<8x8x128xf32>
    "tpu.trace_start"() <{level = 10 : i32, message = "nqd,nkd->nqk"}> : () -> ()
    %cst_24 = arith.constant dense<0.000000e+00> : vector<8x8x8xf32>
    %77 = tpu.matmul %62, %69, %cst_24 {dimension_numbers = #tpu.dot_dimension_numbers<[2], [2], [1], [1], [0, 0, 0, 1, 1, 1], [0], [0]>} : vector<8x8x128xf32>, vector<8x8x128xf32>, vector<8x8x8xf32> -> vector<8x8x8xf32>
    "tpu.trace_stop"() : () -> ()
    %cst_25 = arith.constant dense<0xFF800000> : vector<8x8xf32>
    %78 = vector.multi_reduction <maximumf>, %77, %cst_25 [2] : vector<8x8x8xf32> to vector<8x8xf32>
    %79 = vector.shape_cast %78 : vector<8x8xf32> to vector<8x8x1xf32>
    %80 = vector.broadcast %79 : vector<8x8x1xf32> to vector<8x8x8xf32>
    %81 = arith.subf %77, %80 : vector<8x8x8xf32>
    %82 = math.exp %81 : vector<8x8x8xf32>
    %cst_26 = arith.constant dense<0.000000e+00> : vector<8x8xf32>
    %83 = vector.multi_reduction <add>, %82, %cst_26 [2] : vector<8x8x8xf32> to vector<8x8xf32>
    %84 = vector.shape_cast %83 : vector<8x8xf32> to vector<8x8x1xf32>
    %85 = tpu.reciprocal %84 {approx = true} : vector<8x8x1xf32> -> vector<8x8x1xf32>
    %86 = vector.broadcast %85 : vector<8x8x1xf32> to vector<8x8x8xf32>
    %87 = arith.mulf %82, %86 : vector<8x8x8xf32>
    "tpu.trace_start"() <{level = 10 : i32, message = "nqk,nkd->nqd"}> : () -> ()
    %cst_27 = arith.constant dense<0.000000e+00> : vector<8x8x128xf32>
    %88 = tpu.matmul %87, %76, %cst_27 {dimension_numbers = #tpu.dot_dimension_numbers<[2], [1], [1], [2], [0, 0, 0, 1, 1, 2], [0], [0]>} : vector<8x8x8xf32>, vector<8x8x128xf32>, vector<8x8x128xf32> -> vector<8x8x128xf32>
    "tpu.trace_stop"() : () -> ()
    %89 = vector.shape_cast %88 : vector<8x8x128xf32> to vector<2x4x8x128xf32>
    %cst_28 = arith.constant dense<0.000000e+00> : vector<2x8x128xf32>
    %90 = vector.multi_reduction <add>, %89, %cst_28 [1] : vector<2x4x8x128xf32> to vector<2x8x128xf32>
    %91 = vector.shape_cast %90 : vector<2x8x128xf32> to vector<16x128xf32>
    %92 = arith.truncf %91 : vector<16x128xf32> to vector<16x128xbf16>
    %93 = arith.index_cast %c0_i32 : i32 to index
    %c0_29 = arith.constant 0 : index
    %c0_30 = arith.constant 0 : index
    %94 = vector.load %arg11[%93, %c0_29, %c0_30] : memref<2x128x128xbf16, #tpu.memory_space<vmem>>, vector<1x128x128xbf16>
    %95 = vector.shape_cast %94 : vector<1x128x128xbf16> to vector<128x128xbf16>
    %cst_31 = arith.constant dense<0.000000e+00> : vector<16x128xf32>
    %96 = tpu.matmul %92, %95, %cst_31 {dimension_numbers = #tpu.dot_dimension_numbers<[1], [0], [0], [1], [0, 0, 1, 1], [], []>} : vector<16x128xbf16>, vector<128x128xbf16>, vector<16x128xf32> -> vector<16x128xf32>
    %97 = arith.index_cast %c0_i32 : i32 to index
    %c0_32 = arith.constant 0 : index
    %c0_33 = arith.constant 0 : index
    %98 = vector.load %arg12[%97, %c0_32, %c0_33] : memref<2x1x128xf32, #tpu.memory_space<vmem>>, vector<1x1x128xf32>
    %99 = vector.shape_cast %98 : vector<1x1x128xf32> to vector<1x128xf32>
    %100 = vector.broadcast %99 : vector<1x128xf32> to vector<16x128xf32>
    %101 = arith.addf %96, %100 : vector<16x128xf32>
    %102 = arith.addf %29, %101 : vector<16x128xf32>
    %103 = arith.index_cast %c0_i32 : i32 to index
    %c0_34 = arith.constant 0 : index
    %c0_35 = arith.constant 0 : index
    %104 = vector.load %arg17[%103, %c0_34, %c0_35] : memref<2x1x128xf32, #tpu.memory_space<vmem>>, vector<1x1x128xf32>
    %105 = vector.shape_cast %104 : vector<1x1x128xf32> to vector<1x128xf32>
    %106 = arith.index_cast %c0_i32 : i32 to index
    %c0_36 = arith.constant 0 : index
    %c0_37 = arith.constant 0 : index
    %107 = vector.load %arg18[%106, %c0_36, %c0_37] : memref<2x1x128xf32, #tpu.memory_space<vmem>>, vector<1x1x128xf32>
    %108 = vector.shape_cast %107 : vector<1x1x128xf32> to vector<1x128xf32>
    %cst_38 = arith.constant dense<0.000000e+00> : vector<16xf32>
    %109 = vector.multi_reduction <add>, %102, %cst_38 [1] : vector<16x128xf32> to vector<16xf32>
    %110 = vector.shape_cast %109 : vector<16xf32> to vector<16x1xf32>
    %cst_39 = arith.constant 3.125000e-02 : f32
    %111 = vector.broadcast %cst_39 : f32 to vector<16x1xf32>
    %112 = arith.mulf %110, %111 : vector<16x1xf32>
    %113 = vector.broadcast %112 : vector<16x1xf32> to vector<16x128xf32>
    %114 = arith.subf %102, %113 : vector<16x128xf32>
    %115 = vector.broadcast %4 : vector<1x128xf32> to vector<16x128xf32>
    %116 = arith.mulf %114, %115 : vector<16x128xf32>
    %117 = arith.mulf %116, %116 : vector<16x128xf32>
    %cst_40 = arith.constant dense<0.000000e+00> : vector<16xf32>
    %118 = vector.multi_reduction <add>, %117, %cst_40 [1] : vector<16x128xf32> to vector<16xf32>
    %119 = vector.shape_cast %118 : vector<16xf32> to vector<16x1xf32>
    %cst_41 = arith.constant 3.125000e-02 : f32
    %120 = vector.broadcast %cst_41 : f32 to vector<16x1xf32>
    %121 = arith.mulf %119, %120 : vector<16x1xf32>
    %cst_42 = arith.constant 9.99999974E-6 : f32
    %122 = vector.broadcast %cst_42 : f32 to vector<16x1xf32>
    %123 = arith.addf %121, %122 : vector<16x1xf32>
    %124 = math.rsqrt %123 : vector<16x1xf32>
    %125 = vector.broadcast %124 : vector<16x1xf32> to vector<16x128xf32>
    %126 = arith.mulf %116, %125 : vector<16x128xf32>
    %127 = vector.broadcast %105 : vector<1x128xf32> to vector<16x128xf32>
    %128 = arith.mulf %126, %127 : vector<16x128xf32>
    %129 = vector.broadcast %108 : vector<1x128xf32> to vector<16x128xf32>
    %130 = arith.addf %128, %129 : vector<16x128xf32>
    %131 = arith.truncf %130 : vector<16x128xf32> to vector<16x128xbf16>
    %132 = arith.index_cast %c0_i32 : i32 to index
    %c0_43 = arith.constant 0 : index
    %c0_44 = arith.constant 0 : index
    %133 = vector.load %arg13[%132, %c0_43, %c0_44] : memref<2x128x2048xbf16, #tpu.memory_space<vmem>>, vector<1x128x2048xbf16>
    %134 = vector.shape_cast %133 : vector<1x128x2048xbf16> to vector<128x2048xbf16>
    %cst_45 = arith.constant dense<0.000000e+00> : vector<16x2048xf32>
    %135 = tpu.matmul %131, %134, %cst_45 {dimension_numbers = #tpu.dot_dimension_numbers<[1], [0], [0], [1], [0, 0, 1, 1], [], []>} : vector<16x128xbf16>, vector<128x2048xbf16>, vector<16x2048xf32> -> vector<16x2048xf32>
    %136 = arith.index_cast %c0_i32 : i32 to index
    %c0_46 = arith.constant 0 : index
    %c0_47 = arith.constant 0 : index
    %137 = vector.load %arg14[%136, %c0_46, %c0_47] : memref<2x1x2048xf32, #tpu.memory_space<vmem>>, vector<1x1x2048xf32>
    %138 = vector.shape_cast %137 : vector<1x1x2048xf32> to vector<1x2048xf32>
    %139 = vector.broadcast %138 : vector<1x2048xf32> to vector<16x2048xf32>
    %140 = arith.addf %135, %139 : vector<16x2048xf32>
    %cst_48 = arith.constant 0.000000e+00 : f32
    %141 = vector.broadcast %cst_48 : f32 to vector<16x2048xf32>
    %142 = arith.maximumf %140, %141 : vector<16x2048xf32>
    %143 = arith.truncf %142 : vector<16x2048xf32> to vector<16x2048xbf16>
    %144 = arith.index_cast %c0_i32 : i32 to index
    %c0_49 = arith.constant 0 : index
    %c0_50 = arith.constant 0 : index
    %145 = vector.load %arg15[%144, %c0_49, %c0_50] : memref<2x2048x128xbf16, #tpu.memory_space<vmem>>, vector<1x2048x128xbf16>
    %146 = vector.shape_cast %145 : vector<1x2048x128xbf16> to vector<2048x128xbf16>
    %cst_51 = arith.constant dense<0.000000e+00> : vector<16x128xf32>
    %147 = tpu.matmul %143, %146, %cst_51 {dimension_numbers = #tpu.dot_dimension_numbers<[1], [0], [0], [1], [0, 0, 1, 1], [], []>} : vector<16x2048xbf16>, vector<2048x128xbf16>, vector<16x128xf32> -> vector<16x128xf32>
    %148 = arith.index_cast %c0_i32 : i32 to index
    %c0_52 = arith.constant 0 : index
    %c0_53 = arith.constant 0 : index
    %149 = vector.load %arg16[%148, %c0_52, %c0_53] : memref<2x1x128xf32, #tpu.memory_space<vmem>>, vector<1x1x128xf32>
    %150 = vector.shape_cast %149 : vector<1x1x128xf32> to vector<1x128xf32>
    %151 = vector.broadcast %150 : vector<1x128xf32> to vector<16x128xf32>
    %152 = arith.addf %147, %151 : vector<16x128xf32>
    %153 = arith.addf %130, %152 : vector<16x128xf32>
    %154 = arith.index_cast %c0_i32 : i32 to index
    %c0_54 = arith.constant 0 : index
    %c0_55 = arith.constant 0 : index
    %155 = vector.load %arg19[%154, %c0_54, %c0_55] : memref<2x1x128xf32, #tpu.memory_space<vmem>>, vector<1x1x128xf32>
    %156 = vector.shape_cast %155 : vector<1x1x128xf32> to vector<1x128xf32>
    %157 = arith.index_cast %c0_i32 : i32 to index
    %c0_56 = arith.constant 0 : index
    %c0_57 = arith.constant 0 : index
    %158 = vector.load %arg20[%157, %c0_56, %c0_57] : memref<2x1x128xf32, #tpu.memory_space<vmem>>, vector<1x1x128xf32>
    %159 = vector.shape_cast %158 : vector<1x1x128xf32> to vector<1x128xf32>
    %cst_58 = arith.constant dense<0.000000e+00> : vector<16xf32>
    %160 = vector.multi_reduction <add>, %153, %cst_58 [1] : vector<16x128xf32> to vector<16xf32>
    %161 = vector.shape_cast %160 : vector<16xf32> to vector<16x1xf32>
    %cst_59 = arith.constant 3.125000e-02 : f32
    %162 = vector.broadcast %cst_59 : f32 to vector<16x1xf32>
    %163 = arith.mulf %161, %162 : vector<16x1xf32>
    %164 = vector.broadcast %163 : vector<16x1xf32> to vector<16x128xf32>
    %165 = arith.subf %153, %164 : vector<16x128xf32>
    %166 = vector.broadcast %4 : vector<1x128xf32> to vector<16x128xf32>
    %167 = arith.mulf %165, %166 : vector<16x128xf32>
    %168 = arith.mulf %167, %167 : vector<16x128xf32>
    %cst_60 = arith.constant dense<0.000000e+00> : vector<16xf32>
    %169 = vector.multi_reduction <add>, %168, %cst_60 [1] : vector<16x128xf32> to vector<16xf32>
    %170 = vector.shape_cast %169 : vector<16xf32> to vector<16x1xf32>
    %cst_61 = arith.constant 3.125000e-02 : f32
    %171 = vector.broadcast %cst_61 : f32 to vector<16x1xf32>
    %172 = arith.mulf %170, %171 : vector<16x1xf32>
    %cst_62 = arith.constant 9.99999974E-6 : f32
    %173 = vector.broadcast %cst_62 : f32 to vector<16x1xf32>
    %174 = arith.addf %172, %173 : vector<16x1xf32>
    %175 = math.rsqrt %174 : vector<16x1xf32>
    %176 = vector.broadcast %175 : vector<16x1xf32> to vector<16x128xf32>
    %177 = arith.mulf %167, %176 : vector<16x128xf32>
    %178 = vector.broadcast %156 : vector<1x128xf32> to vector<16x128xf32>
    %179 = arith.mulf %177, %178 : vector<16x128xf32>
    %180 = vector.broadcast %159 : vector<1x128xf32> to vector<16x128xf32>
    %181 = arith.addf %179, %180 : vector<16x128xf32>
    %c1_i32_63 = arith.constant 1 : i32
    %182 = arith.truncf %181 : vector<16x128xf32> to vector<16x128xbf16>
    %183 = arith.index_cast %c1_i32_63 : i32 to index
    %c0_64 = arith.constant 0 : index
    %c0_65 = arith.constant 0 : index
    %184 = vector.load %arg5[%183, %c0_64, %c0_65] : memref<2x128x128xbf16, #tpu.memory_space<vmem>>, vector<1x128x128xbf16>
    %185 = vector.shape_cast %184 : vector<1x128x128xbf16> to vector<128x128xbf16>
    %cst_66 = arith.constant dense<0.000000e+00> : vector<16x128xf32>
    %186 = tpu.matmul %182, %185, %cst_66 {dimension_numbers = #tpu.dot_dimension_numbers<[1], [0], [0], [1], [0, 0, 1, 1], [], []>} : vector<16x128xbf16>, vector<128x128xbf16>, vector<16x128xf32> -> vector<16x128xf32>
    %187 = arith.index_cast %c1_i32_63 : i32 to index
    %c0_67 = arith.constant 0 : index
    %c0_68 = arith.constant 0 : index
    %188 = vector.load %arg6[%187, %c0_67, %c0_68] : memref<2x1x128xf32, #tpu.memory_space<vmem>>, vector<1x1x128xf32>
    %189 = vector.shape_cast %188 : vector<1x1x128xf32> to vector<1x128xf32>
    %190 = vector.broadcast %189 : vector<1x128xf32> to vector<16x128xf32>
    %191 = arith.addf %186, %190 : vector<16x128xf32>
    %192 = arith.index_cast %c1_i32_63 : i32 to index
    %c0_69 = arith.constant 0 : index
    %c0_70 = arith.constant 0 : index
    %193 = vector.load %arg7[%192, %c0_69, %c0_70] : memref<2x128x128xbf16, #tpu.memory_space<vmem>>, vector<1x128x128xbf16>
    %194 = vector.shape_cast %193 : vector<1x128x128xbf16> to vector<128x128xbf16>
    %cst_71 = arith.constant dense<0.000000e+00> : vector<16x128xf32>
    %195 = tpu.matmul %182, %194, %cst_71 {dimension_numbers = #tpu.dot_dimension_numbers<[1], [0], [0], [1], [0, 0, 1, 1], [], []>} : vector<16x128xbf16>, vector<128x128xbf16>, vector<16x128xf32> -> vector<16x128xf32>
    %196 = arith.index_cast %c1_i32_63 : i32 to index
    %c0_72 = arith.constant 0 : index
    %c0_73 = arith.constant 0 : index
    %197 = vector.load %arg8[%196, %c0_72, %c0_73] : memref<2x1x128xf32, #tpu.memory_space<vmem>>, vector<1x1x128xf32>
    %198 = vector.shape_cast %197 : vector<1x1x128xf32> to vector<1x128xf32>
    %199 = vector.broadcast %198 : vector<1x128xf32> to vector<16x128xf32>
    %200 = arith.addf %195, %199 : vector<16x128xf32>
    %201 = arith.index_cast %c1_i32_63 : i32 to index
    %c0_74 = arith.constant 0 : index
    %c0_75 = arith.constant 0 : index
    %202 = vector.load %arg9[%201, %c0_74, %c0_75] : memref<2x128x128xbf16, #tpu.memory_space<vmem>>, vector<1x128x128xbf16>
    %203 = vector.shape_cast %202 : vector<1x128x128xbf16> to vector<128x128xbf16>
    %cst_76 = arith.constant dense<0.000000e+00> : vector<16x128xf32>
    %204 = tpu.matmul %182, %203, %cst_76 {dimension_numbers = #tpu.dot_dimension_numbers<[1], [0], [0], [1], [0, 0, 1, 1], [], []>} : vector<16x128xbf16>, vector<128x128xbf16>, vector<16x128xf32> -> vector<16x128xf32>
    %205 = arith.index_cast %c1_i32_63 : i32 to index
    %c0_77 = arith.constant 0 : index
    %c0_78 = arith.constant 0 : index
    %206 = vector.load %arg10[%205, %c0_77, %c0_78] : memref<2x1x128xf32, #tpu.memory_space<vmem>>, vector<1x1x128xf32>
    %207 = vector.shape_cast %206 : vector<1x1x128xf32> to vector<1x128xf32>
    %208 = vector.broadcast %207 : vector<1x128xf32> to vector<16x128xf32>
    %209 = arith.addf %204, %208 : vector<16x128xf32>
    %210 = vector.shape_cast %191 : vector<16x128xf32> to vector<2x8x128xf32>
    %211 = vector.shape_cast %210 : vector<2x8x128xf32> to vector<2x1x8x128xf32>
    %212 = vector.shape_cast %211 : vector<2x1x8x128xf32> to vector<2x1x8x128xf32>
    %213 = vector.broadcast %212 : vector<2x1x8x128xf32> to vector<2x4x8x128xf32>
    %214 = vector.shape_cast %213 : vector<2x4x8x128xf32> to vector<8x8x128xf32>
    %215 = vector.shape_cast %200 : vector<16x128xf32> to vector<2x8x128xf32>
    %216 = vector.shape_cast %215 : vector<2x8x128xf32> to vector<2x1x8x128xf32>
    %217 = vector.shape_cast %17 : vector<4x128xf32> to vector<1x4x1x128xf32>
    %218 = vector.broadcast %216 : vector<2x1x8x128xf32> to vector<2x4x8x128xf32>
    %219 = vector.broadcast %217 : vector<1x4x1x128xf32> to vector<2x4x8x128xf32>
    %220 = arith.mulf %218, %219 : vector<2x4x8x128xf32>
    %221 = vector.shape_cast %220 : vector<2x4x8x128xf32> to vector<8x8x128xf32>
    %222 = vector.shape_cast %209 : vector<16x128xf32> to vector<2x8x128xf32>
    %223 = vector.shape_cast %222 : vector<2x8x128xf32> to vector<2x1x8x128xf32>
    %224 = vector.shape_cast %17 : vector<4x128xf32> to vector<1x4x1x128xf32>
    %225 = vector.broadcast %223 : vector<2x1x8x128xf32> to vector<2x4x8x128xf32>
    %226 = vector.broadcast %224 : vector<1x4x1x128xf32> to vector<2x4x8x128xf32>
    %227 = arith.mulf %225, %226 : vector<2x4x8x128xf32>
    %228 = vector.shape_cast %227 : vector<2x4x8x128xf32> to vector<8x8x128xf32>
    "tpu.trace_start"() <{level = 10 : i32, message = "nqd,nkd->nqk"}> : () -> ()
    %cst_79 = arith.constant dense<0.000000e+00> : vector<8x8x8xf32>
    %229 = tpu.matmul %214, %221, %cst_79 {dimension_numbers = #tpu.dot_dimension_numbers<[2], [2], [1], [1], [0, 0, 0, 1, 1, 1], [0], [0]>} : vector<8x8x128xf32>, vector<8x8x128xf32>, vector<8x8x8xf32> -> vector<8x8x8xf32>
    "tpu.trace_stop"() : () -> ()
    %cst_80 = arith.constant dense<0xFF800000> : vector<8x8xf32>
    %230 = vector.multi_reduction <maximumf>, %229, %cst_80 [2] : vector<8x8x8xf32> to vector<8x8xf32>
    %231 = vector.shape_cast %230 : vector<8x8xf32> to vector<8x8x1xf32>
    %232 = vector.broadcast %231 : vector<8x8x1xf32> to vector<8x8x8xf32>
    %233 = arith.subf %229, %232 : vector<8x8x8xf32>
    %234 = math.exp %233 : vector<8x8x8xf32>
    %cst_81 = arith.constant dense<0.000000e+00> : vector<8x8xf32>
    %235 = vector.multi_reduction <add>, %234, %cst_81 [2] : vector<8x8x8xf32> to vector<8x8xf32>
    %236 = vector.shape_cast %235 : vector<8x8xf32> to vector<8x8x1xf32>
    %237 = tpu.reciprocal %236 {approx = true} : vector<8x8x1xf32> -> vector<8x8x1xf32>
    %238 = vector.broadcast %237 : vector<8x8x1xf32> to vector<8x8x8xf32>
    %239 = arith.mulf %234, %238 : vector<8x8x8xf32>
    "tpu.trace_start"() <{level = 10 : i32, message = "nqk,nkd->nqd"}> : () -> ()
    %cst_82 = arith.constant dense<0.000000e+00> : vector<8x8x128xf32>
    %240 = tpu.matmul %239, %228, %cst_82 {dimension_numbers = #tpu.dot_dimension_numbers<[2], [1], [1], [2], [0, 0, 0, 1, 1, 2], [0], [0]>} : vector<8x8x8xf32>, vector<8x8x128xf32>, vector<8x8x128xf32> -> vector<8x8x128xf32>
    "tpu.trace_stop"() : () -> ()
    %241 = vector.shape_cast %240 : vector<8x8x128xf32> to vector<2x4x8x128xf32>
    %cst_83 = arith.constant dense<0.000000e+00> : vector<2x8x128xf32>
    %242 = vector.multi_reduction <add>, %241, %cst_83 [1] : vector<2x4x8x128xf32> to vector<2x8x128xf32>
    %243 = vector.shape_cast %242 : vector<2x8x128xf32> to vector<16x128xf32>
    %244 = arith.truncf %243 : vector<16x128xf32> to vector<16x128xbf16>
    %245 = arith.index_cast %c1_i32_63 : i32 to index
    %c0_84 = arith.constant 0 : index
    %c0_85 = arith.constant 0 : index
    %246 = vector.load %arg11[%245, %c0_84, %c0_85] : memref<2x128x128xbf16, #tpu.memory_space<vmem>>, vector<1x128x128xbf16>
    %247 = vector.shape_cast %246 : vector<1x128x128xbf16> to vector<128x128xbf16>
    %cst_86 = arith.constant dense<0.000000e+00> : vector<16x128xf32>
    %248 = tpu.matmul %244, %247, %cst_86 {dimension_numbers = #tpu.dot_dimension_numbers<[1], [0], [0], [1], [0, 0, 1, 1], [], []>} : vector<16x128xbf16>, vector<128x128xbf16>, vector<16x128xf32> -> vector<16x128xf32>
    %249 = arith.index_cast %c1_i32_63 : i32 to index
    %c0_87 = arith.constant 0 : index
    %c0_88 = arith.constant 0 : index
    %250 = vector.load %arg12[%249, %c0_87, %c0_88] : memref<2x1x128xf32, #tpu.memory_space<vmem>>, vector<1x1x128xf32>
    %251 = vector.shape_cast %250 : vector<1x1x128xf32> to vector<1x128xf32>
    %252 = vector.broadcast %251 : vector<1x128xf32> to vector<16x128xf32>
    %253 = arith.addf %248, %252 : vector<16x128xf32>
    %254 = arith.addf %181, %253 : vector<16x128xf32>
    %255 = arith.index_cast %c1_i32_63 : i32 to index
    %c0_89 = arith.constant 0 : index
    %c0_90 = arith.constant 0 : index
    %256 = vector.load %arg17[%255, %c0_89, %c0_90] : memref<2x1x128xf32, #tpu.memory_space<vmem>>, vector<1x1x128xf32>
    %257 = vector.shape_cast %256 : vector<1x1x128xf32> to vector<1x128xf32>
    %258 = arith.index_cast %c1_i32_63 : i32 to index
    %c0_91 = arith.constant 0 : index
    %c0_92 = arith.constant 0 : index
    %259 = vector.load %arg18[%258, %c0_91, %c0_92] : memref<2x1x128xf32, #tpu.memory_space<vmem>>, vector<1x1x128xf32>
    %260 = vector.shape_cast %259 : vector<1x1x128xf32> to vector<1x128xf32>
    %cst_93 = arith.constant dense<0.000000e+00> : vector<16xf32>
    %261 = vector.multi_reduction <add>, %254, %cst_93 [1] : vector<16x128xf32> to vector<16xf32>
    %262 = vector.shape_cast %261 : vector<16xf32> to vector<16x1xf32>
    %cst_94 = arith.constant 3.125000e-02 : f32
    %263 = vector.broadcast %cst_94 : f32 to vector<16x1xf32>
    %264 = arith.mulf %262, %263 : vector<16x1xf32>
    %265 = vector.broadcast %264 : vector<16x1xf32> to vector<16x128xf32>
    %266 = arith.subf %254, %265 : vector<16x128xf32>
    %267 = vector.broadcast %4 : vector<1x128xf32> to vector<16x128xf32>
    %268 = arith.mulf %266, %267 : vector<16x128xf32>
    %269 = arith.mulf %268, %268 : vector<16x128xf32>
    %cst_95 = arith.constant dense<0.000000e+00> : vector<16xf32>
    %270 = vector.multi_reduction <add>, %269, %cst_95 [1] : vector<16x128xf32> to vector<16xf32>
    %271 = vector.shape_cast %270 : vector<16xf32> to vector<16x1xf32>
    %cst_96 = arith.constant 3.125000e-02 : f32
    %272 = vector.broadcast %cst_96 : f32 to vector<16x1xf32>
    %273 = arith.mulf %271, %272 : vector<16x1xf32>
    %cst_97 = arith.constant 9.99999974E-6 : f32
    %274 = vector.broadcast %cst_97 : f32 to vector<16x1xf32>
    %275 = arith.addf %273, %274 : vector<16x1xf32>
    %276 = math.rsqrt %275 : vector<16x1xf32>
    %277 = vector.broadcast %276 : vector<16x1xf32> to vector<16x128xf32>
    %278 = arith.mulf %268, %277 : vector<16x128xf32>
    %279 = vector.broadcast %257 : vector<1x128xf32> to vector<16x128xf32>
    %280 = arith.mulf %278, %279 : vector<16x128xf32>
    %281 = vector.broadcast %260 : vector<1x128xf32> to vector<16x128xf32>
    %282 = arith.addf %280, %281 : vector<16x128xf32>
    %283 = arith.truncf %282 : vector<16x128xf32> to vector<16x128xbf16>
    %284 = arith.index_cast %c1_i32_63 : i32 to index
    %c0_98 = arith.constant 0 : index
    %c0_99 = arith.constant 0 : index
    %285 = vector.load %arg13[%284, %c0_98, %c0_99] : memref<2x128x2048xbf16, #tpu.memory_space<vmem>>, vector<1x128x2048xbf16>
    %286 = vector.shape_cast %285 : vector<1x128x2048xbf16> to vector<128x2048xbf16>
    %cst_100 = arith.constant dense<0.000000e+00> : vector<16x2048xf32>
    %287 = tpu.matmul %283, %286, %cst_100 {dimension_numbers = #tpu.dot_dimension_numbers<[1], [0], [0], [1], [0, 0, 1, 1], [], []>} : vector<16x128xbf16>, vector<128x2048xbf16>, vector<16x2048xf32> -> vector<16x2048xf32>
    %288 = arith.index_cast %c1_i32_63 : i32 to index
    %c0_101 = arith.constant 0 : index
    %c0_102 = arith.constant 0 : index
    %289 = vector.load %arg14[%288, %c0_101, %c0_102] : memref<2x1x2048xf32, #tpu.memory_space<vmem>>, vector<1x1x2048xf32>
    %290 = vector.shape_cast %289 : vector<1x1x2048xf32> to vector<1x2048xf32>
    %291 = vector.broadcast %290 : vector<1x2048xf32> to vector<16x2048xf32>
    %292 = arith.addf %287, %291 : vector<16x2048xf32>
    %cst_103 = arith.constant 0.000000e+00 : f32
    %293 = vector.broadcast %cst_103 : f32 to vector<16x2048xf32>
    %294 = arith.maximumf %292, %293 : vector<16x2048xf32>
    %295 = arith.truncf %294 : vector<16x2048xf32> to vector<16x2048xbf16>
    %296 = arith.index_cast %c1_i32_63 : i32 to index
    %c0_104 = arith.constant 0 : index
    %c0_105 = arith.constant 0 : index
    %297 = vector.load %arg15[%296, %c0_104, %c0_105] : memref<2x2048x128xbf16, #tpu.memory_space<vmem>>, vector<1x2048x128xbf16>
    %298 = vector.shape_cast %297 : vector<1x2048x128xbf16> to vector<2048x128xbf16>
    %cst_106 = arith.constant dense<0.000000e+00> : vector<16x128xf32>
    %299 = tpu.matmul %295, %298, %cst_106 {dimension_numbers = #tpu.dot_dimension_numbers<[1], [0], [0], [1], [0, 0, 1, 1], [], []>} : vector<16x2048xbf16>, vector<2048x128xbf16>, vector<16x128xf32> -> vector<16x128xf32>
    %300 = arith.index_cast %c1_i32_63 : i32 to index
    %c0_107 = arith.constant 0 : index
    %c0_108 = arith.constant 0 : index
    %301 = vector.load %arg16[%300, %c0_107, %c0_108] : memref<2x1x128xf32, #tpu.memory_space<vmem>>, vector<1x1x128xf32>
    %302 = vector.shape_cast %301 : vector<1x1x128xf32> to vector<1x128xf32>
    %303 = vector.broadcast %302 : vector<1x128xf32> to vector<16x128xf32>
    %304 = arith.addf %299, %303 : vector<16x128xf32>
    %305 = arith.addf %282, %304 : vector<16x128xf32>
    %306 = arith.index_cast %c1_i32_63 : i32 to index
    %c0_109 = arith.constant 0 : index
    %c0_110 = arith.constant 0 : index
    %307 = vector.load %arg19[%306, %c0_109, %c0_110] : memref<2x1x128xf32, #tpu.memory_space<vmem>>, vector<1x1x128xf32>
    %308 = vector.shape_cast %307 : vector<1x1x128xf32> to vector<1x128xf32>
    %309 = arith.index_cast %c1_i32_63 : i32 to index
    %c0_111 = arith.constant 0 : index
    %c0_112 = arith.constant 0 : index
    %310 = vector.load %arg20[%309, %c0_111, %c0_112] : memref<2x1x128xf32, #tpu.memory_space<vmem>>, vector<1x1x128xf32>
    %311 = vector.shape_cast %310 : vector<1x1x128xf32> to vector<1x128xf32>
    %cst_113 = arith.constant dense<0.000000e+00> : vector<16xf32>
    %312 = vector.multi_reduction <add>, %305, %cst_113 [1] : vector<16x128xf32> to vector<16xf32>
    %313 = vector.shape_cast %312 : vector<16xf32> to vector<16x1xf32>
    %cst_114 = arith.constant 3.125000e-02 : f32
    %314 = vector.broadcast %cst_114 : f32 to vector<16x1xf32>
    %315 = arith.mulf %313, %314 : vector<16x1xf32>
    %316 = vector.broadcast %315 : vector<16x1xf32> to vector<16x128xf32>
    %317 = arith.subf %305, %316 : vector<16x128xf32>
    %318 = vector.broadcast %4 : vector<1x128xf32> to vector<16x128xf32>
    %319 = arith.mulf %317, %318 : vector<16x128xf32>
    %320 = arith.mulf %319, %319 : vector<16x128xf32>
    %cst_115 = arith.constant dense<0.000000e+00> : vector<16xf32>
    %321 = vector.multi_reduction <add>, %320, %cst_115 [1] : vector<16x128xf32> to vector<16xf32>
    %322 = vector.shape_cast %321 : vector<16xf32> to vector<16x1xf32>
    %cst_116 = arith.constant 3.125000e-02 : f32
    %323 = vector.broadcast %cst_116 : f32 to vector<16x1xf32>
    %324 = arith.mulf %322, %323 : vector<16x1xf32>
    %cst_117 = arith.constant 9.99999974E-6 : f32
    %325 = vector.broadcast %cst_117 : f32 to vector<16x1xf32>
    %326 = arith.addf %324, %325 : vector<16x1xf32>
    %327 = math.rsqrt %326 : vector<16x1xf32>
    %328 = vector.broadcast %327 : vector<16x1xf32> to vector<16x128xf32>
    %329 = arith.mulf %319, %328 : vector<16x128xf32>
    %330 = vector.broadcast %308 : vector<1x128xf32> to vector<16x128xf32>
    %331 = arith.mulf %329, %330 : vector<16x128xf32>
    %332 = vector.broadcast %311 : vector<1x128xf32> to vector<16x128xf32>
    %333 = arith.addf %331, %332 : vector<16x128xf32>
    %c2_i32 = arith.constant 2 : i32
    %334 = vector.shape_cast %333 : vector<16x128xf32> to vector<2x8x128xf32>
    %cst_118 = arith.constant dense<0.000000e+00> : vector<2x128xf32>
    %335 = vector.multi_reduction <add>, %334, %cst_118 [1] : vector<2x8x128xf32> to vector<2x128xf32>
    %cst_119 = arith.constant 8.000000e+00 : f32
    %336 = vector.broadcast %cst_119 : f32 to vector<2x128xf32>
    %337 = arith.divf %335, %336 : vector<2x128xf32>
    %c0_120 = arith.constant 0 : index
    %c0_121 = arith.constant 0 : index
    %338 = vector.load %arg21[%c0_120, %c0_121] : memref<128x128xf32, #tpu.memory_space<vmem>>, vector<128x128xf32>
    %cst_122 = arith.constant dense<0.000000e+00> : vector<2x128xf32>
    %339 = tpu.matmul %337, %338, %cst_122 {dimension_numbers = #tpu.dot_dimension_numbers<[1], [0], [0], [1], [0, 0, 1, 1], [], []>} : vector<2x128xf32>, vector<128x128xf32>, vector<2x128xf32> -> vector<2x128xf32>
    %c0_123 = arith.constant 0 : index
    %c0_124 = arith.constant 0 : index
    %340 = vector.load %arg22[%c0_123, %c0_124] : memref<1x128xf32, #tpu.memory_space<vmem>>, vector<1x128xf32>
    %341 = vector.broadcast %340 : vector<1x128xf32> to vector<2x128xf32>
    %342 = arith.addf %339, %341 : vector<2x128xf32>
    %c0_125 = arith.constant 0 : index
    %c0_126 = arith.constant 0 : index
    %343 = vector.load %arg23[%c0_125, %c0_126] : memref<2x128xf32, #tpu.memory_space<vmem>>, vector<2x128xf32>
    tpu.vector_store %arg23[%c0_125, %c0_126], %342 {strides = array<i32>} : memref<2x128xf32, #tpu.memory_space<vmem>>, vector<2x128xf32>,
    return
  }
  func.func @transform_0(%arg0: i32) -> (i32, i32) {
    %c0_i32 = arith.constant 0 : i32
    %c0_i32_0 = arith.constant 0 : i32
    %c0_i32_1 = arith.constant 0 : i32
    return %c0_i32, %c0_i32_0 : i32, i32
  }
  func.func @transform_1(%arg0: i32) -> (i32, i32, i32) {
    %c0_i32 = arith.constant 0 : i32
    %c0_i32_0 = arith.constant 0 : i32
    %c0_i32_1 = arith.constant 0 : i32
    %c0_i32_2 = arith.constant 0 : i32
    return %c0_i32, %c0_i32_0, %c0_i32_1 : i32, i32, i32
  }
  func.func @transform_2(%arg0: i32) -> (i32, i32) {
    %c0_i32 = arith.constant 0 : i32
    %c0_i32_0 = arith.constant 0 : i32
    %c0_i32_1 = arith.constant 0 : i32
    return %c0_i32, %c0_i32_0 : i32, i32
  }
  func.func @transform_3(%arg0: i32) -> (i32, i32) {
    %c0_i32 = arith.constant 0 : i32
    %c0_i32_0 = arith.constant 0 : i32
    %c0_i32_1 = arith.constant 0 : i32
    return %c0_i32, %c0_i32_0 : i32, i32
  }
  func.func @transform_4(%arg0: i32) -> (i32, i32, i32) {
    %c0_i32 = arith.constant 0 : i32
    %c0_i32_0 = arith.constant 0 : i32
    %c0_i32_1 = arith.constant 0 : i32
    %c0_i32_2 = arith.constant 0 : i32
    return %c0_i32, %c0_i32_0, %c0_i32_1 : i32, i32, i32
  }
  func.func @transform_5(%arg0: i32) -> (i32, i32, i32) {
    %c0_i32 = arith.constant 0 : i32
    %c0_i32_0 = arith.constant 0 : i32
    %c0_i32_1 = arith.constant 0 : i32
    %c0_i32_2 = arith.constant 0 : i32
    return %c0_i32, %c0_i32_0, %c0_i32_1 : i32, i32, i32
  }
  func.func @transform_6(%arg0: i32) -> (i32, i32, i32) {
    %c0_i32 = arith.constant 0 : i32
    %c0_i32_0 = arith.constant 0 : i32
    %c0_i32_1 = arith.constant 0 : i32
    %c0_i32_2 = arith.constant 0 : i32
    return %c0_i32, %c0_i32_0, %c0_i32_1 : i32, i32, i32
  }
  func.func @transform_7(%arg0: i32) -> (i32, i32, i32) {
    %c0_i32 = arith.constant 0 : i32
    %c0_i32_0 = arith.constant 0 : i32
    %c0_i32_1 = arith.constant 0 : i32
    %c0_i32_2 = arith.constant 0 : i32
    return %c0_i32, %c0_i32_0, %c0_i32_1 : i32, i32, i32
  }
  func.func @transform_8(%arg0: i32) -> (i32, i32, i32) {
    %c0_i32 = arith.constant 0 : i32
    %c0_i32_0 = arith.constant 0 : i32
    %c0_i32_1 = arith.constant 0 : i32
    %c0_i32_2 = arith.constant 0 : i32
    return %c0_i32, %c0_i32_0, %c0_i32_1 : i32, i32, i32
  }
  func.func @transform_9(%arg0: i32) -> (i32, i32, i32) {
    %c0_i32 = arith.constant 0 : i32
    %c0_i32_0 = arith.constant 0 : i32
    %c0_i32_1 = arith.constant 0 : i32
    %c0_i32_2 = arith.constant 0 : i32
    return %c0_i32, %c0_i32_0, %c0_i32_1 : i32, i32, i32
  }
  func.func @transform_10(%arg0: i32) -> (i32, i32, i32) {
    %c0_i32 = arith.constant 0 : i32
    %c0_i32_0 = arith.constant 0 : i32
    %c0_i32_1 = arith.constant 0 : i32
    %c0_i32_2 = arith.constant 0 : i32
    return %c0_i32, %c0_i32_0, %c0_i32_1 : i32, i32, i32
  }
  func.func @transform_11(%arg0: i32) -> (i32, i32, i32) {
    %c0_i32 = arith.constant 0 : i32
    %c0_i32_0 = arith.constant 0 : i32
    %c0_i32_1 = arith.constant 0 : i32
    %c0_i32_2 = arith.constant 0 : i32
    return %c0_i32, %c0_i32_0, %c0_i32_1 : i32, i32, i32
  }
  func.func @transform_12(%arg0: i32) -> (i32, i32, i32) {
    %c0_i32 = arith.constant 0 : i32
    %c0_i32_0 = arith.constant 0 : i32
    %c0_i32_1 = arith.constant 0 : i32
    %c0_i32_2 = arith.constant 0 : i32
    return %c0_i32, %c0_i32_0, %c0_i32_1 : i32, i32, i32
  }
  func.func @transform_13(%arg0: i32) -> (i32, i32, i32) {
    %c0_i32 = arith.constant 0 : i32
    %c0_i32_0 = arith.constant 0 : i32
    %c0_i32_1 = arith.constant 0 : i32
    %c0_i32_2 = arith.constant 0 : i32
    return %c0_i32, %c0_i32_0, %c0_i32_1 : i32, i32, i32
  }
  func.func @transform_14(%arg0: i32) -> (i32, i32, i32) {
    %c0_i32 = arith.constant 0 : i32
    %c0_i32_0 = arith.constant 0 : i32
    %c0_i32_1 = arith.constant 0 : i32
    %c0_i32_2 = arith.constant 0 : i32
    return %c0_i32, %c0_i32_0, %c0_i32_1 : i32, i32, i32
  }
  func.func @transform_15(%arg0: i32) -> (i32, i32, i32) {
    %c0_i32 = arith.constant 0 : i32
    %c0_i32_0 = arith.constant 0 : i32
    %c0_i32_1 = arith.constant 0 : i32
    %c0_i32_2 = arith.constant 0 : i32
    return %c0_i32, %c0_i32_0, %c0_i32_1 : i32, i32, i32
  }
  func.func @transform_16(%arg0: i32) -> (i32, i32, i32) {
    %c0_i32 = arith.constant 0 : i32
    %c0_i32_0 = arith.constant 0 : i32
    %c0_i32_1 = arith.constant 0 : i32
    %c0_i32_2 = arith.constant 0 : i32
    return %c0_i32, %c0_i32_0, %c0_i32_1 : i32, i32, i32
  }
  func.func @transform_17(%arg0: i32) -> (i32, i32, i32) {
    %c0_i32 = arith.constant 0 : i32
    %c0_i32_0 = arith.constant 0 : i32
    %c0_i32_1 = arith.constant 0 : i32
    %c0_i32_2 = arith.constant 0 : i32
    return %c0_i32, %c0_i32_0, %c0_i32_1 : i32, i32, i32
  }
  func.func @transform_18(%arg0: i32) -> (i32, i32, i32) {
    %c0_i32 = arith.constant 0 : i32
    %c0_i32_0 = arith.constant 0 : i32
    %c0_i32_1 = arith.constant 0 : i32
    %c0_i32_2 = arith.constant 0 : i32
    return %c0_i32, %c0_i32_0, %c0_i32_1 : i32, i32, i32
  }
  func.func @transform_19(%arg0: i32) -> (i32, i32, i32) {
    %c0_i32 = arith.constant 0 : i32
    %c0_i32_0 = arith.constant 0 : i32
    %c0_i32_1 = arith.constant 0 : i32
    %c0_i32_2 = arith.constant 0 : i32
    return %c0_i32, %c0_i32_0, %c0_i32_1 : i32, i32, i32
  }
  func.func @transform_20(%arg0: i32) -> (i32, i32) {
    %c0_i32 = arith.constant 0 : i32
    %c0_i32_0 = arith.constant 0 : i32
    %c0_i32_1 = arith.constant 0 : i32
    return %c0_i32, %c0_i32_0 : i32, i32
  }
  func.func @transform_21(%arg0: i32) -> (i32, i32) {
    %c0_i32 = arith.constant 0 : i32
    %c0_i32_0 = arith.constant 0 : i32
    %c0_i32_1 = arith.constant 0 : i32
    return %c0_i32, %c0_i32_0 : i32, i32
  }
  func.func @transform_22(%arg0: i32) -> (i32, i32) {
    %c0_i32 = arith.constant 0 : i32
    %c0_i32_0 = arith.constant 0 : i32
    %c0_i32_1 = arith.constant 0 : i32
    return %c0_i32, %c0_i32_0 : i32, i32
  }
}

</mosaic_0001>

<llo_original>
// kernel: tpu_custom_call.1
$region0: #{tpu_custom_call.1}
  #allocation0 [shape = 'u32[]', space=smem, size = 0x4, offset = 0x4, fixed_abs, tag = 'smem constant byte address 0x4 - core index']
  #allocation1 [shape = 'u32[144,128]{1,0:T(1,128)}', space=vmem, size = 0x12000, scoped, tag = 'internal scratch']
  %s0 = inlined_call_operand.hbm [shape: f32[16,16], index: 0, kind: input, shape index: {}]
  %s1 = inlined_call_operand.vmem [shape: f32[2,1,128], index: 1, kind: input, shape index: {}]
  %s2 = inlined_call_operand.hbm [shape: bf16[16,128], index: 2, kind: input, shape index: {}]
  %s3 = inlined_call_operand.vmem [shape: f32[1,128], index: 3, kind: input, shape index: {}]
  %s4 = inlined_call_operand.hbm [shape: bf16[2,128,128], index: 4, kind: input, shape index: {}]
  %s5 = inlined_call_operand.vmem [shape: f32[2,1,128], index: 5, kind: input, shape index: {}]
  %s6 = inlined_call_operand.hbm [shape: bf16[2,128,128], index: 6, kind: input, shape index: {}]
  %s7 = inlined_call_operand.vmem [shape: f32[2,1,128], index: 7, kind: input, shape index: {}]
  %s8 = inlined_call_operand.hbm [shape: bf16[2,128,128], index: 8, kind: input, shape index: {}]
  %s9 = inlined_call_operand.vmem [shape: f32[2,1,128], index: 9, kind: input, shape index: {}]
  %s10 = inlined_call_operand.hbm [shape: bf16[2,128,128], index: 10, kind: input, shape index: {}]
  %s11 = inlined_call_operand.vmem [shape: f32[2,1,128], index: 11, kind: input, shape index: {}]
  %s12 = inlined_call_operand.hbm [shape: bf16[2,128,2048], index: 12, kind: input, shape index: {}]
  %s13 = inlined_call_operand.vmem [shape: f32[2,1,2048], index: 13, kind: input, shape index: {}]
  %s14 = inlined_call_operand.hbm [shape: bf16[2,2048,128], index: 14, kind: input, shape index: {}]
  %s15 = inlined_call_operand.vmem [shape: f32[2,1,128], index: 15, kind: input, shape index: {}]
  %s16 = inlined_call_operand.vmem [shape: f32[2,1,128], index: 16, kind: input, shape index: {}]
  %s17 = inlined_call_operand.vmem [shape: f32[2,1,128], index: 17, kind: input, shape index: {}]
  %s18 = inlined_call_operand.vmem [shape: f32[2,1,128], index: 18, kind: input, shape index: {}]
  %s19 = inlined_call_operand.vmem [shape: f32[2,1,128], index: 19, kind: input, shape index: {}]
  %s20 = inlined_call_operand.hbm [shape: f32[128,128], index: 20, kind: input, shape index: {}]
  %s21 = inlined_call_operand.vmem [shape: f32[1,128], index: 21, kind: input, shape index: {}]
  %s22 = inlined_call_operand.hbm [shape: f32[2,128], index: 22, kind: output, shape index: {}]
  %s23 = sld [smem:[#allocation0]]
  $region134: #{tpu_custom_call.1} parent=0
    _
  %s25 = ssub.s32 1, %s23
  %s26 = scalar_select 0, %s25, %s23
  $region1: #{tpu_custom_call.1} parent=0
    #allocation2 [shape = 'u8[8192]{0}', space=vmem, size = 0x2000, scoped, tag = 'input window, operand 0, single buffered']
    #allocation3 [shape = 's32[1]{0}', space=sflag, size = 0x4, scoped, tag = 'scoped memory for tpu_custom_call.1']
    #allocation4 [shape = 's32[1]{0}', space=sflag, size = 0x4, scoped, tag = 'scoped memory for tpu_custom_call.1']
    #allocation5 [shape = 'u8[4096]{0}', space=vmem, size = 0x1000, scoped, tag = 'input window, operand 2, single buffered']
    #allocation6 [shape = 's32[1]{0}', space=sflag, size = 0x4, scoped, tag = 'scoped memory for tpu_custom_call.1']
    #allocation7 [shape = 'u8[65536]{0}', space=vmem, size = 0x10000, scoped, tag = 'input window, operand 4, single buffered']
    #allocation8 [shape = 'u8[65536]{0}', space=vmem, size = 0x10000, scoped, tag = 'input window, operand 6, single buffered']
    #allocation9 [shape = 's32[1]{0}', space=sflag, size = 0x4, scoped, tag = 'scoped memory for tpu_custom_call.1']
    #allocation10 [shape = 'u8[65536]{0}', space=vmem, size = 0x10000, scoped, tag = 'input window, operand 8, single buffered']
    #allocation11 [shape = 'u8[65536]{0}', space=vmem, size = 0x10000, scoped, tag = 'input window, operand 10, single buffered']
    #allocation12 [shape = 's32[1]{0}', space=sflag, size = 0x4, scoped, tag = 'scoped memory for tpu_custom_call.1']
    #allocation13 [shape = 'u8[1048576]{0}', space=vmem, size = 0x100000, scoped, tag = 'input window, operand 12, single buffered']
    #allocation14 [shape = 'u8[1048576]{0}', space=vmem, size = 0x100000, scoped, tag = 'input window, operand 14, single buffered']
    #allocation15 [shape = 's32[1]{0}', space=sflag, size = 0x4, scoped, tag = 'scoped memory for tpu_custom_call.1']
    #allocation16 [shape = 'u8[65536]{0}', space=vmem, size = 0x10000, scoped, tag = 'input window, operand 20, single buffered']
    #allocation17 [shape = 'u8[1024]{0}', space=vmem, size = 0x400, scoped, tag = 'output window, operand 0, single buffered']
    %27 = vsyncpa [#allocation3], 0
    %28 = vsyncpa [#allocation6], 0
    %29 = vsyncpa [#allocation9], 0
    %30 = vsyncpa [#allocation12], 0
    %31 = vsyncpa [#allocation15], 0
    %32 = vsyncpa [#allocation4], 0
    // Predicated region
    $region2: #{tpu_custom_call.1} parent=1 // pred_check
      _
    $region3: #{tpu_custom_call.1} parent=1 // pred_check_branch
      %34 = sbr.rel (0) target = $region5
    $region4: #{tpu_custom_call.1} parent=1 // pred_region
      %s36 = ssub.s32 256, 256
      %37 = vsyncadd [#allocation3], %s36
      %s38 = sshll.u32 [#allocation2], 4
      %s39 = int_to_ptr.vmem [resolvable:$true] %s38
      %44 = dma.hbm_to_vmem [thread:$0]  %s0, 256, %s39, [#allocation3], 128, 128, 8
    $region5: #{tpu_custom_call.1} parent=1 // pred_fallthru
      _
    // Predicated region
    $region6: #{tpu_custom_call.1} parent=1 // pred_check
      _
    $region7: #{tpu_custom_call.1} parent=1 // pred_check_branch
      %46 = sbr.rel (0) target = $region9
    $region8: #{tpu_custom_call.1} parent=1 // pred_region
      _
    $region9: #{tpu_custom_call.1} parent=1 // pred_fallthru
      _
    // Predicated region
    $region10: #{tpu_custom_call.1} parent=1 // pred_check
      _
    $region11: #{tpu_custom_call.1} parent=1 // pred_check_branch
      %48 = sbr.rel (0) target = $region13
    $region12: #{tpu_custom_call.1} parent=1 // pred_region
      %s50 = ssub.s32 128, 128
      %51 = vsyncadd [#allocation6], %s50
      %s52 = sshll.u32 [#allocation5], 4
      %s53 = int_to_ptr.vmem [resolvable:$true] %s52
      %58 = dma.hbm_to_vmem [thread:$0]  %s2, 128, %s53, [#allocation6], 64, 64, 4
    $region13: #{tpu_custom_call.1} parent=1 // pred_fallthru
      _
    // Predicated region
    $region14: #{tpu_custom_call.1} parent=1 // pred_check
      _
    $region15: #{tpu_custom_call.1} parent=1 // pred_check_branch
      %60 = sbr.rel (0) target = $region17
    $region16: #{tpu_custom_call.1} parent=1 // pred_region
      _
    $region17: #{tpu_custom_call.1} parent=1 // pred_fallthru
      _
    // Predicated region
    $region18: #{tpu_custom_call.1} parent=1 // pred_check
      _
    $region19: #{tpu_custom_call.1} parent=1 // pred_check_branch
      %62 = sbr.rel (0) target = $region21
    $region20: #{tpu_custom_call.1} parent=1 // pred_region
      %s64 = ssub.s32 2048, 2048
      %65 = vsyncadd [#allocation6], %s64
      %s66 = sshll.u32 [#allocation7], 4
      %s67 = int_to_ptr.vmem [resolvable:$true] %s66
      %72 = dma.hbm_to_vmem [thread:$0]  %s4, 2048, %s67, [#allocation6], 64, 64, 4
    $region21: #{tpu_custom_call.1} parent=1 // pred_fallthru
      _
    // Predicated region
    $region22: #{tpu_custom_call.1} parent=1 // pred_check
      _
    $region23: #{tpu_custom_call.1} parent=1 // pred_check_branch
      %74 = sbr.rel (0) target = $region25
    $region24: #{tpu_custom_call.1} parent=1 // pred_region
      _
    $region25: #{tpu_custom_call.1} parent=1 // pred_fallthru
      _
    // Predicated region
    $region26: #{tpu_custom_call.1} parent=1 // pred_check
      _
    $region27: #{tpu_custom_call.1} parent=1 // pred_check_branch
      %76 = sbr.rel (0) target = $region29
    $region28: #{tpu_custom_call.1} parent=1 // pred_region
      %s78 = ssub.s32 2048, 2048
      %79 = vsyncadd [#allocation9], %s78
      %s80 = sshll.u32 [#allocation8], 4
      %s81 = int_to_ptr.vmem [resolvable:$true] %s80
      %86 = dma.hbm_to_vmem [thread:$0]  %s6, 2048, %s81, [#allocation9], 64, 64, 4
    $region29: #{tpu_custom_call.1} parent=1 // pred_fallthru
      _
    // Predicated region
    $region30: #{tpu_custom_call.1} parent=1 // pred_check
      _
    $region31: #{tpu_custom_call.1} parent=1 // pred_check_branch
      %88 = sbr.rel (0) target = $region33
    $region32: #{tpu_custom_call.1} parent=1 // pred_region
      _
    $region33: #{tpu_custom_call.1} parent=1 // pred_fallthru
      _
    // Predicated region
    $region34: #{tpu_custom_call.1} parent=1 // pred_check
      _
    $region35: #{tpu_custom_call.1} parent=1 // pred_check_branch
      %90 = sbr.rel (0) target = $region37
    $region36: #{tpu_custom_call.1} parent=1 // pred_region
      %s92 = ssub.s32 2048, 2048
      %93 = vsyncadd [#allocation9], %s92
      %s94 = sshll.u32 [#allocation10], 4
      %s95 = int_to_ptr.vmem [resolvable:$true] %s94
      %100 = dma.hbm_to_vmem [thread:$0]  %s8, 2048, %s95, [#allocation9], 64, 64, 4
    $region37: #{tpu_custom_call.1} parent=1 // pred_fallthru
      _
    // Predicated region
    $region38: #{tpu_custom_call.1} parent=1 // pred_check
      _
    $region39: #{tpu_custom_call.1} parent=1 // pred_check_branch
      %102 = sbr.rel (0) target = $region41
    $region40: #{tpu_custom_call.1} parent=1 // pred_region
      _
    $region41: #{tpu_custom_call.1} parent=1 // pred_fallthru
      _
    // Predicated region
    $region42: #{tpu_custom_call.1} parent=1 // pred_check
      _
    $region43: #{tpu_custom_call.1} parent=1 // pred_check_branch
      %104 = sbr.rel (0) target = $region45
    $region44: #{tpu_custom_call.1} parent=1 // pred_region
      %s106 = ssub.s32 2048, 2048
      %107 = vsyncadd [#allocation12], %s106
      %s108 = sshll.u32 [#allocation11], 4
      %s109 = int_to_ptr.vmem [resolvable:$true] %s108
      %114 = dma.hbm_to_vmem [thread:$0]  %s10, 2048, %s109, [#allocation12], 64, 64, 4
    $region45: #{tpu_custom_call.1} parent=1 // pred_fallthru
      _
    // Predicated region
    $region46: #{tpu_custom_call.1} parent=1 // pred_check
      _
    $region47: #{tpu_custom_call.1} parent=1 // pred_check_branch
      %116 = sbr.rel (0) target = $region49
    $region48: #{tpu_custom_call.1} parent=1 // pred_region
      _
    $region49: #{tpu_custom_call.1} parent=1 // pred_fallthru
      _
    // Predicated region
    $region50: #{tpu_custom_call.1} parent=1 // pred_check
      _
    $region51: #{tpu_custom_call.1} parent=1 // pred_check_branch
      %118 = sbr.rel (0) target = $region53
    $region52: #{tpu_custom_call.1} parent=1 // pred_region
      %s120 = ssub.s32 32768, 32768
      %121 = vsyncadd [#allocation12], %s120
      %s122 = sshll.u32 [#allocation13], 4
      %s123 = int_to_ptr.vmem [resolvable:$true] %s122
      %128 = dma.hbm_to_vmem [thread:$0]  %s12, 32768, %s123, [#allocation12], 1024, 1024, 64
    $region53: #{tpu_custom_call.1} parent=1 // pred_fallthru
      _
    // Predicated region
    $region54: #{tpu_custom_call.1} parent=1 // pred_check
      _
    $region55: #{tpu_custom_call.1} parent=1 // pred_check_branch
      %130 = sbr.rel (0) target = $region57
    $region56: #{tpu_custom_call.1} parent=1 // pred_region
      _
    $region57: #{tpu_custom_call.1} parent=1 // pred_fallthru
      _
    // Predicated region
    $region58: #{tpu_custom_call.1} parent=1 // pred_check
      _
    $region59: #{tpu_custom_call.1} parent=1 // pred_check_branch
      %132 = sbr.rel (0) target = $region61
    $region60: #{tpu_custom_call.1} parent=1 // pred_region
      %s134 = ssub.s32 32768, 32768
      %135 = vsyncadd [#allocation15], %s134
      %s136 = sshll.u32 [#allocation14], 4
      %s137 = int_to_ptr.vmem [resolvable:$true] %s136
      %142 = dma.hbm_to_vmem [thread:$0]  %s14, 32768, %s137, [#allocation15], 64, 64, 4
    $region61: #{tpu_custom_call.1} parent=1 // pred_fallthru
      _
    // Predicated region
    $region62: #{tpu_custom_call.1} parent=1 // pred_check
      _
    $region63: #{tpu_custom_call.1} parent=1 // pred_check_branch
      %144 = sbr.rel (0) target = $region65
    $region64: #{tpu_custom_call.1} parent=1 // pred_region
      _
    $region65: #{tpu_custom_call.1} parent=1 // pred_fallthru
      _
    // Predicated region
    $region66: #{tpu_custom_call.1} parent=1 // pred_check
      _
    $region67: #{tpu_custom_call.1} parent=1 // pred_check_branch
      %146 = sbr.rel (0) target = $region69
    $region68: #{tpu_custom_call.1} parent=1 // pred_region
      _
    $region69: #{tpu_custom_call.1} parent=1 // pred_fallthru
      _
    // Predicated region
    $region70: #{tpu_custom_call.1} parent=1 // pred_check
      _
    $region71: #{tpu_custom_call.1} parent=1 // pred_check_branch
      %148 = sbr.rel (0) target = $region73
    $region72: #{tpu_custom_call.1} parent=1 // pred_region
      _
    $region73: #{tpu_custom_call.1} parent=1 // pred_fallthru
      _
    // Predicated region
    $region74: #{tpu_custom_call.1} parent=1 // pred_check
      _
    $region75: #{tpu_custom_call.1} parent=1 // pred_check_branch
      %150 = sbr.rel (0) target = $region77
    $region76: #{tpu_custom_call.1} parent=1 // pred_region
      _
    $region77: #{tpu_custom_call.1} parent=1 // pred_fallthru
      _
    // Predicated region
    $region78: #{tpu_custom_call.1} parent=1 // pred_check
      _
    $region79: #{tpu_custom_call.1} parent=1 // pred_check_branch
      %152 = sbr.rel (0) target = $region81
    $region80: #{tpu_custom_call.1} parent=1 // pred_region
      _
    $region81: #{tpu_custom_call.1} parent=1 // pred_fallthru
      _
    // Predicated region
    $region82: #{tpu_custom_call.1} parent=1 // pred_check
      _
    $region83: #{tpu_custom_call.1} parent=1 // pred_check_branch
      %154 = sbr.rel (0) target = $region85
    $region84: #{tpu_custom_call.1} parent=1 // pred_region
      %s156 = ssub.s32 2048, 2048
      %157 = vsyncadd [#allocation15], %s156
      %s158 = sshll.u32 [#allocation16], 4
      %s159 = int_to_ptr.vmem [resolvable:$true] %s158
      %164 = dma.hbm_to_vmem [thread:$0]  %s20, 2048, %s159, [#allocation15], 128, 128, 8
    $region85: #{tpu_custom_call.1} parent=1 // pred_fallthru
      _
    // Predicated region
    $region86: #{tpu_custom_call.1} parent=1 // pred_check
      _
    $region87: #{tpu_custom_call.1} parent=1 // pred_check_branch
      %166 = sbr.rel (0) target = $region89
    $region88: #{tpu_custom_call.1} parent=1 // pred_region
      _
    $region89: #{tpu_custom_call.1} parent=1 // pred_fallthru
      _
    // Predicated region
    $region90: #{tpu_custom_call.1} parent=1 // pred_check
      _
    $region91: #{tpu_custom_call.1} parent=1 // pred_check_branch
      %168 = sbr.rel (0) target = $region93
    $region92: #{tpu_custom_call.1} parent=1 // pred_region
      %169 = dma.done [#allocation3], 256
    $region93: #{tpu_custom_call.1} parent=1 // pred_fallthru
      _
    // Predicated region
    $region94: #{tpu_custom_call.1} parent=1 // pred_check
      _
    $region95: #{tpu_custom_call.1} parent=1 // pred_check_branch
      %171 = sbr.rel (0) target = $region97
    $region96: #{tpu_custom_call.1} parent=1 // pred_region
      %172 = dma.done [#allocation6], 128
    $region97: #{tpu_custom_call.1} parent=1 // pred_fallthru
      _
    // Predicated region
    $region98: #{tpu_custom_call.1} parent=1 // pred_check
      _
    $region99: #{tpu_custom_call.1} parent=1 // pred_check_branch
      %174 = sbr.rel (0) target = $region101
    $region100: #{tpu_custom_call.1} parent=1 // pred_region
      %175 = dma.done [#allocation6], 2048
    $region101: #{tpu_custom_call.1} parent=1 // pred_fallthru
      _
    // Predicated region
    $region102: #{tpu_custom_call.1} parent=1 // pred_check
      _
    $region103: #{tpu_custom_call.1} parent=1 // pred_check_branch
      %177 = sbr.rel (0) target = $region105
    $region104: #{tpu_custom_call.1} parent=1 // pred_region
      %178 = dma.done [#allocation9], 2048
    $region105: #{tpu_custom_call.1} parent=1 // pred_fallthru
      _
    // Predicated region
    $region106: #{tpu_custom_call.1} parent=1 // pred_check
      _
    $region107: #{tpu_custom_call.1} parent=1 // pred_check_branch
      %180 = sbr.rel (0) target = $region109
    $region108: #{tpu_custom_call.1} parent=1 // pred_region
      %181 = dma.done [#allocation9], 2048
    $region109: #{tpu_custom_call.1} parent=1 // pred_fallthru
      _
    // Predicated region
    $region110: #{tpu_custom_call.1} parent=1 // pred_check
      _
    $region111: #{tpu_custom_call.1} parent=1 // pred_check_branch
      %183 = sbr.rel (0) target = $region113
    $region112: #{tpu_custom_call.1} parent=1 // pred_region
      %184 = dma.done [#allocation12], 2048
    $region113: #{tpu_custom_call.1} parent=1 // pred_fallthru
      _
    // Predicated region
    $region114: #{tpu_custom_call.1} parent=1 // pred_check
      _
    $region115: #{tpu_custom_call.1} parent=1 // pred_check_branch
      %186 = sbr.rel (0) target = $region117
    $region116: #{tpu_custom_call.1} parent=1 // pred_region
      %187 = dma.done [#allocation12], 32768
    $region117: #{tpu_custom_call.1} parent=1 // pred_fallthru
      _
    // Predicated region
    $region118: #{tpu_custom_call.1} parent=1 // pred_check
      _
    $region119: #{tpu_custom_call.1} parent=1 // pred_check_branch
      %189 = sbr.rel (0) target = $region121
    $region120: #{tpu_custom_call.1} parent=1 // pred_region
      %190 = dma.done [#allocation15], 32768
    $region121: #{tpu_custom_call.1} parent=1 // pred_fallthru
      _
    // Predicated region
    $region122: #{tpu_custom_call.1} parent=1 // pred_check
      _
    $region123: #{tpu_custom_call.1} parent=1 // pred_check_branch
      %192 = sbr.rel (0) target = $region125
    $region124: #{tpu_custom_call.1} parent=1 // pred_region
      %193 = dma.done [#allocation15], 2048
    $region125: #{tpu_custom_call.1} parent=1 // pred_fallthru
      _
    %v195 = vlaneseq
    %v196 = vand.u32 %v195, 127
    %vm197 = vcmp.lt.s32.totalorder %v196, 32
    %v198 = vsel %vm197, 1, 0
    %v199 = vcvt.s32.f32 %v198
    %v200 = vlaneseq
    %v201 = vshrl.u32 %v200, 7
    %v202 = vmul.u32 %v201, 8
    %vm203 = vcmp.ge.s32.totalorder %v196, %v202
    %v204 = vadd.s32 %v201, 1
    %v205 = vmul.u32 %v204, 8
    %vm206 = vcmp.lt.s32.totalorder %v196, %v205
    %vm207 = vmand %vm203, %vm206
    %v208 = vsel %vm207, 1, 0
    %v209 = vcvt.s32.f32 %v208
    %v210 = vld [vmem:[#allocation2] sm:$0xff]
    %v211 = vld [vmem:[#allocation2 + $0x8] sm:$0xff]
    %v212 = vpack.c.bf16 %v211, %v210
    %v213 = vld [vmem:[#allocation5] sm:$0xf]
    %v214 = vld [vmem:[#allocation5 + $0x4] sm:$0xf]
    %v215 = vld [vmem:[%s3] sm:$0x1]
    %v217 = vlaneseq
    %v218 = vshrl.u32 %v217, 7
    %v219 = vsub.s32 0, %v218
    %v220 = vrot.slane %v215, %v219
    %v224 = vunpack.c.l.b16 %v213
    %v225 = vunpack.c.l.b16 %v214
    %v226 = vpack.c.b16 %v225, %v224
    %vm228 = vcmask 130048
    %v230 = vsel %vm228, %v212, 0
    %232 = vmatprep.subr.bf16.mxu0 0
    %233 = vmatpush1.bf16.msra.mxu0 %v226
    %234 = vmatprep.subr.bf16.mxu0 0
    %235 = vmatpush1.bf16.msra.mxu0 0
    %236 = vmatprep.subr.bf16.mxu0 0
    %237 = vmatpush1.bf16.msra.mxu0 0
    %238 = vmatprep.subr.bf16.mxu0 0
    %239 = vmatpush1.bf16.msra.mxu0 0
    %240 = vmatprep.subr.bf16.mxu0 0
    %241 = vmatpush1.bf16.msra.mxu0 0
    %242 = vmatprep.subr.bf16.mxu0 0
    %243 = vmatpush1.bf16.msra.mxu0 0
    %244 = vmatprep.subr.bf16.mxu0 0
    %245 = vmatpush1.bf16.msra.mxu0 0
    %246 = vmatprep.subr.bf16.mxu0 0
    %247 = vmatpush1.bf16.msra.mxu0 0
    %248 = vmatprep.subr.bf16.mxu0 0
    %249 = vmatpush1.bf16.msra.mxu0 0
    %250 = vmatprep.subr.bf16.mxu0 0
    %251 = vmatpush1.bf16.msra.mxu0 0
    %252 = vmatprep.subr.bf16.mxu0 0
    %253 = vmatpush1.bf16.msra.mxu0 0
    %254 = vmatprep.subr.bf16.mxu0 0
    %255 = vmatpush1.bf16.msra.mxu0 0
    %256 = vmatprep.subr.bf16.mxu0 0
    %257 = vmatpush1.bf16.msra.mxu0 0
    %258 = vmatprep.subr.bf16.mxu0 0
    %259 = vmatpush1.bf16.msra.mxu0 0
    %260 = vmatprep.subr.bf16.mxu0 0
    %261 = vmatpush1.bf16.msra.mxu0 0
    %262 = vmatprep.subr.bf16.mxu0 0
    %263 = vmatpush1.bf16.msra.mxu0 0
    %264 = vmatprep.mubr.bf16.mxu0 0
    %265 = vmatmul.mubr.bf16.gmra.mrb[0].mxu0 %v230
    %v266 = vpop.f32.mrb[0].mxu0
    %v267 = vadd.f32 %v220, %v266
    %v268 = vpop.f32.mrb[0].mxu0
    %v269 = vpop.f32.mrb[0].mxu0
    %v270 = vadd.f32 %v220, %v269
    %v271 = vpop.f32.mrb[0].mxu0
    %272 = vdwg.mxu0
    %v273 = vld [vmem:[%s1] sm:$0x1]
    %v274 = vld [vmem:[%s1 + $0x1] sm:$0x1]
    %v277 = vlaneseq
    %v278 = vshrl.u32 %v277, 7
    %v279 = vsub.s32 0, %v278
    %v280 = vrot.slane %v273, %v279
    %v281 = vlaneseq
    %v282 = vshrl.u32 %v281, 7
    %v283 = vsub.s32 0, %v282
    %v284 = vrot.slane %v274, %v283
    %v287 = vadd.f32 %v267, %v280
    %v288 = vadd.f32 %v270, %v284
    %v289 = vpack.c.bf16 %v288, %v287
    %v290 = vld [vmem:[#allocation7] sm:$0xf]
    %v291 = vld [vmem:[#allocation7 + $0x4] sm:$0xf]
    %v292 = vld [vmem:[#allocation7 + $0x8] sm:$0xf]
    %v293 = vld [vmem:[#allocation7 + $0xc] sm:$0xf]
    %v294 = vld [vmem:[#allocation7 + $0x10] sm:$0xf]
    %v295 = vld [vmem:[#allocation7 + $0x14] sm:$0xf]
    %v296 = vld [vmem:[#allocation7 + $0x18] sm:$0xf]
    %v297 = vld [vmem:[#allocation7 + $0x1c] sm:$0xf]
    %v298 = vld [vmem:[#allocation7 + $0x20] sm:$0xf]
    %v299 = vld [vmem:[#allocation7 + $0x24] sm:$0xf]
    %v300 = vld [vmem:[#allocation7 + $0x28] sm:$0xf]
    %v301 = vld [vmem:[#allocation7 + $0x2c] sm:$0xf]
    %v302 = vld [vmem:[#allocation7 + $0x30] sm:$0xf]
    %v303 = vld [vmem:[#allocation7 + $0x34] sm:$0xf]
    %v304 = vld [vmem:[#allocation7 + $0x38] sm:$0xf]
    %v305 = vld [vmem:[#allocation7 + $0x3c] sm:$0xf]
    %v306 = vld [vmem:[%s5] sm:$0x1]
    %v308 = vlaneseq
    %v309 = vshrl.u32 %v308, 7
    %v310 = vsub.s32 0, %v309
    %v311 = vrot.slane %v306, %v310
    %v329 = vunpack.c.l.b16 %v290
    %v330 = vunpack.c.l.b16 %v291
    %v331 = vunpack.c.l.b16 %v292
    %v332 = vunpack.c.l.b16 %v293
    %v333 = vunpack.c.l.b16 %v294
    %v334 = vunpack.c.l.b16 %v295
    %v335 = vunpack.c.l.b16 %v296
    %v336 = vunpack.c.l.b16 %v297
    %v337 = vunpack.c.l.b16 %v298
    %v338 = vunpack.c.l.b16 %v299
    %v339 = vunpack.c.l.b16 %v300
    %v340 = vunpack.c.l.b16 %v301
    %v341 = vunpack.c.l.b16 %v302
    %v342 = vunpack.c.l.b16 %v303
    %v343 = vunpack.c.l.b16 %v304
    %v344 = vunpack.c.l.b16 %v305
    %v345 = vpack.c.b16 %v330, %v329
    %v346 = vpack.c.b16 %v332, %v331
    %v347 = vpack.c.b16 %v334, %v333
    %v348 = vpack.c.b16 %v336, %v335
    %v349 = vpack.c.b16 %v338, %v337
    %v350 = vpack.c.b16 %v340, %v339
    %v351 = vpack.c.b16 %v342, %v341
    %v352 = vpack.c.b16 %v344, %v343
    %361 = vmatprep.subr.bf16.mxu0 0
    %362 = vmatpush1.bf16.msra.mxu0 %v345
    %363 = vmatprep.subr.bf16.mxu0 0
    %364 = vmatpush1.bf16.msra.mxu0 %v346
    %365 = vmatprep.subr.bf16.mxu0 0
    %366 = vmatpush1.bf16.msra.mxu0 %v347
    %367 = vmatprep.subr.bf16.mxu0 0
    %368 = vmatpush1.bf16.msra.mxu0 %v348
    %369 = vmatprep.subr.bf16.mxu0 0
    %370 = vmatpush1.bf16.msra.mxu0 %v349
    %371 = vmatprep.subr.bf16.mxu0 0
    %372 = vmatpush1.bf16.msra.mxu0 %v350
    %373 = vmatprep.subr.bf16.mxu0 0
    %374 = vmatpush1.bf16.msra.mxu0 %v351
    %375 = vmatprep.subr.bf16.mxu0 0
    %376 = vmatpush1.bf16.msra.mxu0 %v352
    %377 = vmatprep.subr.bf16.mxu0 0
    %378 = vmatpush1.bf16.msra.mxu0 0
    %379 = vmatprep.subr.bf16.mxu0 0
    %380 = vmatpush1.bf16.msra.mxu0 0
    %381 = vmatprep.subr.bf16.mxu0 0
    %382 = vmatpush1.bf16.msra.mxu0 0
    %383 = vmatprep.subr.bf16.mxu0 0
    %384 = vmatpush1.bf16.msra.mxu0 0
    %385 = vmatprep.subr.bf16.mxu0 0
    %386 = vmatpush1.bf16.msra.mxu0 0
    %387 = vmatprep.subr.bf16.mxu0 0
    %388 = vmatpush1.bf16.msra.mxu0 0
    %389 = vmatprep.subr.bf16.mxu0 0
    %390 = vmatpush1.bf16.msra.mxu0 0
    %391 = vmatprep.subr.bf16.mxu0 0
    %392 = vmatpush1.bf16.msra.mxu0 0
    %393 = vmatprep.mubr.bf16.mxu0 0
    %394 = vmatmul.mubr.bf16.gmra.mrb[0].mxu0 %v289
    %v395 = vpop.f32.mrb[0].mxu0
    %v396 = vadd.f32 %v311, %v395
    %v397 = vpop.f32.mrb[0].mxu0
    %v398 = vpop.f32.mrb[0].mxu0
    %v399 = vadd.f32 %v311, %v398
    %v400 = vpop.f32.mrb[0].mxu0
    %401 = vdwg.mxu0
    %v402 = vld [vmem:[#allocation8] sm:$0xf]
    %v403 = vld [vmem:[#allocation8 + $0x4] sm:$0xf]
    %v404 = vld [vmem:[#allocation8 + $0x8] sm:$0xf]
    %v405 = vld [vmem:[#allocation8 + $0xc] sm:$0xf]
    %v406 = vld [vmem:[#allocation8 + $0x10] sm:$0xf]
    %v407 = vld [vmem:[#allocation8 + $0x14] sm:$0xf]
    %v408 = vld [vmem:[#allocation8 + $0x18] sm:$0xf]
    %v409 = vld [vmem:[#allocation8 + $0x1c] sm:$0xf]
    %v410 = vld [vmem:[#allocation8 + $0x20] sm:$0xf]
    %v411 = vld [vmem:[#allocation8 + $0x24] sm:$0xf]
    %v412 = vld [vmem:[#allocation8 + $0x28] sm:$0xf]
    %v413 = vld [vmem:[#allocation8 + $0x2c] sm:$0xf]
    %v414 = vld [vmem:[#allocation8 + $0x30] sm:$0xf]
    %v415 = vld [vmem:[#allocation8 + $0x34] sm:$0xf]
    %v416 = vld [vmem:[#allocation8 + $0x38] sm:$0xf]
    %v417 = vld [vmem:[#allocation8 + $0x3c] sm:$0xf]
    %v418 = vld [vmem:[%s7] sm:$0x1]
    %v420 = vlaneseq
    %v421 = vshrl.u32 %v420, 7
    %v422 = vsub.s32 0, %v421
    %v423 = vrot.slane %v418, %v422
    %v441 = vunpack.c.l.b16 %v402
    %v442 = vunpack.c.l.b16 %v403
    %v443 = vunpack.c.l.b16 %v404
    %v444 = vunpack.c.l.b16 %v405
    %v445 = vunpack.c.l.b16 %v406
    %v446 = vunpack.c.l.b16 %v407
    %v447 = vunpack.c.l.b16 %v408
    %v448 = vunpack.c.l.b16 %v409
    %v449 = vunpack.c.l.b16 %v410
    %v450 = vunpack.c.l.b16 %v411
    %v451 = vunpack.c.l.b16 %v412
    %v452 = vunpack.c.l.b16 %v413
    %v453 = vunpack.c.l.b16 %v414
    %v454 = vunpack.c.l.b16 %v415
    %v455 = vunpack.c.l.b16 %v416
    %v456 = vunpack.c.l.b16 %v417
    %v457 = vpack.c.b16 %v442, %v441
    %v458 = vpack.c.b16 %v444, %v443
    %v459 = vpack.c.b16 %v446, %v445
    %v460 = vpack.c.b16 %v448, %v447
    %v461 = vpack.c.b16 %v450, %v449
    %v462 = vpack.c.b16 %v452, %v451
    %v463 = vpack.c.b16 %v454, %v453
    %v464 = vpack.c.b16 %v456, %v455
    %473 = vmatprep.subr.bf16.mxu0 0
    %474 = vmatpush1.bf16.msra.mxu0 %v457
    %475 = vmatprep.subr.bf16.mxu0 0
    %476 = vmatpush1.bf16.msra.mxu0 %v458
    %477 = vmatprep.subr.bf16.mxu0 0
    %478 = vmatpush1.bf16.msra.mxu0 %v459
    %479 = vmatprep.subr.bf16.mxu0 0
    %480 = vmatpush1.bf16.msra.mxu0 %v460
    %481 = vmatprep.subr.bf16.mxu0 0
    %482 = vmatpush1.bf16.msra.mxu0 %v461
    %483 = vmatprep.subr.bf16.mxu0 0
    %484 = vmatpush1.bf16.msra.mxu0 %v462
    %485 = vmatprep.subr.bf16.mxu0 0
    %486 = vmatpush1.bf16.msra.mxu0 %v463
    %487 = vmatprep.subr.bf16.mxu0 0
    %488 = vmatpush1.bf16.msra.mxu0 %v464
    %489 = vmatprep.subr.bf16.mxu0 0
    %490 = vmatpush1.bf16.msra.mxu0 0
    %491 = vmatprep.subr.bf16.mxu0 0
    %492 = vmatpush1.bf16.msra.mxu0 0
    %493 = vmatprep.subr.bf16.mxu0 0
    %494 = vmatpush1.bf16.msra.mxu0 0
    %495 = vmatprep.subr.bf16.mxu0 0
    %496 = vmatpush1.bf16.msra.mxu0 0
    %497 = vmatprep.subr.bf16.mxu0 0
    %498 = vmatpush1.bf16.msra.mxu0 0
    %499 = vmatprep.subr.bf16.mxu0 0
    %500 = vmatpush1.bf16.msra.mxu0 0
    %501 = vmatprep.subr.bf16.mxu0 0
    %502 = vmatpush1.bf16.msra.mxu0 0
    %503 = vmatprep.subr.bf16.mxu0 0
    %504 = vmatpush1.bf16.msra.mxu0 0
    %505 = vmatprep.mubr.bf16.mxu0 0
    %506 = vmatmul.mubr.bf16.gmra.mrb[0].mxu0 %v289
    %v507 = vpop.f32.mrb[0].mxu0
    %v508 = vadd.f32 %v423, %v507
    %v509 = vpop.f32.mrb[0].mxu0
    %v510 = vpop.f32.mrb[0].mxu0
    %v511 = vadd.f32 %v423, %v510
    %v512 = vpop.f32.mrb[0].mxu0
    %513 = vdwg.mxu0
    %v514 = vld [vmem:[#allocation10] sm:$0xf]
    %v515 = vld [vmem:[#allocation10 + $0x4] sm:$0xf]
    %v516 = vld [vmem:[#allocation10 + $0x8] sm:$0xf]
    %v517 = vld [vmem:[#allocation10 + $0xc] sm:$0xf]
    %v518 = vld [vmem:[#allocation10 + $0x10] sm:$0xf]
    %v519 = vld [vmem:[#allocation10 + $0x14] sm:$0xf]
    %v520 = vld [vmem:[#allocation10 + $0x18] sm:$0xf]
    %v521 = vld [vmem:[#allocation10 + $0x1c] sm:$0xf]
    %v522 = vld [vmem:[#allocation10 + $0x20] sm:$0xf]
    %v523 = vld [vmem:[#allocation10 + $0x24] sm:$0xf]
    %v524 = vld [vmem:[#allocation10 + $0x28] sm:$0xf]
    %v525 = vld [vmem:[#allocation10 + $0x2c] sm:$0xf]
    %v526 = vld [vmem:[#allocation10 + $0x30] sm:$0xf]
    %v527 = vld [vmem:[#allocation10 + $0x34] sm:$0xf]
    %v528 = vld [vmem:[#allocation10 + $0x38] sm:$0xf]
    %v529 = vld [vmem:[#allocation10 + $0x3c] sm:$0xf]
    %v530 = vld [vmem:[%s9] sm:$0x1]
    %v532 = vlaneseq
    %v533 = vshrl.u32 %v532, 7
    %v534 = vsub.s32 0, %v533
    %v535 = vrot.slane %v530, %v534
    %v553 = vunpack.c.l.b16 %v514
    %v554 = vunpack.c.l.b16 %v515
    %v555 = vunpack.c.l.b16 %v516
    %v556 = vunpack.c.l.b16 %v517
    %v557 = vunpack.c.l.b16 %v518
    %v558 = vunpack.c.l.b16 %v519
    %v559 = vunpack.c.l.b16 %v520
    %v560 = vunpack.c.l.b16 %v521
    %v561 = vunpack.c.l.b16 %v522
    %v562 = vunpack.c.l.b16 %v523
    %v563 = vunpack.c.l.b16 %v524
    %v564 = vunpack.c.l.b16 %v525
    %v565 = vunpack.c.l.b16 %v526
    %v566 = vunpack.c.l.b16 %v527
    %v567 = vunpack.c.l.b16 %v528
    %v568 = vunpack.c.l.b16 %v529
    %v569 = vpack.c.b16 %v554, %v553
    %v570 = vpack.c.b16 %v556, %v555
    %v571 = vpack.c.b16 %v558, %v557
    %v572 = vpack.c.b16 %v560, %v559
    %v573 = vpack.c.b16 %v562, %v561
    %v574 = vpack.c.b16 %v564, %v563
    %v575 = vpack.c.b16 %v566, %v565
    %v576 = vpack.c.b16 %v568, %v567
    %585 = vmatprep.subr.bf16.mxu0 0
    %586 = vmatpush1.bf16.msra.mxu0 %v569
    %587 = vmatprep.subr.bf16.mxu0 0
    %588 = vmatpush1.bf16.msra.mxu0 %v570
    %589 = vmatprep.subr.bf16.mxu0 0
    %590 = vmatpush1.bf16.msra.mxu0 %v571
    %591 = vmatprep.subr.bf16.mxu0 0
    %592 = vmatpush1.bf16.msra.mxu0 %v572
    %593 = vmatprep.subr.bf16.mxu0 0
    %594 = vmatpush1.bf16.msra.mxu0 %v573
    %595 = vmatprep.subr.bf16.mxu0 0
    %596 = vmatpush1.bf16.msra.mxu0 %v574
    %597 = vmatprep.subr.bf16.mxu0 0
    %598 = vmatpush1.bf16.msra.mxu0 %v575
    %599 = vmatprep.subr.bf16.mxu0 0
    %600 = vmatpush1.bf16.msra.mxu0 %v576
    %601 = vmatprep.subr.bf16.mxu0 0
    %602 = vmatpush1.bf16.msra.mxu0 0
    %603 = vmatprep.subr.bf16.mxu0 0
    %604 = vmatpush1.bf16.msra.mxu0 0
    %605 = vmatprep.subr.bf16.mxu0 0
    %606 = vmatpush1.bf16.msra.mxu0 0
    %607 = vmatprep.subr.bf16.mxu0 0
    %608 = vmatpush1.bf16.msra.mxu0 0
    %609 = vmatprep.subr.bf16.mxu0 0
    %610 = vmatpush1.bf16.msra.mxu0 0
    %611 = vmatprep.subr.bf16.mxu0 0
    %612 = vmatpush1.bf16.msra.mxu0 0
    %613 = vmatprep.subr.bf16.mxu0 0
    %614 = vmatpush1.bf16.msra.mxu0 0
    %615 = vmatprep.subr.bf16.mxu0 0
    %616 = vmatpush1.bf16.msra.mxu0 0
    %617 = vmatprep.mubr.bf16.mxu0 0
    %618 = vmatmul.mubr.bf16.gmra.mrb[0].mxu0 %v289
    %v619 = vpop.f32.mrb[0].mxu0
    %v620 = vadd.f32 %v535, %v619
    %v621 = vpop.f32.mrb[0].mxu0
    %v622 = vpop.f32.mrb[0].mxu0
    %v623 = vadd.f32 %v535, %v622
    %v624 = vpop.f32.mrb[0].mxu0
    %625 = vdwg.mxu0
    %v628 = vunpack.c.l.s4 1966171168
    %v629 = vunpack.c.0.s8 %v628
    %v630 = vlaneseq
    %v631 = vshrl.u32 %v630, 7
    %v632 = vsub.s32 %v629, %v631
    %v633 = vrot.slane %v209, %v632
    %v634 = vcombine.high %v633, %v633
    %v636 = vunpack.c.l.s4 1966171168
    %v637 = vunpack.c.0.s8 %v636
    %v638 = vlaneseq
    %v639 = vshrl.u32 %v638, 7
    %v640 = vsub.s32 %v637, %v639
    %v641 = vrot.slane %v633, %v640
    %v643 = vunpack.c.l.s4 1966171168
    %v644 = vunpack.c.0.s8 %v643
    %v645 = vlaneseq
    %v646 = vshrl.u32 %v645, 7
    %v647 = vsub.s32 %v644, %v646
    %v648 = vrot.slane %v634, %v647
    %v649 = vcombine.high %v641, %v641
    %v650 = vcombine.high %v648, %v648
    %v651 = vlaneseq
    %v652 = vshrl.u32 %v651, 7
    %v653 = vsub.s32 0, %v652
    %v654 = vrot.slane %v641, %v653
    %v655 = vlaneseq
    %v656 = vshrl.u32 %v655, 7
    %v657 = vsub.s32 0, %v656
    %v658 = vrot.slane %v648, %v657
    %v659 = vlaneseq
    %v660 = vshrl.u32 %v659, 7
    %v661 = vsub.s32 0, %v660
    %v662 = vrot.slane %v649, %v661
    %v663 = vlaneseq
    %v664 = vshrl.u32 %v663, 7
    %v665 = vsub.s32 0, %v664
    %v666 = vrot.slane %v650, %v665
    %v671 = vmul.f32 %v508, %v654
    %v672 = vmul.f32 %v508, %v658
    %v673 = vmul.f32 %v508, %v662
    %v674 = vmul.f32 %v508, %v666
    %v675 = vmul.f32 %v511, %v654
    %v676 = vmul.f32 %v511, %v658
    %v677 = vmul.f32 %v511, %v662
    %v678 = vmul.f32 %v511, %v666
    %v679 = vmul.f32 %v620, %v654
    %v680 = vmul.f32 %v620, %v658
    %v681 = vmul.f32 %v620, %v662
    %v682 = vmul.f32 %v620, %v666
    %v683 = vmul.f32 %v623, %v654
    %v684 = vmul.f32 %v623, %v658
    %v685 = vmul.f32 %v623, %v662
    %v686 = vmul.f32 %v623, %v666
    %687 = vmatprep.subr.mxu0 0.0
    %688 = vmatpush1.xpose.msra.mxu0 %v671
    %689 = vmatprep.subr.mxu0 0.0
    %690 = vmatpush1.xpose.msra.mxu0 0.0
    %691 = vmatprep.subr.mxu0 0.0
    %692 = vmatpush1.xpose.msra.mxu0 0.0
    %693 = vmatprep.subr.mxu0 0.0
    %694 = vmatpush1.xpose.msra.mxu0 0.0
    %695 = vmatprep.subr.mxu0 0.0
    %696 = vmatpush1.xpose.msra.mxu0 0.0
    %697 = vmatprep.subr.mxu0 0.0
    %698 = vmatpush1.xpose.msra.mxu0 0.0
    %699 = vmatprep.subr.mxu0 0.0
    %700 = vmatpush1.xpose.msra.mxu0 0.0
    %701 = vmatprep.subr.mxu0 0.0
    %702 = vmatpush1.xpose.msra.mxu0 0.0
    %703 = vmatprep.subr.mxu0 0.0
    %704 = vmatpush1.xpose.msra.mxu0 0.0
    %705 = vmatprep.subr.mxu0 0.0
    %706 = vmatpush1.xpose.msra.mxu0 0.0
    %707 = vmatprep.subr.mxu0 0.0
    %708 = vmatpush1.xpose.msra.mxu0 0.0
    %709 = vmatprep.subr.mxu0 0.0
    %710 = vmatpush1.xpose.msra.mxu0 0.0
    %711 = vmatprep.subr.mxu0 0.0
    %712 = vmatpush1.xpose.msra.mxu0 0.0
    %713 = vmatprep.subr.mxu0 0.0
    %714 = vmatpush1.xpose.msra.mxu0 0.0
    %715 = vmatprep.subr.mxu0 0.0
    %716 = vmatpush1.xpose.msra.mxu0 0.0
    %717 = vmatprep.subr.mxu0 0.0
    %718 = vmatpush1.xpose.msra.mxu0 0.0
    %719 = vmatprep.subr.mxu0 0.0
    %720 = vmatpush1.xpose.msra.mxu0 0.0
    %721 = vmatprep.subr.mxu0 0.0
    %722 = vmatpush1.xpose.msra.mxu0 0.0
    %723 = vmatprep.subr.mxu0 0.0
    %724 = vmatpush1.xpose.msra.mxu0 0.0
    %725 = vmatprep.subr.mxu0 0.0
    %726 = vmatpush1.xpose.msra.mxu0 0.0
    %727 = vmatprep.subr.mxu0 0.0
    %728 = vmatpush1.xpose.msra.mxu0 0.0
    %729 = vmatprep.subr.mxu0 0.0
    %730 = vmatpush1.xpose.msra.mxu0 0.0
    %731 = vmatprep.subr.mxu0 0.0
    %732 = vmatpush1.xpose.msra.mxu0 0.0
    %733 = vmatprep.subr.mxu0 0.0
    %734 = vmatpush1.xpose.msra.mxu0 0.0
    %735 = vmatprep.subr.mxu0 0.0
    %736 = vmatpush1.xpose.msra.mxu0 0.0
    %737 = vmatprep.subr.mxu0 0.0
    %738 = vmatpush1.xpose.msra.mxu0 0.0
    %739 = vmatprep.subr.mxu0 0.0
    %740 = vmatpush1.xpose.msra.mxu0 0.0
    %741 = vmatprep.subr.mxu0 0.0
    %742 = vmatpush1.xpose.msra.mxu0 0.0
    %743 = vmatprep.subr.mxu0 0.0
    %744 = vmatpush1.xpose.msra.mxu0 0.0
    %745 = vmatprep.subr.mxu0 0.0
    %746 = vmatpush1.xpose.msra.mxu0 0.0
    %747 = vmatprep.subr.mxu0 0.0
    %748 = vmatpush1.xpose.msra.mxu0 0.0
    %749 = vmatprep.subr.mxu0 0.0
    %750 = vmatpush1.xpose.msra.mxu0 0.0
    %751 = vmatprep.mubr.f32.mxu0 0.0
    %752 = vmatmul.mubr.f32.gmra.mrb[0].mxu0 %v396
    %v753 = vpop.f32.mrb[0].mxu0
    %v754 = vadd.f32 0.0, %v753
    %v755 = vpop.f32.mrb[0].mxu0
    %756 = vdwg.mxu0
    %757 = vmatprep.subr.mxu0 0.0
    %758 = vmatpush1.xpose.msra.mxu0 %v672
    %759 = vmatprep.subr.mxu0 0.0
    %760 = vmatpush1.xpose.msra.mxu0 0.0
    %761 = vmatprep.subr.mxu0 0.0
    %762 = vmatpush1.xpose.msra.mxu0 0.0
    %763 = vmatprep.subr.mxu0 0.0
    %764 = vmatpush1.xpose.msra.mxu0 0.0
    %765 = vmatprep.subr.mxu0 0.0
    %766 = vmatpush1.xpose.msra.mxu0 0.0
    %767 = vmatprep.subr.mxu0 0.0
    %768 = vmatpush1.xpose.msra.mxu0 0.0
    %769 = vmatprep.subr.mxu0 0.0
    %770 = vmatpush1.xpose.msra.mxu0 0.0
    %771 = vmatprep.subr.mxu0 0.0
    %772 = vmatpush1.xpose.msra.mxu0 0.0
    %773 = vmatprep.subr.mxu0 0.0
    %774 = vmatpush1.xpose.msra.mxu0 0.0
    %775 = vmatprep.subr.mxu0 0.0
    %776 = vmatpush1.xpose.msra.mxu0 0.0
    %777 = vmatprep.subr.mxu0 0.0
    %778 = vmatpush1.xpose.msra.mxu0 0.0
    %779 = vmatprep.subr.mxu0 0.0
    %780 = vmatpush1.xpose.msra.mxu0 0.0
    %781 = vmatprep.subr.mxu0 0.0
    %782 = vmatpush1.xpose.msra.mxu0 0.0
    %783 = vmatprep.subr.mxu0 0.0
    %784 = vmatpush1.xpose.msra.mxu0 0.0
    %785 = vmatprep.subr.mxu0 0.0
    %786 = vmatpush1.xpose.msra.mxu0 0.0
    %787 = vmatprep.subr.mxu0 0.0
    %788 = vmatpush1.xpose.msra.mxu0 0.0
    %789 = vmatprep.subr.mxu0 0.0
    %790 = vmatpush1.xpose.msra.mxu0 0.0
    %791 = vmatprep.subr.mxu0 0.0
    %792 = vmatpush1.xpose.msra.mxu0 0.0
    %793 = vmatprep.subr.mxu0 0.0
    %794 = vmatpush1.xpose.msra.mxu0 0.0
    %795 = vmatprep.subr.mxu0 0.0
    %796 = vmatpush1.xpose.msra.mxu0 0.0
    %797 = vmatprep.subr.mxu0 0.0
    %798 = vmatpush1.xpose.msra.mxu0 0.0
    %799 = vmatprep.subr.mxu0 0.0
    %800 = vmatpush1.xpose.msra.mxu0 0.0
    %801 = vmatprep.subr.mxu0 0.0
    %802 = vmatpush1.xpose.msra.mxu0 0.0
    %803 = vmatprep.subr.mxu0 0.0
    %804 = vmatpush1.xpose.msra.mxu0 0.0
    %805 = vmatprep.subr.mxu0 0.0
    %806 = vmatpush1.xpose.msra.mxu0 0.0
    %807 = vmatprep.subr.mxu0 0.0
    %808 = vmatpush1.xpose.msra.mxu0 0.0
    %809 = vmatprep.subr.mxu0 0.0
    %810 = vmatpush1.xpose.msra.mxu0 0.0
    %811 = vmatprep.subr.mxu0 0.0
    %812 = vmatpush1.xpose.msra.mxu0 0.0
    %813 = vmatprep.subr.mxu0 0.0
    %814 = vmatpush1.xpose.msra.mxu0 0.0
    %815 = vmatprep.subr.mxu0 0.0
    %816 = vmatpush1.xpose.msra.mxu0 0.0
    %817 = vmatprep.subr.mxu0 0.0
    %818 = vmatpush1.xpose.msra.mxu0 0.0
    %819 = vmatprep.subr.mxu0 0.0
    %820 = vmatpush1.xpose.msra.mxu0 0.0
    %821 = vmatprep.mubr.f32.mxu0 0.0
    %822 = vmatmul.mubr.f32.gmra.mrb[0].mxu0 %v396
    %v823 = vpop.f32.mrb[0].mxu0
    %v824 = vadd.f32 0.0, %v823
    %v825 = vpop.f32.mrb[0].mxu0
    %826 = vdwg.mxu0
    %827 = vmatprep.subr.mxu0 0.0
    %828 = vmatpush1.xpose.msra.mxu0 %v673
    %829 = vmatprep.subr.mxu0 0.0
    %830 = vmatpush1.xpose.msra.mxu0 0.0
    %831 = vmatprep.subr.mxu0 0.0
    %832 = vmatpush1.xpose.msra.mxu0 0.0
    %833 = vmatprep.subr.mxu0 0.0
    %834 = vmatpush1.xpose.msra.mxu0 0.0
    %835 = vmatprep.subr.mxu0 0.0
    %836 = vmatpush1.xpose.msra.mxu0 0.0
    %837 = vmatprep.subr.mxu0 0.0
    %838 = vmatpush1.xpose.msra.mxu0 0.0
    %839 = vmatprep.subr.mxu0 0.0
    %840 = vmatpush1.xpose.msra.mxu0 0.0
    %841 = vmatprep.subr.mxu0 0.0
    %842 = vmatpush1.xpose.msra.mxu0 0.0
    %843 = vmatprep.subr.mxu0 0.0
    %844 = vmatpush1.xpose.msra.mxu0 0.0
    %845 = vmatprep.subr.mxu0 0.0
    %846 = vmatpush1.xpose.msra.mxu0 0.0
    %847 = vmatprep.subr.mxu0 0.0
    %848 = vmatpush1.xpose.msra.mxu0 0.0
    %849 = vmatprep.subr.mxu0 0.0
    %850 = vmatpush1.xpose.msra.mxu0 0.0
    %851 = vmatprep.subr.mxu0 0.0
    %852 = vmatpush1.xpose.msra.mxu0 0.0
    %853 = vmatprep.subr.mxu0 0.0
    %854 = vmatpush1.xpose.msra.mxu0 0.0
    %855 = vmatprep.subr.mxu0 0.0
    %856 = vmatpush1.xpose.msra.mxu0 0.0
    %857 = vmatprep.subr.mxu0 0.0
    %858 = vmatpush1.xpose.msra.mxu0 0.0
    %859 = vmatprep.subr.mxu0 0.0
    %860 = vmatpush1.xpose.msra.mxu0 0.0
    %861 = vmatprep.subr.mxu0 0.0
    %862 = vmatpush1.xpose.msra.mxu0 0.0
    %863 = vmatprep.subr.mxu0 0.0
    %864 = vmatpush1.xpose.msra.mxu0 0.0
    %865 = vmatprep.subr.mxu0 0.0
    %866 = vmatpush1.xpose.msra.mxu0 0.0
    %867 = vmatprep.subr.mxu0 0.0
    %868 = vmatpush1.xpose.msra.mxu0 0.0
    %869 = vmatprep.subr.mxu0 0.0
    %870 = vmatpush1.xpose.msra.mxu0 0.0
    %871 = vmatprep.subr.mxu0 0.0
    %872 = vmatpush1.xpose.msra.mxu0 0.0
    %873 = vmatprep.subr.mxu0 0.0
    %874 = vmatpush1.xpose.msra.mxu0 0.0
    %875 = vmatprep.subr.mxu0 0.0
    %876 = vmatpush1.xpose.msra.mxu0 0.0
    %877 = vmatprep.subr.mxu0 0.0
    %878 = vmatpush1.xpose.msra.mxu0 0.0
    %879 = vmatprep.subr.mxu0 0.0
    %880 = vmatpush1.xpose.msra.mxu0 0.0
    %881 = vmatprep.subr.mxu0 0.0
    %882 = vmatpush1.xpose.msra.mxu0 0.0
    %883 = vmatprep.subr.mxu0 0.0
    %884 = vmatpush1.xpose.msra.mxu0 0.0
    %885 = vmatprep.subr.mxu0 0.0
    %886 = vmatpush1.xpose.msra.mxu0 0.0
    %887 = vmatprep.subr.mxu0 0.0
    %888 = vmatpush1.xpose.msra.mxu0 0.0
    %889 = vmatprep.subr.mxu0 0.0
    %890 = vmatpush1.xpose.msra.mxu0 0.0
    %891 = vmatprep.mubr.f32.mxu0 0.0
    %892 = vmatmul.mubr.f32.gmra.mrb[0].mxu0 %v396
    %v893 = vpop.f32.mrb[0].mxu0
    %v894 = vadd.f32 0.0, %v893
    %v895 = vpop.f32.mrb[0].mxu0
    %896 = vdwg.mxu0
    %897 = vmatprep.subr.mxu0 0.0
    %898 = vmatpush1.xpose.msra.mxu0 %v674
    %899 = vmatprep.subr.mxu0 0.0
    %900 = vmatpush1.xpose.msra.mxu0 0.0
    %901 = vmatprep.subr.mxu0 0.0
    %902 = vmatpush1.xpose.msra.mxu0 0.0
    %903 = vmatprep.subr.mxu0 0.0
    %904 = vmatpush1.xpose.msra.mxu0 0.0
    %905 = vmatprep.subr.mxu0 0.0
    %906 = vmatpush1.xpose.msra.mxu0 0.0
    %907 = vmatprep.subr.mxu0 0.0
    %908 = vmatpush1.xpose.msra.mxu0 0.0
    %909 = vmatprep.subr.mxu0 0.0
    %910 = vmatpush1.xpose.msra.mxu0 0.0
    %911 = vmatprep.subr.mxu0 0.0
    %912 = vmatpush1.xpose.msra.mxu0 0.0
    %913 = vmatprep.subr.mxu0 0.0
    %914 = vmatpush1.xpose.msra.mxu0 0.0
    %915 = vmatprep.subr.mxu0 0.0
    %916 = vmatpush1.xpose.msra.mxu0 0.0
    %917 = vmatprep.subr.mxu0 0.0
    %918 = vmatpush1.xpose.msra.mxu0 0.0
    %919 = vmatprep.subr.mxu0 0.0
    %920 = vmatpush1.xpose.msra.mxu0 0.0
    %921 = vmatprep.subr.mxu0 0.0
    %922 = vmatpush1.xpose.msra.mxu0 0.0
    %923 = vmatprep.subr.mxu0 0.0
    %924 = vmatpush1.xpose.msra.mxu0 0.0
    %925 = vmatprep.subr.mxu0 0.0
    %926 = vmatpush1.xpose.msra.mxu0 0.0
    %927 = vmatprep.subr.mxu0 0.0
    %928 = vmatpush1.xpose.msra.mxu0 0.0
    %929 = vmatprep.subr.mxu0 0.0
    %930 = vmatpush1.xpose.msra.mxu0 0.0
    %931 = vmatprep.subr.mxu0 0.0
    %932 = vmatpush1.xpose.msra.mxu0 0.0
    %933 = vmatprep.subr.mxu0 0.0
    %934 = vmatpush1.xpose.msra.mxu0 0.0
    %935 = vmatprep.subr.mxu0 0.0
    %936 = vmatpush1.xpose.msra.mxu0 0.0
    %937 = vmatprep.subr.mxu0 0.0
    %938 = vmatpush1.xpose.msra.mxu0 0.0
    %939 = vmatprep.subr.mxu0 0.0
    %940 = vmatpush1.xpose.msra.mxu0 0.0
    %941 = vmatprep.subr.mxu0 0.0
    %942 = vmatpush1.xpose.msra.mxu0 0.0
    %943 = vmatprep.subr.mxu0 0.0
    %944 = vmatpush1.xpose.msra.mxu0 0.0
    %945 = vmatprep.subr.mxu0 0.0
    %946 = vmatpush1.xpose.msra.mxu0 0.0
    %947 = vmatprep.subr.mxu0 0.0
    %948 = vmatpush1.xpose.msra.mxu0 0.0
    %949 = vmatprep.subr.mxu0 0.0
    %950 = vmatpush1.xpose.msra.mxu0 0.0
    %951 = vmatprep.subr.mxu0 0.0
    %952 = vmatpush1.xpose.msra.mxu0 0.0
    %953 = vmatprep.subr.mxu0 0.0
    %954 = vmatpush1.xpose.msra.mxu0 0.0
    %955 = vmatprep.subr.mxu0 0.0
    %956 = vmatpush1.xpose.msra.mxu0 0.0
    %957 = vmatprep.subr.mxu0 0.0
    %958 = vmatpush1.xpose.msra.mxu0 0.0
    %959 = vmatprep.subr.mxu0 0.0
    %960 = vmatpush1.xpose.msra.mxu0 0.0
    %961 = vmatprep.mubr.f32.mxu0 0.0
    %962 = vmatmul.mubr.f32.gmra.mrb[0].mxu0 %v396
    %v963 = vpop.f32.mrb[0].mxu0
    %v964 = vadd.f32 0.0, %v963
    %v965 = vpop.f32.mrb[0].mxu0
    %966 = vdwg.mxu0
    %967 = vmatprep.subr.mxu0 0.0
    %968 = vmatpush1.xpose.msra.mxu0 %v675
    %969 = vmatprep.subr.mxu0 0.0
    %970 = vmatpush1.xpose.msra.mxu0 0.0
    %971 = vmatprep.subr.mxu0 0.0
    %972 = vmatpush1.xpose.msra.mxu0 0.0
    %973 = vmatprep.subr.mxu0 0.0
    %974 = vmatpush1.xpose.msra.mxu0 0.0
    %975 = vmatprep.subr.mxu0 0.0
    %976 = vmatpush1.xpose.msra.mxu0 0.0
    %977 = vmatprep.subr.mxu0 0.0
    %978 = vmatpush1.xpose.msra.mxu0 0.0
    %979 = vmatprep.subr.mxu0 0.0
    %980 = vmatpush1.xpose.msra.mxu0 0.0
    %981 = vmatprep.subr.mxu0 0.0
    %982 = vmatpush1.xpose.msra.mxu0 0.0
    %983 = vmatprep.subr.mxu0 0.0
    %984 = vmatpush1.xpose.msra.mxu0 0.0
    %985 = vmatprep.subr.mxu0 0.0
    %986 = vmatpush1.xpose.msra.mxu0 0.0
    %987 = vmatprep.subr.mxu0 0.0
    %988 = vmatpush1.xpose.msra.mxu0 0.0
    %989 = vmatprep.subr.mxu0 0.0
    %990 = vmatpush1.xpose.msra.mxu0 0.0
    %991 = vmatprep.subr.mxu0 0.0
    %992 = vmatpush1.xpose.msra.mxu0 0.0
    %993 = vmatprep.subr.mxu0 0.0
    %994 = vmatpush1.xpose.msra.mxu0 0.0
    %995 = vmatprep.subr.mxu0 0.0
    %996 = vmatpush1.xpose.msra.mxu0 0.0
    %997 = vmatprep.subr.mxu0 0.0
    %998 = vmatpush1.xpose.msra.mxu0 0.0
    %999 = vmatprep.subr.mxu0 0.0
    %1000 = vmatpush1.xpose.msra.mxu0 0.0
    %1001 = vmatprep.subr.mxu0 0.0
    %1002 = vmatpush1.xpose.msra.mxu0 0.0
    %1003 = vmatprep.subr.mxu0 0.0
    %1004 = vmatpush1.xpose.msra.mxu0 0.0
    %1005 = vmatprep.subr.mxu0 0.0
    %1006 = vmatpush1.xpose.msra.mxu0 0.0
    %1007 = vmatprep.subr.mxu0 0.0
    %1008 = vmatpush1.xpose.msra.mxu0 0.0
    %1009 = vmatprep.subr.mxu0 0.0
    %1010 = vmatpush1.xpose.msra.mxu0 0.0
    %1011 = vmatprep.subr.mxu0 0.0
    %1012 = vmatpush1.xpose.msra.mxu0 0.0
    %1013 = vmatprep.subr.mxu0 0.0
    %1014 = vmatpush1.xpose.msra.mxu0 0.0
    %1015 = vmatprep.subr.mxu0 0.0
    %1016 = vmatpush1.xpose.msra.mxu0 0.0
    %1017 = vmatprep.subr.mxu0 0.0
    %1018 = vmatpush1.xpose.msra.mxu0 0.0
    %1019 = vmatprep.subr.mxu0 0.0
    %1020 = vmatpush1.xpose.msra.mxu0 0.0
    %1021 = vmatprep.subr.mxu0 0.0
    %1022 = vmatpush1.xpose.msra.mxu0 0.0
    %1023 = vmatprep.subr.mxu0 0.0
    %1024 = vmatpush1.xpose.msra.mxu0 0.0
    %1025 = vmatprep.subr.mxu0 0.0
    %1026 = vmatpush1.xpose.msra.mxu0 0.0
    %1027 = vmatprep.subr.mxu0 0.0
    %1028 = vmatpush1.xpose.msra.mxu0 0.0
    %1029 = vmatprep.subr.mxu0 0.0
    %1030 = vmatpush1.xpose.msra.mxu0 0.0
    %1031 = vmatprep.mubr.f32.mxu0 0.0
    %1032 = vmatmul.mubr.f32.gmra.mrb[0].mxu0 %v399
    %v1033 = vpop.f32.mrb[0].mxu0
    %v1034 = vadd.f32 0.0, %v1033
    %v1035 = vpop.f32.mrb[0].mxu0
    %1036 = vdwg.mxu0
    %1037 = vmatprep.subr.mxu0 0.0
    %1038 = vmatpush1.xpose.msra.mxu0 %v676
    %1039 = vmatprep.subr.mxu0 0.0
    %1040 = vmatpush1.xpose.msra.mxu0 0.0
    %1041 = vmatprep.subr.mxu0 0.0
    %1042 = vmatpush1.xpose.msra.mxu0 0.0
    %1043 = vmatprep.subr.mxu0 0.0
    %1044 = vmatpush1.xpose.msra.mxu0 0.0
    %1045 = vmatprep.subr.mxu0 0.0
    %1046 = vmatpush1.xpose.msra.mxu0 0.0
    %1047 = vmatprep.subr.mxu0 0.0
    %1048 = vmatpush1.xpose.msra.mxu0 0.0
    %1049 = vmatprep.subr.mxu0 0.0
    %1050 = vmatpush1.xpose.msra.mxu0 0.0
    %1051 = vmatprep.subr.mxu0 0.0
    %1052 = vmatpush1.xpose.msra.mxu0 0.0
    %1053 = vmatprep.subr.mxu0 0.0
    %1054 = vmatpush1.xpose.msra.mxu0 0.0
    %1055 = vmatprep.subr.mxu0 0.0
    %1056 = vmatpush1.xpose.msra.mxu0 0.0
    %1057 = vmatprep.subr.mxu0 0.0
    %1058 = vmatpush1.xpose.msra.mxu0 0.0
    %1059 = vmatprep.subr.mxu0 0.0
    %1060 = vmatpush1.xpose.msra.mxu0 0.0
    %1061 = vmatprep.subr.mxu0 0.0
    %1062 = vmatpush1.xpose.msra.mxu0 0.0
    %1063 = vmatprep.subr.mxu0 0.0
    %1064 = vmatpush1.xpose.msra.mxu0 0.0
    %1065 = vmatprep.subr.mxu0 0.0
    %1066 = vmatpush1.xpose.msra.mxu0 0.0
    %1067 = vmatprep.subr.mxu0 0.0
    %1068 = vmatpush1.xpose.msra.mxu0 0.0
    %1069 = vmatprep.subr.mxu0 0.0
    %1070 = vmatpush1.xpose.msra.mxu0 0.0
    %1071 = vmatprep.subr.mxu0 0.0
    %1072 = vmatpush1.xpose.msra.mxu0 0.0
    %1073 = vmatprep.subr.mxu0 0.0
    %1074 = vmatpush1.xpose.msra.mxu0 0.0
    %1075 = vmatprep.subr.mxu0 0.0
    %1076 = vmatpush1.xpose.msra.mxu0 0.0
    %1077 = vmatprep.subr.mxu0 0.0
    %1078 = vmatpush1.xpose.msra.mxu0 0.0
    %1079 = vmatprep.subr.mxu0 0.0
    %1080 = vmatpush1.xpose.msra.mxu0 0.0
    %1081 = vmatprep.subr.mxu0 0.0
    %1082 = vmatpush1.xpose.msra.mxu0 0.0
    %1083 = vmatprep.subr.mxu0 0.0
    %1084 = vmatpush1.xpose.msra.mxu0 0.0
    %1085 = vmatprep.subr.mxu0 0.0
    %1086 = vmatpush1.xpose.msra.mxu0 0.0
    %1087 = vmatprep.subr.mxu0 0.0
    %1088 = vmatpush1.xpose.msra.mxu0 0.0
    %1089 = vmatprep.subr.mxu0 0.0
    %1090 = vmatpush1.xpose.msra.mxu0 0.0
    %1091 = vmatprep.subr.mxu0 0.0
    %1092 = vmatpush1.xpose.msra.mxu0 0.0
    %1093 = vmatprep.subr.mxu0 0.0
    %1094 = vmatpush1.xpose.msra.mxu0 0.0
    %1095 = vmatprep.subr.mxu0 0.0
    %1096 = vmatpush1.xpose.msra.mxu0 0.0
    %1097 = vmatprep.subr.mxu0 0.0
    %1098 = vmatpush1.xpose.msra.mxu0 0.0
    %1099 = vmatprep.subr.mxu0 0.0
    %1100 = vmatpush1.xpose.msra.mxu0 0.0
    %1101 = vmatprep.mubr.f32.mxu0 0.0
    %1102 = vmatmul.mubr.f32.gmra.mrb[0].mxu0 %v399
    %v1103 = vpop.f32.mrb[0].mxu0
    %v1104 = vadd.f32 0.0, %v1103
    %v1105 = vpop.f32.mrb[0].mxu0
    %1106 = vdwg.mxu0
    %1107 = vmatprep.subr.mxu0 0.0
    %1108 = vmatpush1.xpose.msra.mxu0 %v677
    %1109 = vmatprep.subr.mxu0 0.0
    %1110 = vmatpush1.xpose.msra.mxu0 0.0
    %1111 = vmatprep.subr.mxu0 0.0
    %1112 = vmatpush1.xpose.msra.mxu0 0.0
    %1113 = vmatprep.subr.mxu0 0.0
    %1114 = vmatpush1.xpose.msra.mxu0 0.0
    %1115 = vmatprep.subr.mxu0 0.0
    %1116 = vmatpush1.xpose.msra.mxu0 0.0
    %1117 = vmatprep.subr.mxu0 0.0
    %1118 = vmatpush1.xpose.msra.mxu0 0.0
    %1119 = vmatprep.subr.mxu0 0.0
    %1120 = vmatpush1.xpose.msra.mxu0 0.0
    %1121 = vmatprep.subr.mxu0 0.0
    %1122 = vmatpush1.xpose.msra.mxu0 0.0
    %1123 = vmatprep.subr.mxu0 0.0
    %1124 = vmatpush1.xpose.msra.mxu0 0.0
    %1125 = vmatprep.subr.mxu0 0.0
    %1126 = vmatpush1.xpose.msra.mxu0 0.0
    %1127 = vmatprep.subr.mxu0 0.0
    %1128 = vmatpush1.xpose.msra.mxu0 0.0
    %1129 = vmatprep.subr.mxu0 0.0
    %1130 = vmatpush1.xpose.msra.mxu0 0.0
    %1131 = vmatprep.subr.mxu0 0.0
    %1132 = vmatpush1.xpose.msra.mxu0 0.0
    %1133 = vmatprep.subr.mxu0 0.0
    %1134 = vmatpush1.xpose.msra.mxu0 0.0
    %1135 = vmatprep.subr.mxu0 0.0
    %1136 = vmatpush1.xpose.msra.mxu0 0.0
    %1137 = vmatprep.subr.mxu0 0.0
    %1138 = vmatpush1.xpose.msra.mxu0 0.0
    %1139 = vmatprep.subr.mxu0 0.0
    %1140 = vmatpush1.xpose.msra.mxu0 0.0
    %1141 = vmatprep.subr.mxu0 0.0
    %1142 = vmatpush1.xpose.msra.mxu0 0.0
    %1143 = vmatprep.subr.mxu0 0.0
    %1144 = vmatpush1.xpose.msra.mxu0 0.0
    %1145 = vmatprep.subr.mxu0 0.0
    %1146 = vmatpush1.xpose.msra.mxu0 0.0
    %1147 = vmatprep.subr.mxu0 0.0
    %1148 = vmatpush1.xpose.msra.mxu0 0.0
    %1149 = vmatprep.subr.mxu0 0.0
    %1150 = vmatpush1.xpose.msra.mxu0 0.0
    %1151 = vmatprep.subr.mxu0 0.0
    %1152 = vmatpush1.xpose.msra.mxu0 0.0
    %1153 = vmatprep.subr.mxu0 0.0
    %1154 = vmatpush1.xpose.msra.mxu0 0.0
    %1155 = vmatprep.subr.mxu0 0.0
    %1156 = vmatpush1.xpose.msra.mxu0 0.0
    %1157 = vmatprep.subr.mxu0 0.0
    %1158 = vmatpush1.xpose.msra.mxu0 0.0
    %1159 = vmatprep.subr.mxu0 0.0
    %1160 = vmatpush1.xpose.msra.mxu0 0.0
    %1161 = vmatprep.subr.mxu0 0.0
    %1162 = vmatpush1.xpose.msra.mxu0 0.0
    %1163 = vmatprep.subr.mxu0 0.0
    %1164 = vmatpush1.xpose.msra.mxu0 0.0
    %1165 = vmatprep.subr.mxu0 0.0
    %1166 = vmatpush1.xpose.msra.mxu0 0.0
    %1167 = vmatprep.subr.mxu0 0.0
    %1168 = vmatpush1.xpose.msra.mxu0 0.0
    %1169 = vmatprep.subr.mxu0 0.0
    %1170 = vmatpush1.xpose.msra.mxu0 0.0
    %1171 = vmatprep.mubr.f32.mxu0 0.0
    %1172 = vmatmul.mubr.f32.gmra.mrb[0].mxu0 %v399
    %v1173 = vpop.f32.mrb[0].mxu0
    %v1174 = vadd.f32 0.0, %v1173
    %v1175 = vpop.f32.mrb[0].mxu0
    %1176 = vdwg.mxu0
    %1177 = vmatprep.subr.mxu0 0.0
    %1178 = vmatpush1.xpose.msra.mxu0 %v678
    %1179 = vmatprep.subr.mxu0 0.0
    %1180 = vmatpush1.xpose.msra.mxu0 0.0
    %1181 = vmatprep.subr.mxu0 0.0
    %1182 = vmatpush1.xpose.msra.mxu0 0.0
    %1183 = vmatprep.subr.mxu0 0.0
    %1184 = vmatpush1.xpose.msra.mxu0 0.0
    %1185 = vmatprep.subr.mxu0 0.0
    %1186 = vmatpush1.xpose.msra.mxu0 0.0
    %1187 = vmatprep.subr.mxu0 0.0
    %1188 = vmatpush1.xpose.msra.mxu0 0.0
    %1189 = vmatprep.subr.mxu0 0.0
    %1190 = vmatpush1.xpose.msra.mxu0 0.0
    %1191 = vmatprep.subr.mxu0 0.0
    %1192 = vmatpush1.xpose.msra.mxu0 0.0
    %1193 = vmatprep.subr.mxu0 0.0
    %1194 = vmatpush1.xpose.msra.mxu0 0.0
    %1195 = vmatprep.subr.mxu0 0.0
    %1196 = vmatpush1.xpose.msra.mxu0 0.0
    %1197 = vmatprep.subr.mxu0 0.0
    %1198 = vmatpush1.xpose.msra.mxu0 0.0
    %1199 = vmatprep.subr.mxu0 0.0
    %1200 = vmatpush1.xpose.msra.mxu0 0.0
    %1201 = vmatprep.subr.mxu0 0.0
    %1202 = vmatpush1.xpose.msra.mxu0 0.0
    %1203 = vmatprep.subr.mxu0 0.0
    %1204 = vmatpush1.xpose.msra.mxu0 0.0
    %1205 = vmatprep.subr.mxu0 0.0
    %1206 = vmatpush1.xpose.msra.mxu0 0.0
    %1207 = vmatprep.subr.mxu0 0.0
    %1208 = vmatpush1.xpose.msra.mxu0 0.0
    %1209 = vmatprep.subr.mxu0 0.0
    %1210 = vmatpush1.xpose.msra.mxu0 0.0
    %1211 = vmatprep.subr.mxu0 0.0
    %1212 = vmatpush1.xpose.msra.mxu0 0.0
    %1213 = vmatprep.subr.mxu0 0.0
    %1214 = vmatpush1.xpose.msra.mxu0 0.0
    %1215 = vmatprep.subr.mxu0 0.0
    %1216 = vmatpush1.xpose.msra.mxu0 0.0
    %1217 = vmatprep.subr.mxu0 0.0
    %1218 = vmatpush1.xpose.msra.mxu0 0.0
    %1219 = vmatprep.subr.mxu0 0.0
    %1220 = vmatpush1.xpose.msra.mxu0 0.0
    %1221 = vmatprep.subr.mxu0 0.0
    %1222 = vmatpush1.xpose.msra.mxu0 0.0
    %1223 = vmatprep.subr.mxu0 0.0
    %1224 = vmatpush1.xpose.msra.mxu0 0.0
    %1225 = vmatprep.subr.mxu0 0.0
    %1226 = vmatpush1.xpose.msra.mxu0 0.0
    %1227 = vmatprep.subr.mxu0 0.0
    %1228 = vmatpush1.xpose.msra.mxu0 0.0
    %1229 = vmatprep.subr.mxu0 0.0
    %1230 = vmatpush1.xpose.msra.mxu0 0.0
    %1231 = vmatprep.subr.mxu0 0.0
    %1232 = vmatpush1.xpose.msra.mxu0 0.0
    %1233 = vmatprep.subr.mxu0 0.0
    %1234 = vmatpush1.xpose.msra.mxu0 0.0
    %1235 = vmatprep.subr.mxu0 0.0
    %1236 = vmatpush1.xpose.msra.mxu0 0.0
    %1237 = vmatprep.subr.mxu0 0.0
    %1238 = vmatpush1.xpose.msra.mxu0 0.0
    %1239 = vmatprep.subr.mxu0 0.0
    %1240 = vmatpush1.xpose.msra.mxu0 0.0
    %1241 = vmatprep.mubr.f32.mxu0 0.0
    %1242 = vmatmul.mubr.f32.gmra.mrb[0].mxu0 %v399
    %v1243 = vpop.f32.mrb[0].mxu0
    %v1244 = vadd.f32 0.0, %v1243
    %v1245 = vpop.f32.mrb[0].mxu0
    %1246 = vdwg.mxu0
    %vm1247 = vcmask 64512
    %v1248 = vsel %vm1247, %v754, -inf
    %1249 = vmax.xlane.f32.xlu0 %v1248
    %v1250 = vpop.xlane.xlu0 %1249
    %v1251 = vsel %vm1247, %v824, -inf
    %1252 = vmax.xlane.f32.xlu0 %v1251
    %v1253 = vpop.xlane.xlu0 %1252
    %v1254 = vsel %vm1247, %v894, -inf
    %1255 = vmax.xlane.f32.xlu0 %v1254
    %v1256 = vpop.xlane.xlu0 %1255
    %v1257 = vsel %vm1247, %v964, -inf
    %1258 = vmax.xlane.f32.xlu0 %v1257
    %v1259 = vpop.xlane.xlu0 %1258
    %v1260 = vsel %vm1247, %v1034, -inf
    %1261 = vmax.xlane.f32.xlu0 %v1260
    %v1262 = vpop.xlane.xlu0 %1261
    %v1263 = vsel %vm1247, %v1104, -inf
    %1264 = vmax.xlane.f32.xlu0 %v1263
    %v1265 = vpop.xlane.xlu0 %1264
    %v1266 = vsel %vm1247, %v1174, -inf
    %1267 = vmax.xlane.f32.xlu0 %v1266
    %v1268 = vpop.xlane.xlu0 %1267
    %v1269 = vsel %vm1247, %v1244, -inf
    %1270 = vmax.xlane.f32.xlu0 %v1269
    %v1271 = vpop.xlane.xlu0 %1270
    %v1272 = vsub.f32 %v754, %v1250
    %v1273 = vsub.f32 %v824, %v1253
    %v1274 = vsub.f32 %v894, %v1256
    %v1275 = vsub.f32 %v964, %v1259
    %v1276 = vsub.f32 %v1034, %v1262
    %v1277 = vsub.f32 %v1104, %v1265
    %v1278 = vsub.f32 %v1174, %v1268
    %v1279 = vsub.f32 %v1244, %v1271
    %v1280 = vmul.f32 %v1272, 1.442695
    %v1281 = vpow.pop %v1280
    %v1282 = vmul.f32 %v1273, 1.442695
    %v1283 = vpow.pop %v1282
    %v1284 = vmul.f32 %v1274, 1.442695
    %v1285 = vpow.pop %v1284
    %v1286 = vmul.f32 %v1275, 1.442695
    %v1287 = vpow.pop %v1286
    %v1288 = vmul.f32 %v1276, 1.442695
    %v1289 = vpow.pop %v1288
    %v1290 = vmul.f32 %v1277, 1.442695
    %v1291 = vpow.pop %v1290
    %v1292 = vmul.f32 %v1278, 1.442695
    %v1293 = vpow.pop %v1292
    %v1294 = vmul.f32 %v1279, 1.442695
    %v1295 = vpow.pop %v1294
    %v1296 = vsel %vm1247, %v1281, 0.0
    %1297 = vadd.xlane.f32.xlu0 %v1296
    %v1298 = vpop.xlane.xlu0 %1297
    %v1299 = vsel %vm1247, %v1283, 0.0
    %1300 = vadd.xlane.f32.xlu0 %v1299
    %v1301 = vpop.xlane.xlu0 %1300
    %v1302 = vsel %vm1247, %v1285, 0.0
    %1303 = vadd.xlane.f32.xlu0 %v1302
    %v1304 = vpop.xlane.xlu0 %1303
    %v1305 = vsel %vm1247, %v1287, 0.0
    %1306 = vadd.xlane.f32.xlu0 %v1305
    %v1307 = vpop.xlane.xlu0 %1306
    %v1308 = vsel %vm1247, %v1289, 0.0
    %1309 = vadd.xlane.f32.xlu0 %v1308
    %v1310 = vpop.xlane.xlu0 %1309
    %v1311 = vsel %vm1247, %v1291, 0.0
    %1312 = vadd.xlane.f32.xlu0 %v1311
    %v1313 = vpop.xlane.xlu0 %1312
    %v1314 = vsel %vm1247, %v1293, 0.0
    %1315 = vadd.xlane.f32.xlu0 %v1314
    %v1316 = vpop.xlane.xlu0 %1315
    %v1317 = vsel %vm1247, %v1295, 0.0
    %1318 = vadd.xlane.f32.xlu0 %v1317
    %v1319 = vpop.xlane.xlu0 %1318
    %v1320 = vrcp.pop %v1298
    %v1321 = vrcp.pop %v1301
    %v1322 = vrcp.pop %v1304
    %v1323 = vrcp.pop %v1307
    %v1324 = vrcp.pop %v1310
    %v1325 = vrcp.pop %v1313
    %v1326 = vrcp.pop %v1316
    %v1327 = vrcp.pop %v1319
    %v1328 = vmul.f32 %v1281, %v1320
    %v1329 = vmul.f32 %v1283, %v1321
    %v1330 = vmul.f32 %v1285, %v1322
    %v1331 = vmul.f32 %v1287, %v1323
    %v1332 = vmul.f32 %v1289, %v1324
    %v1333 = vmul.f32 %v1291, %v1325
    %v1334 = vmul.f32 %v1293, %v1326
    %v1335 = vmul.f32 %v1295, %v1327
    %v1337 = vsel %vm1247, %v1328, 0
    %1339 = vmatprep.subr.mxu0 0.0
    %1340 = vmatpush1.msra.mxu0 %v679
    %1341 = vmatprep.subr.mxu0 0.0
    %1342 = vmatpush1.msra.mxu0 0.0
    %1343 = vmatprep.subr.mxu0 0.0
    %1344 = vmatpush1.msra.mxu0 0.0
    %1345 = vmatprep.subr.mxu0 0.0
    %1346 = vmatpush1.msra.mxu0 0.0
    %1347 = vmatprep.subr.mxu0 0.0
    %1348 = vmatpush1.msra.mxu0 0.0
    %1349 = vmatprep.subr.mxu0 0.0
    %1350 = vmatpush1.msra.mxu0 0.0
    %1351 = vmatprep.subr.mxu0 0.0
    %1352 = vmatpush1.msra.mxu0 0.0
    %1353 = vmatprep.subr.mxu0 0.0
    %1354 = vmatpush1.msra.mxu0 0.0
    %1355 = vmatprep.subr.mxu0 0.0
    %1356 = vmatpush1.msra.mxu0 0.0
    %1357 = vmatprep.subr.mxu0 0.0
    %1358 = vmatpush1.msra.mxu0 0.0
    %1359 = vmatprep.subr.mxu0 0.0
    %1360 = vmatpush1.msra.mxu0 0.0
    %1361 = vmatprep.subr.mxu0 0.0
    %1362 = vmatpush1.msra.mxu0 0.0
    %1363 = vmatprep.subr.mxu0 0.0
    %1364 = vmatpush1.msra.mxu0 0.0
    %1365 = vmatprep.subr.mxu0 0.0
    %1366 = vmatpush1.msra.mxu0 0.0
    %1367 = vmatprep.subr.mxu0 0.0
    %1368 = vmatpush1.msra.mxu0 0.0
    %1369 = vmatprep.subr.mxu0 0.0
    %1370 = vmatpush1.msra.mxu0 0.0
    %1371 = vmatprep.subr.mxu0 0.0
    %1372 = vmatpush1.msra.mxu0 0.0
    %1373 = vmatprep.subr.mxu0 0.0
    %1374 = vmatpush1.msra.mxu0 0.0
    %1375 = vmatprep.subr.mxu0 0.0
    %1376 = vmatpush1.msra.mxu0 0.0
    %1377 = vmatprep.subr.mxu0 0.0
    %1378 = vmatpush1.msra.mxu0 0.0
    %1379 = vmatprep.subr.mxu0 0.0
    %1380 = vmatpush1.msra.mxu0 0.0
    %1381 = vmatprep.subr.mxu0 0.0
    %1382 = vmatpush1.msra.mxu0 0.0
    %1383 = vmatprep.subr.mxu0 0.0
    %1384 = vmatpush1.msra.mxu0 0.0
    %1385 = vmatprep.subr.mxu0 0.0
    %1386 = vmatpush1.msra.mxu0 0.0
    %1387 = vmatprep.subr.mxu0 0.0
    %1388 = vmatpush1.msra.mxu0 0.0
    %1389 = vmatprep.subr.mxu0 0.0
    %1390 = vmatpush1.msra.mxu0 0.0
    %1391 = vmatprep.subr.mxu0 0.0
    %1392 = vmatpush1.msra.mxu0 0.0
    %1393 = vmatprep.subr.mxu0 0.0
    %1394 = vmatpush1.msra.mxu0 0.0
    %1395 = vmatprep.subr.mxu0 0.0
    %1396 = vmatpush1.msra.mxu0 0.0
    %1397 = vmatprep.subr.mxu0 0.0
    %1398 = vmatpush1.msra.mxu0 0.0
    %1399 = vmatprep.subr.mxu0 0.0
    %1400 = vmatpush1.msra.mxu0 0.0
    %1401 = vmatprep.subr.mxu0 0.0
    %1402 = vmatpush1.msra.mxu0 0.0
    %1403 = vmatprep.mubr.f32.mxu0 0.0
    %1404 = vmatmul.mubr.f32.gmra.mrb[0].mxu0 %v1337
    %v1405 = vpop.f32.mrb[0].mxu0
    %v1406 = vadd.f32 0.0, %v1405
    %v1407 = vpop.f32.mrb[0].mxu0
    %1408 = vdwg.mxu0
    %v1410 = vsel %vm1247, %v1329, 0
    %1412 = vmatprep.subr.mxu0 0.0
    %1413 = vmatpush1.msra.mxu0 %v680
    %1414 = vmatprep.subr.mxu0 0.0
    %1415 = vmatpush1.msra.mxu0 0.0
    %1416 = vmatprep.subr.mxu0 0.0
    %1417 = vmatpush1.msra.mxu0 0.0
    %1418 = vmatprep.subr.mxu0 0.0
    %1419 = vmatpush1.msra.mxu0 0.0
    %1420 = vmatprep.subr.mxu0 0.0
    %1421 = vmatpush1.msra.mxu0 0.0
    %1422 = vmatprep.subr.mxu0 0.0
    %1423 = vmatpush1.msra.mxu0 0.0
    %1424 = vmatprep.subr.mxu0 0.0
    %1425 = vmatpush1.msra.mxu0 0.0
    %1426 = vmatprep.subr.mxu0 0.0
    %1427 = vmatpush1.msra.mxu0 0.0
    %1428 = vmatprep.subr.mxu0 0.0
    %1429 = vmatpush1.msra.mxu0 0.0
    %1430 = vmatprep.subr.mxu0 0.0
    %1431 = vmatpush1.msra.mxu0 0.0
    %1432 = vmatprep.subr.mxu0 0.0
    %1433 = vmatpush1.msra.mxu0 0.0
    %1434 = vmatprep.subr.mxu0 0.0
    %1435 = vmatpush1.msra.mxu0 0.0
    %1436 = vmatprep.subr.mxu0 0.0
    %1437 = vmatpush1.msra.mxu0 0.0
    %1438 = vmatprep.subr.mxu0 0.0
    %1439 = vmatpush1.msra.mxu0 0.0
    %1440 = vmatprep.subr.mxu0 0.0
    %1441 = vmatpush1.msra.mxu0 0.0
    %1442 = vmatprep.subr.mxu0 0.0
    %1443 = vmatpush1.msra.mxu0 0.0
    %1444 = vmatprep.subr.mxu0 0.0
    %1445 = vmatpush1.msra.mxu0 0.0
    %1446 = vmatprep.subr.mxu0 0.0
    %1447 = vmatpush1.msra.mxu0 0.0
    %1448 = vmatprep.subr.mxu0 0.0
    %1449 = vmatpush1.msra.mxu0 0.0
    %1450 = vmatprep.subr.mxu0 0.0
    %1451 = vmatpush1.msra.mxu0 0.0
    %1452 = vmatprep.subr.mxu0 0.0
    %1453 = vmatpush1.msra.mxu0 0.0
    %1454 = vmatprep.subr.mxu0 0.0
    %1455 = vmatpush1.msra.mxu0 0.0
    %1456 = vmatprep.subr.mxu0 0.0
    %1457 = vmatpush1.msra.mxu0 0.0
    %1458 = vmatprep.subr.mxu0 0.0
    %1459 = vmatpush1.msra.mxu0 0.0
    %1460 = vmatprep.subr.mxu0 0.0
    %1461 = vmatpush1.msra.mxu0 0.0
    %1462 = vmatprep.subr.mxu0 0.0
    %1463 = vmatpush1.msra.mxu0 0.0
    %1464 = vmatprep.subr.mxu0 0.0
    %1465 = vmatpush1.msra.mxu0 0.0
    %1466 = vmatprep.subr.mxu0 0.0
    %1467 = vmatpush1.msra.mxu0 0.0
    %1468 = vmatprep.subr.mxu0 0.0
    %1469 = vmatpush1.msra.mxu0 0.0
    %1470 = vmatprep.subr.mxu0 0.0
    %1471 = vmatpush1.msra.mxu0 0.0
    %1472 = vmatprep.subr.mxu0 0.0
    %1473 = vmatpush1.msra.mxu0 0.0
    %1474 = vmatprep.subr.mxu0 0.0
    %1475 = vmatpush1.msra.mxu0 0.0
    %1476 = vmatprep.mubr.f32.mxu0 0.0
    %1477 = vmatmul.mubr.f32.gmra.mrb[0].mxu0 %v1410
    %v1478 = vpop.f32.mrb[0].mxu0
    %v1479 = vadd.f32 0.0, %v1478
    %v1480 = vpop.f32.mrb[0].mxu0
    %1481 = vdwg.mxu0
    %v1483 = vsel %vm1247, %v1330, 0
    %1485 = vmatprep.subr.mxu0 0.0
    %1486 = vmatpush1.msra.mxu0 %v681
    %1487 = vmatprep.subr.mxu0 0.0
    %1488 = vmatpush1.msra.mxu0 0.0
    %1489 = vmatprep.subr.mxu0 0.0
    %1490 = vmatpush1.msra.mxu0 0.0
    %1491 = vmatprep.subr.mxu0 0.0
    %1492 = vmatpush1.msra.mxu0 0.0
    %1493 = vmatprep.subr.mxu0 0.0
    %1494 = vmatpush1.msra.mxu0 0.0
    %1495 = vmatprep.subr.mxu0 0.0
    %1496 = vmatpush1.msra.mxu0 0.0
    %1497 = vmatprep.subr.mxu0 0.0
    %1498 = vmatpush1.msra.mxu0 0.0
    %1499 = vmatprep.subr.mxu0 0.0
    %1500 = vmatpush1.msra.mxu0 0.0
    %1501 = vmatprep.subr.mxu0 0.0
    %1502 = vmatpush1.msra.mxu0 0.0
    %1503 = vmatprep.subr.mxu0 0.0
    %1504 = vmatpush1.msra.mxu0 0.0
    %1505 = vmatprep.subr.mxu0 0.0
    %1506 = vmatpush1.msra.mxu0 0.0
    %1507 = vmatprep.subr.mxu0 0.0
    %1508 = vmatpush1.msra.mxu0 0.0
    %1509 = vmatprep.subr.mxu0 0.0
    %1510 = vmatpush1.msra.mxu0 0.0
    %1511 = vmatprep.subr.mxu0 0.0
    %1512 = vmatpush1.msra.mxu0 0.0
    %1513 = vmatprep.subr.mxu0 0.0
    %1514 = vmatpush1.msra.mxu0 0.0
    %1515 = vmatprep.subr.mxu0 0.0
    %1516 = vmatpush1.msra.mxu0 0.0
    %1517 = vmatprep.subr.mxu0 0.0
    %1518 = vmatpush1.msra.mxu0 0.0
    %1519 = vmatprep.subr.mxu0 0.0
    %1520 = vmatpush1.msra.mxu0 0.0
    %1521 = vmatprep.subr.mxu0 0.0
    %1522 = vmatpush1.msra.mxu0 0.0
    %1523 = vmatprep.subr.mxu0 0.0
    %1524 = vmatpush1.msra.mxu0 0.0
    %1525 = vmatprep.subr.mxu0 0.0
    %1526 = vmatpush1.msra.mxu0 0.0
    %1527 = vmatprep.subr.mxu0 0.0
    %1528 = vmatpush1.msra.mxu0 0.0
    %1529 = vmatprep.subr.mxu0 0.0
    %1530 = vmatpush1.msra.mxu0 0.0
    %1531 = vmatprep.subr.mxu0 0.0
    %1532 = vmatpush1.msra.mxu0 0.0
    %1533 = vmatprep.subr.mxu0 0.0
    %1534 = vmatpush1.msra.mxu0 0.0
    %1535 = vmatprep.subr.mxu0 0.0
    %1536 = vmatpush1.msra.mxu0 0.0
    %1537 = vmatprep.subr.mxu0 0.0
    %1538 = vmatpush1.msra.mxu0 0.0
    %1539 = vmatprep.subr.mxu0 0.0
    %1540 = vmatpush1.msra.mxu0 0.0
    %1541 = vmatprep.subr.mxu0 0.0
    %1542 = vmatpush1.msra.mxu0 0.0
    %1543 = vmatprep.subr.mxu0 0.0
    %1544 = vmatpush1.msra.mxu0 0.0
    %1545 = vmatprep.subr.mxu0 0.0
    %1546 = vmatpush1.msra.mxu0 0.0
    %1547 = vmatprep.subr.mxu0 0.0
    %1548 = vmatpush1.msra.mxu0 0.0
    %1549 = vmatprep.mubr.f32.mxu0 0.0
    %1550 = vmatmul.mubr.f32.gmra.mrb[0].mxu0 %v1483
    %v1551 = vpop.f32.mrb[0].mxu0
    %v1552 = vadd.f32 0.0, %v1551
    %v1553 = vpop.f32.mrb[0].mxu0
    %1554 = vdwg.mxu0
    %v1556 = vsel %vm1247, %v1331, 0
    %1558 = vmatprep.subr.mxu0 0.0
    %1559 = vmatpush1.msra.mxu0 %v682
    %1560 = vmatprep.subr.mxu0 0.0
    %1561 = vmatpush1.msra.mxu0 0.0
    %1562 = vmatprep.subr.mxu0 0.0
    %1563 = vmatpush1.msra.mxu0 0.0
    %1564 = vmatprep.subr.mxu0 0.0
    %1565 = vmatpush1.msra.mxu0 0.0
    %1566 = vmatprep.subr.mxu0 0.0
    %1567 = vmatpush1.msra.mxu0 0.0
    %1568 = vmatprep.subr.mxu0 0.0
    %1569 = vmatpush1.msra.mxu0 0.0
    %1570 = vmatprep.subr.mxu0 0.0
    %1571 = vmatpush1.msra.mxu0 0.0
    %1572 = vmatprep.subr.mxu0 0.0
    %1573 = vmatpush1.msra.mxu0 0.0
    %1574 = vmatprep.subr.mxu0 0.0
    %1575 = vmatpush1.msra.mxu0 0.0
    %1576 = vmatprep.subr.mxu0 0.0
    %1577 = vmatpush1.msra.mxu0 0.0
    %1578 = vmatprep.subr.mxu0 0.0
    %1579 = vmatpush1.msra.mxu0 0.0
    %1580 = vmatprep.subr.mxu0 0.0
    %1581 = vmatpush1.msra.mxu0 0.0
    %1582 = vmatprep.subr.mxu0 0.0
    %1583 = vmatpush1.msra.mxu0 0.0
    %1584 = vmatprep.subr.mxu0 0.0
    %1585 = vmatpush1.msra.mxu0 0.0
    %1586 = vmatprep.subr.mxu0 0.0
    %1587 = vmatpush1.msra.mxu0 0.0
    %1588 = vmatprep.subr.mxu0 0.0
    %1589 = vmatpush1.msra.mxu0 0.0
    %1590 = vmatprep.subr.mxu0 0.0
    %1591 = vmatpush1.msra.mxu0 0.0
    %1592 = vmatprep.subr.mxu0 0.0
    %1593 = vmatpush1.msra.mxu0 0.0
    %1594 = vmatprep.subr.mxu0 0.0
    %1595 = vmatpush1.msra.mxu0 0.0
    %1596 = vmatprep.subr.mxu0 0.0
    %1597 = vmatpush1.msra.mxu0 0.0
    %1598 = vmatprep.subr.mxu0 0.0
    %1599 = vmatpush1.msra.mxu0 0.0
    %1600 = vmatprep.subr.mxu0 0.0
    %1601 = vmatpush1.msra.mxu0 0.0
    %1602 = vmatprep.subr.mxu0 0.0
    %1603 = vmatpush1.msra.mxu0 0.0
    %1604 = vmatprep.subr.mxu0 0.0
    %1605 = vmatpush1.msra.mxu0 0.0
    %1606 = vmatprep.subr.mxu0 0.0
    %1607 = vmatpush1.msra.mxu0 0.0
    %1608 = vmatprep.subr.mxu0 0.0
    %1609 = vmatpush1.msra.mxu0 0.0
    %1610 = vmatprep.subr.mxu0 0.0
    %1611 = vmatpush1.msra.mxu0 0.0
    %1612 = vmatprep.subr.mxu0 0.0
    %1613 = vmatpush1.msra.mxu0 0.0
    %1614 = vmatprep.subr.mxu0 0.0
    %1615 = vmatpush1.msra.mxu0 0.0
    %1616 = vmatprep.subr.mxu0 0.0
    %1617 = vmatpush1.msra.mxu0 0.0
    %1618 = vmatprep.subr.mxu0 0.0
    %1619 = vmatpush1.msra.mxu0 0.0
    %1620 = vmatprep.subr.mxu0 0.0
    %1621 = vmatpush1.msra.mxu0 0.0
    %1622 = vmatprep.mubr.f32.mxu0 0.0
    %1623 = vmatmul.mubr.f32.gmra.mrb[0].mxu0 %v1556
    %v1624 = vpop.f32.mrb[0].mxu0
    %v1625 = vadd.f32 0.0, %v1624
    %v1626 = vpop.f32.mrb[0].mxu0
    %1627 = vdwg.mxu0
    %v1629 = vsel %vm1247, %v1332, 0
    %1631 = vmatprep.subr.mxu0 0.0
    %1632 = vmatpush1.msra.mxu0 %v683
    %1633 = vmatprep.subr.mxu0 0.0
    %1634 = vmatpush1.msra.mxu0 0.0
    %1635 = vmatprep.subr.mxu0 0.0
    %1636 = vmatpush1.msra.mxu0 0.0
    %1637 = vmatprep.subr.mxu0 0.0
    %1638 = vmatpush1.msra.mxu0 0.0
    %1639 = vmatprep.subr.mxu0 0.0
    %1640 = vmatpush1.msra.mxu0 0.0
    %1641 = vmatprep.subr.mxu0 0.0
    %1642 = vmatpush1.msra.mxu0 0.0
    %1643 = vmatprep.subr.mxu0 0.0
    %1644 = vmatpush1.msra.mxu0 0.0
    %1645 = vmatprep.subr.mxu0 0.0
    %1646 = vmatpush1.msra.mxu0 0.0
    %1647 = vmatprep.subr.mxu0 0.0
    %1648 = vmatpush1.msra.mxu0 0.0
    %1649 = vmatprep.subr.mxu0 0.0
    %1650 = vmatpush1.msra.mxu0 0.0
    %1651 = vmatprep.subr.mxu0 0.0
    %1652 = vmatpush1.msra.mxu0 0.0
    %1653 = vmatprep.subr.mxu0 0.0
    %1654 = vmatpush1.msra.mxu0 0.0
    %1655 = vmatprep.subr.mxu0 0.0
    %1656 = vmatpush1.msra.mxu0 0.0
    %1657 = vmatprep.subr.mxu0 0.0
    %1658 = vmatpush1.msra.mxu0 0.0
    %1659 = vmatprep.subr.mxu0 0.0
    %1660 = vmatpush1.msra.mxu0 0.0
    %1661 = vmatprep.subr.mxu0 0.0
    %1662 = vmatpush1.msra.mxu0 0.0
    %1663 = vmatprep.subr.mxu0 0.0
    %1664 = vmatpush1.msra.mxu0 0.0
    %1665 = vmatprep.subr.mxu0 0.0
    %1666 = vmatpush1.msra.mxu0 0.0
    %1667 = vmatprep.subr.mxu0 0.0
    %1668 = vmatpush1.msra.mxu0 0.0
    %1669 = vmatprep.subr.mxu0 0.0
    %1670 = vmatpush1.msra.mxu0 0.0
    %1671 = vmatprep.subr.mxu0 0.0
    %1672 = vmatpush1.msra.mxu0 0.0
    %1673 = vmatprep.subr.mxu0 0.0
    %1674 = vmatpush1.msra.mxu0 0.0
    %1675 = vmatprep.subr.mxu0 0.0
    %1676 = vmatpush1.msra.mxu0 0.0
    %1677 = vmatprep.subr.mxu0 0.0
    %1678 = vmatpush1.msra.mxu0 0.0
    %1679 = vmatprep.subr.mxu0 0.0
    %1680 = vmatpush1.msra.mxu0 0.0
    %1681 = vmatprep.subr.mxu0 0.0
    %1682 = vmatpush1.msra.mxu0 0.0
    %1683 = vmatprep.subr.mxu0 0.0
    %1684 = vmatpush1.msra.mxu0 0.0
    %1685 = vmatprep.subr.mxu0 0.0
    %1686 = vmatpush1.msra.mxu0 0.0
    %1687 = vmatprep.subr.mxu0 0.0
    %1688 = vmatpush1.msra.mxu0 0.0
    %1689 = vmatprep.subr.mxu0 0.0
    %1690 = vmatpush1.msra.mxu0 0.0
    %1691 = vmatprep.subr.mxu0 0.0
    %1692 = vmatpush1.msra.mxu0 0.0
    %1693 = vmatprep.subr.mxu0 0.0
    %1694 = vmatpush1.msra.mxu0 0.0
    %1695 = vmatprep.mubr.f32.mxu0 0.0
    %1696 = vmatmul.mubr.f32.gmra.mrb[0].mxu0 %v1629
    %v1697 = vpop.f32.mrb[0].mxu0
    %v1698 = vadd.f32 0.0, %v1697
    %v1699 = vpop.f32.mrb[0].mxu0
    %1700 = vdwg.mxu0
    %v1702 = vsel %vm1247, %v1333, 0
    %1704 = vmatprep.subr.mxu0 0.0
    %1705 = vmatpush1.msra.mxu0 %v684
    %1706 = vmatprep.subr.mxu0 0.0
    %1707 = vmatpush1.msra.mxu0 0.0
    %1708 = vmatprep.subr.mxu0 0.0
    %1709 = vmatpush1.msra.mxu0 0.0
    %1710 = vmatprep.subr.mxu0 0.0
    %1711 = vmatpush1.msra.mxu0 0.0
    %1712 = vmatprep.subr.mxu0 0.0
    %1713 = vmatpush1.msra.mxu0 0.0
    %1714 = vmatprep.subr.mxu0 0.0
    %1715 = vmatpush1.msra.mxu0 0.0
    %1716 = vmatprep.subr.mxu0 0.0
    %1717 = vmatpush1.msra.mxu0 0.0
    %1718 = vmatprep.subr.mxu0 0.0
    %1719 = vmatpush1.msra.mxu0 0.0
    %1720 = vmatprep.subr.mxu0 0.0
    %1721 = vmatpush1.msra.mxu0 0.0
    %1722 = vmatprep.subr.mxu0 0.0
    %1723 = vmatpush1.msra.mxu0 0.0
    %1724 = vmatprep.subr.mxu0 0.0
    %1725 = vmatpush1.msra.mxu0 0.0
    %1726 = vmatprep.subr.mxu0 0.0
    %1727 = vmatpush1.msra.mxu0 0.0
    %1728 = vmatprep.subr.mxu0 0.0
    %1729 = vmatpush1.msra.mxu0 0.0
    %1730 = vmatprep.subr.mxu0 0.0
    %1731 = vmatpush1.msra.mxu0 0.0
    %1732 = vmatprep.subr.mxu0 0.0
    %1733 = vmatpush1.msra.mxu0 0.0
    %1734 = vmatprep.subr.mxu0 0.0
    %1735 = vmatpush1.msra.mxu0 0.0
    %1736 = vmatprep.subr.mxu0 0.0
    %1737 = vmatpush1.msra.mxu0 0.0
    %1738 = vmatprep.subr.mxu0 0.0
    %1739 = vmatpush1.msra.mxu0 0.0
    %1740 = vmatprep.subr.mxu0 0.0
    %1741 = vmatpush1.msra.mxu0 0.0
    %1742 = vmatprep.subr.mxu0 0.0
    %1743 = vmatpush1.msra.mxu0 0.0
    %1744 = vmatprep.subr.mxu0 0.0
    %1745 = vmatpush1.msra.mxu0 0.0
    %1746 = vmatprep.subr.mxu0 0.0
    %1747 = vmatpush1.msra.mxu0 0.0
    %1748 = vmatprep.subr.mxu0 0.0
    %1749 = vmatpush1.msra.mxu0 0.0
    %1750 = vmatprep.subr.mxu0 0.0
    %1751 = vmatpush1.msra.mxu0 0.0
    %1752 = vmatprep.subr.mxu0 0.0
    %1753 = vmatpush1.msra.mxu0 0.0
    %1754 = vmatprep.subr.mxu0 0.0
    %1755 = vmatpush1.msra.mxu0 0.0
    %1756 = vmatprep.subr.mxu0 0.0
    %1757 = vmatpush1.msra.mxu0 0.0
    %1758 = vmatprep.subr.mxu0 0.0
    %1759 = vmatpush1.msra.mxu0 0.0
    %1760 = vmatprep.subr.mxu0 0.0
    %1761 = vmatpush1.msra.mxu0 0.0
    %1762 = vmatprep.subr.mxu0 0.0
    %1763 = vmatpush1.msra.mxu0 0.0
    %1764 = vmatprep.subr.mxu0 0.0
    %1765 = vmatpush1.msra.mxu0 0.0
    %1766 = vmatprep.subr.mxu0 0.0
    %1767 = vmatpush1.msra.mxu0 0.0
    %1768 = vmatprep.mubr.f32.mxu0 0.0
    %1769 = vmatmul.mubr.f32.gmra.mrb[0].mxu0 %v1702
    %v1770 = vpop.f32.mrb[0].mxu0
    %v1771 = vadd.f32 0.0, %v1770
    %v1772 = vpop.f32.mrb[0].mxu0
    %1773 = vdwg.mxu0
    %v1775 = vsel %vm1247, %v1334, 0
    %1777 = vmatprep.subr.mxu0 0.0
    %1778 = vmatpush1.msra.mxu0 %v685
    %1779 = vmatprep.subr.mxu0 0.0
    %1780 = vmatpush1.msra.mxu0 0.0
    %1781 = vmatprep.subr.mxu0 0.0
    %1782 = vmatpush1.msra.mxu0 0.0
    %1783 = vmatprep.subr.mxu0 0.0
    %1784 = vmatpush1.msra.mxu0 0.0
    %1785 = vmatprep.subr.mxu0 0.0
    %1786 = vmatpush1.msra.mxu0 0.0
    %1787 = vmatprep.subr.mxu0 0.0
    %1788 = vmatpush1.msra.mxu0 0.0
    %1789 = vmatprep.subr.mxu0 0.0
    %1790 = vmatpush1.msra.mxu0 0.0
    %1791 = vmatprep.subr.mxu0 0.0
    %1792 = vmatpush1.msra.mxu0 0.0
    %1793 = vmatprep.subr.mxu0 0.0
    %1794 = vmatpush1.msra.mxu0 0.0
    %1795 = vmatprep.subr.mxu0 0.0
    %1796 = vmatpush1.msra.mxu0 0.0
    %1797 = vmatprep.subr.mxu0 0.0
    %1798 = vmatpush1.msra.mxu0 0.0
    %1799 = vmatprep.subr.mxu0 0.0
    %1800 = vmatpush1.msra.mxu0 0.0
    %1801 = vmatprep.subr.mxu0 0.0
    %1802 = vmatpush1.msra.mxu0 0.0
    %1803 = vmatprep.subr.mxu0 0.0
    %1804 = vmatpush1.msra.mxu0 0.0
    %1805 = vmatprep.subr.mxu0 0.0
    %1806 = vmatpush1.msra.mxu0 0.0
    %1807 = vmatprep.subr.mxu0 0.0
    %1808 = vmatpush1.msra.mxu0 0.0
    %1809 = vmatprep.subr.mxu0 0.0
    %1810 = vmatpush1.msra.mxu0 0.0
    %1811 = vmatprep.subr.mxu0 0.0
    %1812 = vmatpush1.msra.mxu0 0.0
    %1813 = vmatprep.subr.mxu0 0.0
    %1814 = vmatpush1.msra.mxu0 0.0
    %1815 = vmatprep.subr.mxu0 0.0
    %1816 = vmatpush1.msra.mxu0 0.0
    %1817 = vmatprep.subr.mxu0 0.0
    %1818 = vmatpush1.msra.mxu0 0.0
    %1819 = vmatprep.subr.mxu0 0.0
    %1820 = vmatpush1.msra.mxu0 0.0
    %1821 = vmatprep.subr.mxu0 0.0
    %1822 = vmatpush1.msra.mxu0 0.0
    %1823 = vmatprep.subr.mxu0 0.0
    %1824 = vmatpush1.msra.mxu0 0.0
    %1825 = vmatprep.subr.mxu0 0.0
    %1826 = vmatpush1.msra.mxu0 0.0
    %1827 = vmatprep.subr.mxu0 0.0
    %1828 = vmatpush1.msra.mxu0 0.0
    %1829 = vmatprep.subr.mxu0 0.0
    %1830 = vmatpush1.msra.mxu0 0.0
    %1831 = vmatprep.subr.mxu0 0.0
    %1832 = vmatpush1.msra.mxu0 0.0
    %1833 = vmatprep.subr.mxu0 0.0
    %1834 = vmatpush1.msra.mxu0 0.0
    %1835 = vmatprep.subr.mxu0 0.0
    %1836 = vmatpush1.msra.mxu0 0.0
    %1837 = vmatprep.subr.mxu0 0.0
    %1838 = vmatpush1.msra.mxu0 0.0
    %1839 = vmatprep.subr.mxu0 0.0
    %1840 = vmatpush1.msra.mxu0 0.0
    %1841 = vmatprep.mubr.f32.mxu0 0.0
    %1842 = vmatmul.mubr.f32.gmra.mrb[0].mxu0 %v1775
    %v1843 = vpop.f32.mrb[0].mxu0
    %v1844 = vadd.f32 0.0, %v1843
    %v1845 = vpop.f32.mrb[0].mxu0
    %1846 = vdwg.mxu0
    %v1848 = vsel %vm1247, %v1335, 0
    %1850 = vmatprep.subr.mxu0 0.0
    %1851 = vmatpush1.msra.mxu0 %v686
    %1852 = vmatprep.subr.mxu0 0.0
    %1853 = vmatpush1.msra.mxu0 0.0
    %1854 = vmatprep.subr.mxu0 0.0
    %1855 = vmatpush1.msra.mxu0 0.0
    %1856 = vmatprep.subr.mxu0 0.0
    %1857 = vmatpush1.msra.mxu0 0.0
    %1858 = vmatprep.subr.mxu0 0.0
    %1859 = vmatpush1.msra.mxu0 0.0
    %1860 = vmatprep.subr.mxu0 0.0
    %1861 = vmatpush1.msra.mxu0 0.0
    %1862 = vmatprep.subr.mxu0 0.0
    %1863 = vmatpush1.msra.mxu0 0.0
    %1864 = vmatprep.subr.mxu0 0.0
    %1865 = vmatpush1.msra.mxu0 0.0
    %1866 = vmatprep.subr.mxu0 0.0
    %1867 = vmatpush1.msra.mxu0 0.0
    %1868 = vmatprep.subr.mxu0 0.0
    %1869 = vmatpush1.msra.mxu0 0.0
    %1870 = vmatprep.subr.mxu0 0.0
    %1871 = vmatpush1.msra.mxu0 0.0
    %1872 = vmatprep.subr.mxu0 0.0
    %1873 = vmatpush1.msra.mxu0 0.0
    %1874 = vmatprep.subr.mxu0 0.0
    %1875 = vmatpush1.msra.mxu0 0.0
    %1876 = vmatprep.subr.mxu0 0.0
    %1877 = vmatpush1.msra.mxu0 0.0
    %1878 = vmatprep.subr.mxu0 0.0
    %1879 = vmatpush1.msra.mxu0 0.0
    %1880 = vmatprep.subr.mxu0 0.0
    %1881 = vmatpush1.msra.mxu0 0.0
    %1882 = vmatprep.subr.mxu0 0.0
    %1883 = vmatpush1.msra.mxu0 0.0
    %1884 = vmatprep.subr.mxu0 0.0
    %1885 = vmatpush1.msra.mxu0 0.0
    %1886 = vmatprep.subr.mxu0 0.0
    %1887 = vmatpush1.msra.mxu0 0.0
    %1888 = vmatprep.subr.mxu0 0.0
    %1889 = vmatpush1.msra.mxu0 0.0
    %1890 = vmatprep.subr.mxu0 0.0
    %1891 = vmatpush1.msra.mxu0 0.0
    %1892 = vmatprep.subr.mxu0 0.0
    %1893 = vmatpush1.msra.mxu0 0.0
    %1894 = vmatprep.subr.mxu0 0.0
    %1895 = vmatpush1.msra.mxu0 0.0
    %1896 = vmatprep.subr.mxu0 0.0
    %1897 = vmatpush1.msra.mxu0 0.0
    %1898 = vmatprep.subr.mxu0 0.0
    %1899 = vmatpush1.msra.mxu0 0.0
    %1900 = vmatprep.subr.mxu0 0.0
    %1901 = vmatpush1.msra.mxu0 0.0
    %1902 = vmatprep.subr.mxu0 0.0
    %1903 = vmatpush1.msra.mxu0 0.0
    %1904 = vmatprep.subr.mxu0 0.0
    %1905 = vmatpush1.msra.mxu0 0.0
    %1906 = vmatprep.subr.mxu0 0.0
    %1907 = vmatpush1.msra.mxu0 0.0
    %1908 = vmatprep.subr.mxu0 0.0
    %1909 = vmatpush1.msra.mxu0 0.0
    %1910 = vmatprep.subr.mxu0 0.0
    %1911 = vmatpush1.msra.mxu0 0.0
    %1912 = vmatprep.subr.mxu0 0.0
    %1913 = vmatpush1.msra.mxu0 0.0
    %1914 = vmatprep.mubr.f32.mxu0 0.0
    %1915 = vmatmul.mubr.f32.gmra.mrb[0].mxu0 %v1848
    %v1916 = vpop.f32.mrb[0].mxu0
    %v1917 = vadd.f32 0.0, %v1916
    %v1918 = vpop.f32.mrb[0].mxu0
    %1919 = vdwg.mxu0
    %v1920 = vadd.f32 %v1406, %v1479
    %v1921 = vadd.f32 %v1920, %v1552
    %v1922 = vadd.f32 %v1921, %v1625
    %v1923 = vadd.f32 %v1698, %v1771
    %v1924 = vadd.f32 %v1923, %v1844
    %v1925 = vadd.f32 %v1924, %v1917
    %v1926 = vpack.c.bf16 %v1925, %v1922
    %v1927 = vld [vmem:[#allocation11] sm:$0xf]
    %v1928 = vld [vmem:[#allocation11 + $0x4] sm:$0xf]
    %v1929 = vld [vmem:[#allocation11 + $0x8] sm:$0xf]
    %v1930 = vld [vmem:[#allocation11 + $0xc] sm:$0xf]
    %v1931 = vld [vmem:[#allocation11 + $0x10] sm:$0xf]
    %v1932 = vld [vmem:[#allocation11 + $0x14] sm:$0xf]
    %v1933 = vld [vmem:[#allocation11 + $0x18] sm:$0xf]
    %v1934 = vld [vmem:[#allocation11 + $0x1c] sm:$0xf]
    %v1935 = vld [vmem:[#allocation11 + $0x20] sm:$0xf]
    %v1936 = vld [vmem:[#allocation11 + $0x24] sm:$0xf]
    %v1937 = vld [vmem:[#allocation11 + $0x28] sm:$0xf]
    %v1938 = vld [vmem:[#allocation11 + $0x2c] sm:$0xf]
    %v1939 = vld [vmem:[#allocation11 + $0x30] sm:$0xf]
    %v1940 = vld [vmem:[#allocation11 + $0x34] sm:$0xf]
    %v1941 = vld [vmem:[#allocation11 + $0x38] sm:$0xf]
    %v1942 = vld [vmem:[#allocation11 + $0x3c] sm:$0xf]
    %v1943 = vld [vmem:[%s11] sm:$0x1]
    %v1945 = vlaneseq
    %v1946 = vshrl.u32 %v1945, 7
    %v1947 = vsub.s32 0, %v1946
    %v1948 = vrot.slane %v1943, %v1947
    %v1966 = vunpack.c.l.b16 %v1927
    %v1967 = vunpack.c.l.b16 %v1928
    %v1968 = vunpack.c.l.b16 %v1929
    %v1969 = vunpack.c.l.b16 %v1930
    %v1970 = vunpack.c.l.b16 %v1931
    %v1971 = vunpack.c.l.b16 %v1932
    %v1972 = vunpack.c.l.b16 %v1933
    %v1973 = vunpack.c.l.b16 %v1934
    %v1974 = vunpack.c.l.b16 %v1935
    %v1975 = vunpack.c.l.b16 %v1936
    %v1976 = vunpack.c.l.b16 %v1937
    %v1977 = vunpack.c.l.b16 %v1938
    %v1978 = vunpack.c.l.b16 %v1939
    %v1979 = vunpack.c.l.b16 %v1940
    %v1980 = vunpack.c.l.b16 %v1941
    %v1981 = vunpack.c.l.b16 %v1942
    %v1982 = vpack.c.b16 %v1967, %v1966
    %v1983 = vpack.c.b16 %v1969, %v1968
    %v1984 = vpack.c.b16 %v1971, %v1970
    %v1985 = vpack.c.b16 %v1973, %v1972
    %v1986 = vpack.c.b16 %v1975, %v1974
    %v1987 = vpack.c.b16 %v1977, %v1976
    %v1988 = vpack.c.b16 %v1979, %v1978
    %v1989 = vpack.c.b16 %v1981, %v1980
    %1998 = vmatprep.subr.bf16.mxu0 0
    %1999 = vmatpush1.bf16.msra.mxu0 %v1982
    %2000 = vmatprep.subr.bf16.mxu0 0
    %2001 = vmatpush1.bf16.msra.mxu0 %v1983
    %2002 = vmatprep.subr.bf16.mxu0 0
    %2003 = vmatpush1.bf16.msra.mxu0 %v1984
    %2004 = vmatprep.subr.bf16.mxu0 0
    %2005 = vmatpush1.bf16.msra.mxu0 %v1985
    %2006 = vmatprep.subr.bf16.mxu0 0
    %2007 = vmatpush1.bf16.msra.mxu0 %v1986
    %2008 = vmatprep.subr.bf16.mxu0 0
    %2009 = vmatpush1.bf16.msra.mxu0 %v1987
    %2010 = vmatprep.subr.bf16.mxu0 0
    %2011 = vmatpush1.bf16.msra.mxu0 %v1988
    %2012 = vmatprep.subr.bf16.mxu0 0
    %2013 = vmatpush1.bf16.msra.mxu0 %v1989
    %2014 = vmatprep.subr.bf16.mxu0 0
    %2015 = vmatpush1.bf16.msra.mxu0 0
    %2016 = vmatprep.subr.bf16.mxu0 0
    %2017 = vmatpush1.bf16.msra.mxu0 0
    %2018 = vmatprep.subr.bf16.mxu0 0
    %2019 = vmatpush1.bf16.msra.mxu0 0
    %2020 = vmatprep.subr.bf16.mxu0 0
    %2021 = vmatpush1.bf16.msra.mxu0 0
    %2022 = vmatprep.subr.bf16.mxu0 0
    %2023 = vmatpush1.bf16.msra.mxu0 0
    %2024 = vmatprep.subr.bf16.mxu0 0
    %2025 = vmatpush1.bf16.msra.mxu0 0
    %2026 = vmatprep.subr.bf16.mxu0 0
    %2027 = vmatpush1.bf16.msra.mxu0 0
    %2028 = vmatprep.subr.bf16.mxu0 0
    %2029 = vmatpush1.bf16.msra.mxu0 0
    %2030 = vmatprep.mubr.bf16.mxu0 0
    %2031 = vmatmul.mubr.bf16.gmra.mrb[0].mxu0 %v1926
    %v2032 = vpop.f32.mrb[0].mxu0
    %v2033 = vadd.f32 %v1948, %v2032
    %v2034 = vpop.f32.mrb[0].mxu0
    %v2035 = vpop.f32.mrb[0].mxu0
    %v2036 = vadd.f32 %v1948, %v2035
    %v2037 = vpop.f32.mrb[0].mxu0
    %2038 = vdwg.mxu0
    %v2039 = vadd.f32 %v287, %v2033
    %v2040 = vadd.f32 %v288, %v2036
    %v2041 = vld [vmem:[%s16] sm:$0x1]
    %v2042 = vld [vmem:[%s17] sm:$0x1]
    %2043 = vadd.xlane.f32.xlu0 %v2039
    %v2044 = vpop.xlane.xlu0 %2043
    %2045 = vadd.xlane.f32.xlu0 %v2040
    %v2046 = vpop.xlane.xlu0 %2045
    %v2047 = vmul.f32 %v2044, 0.03125
    %v2048 = vmul.f32 %v2046, 0.03125
    %v2049 = vsub.f32 %v2039, %v2047
    %v2050 = vsub.f32 %v2040, %v2048
    %v2051 = vmul.f32 %v2049, %v199
    %v2052 = vmul.f32 %v2050, %v199
    %v2053 = vmul.f32 %v2051, %v2051
    %v2054 = vmul.f32 %v2052, %v2052
    %2055 = vadd.xlane.f32.xlu0 %v2053
    %v2056 = vpop.xlane.xlu0 %2055
    %2057 = vadd.xlane.f32.xlu0 %v2054
    %v2058 = vpop.xlane.xlu0 %2057
    %v2059 = vmul.f32 %v2056, 0.03125
    %v2060 = vmul.f32 %v2058, 0.03125
    %v2061 = vadd.f32 %v2059, 1e-05
    %v2062 = vadd.f32 %v2060, 1e-05
    %v2063 = vrsqrt.pop %v2061
    %v2064 = vrsqrt.pop %v2062
    %v2065 = vmul.f32 %v2051, %v2063
    %v2066 = vmul.f32 %v2052, %v2064
    %v2068 = vlaneseq
    %v2069 = vshrl.u32 %v2068, 7
    %v2070 = vsub.s32 0, %v2069
    %v2071 = vrot.slane %v2041, %v2070
    %v2073 = vmul.f32 %v2065, %v2071
    %v2074 = vmul.f32 %v2066, %v2071
    %v2076 = vlaneseq
    %v2077 = vshrl.u32 %v2076, 7
    %v2078 = vsub.s32 0, %v2077
    %v2079 = vrot.slane %v2042, %v2078
    %v2081 = vadd.f32 %v2073, %v2079
    %v2082 = vadd.f32 %v2074, %v2079
    %v2083 = vpack.c.bf16 %v2082, %v2081
    %v2084 = vld [vmem:[#allocation13] sm:$0xff]
    %v2085 = vld [vmem:[#allocation13 + $0x8] sm:$0xff]
    %v2086 = vld [vmem:[#allocation13 + $0x10] sm:$0xff]
    %v2087 = vld [vmem:[#allocation13 + $0x18] sm:$0xff]
    %v2088 = vld [vmem:[#allocation13 + $0x20] sm:$0xff]
    %v2089 = vld [vmem:[#allocation13 + $0x28] sm:$0xff]
    %v2090 = vld [vmem:[#allocation13 + $0x30] sm:$0xff]
    %v2091 = vld [vmem:[#allocation13 + $0x38] sm:$0xff]
    %v2092 = vld [vmem:[#allocation13 + $0x40] sm:$0xff]
    %v2093 = vld [vmem:[#allocation13 + $0x48] sm:$0xff]
    %v2094 = vld [vmem:[#allocation13 + $0x50] sm:$0xff]
    %v2095 = vld [vmem:[#allocation13 + $0x58] sm:$0xff]
    %v2096 = vld [vmem:[#allocation13 + $0x60] sm:$0xff]
    %v2097 = vld [vmem:[#allocation13 + $0x68] sm:$0xff]
    %v2098 = vld [vmem:[#allocation13 + $0x70] sm:$0xff]
    %v2099 = vld [vmem:[#allocation13 + $0x78] sm:$0xff]
    %v2100 = vld [vmem:[#allocation13 + $0x80] sm:$0xff]
    %v2101 = vld [vmem:[#allocation13 + $0x88] sm:$0xff]
    %v2102 = vld [vmem:[#allocation13 + $0x90] sm:$0xff]
    %v2103 = vld [vmem:[#allocation13 + $0x98] sm:$0xff]
    %v2104 = vld [vmem:[#allocation13 + $0xa0] sm:$0xff]
    %v2105 = vld [vmem:[#allocation13 + $0xa8] sm:$0xff]
    %v2106 = vld [vmem:[#allocation13 + $0xb0] sm:$0xff]
    %v2107 = vld [vmem:[#allocation13 + $0xb8] sm:$0xff]
    %v2108 = vld [vmem:[#allocation13 + $0xc0] sm:$0xff]
    %v2109 = vld [vmem:[#allocation13 + $0xc8] sm:$0xff]
    %v2110 = vld [vmem:[#allocation13 + $0xd0] sm:$0xff]
    %v2111 = vld [vmem:[#allocation13 + $0xd8] sm:$0xff]
    %v2112 = vld [vmem:[#allocation13 + $0xe0] sm:$0xff]
    %v2113 = vld [vmem:[#allocation13 + $0xe8] sm:$0xff]
    %v2114 = vld [vmem:[#allocation13 + $0xf0] sm:$0xff]
    %v2115 = vld [vmem:[#allocation13 + $0xf8] sm:$0xff]
    %v2116 = vld [vmem:[#allocation13 + $0x100] sm:$0xff]
    %v2117 = vld [vmem:[#allocation13 + $0x108] sm:$0xff]
    %v2118 = vld [vmem:[#allocation13 + $0x110] sm:$0xff]
    %v2119 = vld [vmem:[#allocation13 + $0x118] sm:$0xff]
    %v2120 = vld [vmem:[#allocation13 + $0x120] sm:$0xff]
    %v2121 = vld [vmem:[#allocation13 + $0x128] sm:$0xff]
    %v2122 = vld [vmem:[#allocation13 + $0x130] sm:$0xff]
    %v2123 = vld [vmem:[#allocation13 + $0x138] sm:$0xff]
    %v2124 = vld [vmem:[#allocation13 + $0x140] sm:$0xff]
    %v2125 = vld [vmem:[#allocation13 + $0x148] sm:$0xff]
    %v2126 = vld [vmem:[#allocation13 + $0x150] sm:$0xff]
    %v2127 = vld [vmem:[#allocation13 + $0x158] sm:$0xff]
    %v2128 = vld [vmem:[#allocation13 + $0x160] sm:$0xff]
    %v2129 = vld [vmem:[#allocation13 + $0x168] sm:$0xff]
    %v2130 = vld [vmem:[#allocation13 + $0x170] sm:$0xff]
    %v2131 = vld [vmem:[#allocation13 + $0x178] sm:$0xff]
    %v2132 = vld [vmem:[#allocation13 + $0x180] sm:$0xff]
    %v2133 = vld [vmem:[#allocation13 + $0x188] sm:$0xff]
    %v2134 = vld [vmem:[#allocation13 + $0x190] sm:$0xff]
    %v2135 = vld [vmem:[#allocation13 + $0x198] sm:$0xff]
    %v2136 = vld [vmem:[#allocation13 + $0x1a0] sm:$0xff]
    %v2137 = vld [vmem:[#allocation13 + $0x1a8] sm:$0xff]
    %v2138 = vld [vmem:[#allocation13 + $0x1b0] sm:$0xff]
    %v2139 = vld [vmem:[#allocation13 + $0x1b8] sm:$0xff]
    %v2140 = vld [vmem:[#allocation13 + $0x1c0] sm:$0xff]
    %v2141 = vld [vmem:[#allocation13 + $0x1c8] sm:$0xff]
    %v2142 = vld [vmem:[#allocation13 + $0x1d0] sm:$0xff]
    %v2143 = vld [vmem:[#allocation13 + $0x1d8] sm:$0xff]
    %v2144 = vld [vmem:[#allocation13 + $0x1e0] sm:$0xff]
    %v2145 = vld [vmem:[#allocation13 + $0x1e8] sm:$0xff]
    %v2146 = vld [vmem:[#allocation13 + $0x1f0] sm:$0xff]
    %v2147 = vld [vmem:[#allocation13 + $0x1f8] sm:$0xff]
    %v2148 = vld [vmem:[#allocation13 + $0x200] sm:$0xff]
    %v2149 = vld [vmem:[#allocation13 + $0x208] sm:$0xff]
    %v2150 = vld [vmem:[#allocation13 + $0x210] sm:$0xff]
    %v2151 = vld [vmem:[#allocation13 + $0x218] sm:$0xff]
    %v2152 = vld [vmem:[#allocation13 + $0x220] sm:$0xff]
    %v2153 = vld [vmem:[#allocation13 + $0x228] sm:$0xff]
    %v2154 = vld [vmem:[#allocation13 + $0x230] sm:$0xff]
    %v2155 = vld [vmem:[#allocation13 + $0x238] sm:$0xff]
    %v2156 = vld [vmem:[#allocation13 + $0x240] sm:$0xff]
    %v2157 = vld [vmem:[#allocation13 + $0x248] sm:$0xff]
    %v2158 = vld [vmem:[#allocation13 + $0x250] sm:$0xff]
    %v2159 = vld [vmem:[#allocation13 + $0x258] sm:$0xff]
    %v2160 = vld [vmem:[#allocation13 + $0x260] sm:$0xff]
    %v2161 = vld [vmem:[#allocation13 + $0x268] sm:$0xff]
    %v2162 = vld [vmem:[#allocation13 + $0x270] sm:$0xff]
    %v2163 = vld [vmem:[#allocation13 + $0x278] sm:$0xff]
    %v2164 = vld [vmem:[#allocation13 + $0x280] sm:$0xff]
    %v2165 = vld [vmem:[#allocation13 + $0x288] sm:$0xff]
    %v2166 = vld [vmem:[#allocation13 + $0x290] sm:$0xff]
    %v2167 = vld [vmem:[#allocation13 + $0x298] sm:$0xff]
    %v2168 = vld [vmem:[#allocation13 + $0x2a0] sm:$0xff]
    %v2169 = vld [vmem:[#allocation13 + $0x2a8] sm:$0xff]
    %v2170 = vld [vmem:[#allocation13 + $0x2b0] sm:$0xff]
    %v2171 = vld [vmem:[#allocation13 + $0x2b8] sm:$0xff]
    %v2172 = vld [vmem:[#allocation13 + $0x2c0] sm:$0xff]
    %v2173 = vld [vmem:[#allocation13 + $0x2c8] sm:$0xff]
    %v2174 = vld [vmem:[#allocation13 + $0x2d0] sm:$0xff]
    %v2175 = vld [vmem:[#allocation13 + $0x2d8] sm:$0xff]
    %v2176 = vld [vmem:[#allocation13 + $0x2e0] sm:$0xff]
    %v2177 = vld [vmem:[#allocation13 + $0x2e8] sm:$0xff]
    %v2178 = vld [vmem:[#allocation13 + $0x2f0] sm:$0xff]
    %v2179 = vld [vmem:[#allocation13 + $0x2f8] sm:$0xff]
    %v2180 = vld [vmem:[#allocation13 + $0x300] sm:$0xff]
    %v2181 = vld [vmem:[#allocation13 + $0x308] sm:$0xff]
    %v2182 = vld [vmem:[#allocation13 + $0x310] sm:$0xff]
    %v2183 = vld [vmem:[#allocation13 + $0x318] sm:$0xff]
    %v2184 = vld [vmem:[#allocation13 + $0x320] sm:$0xff]
    %v2185 = vld [vmem:[#allocation13 + $0x328] sm:$0xff]
    %v2186 = vld [vmem:[#allocation13 + $0x330] sm:$0xff]
    %v2187 = vld [vmem:[#allocation13 + $0x338] sm:$0xff]
    %v2188 = vld [vmem:[#allocation13 + $0x340] sm:$0xff]
    %v2189 = vld [vmem:[#allocation13 + $0x348] sm:$0xff]
    %v2190 = vld [vmem:[#allocation13 + $0x350] sm:$0xff]
    %v2191 = vld [vmem:[#allocation13 + $0x358] sm:$0xff]
    %v2192 = vld [vmem:[#allocation13 + $0x360] sm:$0xff]
    %v2193 = vld [vmem:[#allocation13 + $0x368] sm:$0xff]
    %v2194 = vld [vmem:[#allocation13 + $0x370] sm:$0xff]
    %v2195 = vld [vmem:[#allocation13 + $0x378] sm:$0xff]
    %v2196 = vld [vmem:[#allocation13 + $0x380] sm:$0xff]
    %v2197 = vld [vmem:[#allocation13 + $0x388] sm:$0xff]
    %v2198 = vld [vmem:[#allocation13 + $0x390] sm:$0xff]
    %v2199 = vld [vmem:[#allocation13 + $0x398] sm:$0xff]
    %v2200 = vld [vmem:[#allocation13 + $0x3a0] sm:$0xff]
    %v2201 = vld [vmem:[#allocation13 + $0x3a8] sm:$0xff]
    %v2202 = vld [vmem:[#allocation13 + $0x3b0] sm:$0xff]
    %v2203 = vld [vmem:[#allocation13 + $0x3b8] sm:$0xff]
    %v2204 = vld [vmem:[#allocation13 + $0x3c0] sm:$0xff]
    %v2205 = vld [vmem:[#allocation13 + $0x3c8] sm:$0xff]
    %v2206 = vld [vmem:[#allocation13 + $0x3d0] sm:$0xff]
    %v2207 = vld [vmem:[#allocation13 + $0x3d8] sm:$0xff]
    %v2208 = vld [vmem:[#allocation13 + $0x3e0] sm:$0xff]
    %v2209 = vld [vmem:[#allocation13 + $0x3e8] sm:$0xff]
    %v2210 = vld [vmem:[#allocation13 + $0x3f0] sm:$0xff]
    %v2211 = vld [vmem:[#allocation13 + $0x3f8] sm:$0xff]
    %v2212 = vld [vmem:[%s13] sm:$0xff]
    %v2213 = vld [vmem:[%s13 + $0x8] sm:$0xff]
    %v2216 = vlaneseq
    %v2217 = vshrl.u32 %v2216, 7
    %v2218 = vsub.s32 0, %v2217
    %v2219 = vrot.slane %v2212, %v2218
    %v2220 = vlaneseq
    %v2221 = vshrl.u32 %v2220, 7
    %v2222 = vsub.s32 1, %v2221
    %v2223 = vrot.slane %v2212, %v2222
    %v2224 = vlaneseq
    %v2225 = vshrl.u32 %v2224, 7
    %v2226 = vsub.s32 2, %v2225
    %v2227 = vrot.slane %v2212, %v2226
    %v2228 = vlaneseq
    %v2229 = vshrl.u32 %v2228, 7
    %v2230 = vsub.s32 3, %v2229
    %v2231 = vrot.slane %v2212, %v2230
    %v2232 = vlaneseq
    %v2233 = vshrl.u32 %v2232, 7
    %v2234 = vsub.s32 4, %v2233
    %v2235 = vrot.slane %v2212, %v2234
    %v2236 = vlaneseq
    %v2237 = vshrl.u32 %v2236, 7
    %v2238 = vsub.s32 5, %v2237
    %v2239 = vrot.slane %v2212, %v2238
    %v2240 = vlaneseq
    %v2241 = vshrl.u32 %v2240, 7
    %v2242 = vsub.s32 6, %v2241
    %v2243 = vrot.slane %v2212, %v2242
    %v2244 = vlaneseq
    %v2245 = vshrl.u32 %v2244, 7
    %v2246 = vsub.s32 7, %v2245
    %v2247 = vrot.slane %v2212, %v2246
    %v2248 = vlaneseq
    %v2249 = vshrl.u32 %v2248, 7
    %v2250 = vsub.s32 0, %v2249
    %v2251 = vrot.slane %v2213, %v2250
    %v2252 = vlaneseq
    %v2253 = vshrl.u32 %v2252, 7
    %v2254 = vsub.s32 1, %v2253
    %v2255 = vrot.slane %v2213, %v2254
    %v2256 = vlaneseq
    %v2257 = vshrl.u32 %v2256, 7
    %v2258 = vsub.s32 2, %v2257
    %v2259 = vrot.slane %v2213, %v2258
    %v2260 = vlaneseq
    %v2261 = vshrl.u32 %v2260, 7
    %v2262 = vsub.s32 3, %v2261
    %v2263 = vrot.slane %v2213, %v2262
    %v2264 = vlaneseq
    %v2265 = vshrl.u32 %v2264, 7
    %v2266 = vsub.s32 4, %v2265
    %v2267 = vrot.slane %v2213, %v2266
    %v2268 = vlaneseq
    %v2269 = vshrl.u32 %v2268, 7
    %v2270 = vsub.s32 5, %v2269
    %v2271 = vrot.slane %v2213, %v2270
    %v2272 = vlaneseq
    %v2273 = vshrl.u32 %v2272, 7
    %v2274 = vsub.s32 6, %v2273
    %v2275 = vrot.slane %v2213, %v2274
    %v2276 = vlaneseq
    %v2277 = vshrl.u32 %v2276, 7
    %v2278 = vsub.s32 7, %v2277
    %v2279 = vrot.slane %v2213, %v2278
    %v2424 = vunpack.c.l.b16 %v2084
    %v2425 = vunpack.c.h.b16 %v2084
    %v2426 = vunpack.c.l.b16 %v2085
    %v2427 = vunpack.c.h.b16 %v2085
    %v2428 = vunpack.c.l.b16 %v2086
    %v2429 = vunpack.c.h.b16 %v2086
    %v2430 = vunpack.c.l.b16 %v2087
    %v2431 = vunpack.c.h.b16 %v2087
    %v2432 = vunpack.c.l.b16 %v2088
    %v2433 = vunpack.c.h.b16 %v2088
    %v2434 = vunpack.c.l.b16 %v2089
    %v2435 = vunpack.c.h.b16 %v2089
    %v2436 = vunpack.c.l.b16 %v2090
    %v2437 = vunpack.c.h.b16 %v2090
    %v2438 = vunpack.c.l.b16 %v2091
    %v2439 = vunpack.c.h.b16 %v2091
    %v2440 = vunpack.c.l.b16 %v2092
    %v2441 = vunpack.c.h.b16 %v2092
    %v2442 = vunpack.c.l.b16 %v2093
    %v2443 = vunpack.c.h.b16 %v2093
    %v2444 = vunpack.c.l.b16 %v2094
    %v2445 = vunpack.c.h.b16 %v2094
    %v2446 = vunpack.c.l.b16 %v2095
    %v2447 = vunpack.c.h.b16 %v2095
    %v2448 = vunpack.c.l.b16 %v2096
    %v2449 = vunpack.c.h.b16 %v2096
    %v2450 = vunpack.c.l.b16 %v2097
    %v2451 = vunpack.c.h.b16 %v2097
    %v2452 = vunpack.c.l.b16 %v2098
    %v2453 = vunpack.c.h.b16 %v2098
    %v2454 = vunpack.c.l.b16 %v2099
    %v2455 = vunpack.c.h.b16 %v2099
    %v2456 = vunpack.c.l.b16 %v2100
    %v2457 = vunpack.c.h.b16 %v2100
    %v2458 = vunpack.c.l.b16 %v2101
    %v2459 = vunpack.c.h.b16 %v2101
    %v2460 = vunpack.c.l.b16 %v2102
    %v2461 = vunpack.c.h.b16 %v2102
    %v2462 = vunpack.c.l.b16 %v2103
    %v2463 = vunpack.c.h.b16 %v2103
    %v2464 = vunpack.c.l.b16 %v2104
    %v2465 = vunpack.c.h.b16 %v2104
    %v2466 = vunpack.c.l.b16 %v2105
    %v2467 = vunpack.c.h.b16 %v2105
    %v2468 = vunpack.c.l.b16 %v2106
    %v2469 = vunpack.c.h.b16 %v2106
    %v2470 = vunpack.c.l.b16 %v2107
    %v2471 = vunpack.c.h.b16 %v2107
    %v2472 = vunpack.c.l.b16 %v2108
    %v2473 = vunpack.c.h.b16 %v2108
    %v2474 = vunpack.c.l.b16 %v2109
    %v2475 = vunpack.c.h.b16 %v2109
    %v2476 = vunpack.c.l.b16 %v2110
    %v2477 = vunpack.c.h.b16 %v2110
    %v2478 = vunpack.c.l.b16 %v2111
    %v2479 = vunpack.c.h.b16 %v2111
    %v2480 = vunpack.c.l.b16 %v2112
    %v2481 = vunpack.c.h.b16 %v2112
    %v2482 = vunpack.c.l.b16 %v2113
    %v2483 = vunpack.c.h.b16 %v2113
    %v2484 = vunpack.c.l.b16 %v2114
    %v2485 = vunpack.c.h.b16 %v2114
    %v2486 = vunpack.c.l.b16 %v2115
    %v2487 = vunpack.c.h.b16 %v2115
    %v2488 = vunpack.c.l.b16 %v2116
    %v2489 = vunpack.c.h.b16 %v2116
    %v2490 = vunpack.c.l.b16 %v2117
    %v2491 = vunpack.c.h.b16 %v2117
    %v2492 = vunpack.c.l.b16 %v2118
    %v2493 = vunpack.c.h.b16 %v2118
    %v2494 = vunpack.c.l.b16 %v2119
    %v2495 = vunpack.c.h.b16 %v2119
    %v2496 = vunpack.c.l.b16 %v2120
    %v2497 = vunpack.c.h.b16 %v2120
    %v2498 = vunpack.c.l.b16 %v2121
    %v2499 = vunpack.c.h.b16 %v2121
    %v2500 = vunpack.c.l.b16 %v2122
    %v2501 = vunpack.c.h.b16 %v2122
    %v2502 = vunpack.c.l.b16 %v2123
    %v2503 = vunpack.c.h.b16 %v2123
    %v2504 = vunpack.c.l.b16 %v2124
    %v2505 = vunpack.c.h.b16 %v2124
    %v2506 = vunpack.c.l.b16 %v2125
    %v2507 = vunpack.c.h.b16 %v2125
    %v2508 = vunpack.c.l.b16 %v2126
    %v2509 = vunpack.c.h.b16 %v2126
    %v2510 = vunpack.c.l.b16 %v2127
    %v2511 = vunpack.c.h.b16 %v2127
    %v2512 = vunpack.c.l.b16 %v2128
    %v2513 = vunpack.c.h.b16 %v2128
    %v2514 = vunpack.c.l.b16 %v2129
    %v2515 = vunpack.c.h.b16 %v2129
    %v2516 = vunpack.c.l.b16 %v2130
    %v2517 = vunpack.c.h.b16 %v2130
    %v2518 = vunpack.c.l.b16 %v2131
    %v2519 = vunpack.c.h.b16 %v2131
    %v2520 = vunpack.c.l.b16 %v2132
    %v2521 = vunpack.c.h.b16 %v2132
    %v2522 = vunpack.c.l.b16 %v2133
    %v2523 = vunpack.c.h.b16 %v2133
    %v2524 = vunpack.c.l.b16 %v2134
    %v2525 = vunpack.c.h.b16 %v2134
    %v2526 = vunpack.c.l.b16 %v2135
    %v2527 = vunpack.c.h.b16 %v2135
    %v2528 = vunpack.c.l.b16 %v2136
    %v2529 = vunpack.c.h.b16 %v2136
    %v2530 = vunpack.c.l.b16 %v2137
    %v2531 = vunpack.c.h.b16 %v2137
    %v2532 = vunpack.c.l.b16 %v2138
    %v2533 = vunpack.c.h.b16 %v2138
    %v2534 = vunpack.c.l.b16 %v2139
    %v2535 = vunpack.c.h.b16 %v2139
    %v2536 = vunpack.c.l.b16 %v2140
    %v2537 = vunpack.c.h.b16 %v2140
    %v2538 = vunpack.c.l.b16 %v2141
    %v2539 = vunpack.c.h.b16 %v2141
    %v2540 = vunpack.c.l.b16 %v2142
    %v2541 = vunpack.c.h.b16 %v2142
    %v2542 = vunpack.c.l.b16 %v2143
    %v2543 = vunpack.c.h.b16 %v2143
    %v2544 = vunpack.c.l.b16 %v2144
    %v2545 = vunpack.c.h.b16 %v2144
    %v2546 = vunpack.c.l.b16 %v2145
    %v2547 = vunpack.c.h.b16 %v2145
    %v2548 = vunpack.c.l.b16 %v2146
    %v2549 = vunpack.c.h.b16 %v2146
    %v2550 = vunpack.c.l.b16 %v2147
    %v2551 = vunpack.c.h.b16 %v2147
    %v2552 = vunpack.c.l.b16 %v2148
    %v2553 = vunpack.c.h.b16 %v2148
    %v2554 = vunpack.c.l.b16 %v2149
    %v2555 = vunpack.c.h.b16 %v2149
    %v2556 = vunpack.c.l.b16 %v2150
    %v2557 = vunpack.c.h.b16 %v2150
    %v2558 = vunpack.c.l.b16 %v2151
    %v2559 = vunpack.c.h.b16 %v2151
    %v2560 = vunpack.c.l.b16 %v2152
    %v2561 = vunpack.c.h.b16 %v2152
    %v2562 = vunpack.c.l.b16 %v2153
    %v2563 = vunpack.c.h.b16 %v2153
    %v2564 = vunpack.c.l.b16 %v2154
    %v2565 = vunpack.c.h.b16 %v2154
    %v2566 = vunpack.c.l.b16 %v2155
    %v2567 = vunpack.c.h.b16 %v2155
    %v2568 = vunpack.c.l.b16 %v2156
    %v2569 = vunpack.c.h.b16 %v2156
    %v2570 = vunpack.c.l.b16 %v2157
    %v2571 = vunpack.c.h.b16 %v2157
    %v2572 = vunpack.c.l.b16 %v2158
    %v2573 = vunpack.c.h.b16 %v2158
    %v2574 = vunpack.c.l.b16 %v2159
    %v2575 = vunpack.c.h.b16 %v2159
    %v2576 = vunpack.c.l.b16 %v2160
    %v2577 = vunpack.c.h.b16 %v2160
    %v2578 = vunpack.c.l.b16 %v2161
    %v2579 = vunpack.c.h.b16 %v2161
    %v2580 = vunpack.c.l.b16 %v2162
    %v2581 = vunpack.c.h.b16 %v2162
    %v2582 = vunpack.c.l.b16 %v2163
    %v2583 = vunpack.c.h.b16 %v2163
    %v2584 = vunpack.c.l.b16 %v2164
    %v2585 = vunpack.c.h.b16 %v2164
    %v2586 = vunpack.c.l.b16 %v2165
    %v2587 = vunpack.c.h.b16 %v2165
    %v2588 = vunpack.c.l.b16 %v2166
    %v2589 = vunpack.c.h.b16 %v2166
    %v2590 = vunpack.c.l.b16 %v2167
    %v2591 = vunpack.c.h.b16 %v2167
    %v2592 = vunpack.c.l.b16 %v2168
    %v2593 = vunpack.c.h.b16 %v2168
    %v2594 = vunpack.c.l.b16 %v2169
    %v2595 = vunpack.c.h.b16 %v2169
    %v2596 = vunpack.c.l.b16 %v2170
    %v2597 = vunpack.c.h.b16 %v2170
    %v2598 = vunpack.c.l.b16 %v2171
    %v2599 = vunpack.c.h.b16 %v2171
    %v2600 = vunpack.c.l.b16 %v2172
    %v2601 = vunpack.c.h.b16 %v2172
    %v2602 = vunpack.c.l.b16 %v2173
    %v2603 = vunpack.c.h.b16 %v2173
    %v2604 = vunpack.c.l.b16 %v2174
    %v2605 = vunpack.c.h.b16 %v2174
    %v2606 = vunpack.c.l.b16 %v2175
    %v2607 = vunpack.c.h.b16 %v2175
    %v2608 = vunpack.c.l.b16 %v2176
    %v2609 = vunpack.c.h.b16 %v2176
    %v2610 = vunpack.c.l.b16 %v2177
    %v2611 = vunpack.c.h.b16 %v2177
    %v2612 = vunpack.c.l.b16 %v2178
    %v2613 = vunpack.c.h.b16 %v2178
    %v2614 = vunpack.c.l.b16 %v2179
    %v2615 = vunpack.c.h.b16 %v2179
    %v2616 = vunpack.c.l.b16 %v2180
    %v2617 = vunpack.c.h.b16 %v2180
    %v2618 = vunpack.c.l.b16 %v2181
    %v2619 = vunpack.c.h.b16 %v2181
    %v2620 = vunpack.c.l.b16 %v2182
    %v2621 = vunpack.c.h.b16 %v2182
    %v2622 = vunpack.c.l.b16 %v2183
    %v2623 = vunpack.c.h.b16 %v2183
    %v2624 = vunpack.c.l.b16 %v2184
    %v2625 = vunpack.c.h.b16 %v2184
    %v2626 = vunpack.c.l.b16 %v2185
    %v2627 = vunpack.c.h.b16 %v2185
    %v2628 = vunpack.c.l.b16 %v2186
    %v2629 = vunpack.c.h.b16 %v2186
    %v2630 = vunpack.c.l.b16 %v2187
    %v2631 = vunpack.c.h.b16 %v2187
    %v2632 = vunpack.c.l.b16 %v2188
    %v2633 = vunpack.c.h.b16 %v2188
    %v2634 = vunpack.c.l.b16 %v2189
    %v2635 = vunpack.c.h.b16 %v2189
    %v2636 = vunpack.c.l.b16 %v2190
    %v2637 = vunpack.c.h.b16 %v2190
    %v2638 = vunpack.c.l.b16 %v2191
    %v2639 = vunpack.c.h.b16 %v2191
    %v2640 = vunpack.c.l.b16 %v2192
    %v2641 = vunpack.c.h.b16 %v2192
    %v2642 = vunpack.c.l.b16 %v2193
    %v2643 = vunpack.c.h.b16 %v2193
    %v2644 = vunpack.c.l.b16 %v2194
    %v2645 = vunpack.c.h.b16 %v2194
    %v2646 = vunpack.c.l.b16 %v2195
    %v2647 = vunpack.c.h.b16 %v2195
    %v2648 = vunpack.c.l.b16 %v2196
    %v2649 = vunpack.c.h.b16 %v2196
    %v2650 = vunpack.c.l.b16 %v2197
    %v2651 = vunpack.c.h.b16 %v2197
    %v2652 = vunpack.c.l.b16 %v2198
    %v2653 = vunpack.c.h.b16 %v2198
    %v2654 = vunpack.c.l.b16 %v2199
    %v2655 = vunpack.c.h.b16 %v2199
    %v2656 = vunpack.c.l.b16 %v2200
    %v2657 = vunpack.c.h.b16 %v2200
    %v2658 = vunpack.c.l.b16 %v2201
    %v2659 = vunpack.c.h.b16 %v2201
    %v2660 = vunpack.c.l.b16 %v2202
    %v2661 = vunpack.c.h.b16 %v2202
    %v2662 = vunpack.c.l.b16 %v2203
    %v2663 = vunpack.c.h.b16 %v2203
    %v2664 = vunpack.c.l.b16 %v2204
    %v2665 = vunpack.c.h.b16 %v2204
    %v2666 = vunpack.c.l.b16 %v2205
    %v2667 = vunpack.c.h.b16 %v2205
    %v2668 = vunpack.c.l.b16 %v2206
    %v2669 = vunpack.c.h.b16 %v2206
    %v2670 = vunpack.c.l.b16 %v2207
    %v2671 = vunpack.c.h.b16 %v2207
    %v2672 = vunpack.c.l.b16 %v2208
    %v2673 = vunpack.c.h.b16 %v2208
    %v2674 = vunpack.c.l.b16 %v2209
    %v2675 = vunpack.c.h.b16 %v2209
    %v2676 = vunpack.c.l.b16 %v2210
    %v2677 = vunpack.c.h.b16 %v2210
    %v2678 = vunpack.c.l.b16 %v2211
    %v2679 = vunpack.c.h.b16 %v2211
    %v2680 = vpack.c.b16 %v2440, %v2424
    %v2681 = vpack.c.b16 %v2441, %v2425
    %v2682 = vpack.c.b16 %v2442, %v2426
    %v2683 = vpack.c.b16 %v2443, %v2427
    %v2684 = vpack.c.b16 %v2444, %v2428
    %v2685 = vpack.c.b16 %v2445, %v2429
    %v2686 = vpack.c.b16 %v2446, %v2430
    %v2687 = vpack.c.b16 %v2447, %v2431
    %v2688 = vpack.c.b16 %v2448, %v2432
    %v2689 = vpack.c.b16 %v2449, %v2433
    %v2690 = vpack.c.b16 %v2450, %v2434
    %v2691 = vpack.c.b16 %v2451, %v2435
    %v2692 = vpack.c.b16 %v2452, %v2436
    %v2693 = vpack.c.b16 %v2453, %v2437
    %v2694 = vpack.c.b16 %v2454, %v2438
    %v2695 = vpack.c.b16 %v2455, %v2439
    %v2696 = vpack.c.b16 %v2472, %v2456
    %v2697 = vpack.c.b16 %v2473, %v2457
    %v2698 = vpack.c.b16 %v2474, %v2458
    %v2699 = vpack.c.b16 %v2475, %v2459
    %v2700 = vpack.c.b16 %v2476, %v2460
    %v2701 = vpack.c.b16 %v2477, %v2461
    %v2702 = vpack.c.b16 %v2478, %v2462
    %v2703 = vpack.c.b16 %v2479, %v2463
    %v2704 = vpack.c.b16 %v2480, %v2464
    %v2705 = vpack.c.b16 %v2481, %v2465
    %v2706 = vpack.c.b16 %v2482, %v2466
    %v2707 = vpack.c.b16 %v2483, %v2467
    %v2708 = vpack.c.b16 %v2484, %v2468
    %v2709 = vpack.c.b16 %v2485, %v2469
    %v2710 = vpack.c.b16 %v2486, %v2470
    %v2711 = vpack.c.b16 %v2487, %v2471
    %v2712 = vpack.c.b16 %v2504, %v2488
    %v2713 = vpack.c.b16 %v2505, %v2489
    %v2714 = vpack.c.b16 %v2506, %v2490
    %v2715 = vpack.c.b16 %v2507, %v2491
    %v2716 = vpack.c.b16 %v2508, %v2492
    %v2717 = vpack.c.b16 %v2509, %v2493
    %v2718 = vpack.c.b16 %v2510, %v2494
    %v2719 = vpack.c.b16 %v2511, %v2495
    %v2720 = vpack.c.b16 %v2512, %v2496
    %v2721 = vpack.c.b16 %v2513, %v2497
    %v2722 = vpack.c.b16 %v2514, %v2498
    %v2723 = vpack.c.b16 %v2515, %v2499
    %v2724 = vpack.c.b16 %v2516, %v2500
    %v2725 = vpack.c.b16 %v2517, %v2501
    %v2726 = vpack.c.b16 %v2518, %v2502
    %v2727 = vpack.c.b16 %v2519, %v2503
    %v2728 = vpack.c.b16 %v2536, %v2520
    %v2729 = vpack.c.b16 %v2537, %v2521
    %v2730 = vpack.c.b16 %v2538, %v2522
    %v2731 = vpack.c.b16 %v2539, %v2523
    %v2732 = vpack.c.b16 %v2540, %v2524
    %v2733 = vpack.c.b16 %v2541, %v2525
    %v2734 = vpack.c.b16 %v2542, %v2526
    %v2735 = vpack.c.b16 %v2543, %v2527
    %v2736 = vpack.c.b16 %v2544, %v2528
    %v2737 = vpack.c.b16 %v2545, %v2529
    %v2738 = vpack.c.b16 %v2546, %v2530
    %v2739 = vpack.c.b16 %v2547, %v2531
    %v2740 = vpack.c.b16 %v2548, %v2532
    %v2741 = vpack.c.b16 %v2549, %v2533
    %v2742 = vpack.c.b16 %v2550, %v2534
    %v2743 = vpack.c.b16 %v2551, %v2535
    %v2744 = vpack.c.b16 %v2568, %v2552
    %v2745 = vpack.c.b16 %v2569, %v2553
    %v2746 = vpack.c.b16 %v2570, %v2554
    %v2747 = vpack.c.b16 %v2571, %v2555
    %v2748 = vpack.c.b16 %v2572, %v2556
    %v2749 = vpack.c.b16 %v2573, %v2557
    %v2750 = vpack.c.b16 %v2574, %v2558
    %v2751 = vpack.c.b16 %v2575, %v2559
    %v2752 = vpack.c.b16 %v2576, %v2560
    %v2753 = vpack.c.b16 %v2577, %v2561
    %v2754 = vpack.c.b16 %v2578, %v2562
    %v2755 = vpack.c.b16 %v2579, %v2563
    %v2756 = vpack.c.b16 %v2580, %v2564
    %v2757 = vpack.c.b16 %v2581, %v2565
    %v2758 = vpack.c.b16 %v2582, %v2566
    %v2759 = vpack.c.b16 %v2583, %v2567
    %v2760 = vpack.c.b16 %v2600, %v2584
    %v2761 = vpack.c.b16 %v2601, %v2585
    %v2762 = vpack.c.b16 %v2602, %v2586
    %v2763 = vpack.c.b16 %v2603, %v2587
    %v2764 = vpack.c.b16 %v2604, %v2588
    %v2765 = vpack.c.b16 %v2605, %v2589
    %v2766 = vpack.c.b16 %v2606, %v2590
    %v2767 = vpack.c.b16 %v2607, %v2591
    %v2768 = vpack.c.b16 %v2608, %v2592
    %v2769 = vpack.c.b16 %v2609, %v2593
    %v2770 = vpack.c.b16 %v2610, %v2594
    %v2771 = vpack.c.b16 %v2611, %v2595
    %v2772 = vpack.c.b16 %v2612, %v2596
    %v2773 = vpack.c.b16 %v2613, %v2597
    %v2774 = vpack.c.b16 %v2614, %v2598
    %v2775 = vpack.c.b16 %v2615, %v2599
    %v2776 = vpack.c.b16 %v2632, %v2616
    %v2777 = vpack.c.b16 %v2633, %v2617
    %v2778 = vpack.c.b16 %v2634, %v2618
    %v2779 = vpack.c.b16 %v2635, %v2619
    %v2780 = vpack.c.b16 %v2636, %v2620
    %v2781 = vpack.c.b16 %v2637, %v2621
    %v2782 = vpack.c.b16 %v2638, %v2622
    %v2783 = vpack.c.b16 %v2639, %v2623
    %v2784 = vpack.c.b16 %v2640, %v2624
    %v2785 = vpack.c.b16 %v2641, %v2625
    %v2786 = vpack.c.b16 %v2642, %v2626
    %v2787 = vpack.c.b16 %v2643, %v2627
    %v2788 = vpack.c.b16 %v2644, %v2628
    %v2789 = vpack.c.b16 %v2645, %v2629
    %v2790 = vpack.c.b16 %v2646, %v2630
    %v2791 = vpack.c.b16 %v2647, %v2631
    %v2792 = vpack.c.b16 %v2664, %v2648
    %v2793 = vpack.c.b16 %v2665, %v2649
    %v2794 = vpack.c.b16 %v2666, %v2650
    %v2795 = vpack.c.b16 %v2667, %v2651
    %v2796 = vpack.c.b16 %v2668, %v2652
    %v2797 = vpack.c.b16 %v2669, %v2653
    %v2798 = vpack.c.b16 %v2670, %v2654
    %v2799 = vpack.c.b16 %v2671, %v2655
    %v2800 = vpack.c.b16 %v2672, %v2656
    %v2801 = vpack.c.b16 %v2673, %v2657
    %v2802 = vpack.c.b16 %v2674, %v2658
    %v2803 = vpack.c.b16 %v2675, %v2659
    %v2804 = vpack.c.b16 %v2676, %v2660
    %v2805 = vpack.c.b16 %v2677, %v2661
    %v2806 = vpack.c.b16 %v2678, %v2662
    %v2807 = vpack.c.b16 %v2679, %v2663
    %2936 = vmatprep.subr.bf16.mxu0 %v2681
    %2937 = vmatpush1.bf16.msra.mxu0 %v2680
    %2938 = vmatprep.subr.bf16.mxu0 %v2697
    %2939 = vmatpush1.bf16.msra.mxu0 %v2696
    %2940 = vmatprep.subr.bf16.mxu0 %v2713
    %2941 = vmatpush1.bf16.msra.mxu0 %v2712
    %2942 = vmatprep.subr.bf16.mxu0 %v2729
    %2943 = vmatpush1.bf16.msra.mxu0 %v2728
    %2944 = vmatprep.subr.bf16.mxu0 %v2745
    %2945 = vmatpush1.bf16.msra.mxu0 %v2744
    %2946 = vmatprep.subr.bf16.mxu0 %v2761
    %2947 = vmatpush1.bf16.msra.mxu0 %v2760
    %2948 = vmatprep.subr.bf16.mxu0 %v2777
    %2949 = vmatpush1.bf16.msra.mxu0 %v2776
    %2950 = vmatprep.subr.bf16.mxu0 %v2793
    %2951 = vmatpush1.bf16.msra.mxu0 %v2792
    %2952 = vmatprep.subr.bf16.mxu0 0
    %2953 = vmatpush1.bf16.msra.mxu0 0
    %2954 = vmatprep.subr.bf16.mxu0 0
    %2955 = vmatpush1.bf16.msra.mxu0 0
    %2956 = vmatprep.subr.bf16.mxu0 0
    %2957 = vmatpush1.bf16.msra.mxu0 0
    %2958 = vmatprep.subr.bf16.mxu0 0
    %2959 = vmatpush1.bf16.msra.mxu0 0
    %2960 = vmatprep.subr.bf16.mxu0 0
    %2961 = vmatpush1.bf16.msra.mxu0 0
    %2962 = vmatprep.subr.bf16.mxu0 0
    %2963 = vmatpush1.bf16.msra.mxu0 0
    %2964 = vmatprep.subr.bf16.mxu0 0
    %2965 = vmatpush1.bf16.msra.mxu0 0
    %2966 = vmatprep.subr.bf16.mxu0 0
    %2967 = vmatpush1.bf16.msra.mxu0 0
    %2968 = vmatprep.mubr.bf16.mxu0 0
    %2969 = vmatmul.mubr.bf16.gmra.mrb[0].mxu0 %v2083
    %v2970 = vpop.f32.mrb[0].mxu0
    %v2971 = vadd.f32 %v2219, %v2970
    %v2972 = vpop.f32.mrb[0].mxu0
    %v2973 = vadd.f32 %v2223, %v2972
    %v2974 = vpop.f32.mrb[0].mxu0
    %v2975 = vadd.f32 %v2219, %v2974
    %v2976 = vpop.f32.mrb[0].mxu0
    %v2977 = vadd.f32 %v2223, %v2976
    %2978 = vdwg.mxu0
    %2979 = vmatprep.subr.bf16.mxu0 %v2683
    %2980 = vmatpush1.bf16.msra.mxu0 %v2682
    %2981 = vmatprep.subr.bf16.mxu0 %v2699
    %2982 = vmatpush1.bf16.msra.mxu0 %v2698
    %2983 = vmatprep.subr.bf16.mxu0 %v2715
    %2984 = vmatpush1.bf16.msra.mxu0 %v2714
    %2985 = vmatprep.subr.bf16.mxu0 %v2731
    %2986 = vmatpush1.bf16.msra.mxu0 %v2730
    %2987 = vmatprep.subr.bf16.mxu0 %v2747
    %2988 = vmatpush1.bf16.msra.mxu0 %v2746
    %2989 = vmatprep.subr.bf16.mxu0 %v2763
    %2990 = vmatpush1.bf16.msra.mxu0 %v2762
    %2991 = vmatprep.subr.bf16.mxu0 %v2779
    %2992 = vmatpush1.bf16.msra.mxu0 %v2778
    %2993 = vmatprep.subr.bf16.mxu0 %v2795
    %2994 = vmatpush1.bf16.msra.mxu0 %v2794
    %2995 = vmatprep.subr.bf16.mxu0 0
    %2996 = vmatpush1.bf16.msra.mxu0 0
    %2997 = vmatprep.subr.bf16.mxu0 0
    %2998 = vmatpush1.bf16.msra.mxu0 0
    %2999 = vmatprep.subr.bf16.mxu0 0
    %3000 = vmatpush1.bf16.msra.mxu0 0
    %3001 = vmatprep.subr.bf16.mxu0 0
    %3002 = vmatpush1.bf16.msra.mxu0 0
    %3003 = vmatprep.subr.bf16.mxu0 0
    %3004 = vmatpush1.bf16.msra.mxu0 0
    %3005 = vmatprep.subr.bf16.mxu0 0
    %3006 = vmatpush1.bf16.msra.mxu0 0
    %3007 = vmatprep.subr.bf16.mxu0 0
    %3008 = vmatpush1.bf16.msra.mxu0 0
    %3009 = vmatprep.subr.bf16.mxu0 0
    %3010 = vmatpush1.bf16.msra.mxu0 0
    %3011 = vmatprep.mubr.bf16.mxu0 0
    %3012 = vmatmul.mubr.bf16.gmra.mrb[0].mxu0 %v2083
    %v3013 = vpop.f32.mrb[0].mxu0
    %v3014 = vadd.f32 %v2227, %v3013
    %v3015 = vpop.f32.mrb[0].mxu0
    %v3016 = vadd.f32 %v2231, %v3015
    %v3017 = vpop.f32.mrb[0].mxu0
    %v3018 = vadd.f32 %v2227, %v3017
    %v3019 = vpop.f32.mrb[0].mxu0
    %v3020 = vadd.f32 %v2231, %v3019
    %3021 = vdwg.mxu0
    %3022 = vmatprep.subr.bf16.mxu0 %v2685
    %3023 = vmatpush1.bf16.msra.mxu0 %v2684
    %3024 = vmatprep.subr.bf16.mxu0 %v2701
    %3025 = vmatpush1.bf16.msra.mxu0 %v2700
    %3026 = vmatprep.subr.bf16.mxu0 %v2717
    %3027 = vmatpush1.bf16.msra.mxu0 %v2716
    %3028 = vmatprep.subr.bf16.mxu0 %v2733
    %3029 = vmatpush1.bf16.msra.mxu0 %v2732
    %3030 = vmatprep.subr.bf16.mxu0 %v2749
    %3031 = vmatpush1.bf16.msra.mxu0 %v2748
    %3032 = vmatprep.subr.bf16.mxu0 %v2765
    %3033 = vmatpush1.bf16.msra.mxu0 %v2764
    %3034 = vmatprep.subr.bf16.mxu0 %v2781
    %3035 = vmatpush1.bf16.msra.mxu0 %v2780
    %3036 = vmatprep.subr.bf16.mxu0 %v2797
    %3037 = vmatpush1.bf16.msra.mxu0 %v2796
    %3038 = vmatprep.subr.bf16.mxu0 0
    %3039 = vmatpush1.bf16.msra.mxu0 0
    %3040 = vmatprep.subr.bf16.mxu0 0
    %3041 = vmatpush1.bf16.msra.mxu0 0
    %3042 = vmatprep.subr.bf16.mxu0 0
    %3043 = vmatpush1.bf16.msra.mxu0 0
    %3044 = vmatprep.subr.bf16.mxu0 0
    %3045 = vmatpush1.bf16.msra.mxu0 0
    %3046 = vmatprep.subr.bf16.mxu0 0
    %3047 = vmatpush1.bf16.msra.mxu0 0
    %3048 = vmatprep.subr.bf16.mxu0 0
    %3049 = vmatpush1.bf16.msra.mxu0 0
    %3050 = vmatprep.subr.bf16.mxu0 0
    %3051 = vmatpush1.bf16.msra.mxu0 0
    %3052 = vmatprep.subr.bf16.mxu0 0
    %3053 = vmatpush1.bf16.msra.mxu0 0
    %3054 = vmatprep.mubr.bf16.mxu0 0
    %3055 = vmatmul.mubr.bf16.gmra.mrb[0].mxu0 %v2083
    %v3056 = vpop.f32.mrb[0].mxu0
    %v3057 = vadd.f32 %v2235, %v3056
    %v3058 = vpop.f32.mrb[0].mxu0
    %v3059 = vadd.f32 %v2239, %v3058
    %v3060 = vpop.f32.mrb[0].mxu0
    %v3061 = vadd.f32 %v2235, %v3060
    %v3062 = vpop.f32.mrb[0].mxu0
    %v3063 = vadd.f32 %v2239, %v3062
    %3064 = vdwg.mxu0
    %3065 = vmatprep.subr.bf16.mxu0 %v2687
    %3066 = vmatpush1.bf16.msra.mxu0 %v2686
    %3067 = vmatprep.subr.bf16.mxu0 %v2703
    %3068 = vmatpush1.bf16.msra.mxu0 %v2702
    %3069 = vmatprep.subr.bf16.mxu0 %v2719
    %3070 = vmatpush1.bf16.msra.mxu0 %v2718
    %3071 = vmatprep.subr.bf16.mxu0 %v2735
    %3072 = vmatpush1.bf16.msra.mxu0 %v2734
    %3073 = vmatprep.subr.bf16.mxu0 %v2751
    %3074 = vmatpush1.bf16.msra.mxu0 %v2750
    %3075 = vmatprep.subr.bf16.mxu0 %v2767
    %3076 = vmatpush1.bf16.msra.mxu0 %v2766
    %3077 = vmatprep.subr.bf16.mxu0 %v2783
    %3078 = vmatpush1.bf16.msra.mxu0 %v2782
    %3079 = vmatprep.subr.bf16.mxu0 %v2799
    %3080 = vmatpush1.bf16.msra.mxu0 %v2798
    %3081 = vmatprep.subr.bf16.mxu0 0
    %3082 = vmatpush1.bf16.msra.mxu0 0
    %3083 = vmatprep.subr.bf16.mxu0 0
    %3084 = vmatpush1.bf16.msra.mxu0 0
    %3085 = vmatprep.subr.bf16.mxu0 0
    %3086 = vmatpush1.bf16.msra.mxu0 0
    %3087 = vmatprep.subr.bf16.mxu0 0
    %3088 = vmatpush1.bf16.msra.mxu0 0
    %3089 = vmatprep.subr.bf16.mxu0 0
    %3090 = vmatpush1.bf16.msra.mxu0 0
    %3091 = vmatprep.subr.bf16.mxu0 0
    %3092 = vmatpush1.bf16.msra.mxu0 0
    %3093 = vmatprep.subr.bf16.mxu0 0
    %3094 = vmatpush1.bf16.msra.mxu0 0
    %3095 = vmatprep.subr.bf16.mxu0 0
    %3096 = vmatpush1.bf16.msra.mxu0 0
    %3097 = vmatprep.mubr.bf16.mxu0 0
    %3098 = vmatmul.mubr.bf16.gmra.mrb[0].mxu0 %v2083
    %v3099 = vpop.f32.mrb[0].mxu0
    %v3100 = vadd.f32 %v2243, %v3099
    %v3101 = vpop.f32.mrb[0].mxu0
    %v3102 = vadd.f32 %v2247, %v3101
    %v3103 = vpop.f32.mrb[0].mxu0
    %v3104 = vadd.f32 %v2243, %v3103
    %v3105 = vpop.f32.mrb[0].mxu0
    %v3106 = vadd.f32 %v2247, %v3105
    %3107 = vdwg.mxu0
    %3108 = vmatprep.subr.bf16.mxu0 %v2689
    %3109 = vmatpush1.bf16.msra.mxu0 %v2688
    %3110 = vmatprep.subr.bf16.mxu0 %v2705
    %3111 = vmatpush1.bf16.msra.mxu0 %v2704
    %3112 = vmatprep.subr.bf16.mxu0 %v2721
    %3113 = vmatpush1.bf16.msra.mxu0 %v2720
    %3114 = vmatprep.subr.bf16.mxu0 %v2737
    %3115 = vmatpush1.bf16.msra.mxu0 %v2736
    %3116 = vmatprep.subr.bf16.mxu0 %v2753
    %3117 = vmatpush1.bf16.msra.mxu0 %v2752
    %3118 = vmatprep.subr.bf16.mxu0 %v2769
    %3119 = vmatpush1.bf16.msra.mxu0 %v2768
    %3120 = vmatprep.subr.bf16.mxu0 %v2785
    %3121 = vmatpush1.bf16.msra.mxu0 %v2784
    %3122 = vmatprep.subr.bf16.mxu0 %v2801
    %3123 = vmatpush1.bf16.msra.mxu0 %v2800
    %3124 = vmatprep.subr.bf16.mxu0 0
    %3125 = vmatpush1.bf16.msra.mxu0 0
    %3126 = vmatprep.subr.bf16.mxu0 0
    %3127 = vmatpush1.bf16.msra.mxu0 0
    %3128 = vmatprep.subr.bf16.mxu0 0
    %3129 = vmatpush1.bf16.msra.mxu0 0
    %3130 = vmatprep.subr.bf16.mxu0 0
    %3131 = vmatpush1.bf16.msra.mxu0 0
    %3132 = vmatprep.subr.bf16.mxu0 0
    %3133 = vmatpush1.bf16.msra.mxu0 0
    %3134 = vmatprep.subr.bf16.mxu0 0
    %3135 = vmatpush1.bf16.msra.mxu0 0
    %3136 = vmatprep.subr.bf16.mxu0 0
    %3137 = vmatpush1.bf16.msra.mxu0 0
    %3138 = vmatprep.subr.bf16.mxu0 0
    %3139 = vmatpush1.bf16.msra.mxu0 0
    %3140 = vmatprep.mubr.bf16.mxu0 0
    %3141 = vmatmul.mubr.bf16.gmra.mrb[0].mxu0 %v2083
    %v3142 = vpop.f32.mrb[0].mxu0
    %v3143 = vadd.f32 %v2251, %v3142
    %v3144 = vpop.f32.mrb[0].mxu0
    %v3145 = vadd.f32 %v2255, %v3144
    %v3146 = vpop.f32.mrb[0].mxu0
    %v3147 = vadd.f32 %v2251, %v3146
    %v3148 = vpop.f32.mrb[0].mxu0
    %v3149 = vadd.f32 %v2255, %v3148
    %3150 = vdwg.mxu0
    %3151 = vmatprep.subr.bf16.mxu0 %v2691
    %3152 = vmatpush1.bf16.msra.mxu0 %v2690
    %3153 = vmatprep.subr.bf16.mxu0 %v2707
    %3154 = vmatpush1.bf16.msra.mxu0 %v2706
    %3155 = vmatprep.subr.bf16.mxu0 %v2723
    %3156 = vmatpush1.bf16.msra.mxu0 %v2722
    %3157 = vmatprep.subr.bf16.mxu0 %v2739
    %3158 = vmatpush1.bf16.msra.mxu0 %v2738
    %3159 = vmatprep.subr.bf16.mxu0 %v2755
    %3160 = vmatpush1.bf16.msra.mxu0 %v2754
    %3161 = vmatprep.subr.bf16.mxu0 %v2771
    %3162 = vmatpush1.bf16.msra.mxu0 %v2770
    %3163 = vmatprep.subr.bf16.mxu0 %v2787
    %3164 = vmatpush1.bf16.msra.mxu0 %v2786
    %3165 = vmatprep.subr.bf16.mxu0 %v2803
    %3166 = vmatpush1.bf16.msra.mxu0 %v2802
    %3167 = vmatprep.subr.bf16.mxu0 0
    %3168 = vmatpush1.bf16.msra.mxu0 0
    %3169 = vmatprep.subr.bf16.mxu0 0
    %3170 = vmatpush1.bf16.msra.mxu0 0
    %3171 = vmatprep.subr.bf16.mxu0 0
    %3172 = vmatpush1.bf16.msra.mxu0 0
    %3173 = vmatprep.subr.bf16.mxu0 0
    %3174 = vmatpush1.bf16.msra.mxu0 0
    %3175 = vmatprep.subr.bf16.mxu0 0
    %3176 = vmatpush1.bf16.msra.mxu0 0
    %3177 = vmatprep.subr.bf16.mxu0 0
    %3178 = vmatpush1.bf16.msra.mxu0 0
    %3179 = vmatprep.subr.bf16.mxu0 0
    %3180 = vmatpush1.bf16.msra.mxu0 0
    %3181 = vmatprep.subr.bf16.mxu0 0
    %3182 = vmatpush1.bf16.msra.mxu0 0
    %3183 = vmatprep.mubr.bf16.mxu0 0
    %3184 = vmatmul.mubr.bf16.gmra.mrb[0].mxu0 %v2083
    %v3185 = vpop.f32.mrb[0].mxu0
    %v3186 = vadd.f32 %v2259, %v3185
    %v3187 = vpop.f32.mrb[0].mxu0
    %v3188 = vadd.f32 %v2263, %v3187
    %v3189 = vpop.f32.mrb[0].mxu0
    %v3190 = vadd.f32 %v2259, %v3189
    %v3191 = vpop.f32.mrb[0].mxu0
    %v3192 = vadd.f32 %v2263, %v3191
    %3193 = vdwg.mxu0
    %3194 = vmatprep.subr.bf16.mxu0 %v2693
    %3195 = vmatpush1.bf16.msra.mxu0 %v2692
    %3196 = vmatprep.subr.bf16.mxu0 %v2709
    %3197 = vmatpush1.bf16.msra.mxu0 %v2708
    %3198 = vmatprep.subr.bf16.mxu0 %v2725
    %3199 = vmatpush1.bf16.msra.mxu0 %v2724
    %3200 = vmatprep.subr.bf16.mxu0 %v2741
    %3201 = vmatpush1.bf16.msra.mxu0 %v2740
    %3202 = vmatprep.subr.bf16.mxu0 %v2757
    %3203 = vmatpush1.bf16.msra.mxu0 %v2756
    %3204 = vmatprep.subr.bf16.mxu0 %v2773
    %3205 = vmatpush1.bf16.msra.mxu0 %v2772
    %3206 = vmatprep.subr.bf16.mxu0 %v2789
    %3207 = vmatpush1.bf16.msra.mxu0 %v2788
    %3208 = vmatprep.subr.bf16.mxu0 %v2805
    %3209 = vmatpush1.bf16.msra.mxu0 %v2804
    %3210 = vmatprep.subr.bf16.mxu0 0
    %3211 = vmatpush1.bf16.msra.mxu0 0
    %3212 = vmatprep.subr.bf16.mxu0 0
    %3213 = vmatpush1.bf16.msra.mxu0 0
    %3214 = vmatprep.subr.bf16.mxu0 0
    %3215 = vmatpush1.bf16.msra.mxu0 0
    %3216 = vmatprep.subr.bf16.mxu0 0
    %3217 = vmatpush1.bf16.msra.mxu0 0
    %3218 = vmatprep.subr.bf16.mxu0 0
    %3219 = vmatpush1.bf16.msra.mxu0 0
    %3220 = vmatprep.subr.bf16.mxu0 0
    %3221 = vmatpush1.bf16.msra.mxu0 0
    %3222 = vmatprep.subr.bf16.mxu0 0
    %3223 = vmatpush1.bf16.msra.mxu0 0
    %3224 = vmatprep.subr.bf16.mxu0 0
    %3225 = vmatpush1.bf16.msra.mxu0 0
    %3226 = vmatprep.mubr.bf16.mxu0 0
    %3227 = vmatmul.mubr.bf16.gmra.mrb[0].mxu0 %v2083
    %v3228 = vpop.f32.mrb[0].mxu0
    %v3229 = vadd.f32 %v2267, %v3228
    %v3230 = vpop.f32.mrb[0].mxu0
    %v3231 = vadd.f32 %v2271, %v3230
    %v3232 = vpop.f32.mrb[0].mxu0
    %v3233 = vadd.f32 %v2267, %v3232
    %v3234 = vpop.f32.mrb[0].mxu0
    %v3235 = vadd.f32 %v2271, %v3234
    %3236 = vdwg.mxu0
    %3237 = vmatprep.subr.bf16.mxu0 %v2695
    %3238 = vmatpush1.bf16.msra.mxu0 %v2694
    %3239 = vmatprep.subr.bf16.mxu0 %v2711
    %3240 = vmatpush1.bf16.msra.mxu0 %v2710
    %3241 = vmatprep.subr.bf16.mxu0 %v2727
    %3242 = vmatpush1.bf16.msra.mxu0 %v2726
    %3243 = vmatprep.subr.bf16.mxu0 %v2743
    %3244 = vmatpush1.bf16.msra.mxu0 %v2742
    %3245 = vmatprep.subr.bf16.mxu0 %v2759
    %3246 = vmatpush1.bf16.msra.mxu0 %v2758
    %3247 = vmatprep.subr.bf16.mxu0 %v2775
    %3248 = vmatpush1.bf16.msra.mxu0 %v2774
    %3249 = vmatprep.subr.bf16.mxu0 %v2791
    %3250 = vmatpush1.bf16.msra.mxu0 %v2790
    %3251 = vmatprep.subr.bf16.mxu0 %v2807
    %3252 = vmatpush1.bf16.msra.mxu0 %v2806
    %3253 = vmatprep.subr.bf16.mxu0 0
    %3254 = vmatpush1.bf16.msra.mxu0 0
    %3255 = vmatprep.subr.bf16.mxu0 0
    %3256 = vmatpush1.bf16.msra.mxu0 0
    %3257 = vmatprep.subr.bf16.mxu0 0
    %3258 = vmatpush1.bf16.msra.mxu0 0
    %3259 = vmatprep.subr.bf16.mxu0 0
    %3260 = vmatpush1.bf16.msra.mxu0 0
    %3261 = vmatprep.subr.bf16.mxu0 0
    %3262 = vmatpush1.bf16.msra.mxu0 0
    %3263 = vmatprep.subr.bf16.mxu0 0
    %3264 = vmatpush1.bf16.msra.mxu0 0
    %3265 = vmatprep.subr.bf16.mxu0 0
    %3266 = vmatpush1.bf16.msra.mxu0 0
    %3267 = vmatprep.subr.bf16.mxu0 0
    %3268 = vmatpush1.bf16.msra.mxu0 0
    %3269 = vmatprep.mubr.bf16.mxu0 0
    %3270 = vmatmul.mubr.bf16.gmra.mrb[0].mxu0 %v2083
    %v3271 = vpop.f32.mrb[0].mxu0
    %v3272 = vadd.f32 %v2275, %v3271
    %v3273 = vpop.f32.mrb[0].mxu0
    %v3274 = vadd.f32 %v2279, %v3273
    %v3275 = vpop.f32.mrb[0].mxu0
    %v3276 = vadd.f32 %v2275, %v3275
    %v3277 = vpop.f32.mrb[0].mxu0
    %v3278 = vadd.f32 %v2279, %v3277
    %3279 = vdwg.mxu0
    %v3280 = vmax.f32 %v2971, 0.0
    %v3281 = vmax.f32 %v2973, 0.0
    %v3282 = vmax.f32 %v3014, 0.0
    %v3283 = vmax.f32 %v3016, 0.0
    %v3284 = vmax.f32 %v3057, 0.0
    %v3285 = vmax.f32 %v3059, 0.0
    %v3286 = vmax.f32 %v3100, 0.0
    %v3287 = vmax.f32 %v3102, 0.0
    %v3288 = vmax.f32 %v3143, 0.0
    %v3289 = vmax.f32 %v3145, 0.0
    %v3290 = vmax.f32 %v3186, 0.0
    %v3291 = vmax.f32 %v3188, 0.0
    %v3292 = vmax.f32 %v3229, 0.0
    %v3293 = vmax.f32 %v3231, 0.0
    %v3294 = vmax.f32 %v3272, 0.0
    %v3295 = vmax.f32 %v3274, 0.0
    %v3296 = vmax.f32 %v2975, 0.0
    %v3297 = vmax.f32 %v2977, 0.0
    %v3298 = vmax.f32 %v3018, 0.0
    %v3299 = vmax.f32 %v3020, 0.0
    %v3300 = vmax.f32 %v3061, 0.0
    %v3301 = vmax.f32 %v3063, 0.0
    %v3302 = vmax.f32 %v3104, 0.0
    %v3303 = vmax.f32 %v3106, 0.0
    %v3304 = vmax.f32 %v3147, 0.0
    %v3305 = vmax.f32 %v3149, 0.0
    %v3306 = vmax.f32 %v3190, 0.0
    %v3307 = vmax.f32 %v3192, 0.0
    %v3308 = vmax.f32 %v3233, 0.0
    %v3309 = vmax.f32 %v3235, 0.0
    %v3310 = vmax.f32 %v3276, 0.0
    %v3311 = vmax.f32 %v3278, 0.0
    %v3312 = vpack.c.bf16 %v3296, %v3280
    %v3313 = vpack.c.bf16 %v3297, %v3281
    %v3314 = vpack.c.bf16 %v3298, %v3282
    %v3315 = vpack.c.bf16 %v3299, %v3283
    %v3316 = vpack.c.bf16 %v3300, %v3284
    %v3317 = vpack.c.bf16 %v3301, %v3285
    %v3318 = vpack.c.bf16 %v3302, %v3286
    %v3319 = vpack.c.bf16 %v3303, %v3287
    %v3320 = vpack.c.bf16 %v3304, %v3288
    %v3321 = vpack.c.bf16 %v3305, %v3289
    %v3322 = vpack.c.bf16 %v3306, %v3290
    %v3323 = vpack.c.bf16 %v3307, %v3291
    %v3324 = vpack.c.bf16 %v3308, %v3292
    %v3325 = vpack.c.bf16 %v3309, %v3293
    %v3326 = vpack.c.bf16 %v3310, %v3294
    %v3327 = vpack.c.bf16 %v3311, %v3295
    %v3328 = vld [vmem:[#allocation14] sm:$0xf]
    %v3329 = vld [vmem:[#allocation14 + $0x4] sm:$0xf]
    %v3330 = vld [vmem:[#allocation14 + $0x8] sm:$0xf]
    %v3331 = vld [vmem:[#allocation14 + $0xc] sm:$0xf]
    %v3332 = vld [vmem:[#allocation14 + $0x10] sm:$0xf]
    %v3333 = vld [vmem:[#allocation14 + $0x14] sm:$0xf]
    %v3334 = vld [vmem:[#allocation14 + $0x18] sm:$0xf]
    %v3335 = vld [vmem:[#allocation14 + $0x1c] sm:$0xf]
    %v3336 = vld [vmem:[#allocation14 + $0x20] sm:$0xf]
    %v3337 = vld [vmem:[#allocation14 + $0x24] sm:$0xf]
    %v3338 = vld [vmem:[#allocation14 + $0x28] sm:$0xf]
    %v3339 = vld [vmem:[#allocation14 + $0x2c] sm:$0xf]
    %v3340 = vld [vmem:[#allocation14 + $0x30] sm:$0xf]
    %v3341 = vld [vmem:[#allocation14 + $0x34] sm:$0xf]
    %v3342 = vld [vmem:[#allocation14 + $0x38] sm:$0xf]
    %v3343 = vld [vmem:[#allocation14 + $0x3c] sm:$0xf]
    %v3344 = vld [vmem:[#allocation14 + $0x40] sm:$0xf]
    %v3345 = vld [vmem:[#allocation14 + $0x44] sm:$0xf]
    %v3346 = vld [vmem:[#allocation14 + $0x48] sm:$0xf]
    %v3347 = vld [vmem:[#allocation14 + $0x4c] sm:$0xf]
    %v3348 = vld [vmem:[#allocation14 + $0x50] sm:$0xf]
    %v3349 = vld [vmem:[#allocation14 + $0x54] sm:$0xf]
    %v3350 = vld [vmem:[#allocation14 + $0x58] sm:$0xf]
    %v3351 = vld [vmem:[#allocation14 + $0x5c] sm:$0xf]
    %v3352 = vld [vmem:[#allocation14 + $0x60] sm:$0xf]
    %v3353 = vld [vmem:[#allocation14 + $0x64] sm:$0xf]
    %v3354 = vld [vmem:[#allocation14 + $0x68] sm:$0xf]
    %v3355 = vld [vmem:[#allocation14 + $0x6c] sm:$0xf]
    %v3356 = vld [vmem:[#allocation14 + $0x70] sm:$0xf]
    %v3357 = vld [vmem:[#allocation14 + $0x74] sm:$0xf]
    %v3358 = vld [vmem:[#allocation14 + $0x78] sm:$0xf]
    %v3359 = vld [vmem:[#allocation14 + $0x7c] sm:$0xf]
    %v3360 = vld [vmem:[#allocation14 + $0x80] sm:$0xf]
    %v3361 = vld [vmem:[#allocation14 + $0x84] sm:$0xf]
    %v3362 = vld [vmem:[#allocation14 + $0x88] sm:$0xf]
    %v3363 = vld [vmem:[#allocation14 + $0x8c] sm:$0xf]
    %v3364 = vld [vmem:[#allocation14 + $0x90] sm:$0xf]
    %v3365 = vld [vmem:[#allocation14 + $0x94] sm:$0xf]
    %v3366 = vld [vmem:[#allocation14 + $0x98] sm:$0xf]
    %v3367 = vld [vmem:[#allocation14 + $0x9c] sm:$0xf]
    %v3368 = vld [vmem:[#allocation14 + $0xa0] sm:$0xf]
    %v3369 = vld [vmem:[#allocation14 + $0xa4] sm:$0xf]
    %v3370 = vld [vmem:[#allocation14 + $0xa8] sm:$0xf]
    %v3371 = vld [vmem:[#allocation14 + $0xac] sm:$0xf]
    %v3372 = vld [vmem:[#allocation14 + $0xb0] sm:$0xf]
    %v3373 = vld [vmem:[#allocation14 + $0xb4] sm:$0xf]
    %v3374 = vld [vmem:[#allocation14 + $0xb8] sm:$0xf]
    %v3375 = vld [vmem:[#allocation14 + $0xbc] sm:$0xf]
    %v3376 = vld [vmem:[#allocation14 + $0xc0] sm:$0xf]
    %v3377 = vld [vmem:[#allocation14 + $0xc4] sm:$0xf]
    %v3378 = vld [vmem:[#allocation14 + $0xc8] sm:$0xf]
    %v3379 = vld [vmem:[#allocation14 + $0xcc] sm:$0xf]
    %v3380 = vld [vmem:[#allocation14 + $0xd0] sm:$0xf]
    %v3381 = vld [vmem:[#allocation14 + $0xd4] sm:$0xf]
    %v3382 = vld [vmem:[#allocation14 + $0xd8] sm:$0xf]
    %v3383 = vld [vmem:[#allocation14 + $0xdc] sm:$0xf]
    %v3384 = vld [vmem:[#allocation14 + $0xe0] sm:$0xf]
    %v3385 = vld [vmem:[#allocation14 + $0xe4] sm:$0xf]
    %v3386 = vld [vmem:[#allocation14 + $0xe8] sm:$0xf]
    %v3387 = vld [vmem:[#allocation14 + $0xec] sm:$0xf]
    %v3388 = vld [vmem:[#allocation14 + $0xf0] sm:$0xf]
    %v3389 = vld [vmem:[#allocation14 + $0xf4] sm:$0xf]
    %v3390 = vld [vmem:[#allocation14 + $0xf8] sm:$0xf]
    %v3391 = vld [vmem:[#allocation14 + $0xfc] sm:$0xf]
    %v3392 = vld [vmem:[#allocation14 + $0x100] sm:$0xf]
    %v3393 = vld [vmem:[#allocation14 + $0x104] sm:$0xf]
    %v3394 = vld [vmem:[#allocation14 + $0x108] sm:$0xf]
    %v3395 = vld [vmem:[#allocation14 + $0x10c] sm:$0xf]
    %v3396 = vld [vmem:[#allocation14 + $0x110] sm:$0xf]
    %v3397 = vld [vmem:[#allocation14 + $0x114] sm:$0xf]
    %v3398 = vld [vmem:[#allocation14 + $0x118] sm:$0xf]
    %v3399 = vld [vmem:[#allocation14 + $0x11c] sm:$0xf]
    %v3400 = vld [vmem:[#allocation14 + $0x120] sm:$0xf]
    %v3401 = vld [vmem:[#allocation14 + $0x124] sm:$0xf]
    %v3402 = vld [vmem:[#allocation14 + $0x128] sm:$0xf]
    %v3403 = vld [vmem:[#allocation14 + $0x12c] sm:$0xf]
    %v3404 = vld [vmem:[#allocation14 + $0x130] sm:$0xf]
    %v3405 = vld [vmem:[#allocation14 + $0x134] sm:$0xf]
    %v3406 = vld [vmem:[#allocation14 + $0x138] sm:$0xf]
    %v3407 = vld [vmem:[#allocation14 + $0x13c] sm:$0xf]
    %v3408 = vld [vmem:[#allocation14 + $0x140] sm:$0xf]
    %v3409 = vld [vmem:[#allocation14 + $0x144] sm:$0xf]
    %v3410 = vld [vmem:[#allocation14 + $0x148] sm:$0xf]
    %v3411 = vld [vmem:[#allocation14 + $0x14c] sm:$0xf]
    %v3412 = vld [vmem:[#allocation14 + $0x150] sm:$0xf]
    %v3413 = vld [vmem:[#allocation14 + $0x154] sm:$0xf]
    %v3414 = vld [vmem:[#allocation14 + $0x158] sm:$0xf]
    %v3415 = vld [vmem:[#allocation14 + $0x15c] sm:$0xf]
    %v3416 = vld [vmem:[#allocation14 + $0x160] sm:$0xf]
    %v3417 = vld [vmem:[#allocation14 + $0x164] sm:$0xf]
    %v3418 = vld [vmem:[#allocation14 + $0x168] sm:$0xf]
    %v3419 = vld [vmem:[#allocation14 + $0x16c] sm:$0xf]
    %v3420 = vld [vmem:[#allocation14 + $0x170] sm:$0xf]
    %v3421 = vld [vmem:[#allocation14 + $0x174] sm:$0xf]
    %v3422 = vld [vmem:[#allocation14 + $0x178] sm:$0xf]
    %v3423 = vld [vmem:[#allocation14 + $0x17c] sm:$0xf]
    %v3424 = vld [vmem:[#allocation14 + $0x180] sm:$0xf]
    %v3425 = vld [vmem:[#allocation14 + $0x184] sm:$0xf]
    %v3426 = vld [vmem:[#allocation14 + $0x188] sm:$0xf]
    %v3427 = vld [vmem:[#allocation14 + $0x18c] sm:$0xf]
    %v3428 = vld [vmem:[#allocation14 + $0x190] sm:$0xf]
    %v3429 = vld [vmem:[#allocation14 + $0x194] sm:$0xf]
    %v3430 = vld [vmem:[#allocation14 + $0x198] sm:$0xf]
    %v3431 = vld [vmem:[#allocation14 + $0x19c] sm:$0xf]
    %v3432 = vld [vmem:[#allocation14 + $0x1a0] sm:$0xf]
    %v3433 = vld [vmem:[#allocation14 + $0x1a4] sm:$0xf]
    %v3434 = vld [vmem:[#allocation14 + $0x1a8] sm:$0xf]
    %v3435 = vld [vmem:[#allocation14 + $0x1ac] sm:$0xf]
    %v3436 = vld [vmem:[#allocation14 + $0x1b0] sm:$0xf]
    %v3437 = vld [vmem:[#allocation14 + $0x1b4] sm:$0xf]
    %v3438 = vld [vmem:[#allocation14 + $0x1b8] sm:$0xf]
    %v3439 = vld [vmem:[#allocation14 + $0x1bc] sm:$0xf]
    %v3440 = vld [vmem:[#allocation14 + $0x1c0] sm:$0xf]
    %v3441 = vld [vmem:[#allocation14 + $0x1c4] sm:$0xf]
    %v3442 = vld [vmem:[#allocation14 + $0x1c8] sm:$0xf]
    %v3443 = vld [vmem:[#allocation14 + $0x1cc] sm:$0xf]
    %v3444 = vld [vmem:[#allocation14 + $0x1d0] sm:$0xf]
    %v3445 = vld [vmem:[#allocation14 + $0x1d4] sm:$0xf]
    %v3446 = vld [vmem:[#allocation14 + $0x1d8] sm:$0xf]
    %v3447 = vld [vmem:[#allocation14 + $0x1dc] sm:$0xf]
    %v3448 = vld [vmem:[#allocation14 + $0x1e0] sm:$0xf]
    %v3449 = vld [vmem:[#allocation14 + $0x1e4] sm:$0xf]
    %v3450 = vld [vmem:[#allocation14 + $0x1e8] sm:$0xf]
    %v3451 = vld [vmem:[#allocation14 + $0x1ec] sm:$0xf]
    %v3452 = vld [vmem:[#allocation14 + $0x1f0] sm:$0xf]
    %v3453 = vld [vmem:[#allocation14 + $0x1f4] sm:$0xf]
    %v3454 = vld [vmem:[#allocation14 + $0x1f8] sm:$0xf]
    %v3455 = vld [vmem:[#allocation14 + $0x1fc] sm:$0xf]
    %v3456 = vld [vmem:[#allocation14 + $0x200] sm:$0xf]
    %v3457 = vld [vmem:[#allocation14 + $0x204] sm:$0xf]
    %v3458 = vld [vmem:[#allocation14 + $0x208] sm:$0xf]
    %v3459 = vld [vmem:[#allocation14 + $0x20c] sm:$0xf]
    %v3460 = vld [vmem:[#allocation14 + $0x210] sm:$0xf]
    %v3461 = vld [vmem:[#allocation14 + $0x214] sm:$0xf]
    %v3462 = vld [vmem:[#allocation14 + $0x218] sm:$0xf]
    %v3463 = vld [vmem:[#allocation14 + $0x21c] sm:$0xf]
    %v3464 = vld [vmem:[#allocation14 + $0x220] sm:$0xf]
    %v3465 = vld [vmem:[#allocation14 + $0x224] sm:$0xf]
    %v3466 = vld [vmem:[#allocation14 + $0x228] sm:$0xf]
    %v3467 = vld [vmem:[#allocation14 + $0x22c] sm:$0xf]
    %v3468 = vld [vmem:[#allocation14 + $0x230] sm:$0xf]
    %v3469 = vld [vmem:[#allocation14 + $0x234] sm:$0xf]
    %v3470 = vld [vmem:[#allocation14 + $0x238] sm:$0xf]
    %v3471 = vld [vmem:[#allocation14 + $0x23c] sm:$0xf]
    %v3472 = vld [vmem:[#allocation14 + $0x240] sm:$0xf]
    %v3473 = vld [vmem:[#allocation14 + $0x244] sm:$0xf]
    %v3474 = vld [vmem:[#allocation14 + $0x248] sm:$0xf]
    %v3475 = vld [vmem:[#allocation14 + $0x24c] sm:$0xf]
    %v3476 = vld [vmem:[#allocation14 + $0x250] sm:$0xf]
    %v3477 = vld [vmem:[#allocation14 + $0x254] sm:$0xf]
    %v3478 = vld [vmem:[#allocation14 + $0x258] sm:$0xf]
    %v3479 = vld [vmem:[#allocation14 + $0x25c] sm:$0xf]
    %v3480 = vld [vmem:[#allocation14 + $0x260] sm:$0xf]
    %v3481 = vld [vmem:[#allocation14 + $0x264] sm:$0xf]
    %v3482 = vld [vmem:[#allocation14 + $0x268] sm:$0xf]
    %v3483 = vld [vmem:[#allocation14 + $0x26c] sm:$0xf]
    %v3484 = vld [vmem:[#allocation14 + $0x270] sm:$0xf]
    %v3485 = vld [vmem:[#allocation14 + $0x274] sm:$0xf]
    %v3486 = vld [vmem:[#allocation14 + $0x278] sm:$0xf]
    %v3487 = vld [vmem:[#allocation14 + $0x27c] sm:$0xf]
    %v3488 = vld [vmem:[#allocation14 + $0x280] sm:$0xf]
    %v3489 = vld [vmem:[#allocation14 + $0x284] sm:$0xf]
    %v3490 = vld [vmem:[#allocation14 + $0x288] sm:$0xf]
    %v3491 = vld [vmem:[#allocation14 + $0x28c] sm:$0xf]
    %v3492 = vld [vmem:[#allocation14 + $0x290] sm:$0xf]
    %v3493 = vld [vmem:[#allocation14 + $0x294] sm:$0xf]
    %v3494 = vld [vmem:[#allocation14 + $0x298] sm:$0xf]
    %v3495 = vld [vmem:[#allocation14 + $0x29c] sm:$0xf]
    %v3496 = vld [vmem:[#allocation14 + $0x2a0] sm:$0xf]
    %v3497 = vld [vmem:[#allocation14 + $0x2a4] sm:$0xf]
    %v3498 = vld [vmem:[#allocation14 + $0x2a8] sm:$0xf]
    %v3499 = vld [vmem:[#allocation14 + $0x2ac] sm:$0xf]
    %v3500 = vld [vmem:[#allocation14 + $0x2b0] sm:$0xf]
    %v3501 = vld [vmem:[#allocation14 + $0x2b4] sm:$0xf]
    %v3502 = vld [vmem:[#allocation14 + $0x2b8] sm:$0xf]
    %v3503 = vld [vmem:[#allocation14 + $0x2bc] sm:$0xf]
    %v3504 = vld [vmem:[#allocation14 + $0x2c0] sm:$0xf]
    %v3505 = vld [vmem:[#allocation14 + $0x2c4] sm:$0xf]
    %v3506 = vld [vmem:[#allocation14 + $0x2c8] sm:$0xf]
    %v3507 = vld [vmem:[#allocation14 + $0x2cc] sm:$0xf]
    %v3508 = vld [vmem:[#allocation14 + $0x2d0] sm:$0xf]
    %v3509 = vld [vmem:[#allocation14 + $0x2d4] sm:$0xf]
    %v3510 = vld [vmem:[#allocation14 + $0x2d8] sm:$0xf]
    %v3511 = vld [vmem:[#allocation14 + $0x2dc] sm:$0xf]
    %v3512 = vld [vmem:[#allocation14 + $0x2e0] sm:$0xf]
    %v3513 = vld [vmem:[#allocation14 + $0x2e4] sm:$0xf]
    %v3514 = vld [vmem:[#allocation14 + $0x2e8] sm:$0xf]
    %v3515 = vld [vmem:[#allocation14 + $0x2ec] sm:$0xf]
    %v3516 = vld [vmem:[#allocation14 + $0x2f0] sm:$0xf]
    %v3517 = vld [vmem:[#allocation14 + $0x2f4] sm:$0xf]
    %v3518 = vld [vmem:[#allocation14 + $0x2f8] sm:$0xf]
    %v3519 = vld [vmem:[#allocation14 + $0x2fc] sm:$0xf]
    %v3520 = vld [vmem:[#allocation14 + $0x300] sm:$0xf]
    %v3521 = vld [vmem:[#allocation14 + $0x304] sm:$0xf]
    %v3522 = vld [vmem:[#allocation14 + $0x308] sm:$0xf]
    %v3523 = vld [vmem:[#allocation14 + $0x30c] sm:$0xf]
    %v3524 = vld [vmem:[#allocation14 + $0x310] sm:$0xf]
    %v3525 = vld [vmem:[#allocation14 + $0x314] sm:$0xf]
    %v3526 = vld [vmem:[#allocation14 + $0x318] sm:$0xf]
    %v3527 = vld [vmem:[#allocation14 + $0x31c] sm:$0xf]
    %v3528 = vld [vmem:[#allocation14 + $0x320] sm:$0xf]
    %v3529 = vld [vmem:[#allocation14 + $0x324] sm:$0xf]
    %v3530 = vld [vmem:[#allocation14 + $0x328] sm:$0xf]
    %v3531 = vld [vmem:[#allocation14 + $0x32c] sm:$0xf]
    %v3532 = vld [vmem:[#allocation14 + $0x330] sm:$0xf]
    %v3533 = vld [vmem:[#allocation14 + $0x334] sm:$0xf]
    %v3534 = vld [vmem:[#allocation14 + $0x338] sm:$0xf]
    %v3535 = vld [vmem:[#allocation14 + $0x33c] sm:$0xf]
    %v3536 = vld [vmem:[#allocation14 + $0x340] sm:$0xf]
    %v3537 = vld [vmem:[#allocation14 + $0x344] sm:$0xf]
    %v3538 = vld [vmem:[#allocation14 + $0x348] sm:$0xf]
    %v3539 = vld [vmem:[#allocation14 + $0x34c] sm:$0xf]
    %v3540 = vld [vmem:[#allocation14 + $0x350] sm:$0xf]
    %v3541 = vld [vmem:[#allocation14 + $0x354] sm:$0xf]
    %v3542 = vld [vmem:[#allocation14 + $0x358] sm:$0xf]
    %v3543 = vld [vmem:[#allocation14 + $0x35c] sm:$0xf]
    %v3544 = vld [vmem:[#allocation14 + $0x360] sm:$0xf]
    %v3545 = vld [vmem:[#allocation14 + $0x364] sm:$0xf]
    %v3546 = vld [vmem:[#allocation14 + $0x368] sm:$0xf]
    %v3547 = vld [vmem:[#allocation14 + $0x36c] sm:$0xf]
    %v3548 = vld [vmem:[#allocation14 + $0x370] sm:$0xf]
    %v3549 = vld [vmem:[#allocation14 + $0x374] sm:$0xf]
    %v3550 = vld [vmem:[#allocation14 + $0x378] sm:$0xf]
    %v3551 = vld [vmem:[#allocation14 + $0x37c] sm:$0xf]
    %v3552 = vld [vmem:[#allocation14 + $0x380] sm:$0xf]
    %v3553 = vld [vmem:[#allocation14 + $0x384] sm:$0xf]
    %v3554 = vld [vmem:[#allocation14 + $0x388] sm:$0xf]
    %v3555 = vld [vmem:[#allocation14 + $0x38c] sm:$0xf]
    %v3556 = vld [vmem:[#allocation14 + $0x390] sm:$0xf]
    %v3557 = vld [vmem:[#allocation14 + $0x394] sm:$0xf]
    %v3558 = vld [vmem:[#allocation14 + $0x398] sm:$0xf]
    %v3559 = vld [vmem:[#allocation14 + $0x39c] sm:$0xf]
    %v3560 = vld [vmem:[#allocation14 + $0x3a0] sm:$0xf]
    %v3561 = vld [vmem:[#allocation14 + $0x3a4] sm:$0xf]
    %v3562 = vld [vmem:[#allocation14 + $0x3a8] sm:$0xf]
    %v3563 = vld [vmem:[#allocation14 + $0x3ac] sm:$0xf]
    %v3564 = vld [vmem:[#allocation14 + $0x3b0] sm:$0xf]
    %v3565 = vld [vmem:[#allocation14 + $0x3b4] sm:$0xf]
    %v3566 = vld [vmem:[#allocation14 + $0x3b8] sm:$0xf]
    %v3567 = vld [vmem:[#allocation14 + $0x3bc] sm:$0xf]
    %v3568 = vld [vmem:[#allocation14 + $0x3c0] sm:$0xf]
    %v3569 = vld [vmem:[#allocation14 + $0x3c4] sm:$0xf]
    %v3570 = vld [vmem:[#allocation14 + $0x3c8] sm:$0xf]
    %v3571 = vld [vmem:[#allocation14 + $0x3cc] sm:$0xf]
    %v3572 = vld [vmem:[#allocation14 + $0x3d0] sm:$0xf]
    %v3573 = vld [vmem:[#allocation14 + $0x3d4] sm:$0xf]
    %v3574 = vld [vmem:[#allocation14 + $0x3d8] sm:$0xf]
    %v3575 = vld [vmem:[#allocation14 + $0x3dc] sm:$0xf]
    %v3576 = vld [vmem:[#allocation14 + $0x3e0] sm:$0xf]
    %v3577 = vld [vmem:[#allocation14 + $0x3e4] sm:$0xf]
    %v3578 = vld [vmem:[#allocation14 + $0x3e8] sm:$0xf]
    %v3579 = vld [vmem:[#allocation14 + $0x3ec] sm:$0xf]
    %v3580 = vld [vmem:[#allocation14 + $0x3f0] sm:$0xf]
    %v3581 = vld [vmem:[#allocation14 + $0x3f4] sm:$0xf]
    %v3582 = vld [vmem:[#allocation14 + $0x3f8] sm:$0xf]
    %v3583 = vld [vmem:[#allocation14 + $0x3fc] sm:$0xf]
    %v3584 = vld [vmem:[%s15] sm:$0x1]
    %v3586 = vlaneseq
    %v3587 = vshrl.u32 %v3586, 7
    %v3588 = vsub.s32 0, %v3587
    %v3589 = vrot.slane %v3584, %v3588
    %v3847 = vunpack.c.l.b16 %v3328
    %v3848 = vunpack.c.l.b16 %v3329
    %v3849 = vunpack.c.l.b16 %v3330
    %v3850 = vunpack.c.l.b16 %v3331
    %v3851 = vunpack.c.l.b16 %v3332
    %v3852 = vunpack.c.l.b16 %v3333
    %v3853 = vunpack.c.l.b16 %v3334
    %v3854 = vunpack.c.l.b16 %v3335
    %v3855 = vunpack.c.l.b16 %v3336
    %v3856 = vunpack.c.l.b16 %v3337
    %v3857 = vunpack.c.l.b16 %v3338
    %v3858 = vunpack.c.l.b16 %v3339
    %v3859 = vunpack.c.l.b16 %v3340
    %v3860 = vunpack.c.l.b16 %v3341
    %v3861 = vunpack.c.l.b16 %v3342
    %v3862 = vunpack.c.l.b16 %v3343
    %v3863 = vunpack.c.l.b16 %v3344
    %v3864 = vunpack.c.l.b16 %v3345
    %v3865 = vunpack.c.l.b16 %v3346
    %v3866 = vunpack.c.l.b16 %v3347
    %v3867 = vunpack.c.l.b16 %v3348
    %v3868 = vunpack.c.l.b16 %v3349
    %v3869 = vunpack.c.l.b16 %v3350
    %v3870 = vunpack.c.l.b16 %v3351
    %v3871 = vunpack.c.l.b16 %v3352
    %v3872 = vunpack.c.l.b16 %v3353
    %v3873 = vunpack.c.l.b16 %v3354
    %v3874 = vunpack.c.l.b16 %v3355
    %v3875 = vunpack.c.l.b16 %v3356
    %v3876 = vunpack.c.l.b16 %v3357
    %v3877 = vunpack.c.l.b16 %v3358
    %v3878 = vunpack.c.l.b16 %v3359
    %v3879 = vunpack.c.l.b16 %v3360
    %v3880 = vunpack.c.l.b16 %v3361
    %v3881 = vunpack.c.l.b16 %v3362
    %v3882 = vunpack.c.l.b16 %v3363
    %v3883 = vunpack.c.l.b16 %v3364
    %v3884 = vunpack.c.l.b16 %v3365
    %v3885 = vunpack.c.l.b16 %v3366
    %v3886 = vunpack.c.l.b16 %v3367
    %v3887 = vunpack.c.l.b16 %v3368
    %v3888 = vunpack.c.l.b16 %v3369
    %v3889 = vunpack.c.l.b16 %v3370
    %v3890 = vunpack.c.l.b16 %v3371
    %v3891 = vunpack.c.l.b16 %v3372
    %v3892 = vunpack.c.l.b16 %v3373
    %v3893 = vunpack.c.l.b16 %v3374
    %v3894 = vunpack.c.l.b16 %v3375
    %v3895 = vunpack.c.l.b16 %v3376
    %v3896 = vunpack.c.l.b16 %v3377
    %v3897 = vunpack.c.l.b16 %v3378
    %v3898 = vunpack.c.l.b16 %v3379
    %v3899 = vunpack.c.l.b16 %v3380
    %v3900 = vunpack.c.l.b16 %v3381
    %v3901 = vunpack.c.l.b16 %v3382
    %v3902 = vunpack.c.l.b16 %v3383
    %v3903 = vunpack.c.l.b16 %v3384
    %v3904 = vunpack.c.l.b16 %v3385
    %v3905 = vunpack.c.l.b16 %v3386
    %v3906 = vunpack.c.l.b16 %v3387
    %v3907 = vunpack.c.l.b16 %v3388
    %v3908 = vunpack.c.l.b16 %v3389
    %v3909 = vunpack.c.l.b16 %v3390
    %v3910 = vunpack.c.l.b16 %v3391
    %v3911 = vunpack.c.l.b16 %v3392
    %v3912 = vunpack.c.l.b16 %v3393
    %v3913 = vunpack.c.l.b16 %v3394
    %v3914 = vunpack.c.l.b16 %v3395
    %v3915 = vunpack.c.l.b16 %v3396
    %v3916 = vunpack.c.l.b16 %v3397
    %v3917 = vunpack.c.l.b16 %v3398
    %v3918 = vunpack.c.l.b16 %v3399
    %v3919 = vunpack.c.l.b16 %v3400
    %v3920 = vunpack.c.l.b16 %v3401
    %v3921 = vunpack.c.l.b16 %v3402
    %v3922 = vunpack.c.l.b16 %v3403
    %v3923 = vunpack.c.l.b16 %v3404
    %v3924 = vunpack.c.l.b16 %v3405
    %v3925 = vunpack.c.l.b16 %v3406
    %v3926 = vunpack.c.l.b16 %v3407
    %v3927 = vunpack.c.l.b16 %v3408
    %v3928 = vunpack.c.l.b16 %v3409
    %v3929 = vunpack.c.l.b16 %v3410
    %v3930 = vunpack.c.l.b16 %v3411
    %v3931 = vunpack.c.l.b16 %v3412
    %v3932 = vunpack.c.l.b16 %v3413
    %v3933 = vunpack.c.l.b16 %v3414
    %v3934 = vunpack.c.l.b16 %v3415
    %v3935 = vunpack.c.l.b16 %v3416
    %v3936 = vunpack.c.l.b16 %v3417
    %v3937 = vunpack.c.l.b16 %v3418
    %v3938 = vunpack.c.l.b16 %v3419
    %v3939 = vunpack.c.l.b16 %v3420
    %v3940 = vunpack.c.l.b16 %v3421
    %v3941 = vunpack.c.l.b16 %v3422
    %v3942 = vunpack.c.l.b16 %v3423
    %v3943 = vunpack.c.l.b16 %v3424
    %v3944 = vunpack.c.l.b16 %v3425
    %v3945 = vunpack.c.l.b16 %v3426
    %v3946 = vunpack.c.l.b16 %v3427
    %v3947 = vunpack.c.l.b16 %v3428
    %v3948 = vunpack.c.l.b16 %v3429
    %v3949 = vunpack.c.l.b16 %v3430
    %v3950 = vunpack.c.l.b16 %v3431
    %v3951 = vunpack.c.l.b16 %v3432
    %v3952 = vunpack.c.l.b16 %v3433
    %v3953 = vunpack.c.l.b16 %v3434
    %v3954 = vunpack.c.l.b16 %v3435
    %v3955 = vunpack.c.l.b16 %v3436
    %v3956 = vunpack.c.l.b16 %v3437
    %v3957 = vunpack.c.l.b16 %v3438
    %v3958 = vunpack.c.l.b16 %v3439
    %v3959 = vunpack.c.l.b16 %v3440
    %v3960 = vunpack.c.l.b16 %v3441
    %v3961 = vunpack.c.l.b16 %v3442
    %v3962 = vunpack.c.l.b16 %v3443
    %v3963 = vunpack.c.l.b16 %v3444
    %v3964 = vunpack.c.l.b16 %v3445
    %v3965 = vunpack.c.l.b16 %v3446
    %v3966 = vunpack.c.l.b16 %v3447
    %v3967 = vunpack.c.l.b16 %v3448
    %v3968 = vunpack.c.l.b16 %v3449
    %v3969 = vunpack.c.l.b16 %v3450
    %v3970 = vunpack.c.l.b16 %v3451
    %v3971 = vunpack.c.l.b16 %v3452
    %v3972 = vunpack.c.l.b16 %v3453
    %v3973 = vunpack.c.l.b16 %v3454
    %v3974 = vunpack.c.l.b16 %v3455
    %v3975 = vunpack.c.l.b16 %v3456
    %v3976 = vunpack.c.l.b16 %v3457
    %v3977 = vunpack.c.l.b16 %v3458
    %v3978 = vunpack.c.l.b16 %v3459
    %v3979 = vunpack.c.l.b16 %v3460
    %v3980 = vunpack.c.l.b16 %v3461
    %v3981 = vunpack.c.l.b16 %v3462
    %v3982 = vunpack.c.l.b16 %v3463
    %v3983 = vunpack.c.l.b16 %v3464
    %v3984 = vunpack.c.l.b16 %v3465
    %v3985 = vunpack.c.l.b16 %v3466
    %v3986 = vunpack.c.l.b16 %v3467
    %v3987 = vunpack.c.l.b16 %v3468
    %v3988 = vunpack.c.l.b16 %v3469
    %v3989 = vunpack.c.l.b16 %v3470
    %v3990 = vunpack.c.l.b16 %v3471
    %v3991 = vunpack.c.l.b16 %v3472
    %v3992 = vunpack.c.l.b16 %v3473
    %v3993 = vunpack.c.l.b16 %v3474
    %v3994 = vunpack.c.l.b16 %v3475
    %v3995 = vunpack.c.l.b16 %v3476
    %v3996 = vunpack.c.l.b16 %v3477
    %v3997 = vunpack.c.l.b16 %v3478
    %v3998 = vunpack.c.l.b16 %v3479
    %v3999 = vunpack.c.l.b16 %v3480
    %v4000 = vunpack.c.l.b16 %v3481
    %v4001 = vunpack.c.l.b16 %v3482
    %v4002 = vunpack.c.l.b16 %v3483
    %v4003 = vunpack.c.l.b16 %v3484
    %v4004 = vunpack.c.l.b16 %v3485
    %v4005 = vunpack.c.l.b16 %v3486
    %v4006 = vunpack.c.l.b16 %v3487
    %v4007 = vunpack.c.l.b16 %v3488
    %v4008 = vunpack.c.l.b16 %v3489
    %v4009 = vunpack.c.l.b16 %v3490
    %v4010 = vunpack.c.l.b16 %v3491
    %v4011 = vunpack.c.l.b16 %v3492
    %v4012 = vunpack.c.l.b16 %v3493
    %v4013 = vunpack.c.l.b16 %v3494
    %v4014 = vunpack.c.l.b16 %v3495
    %v4015 = vunpack.c.l.b16 %v3496
    %v4016 = vunpack.c.l.b16 %v3497
    %v4017 = vunpack.c.l.b16 %v3498
    %v4018 = vunpack.c.l.b16 %v3499
    %v4019 = vunpack.c.l.b16 %v3500
    %v4020 = vunpack.c.l.b16 %v3501
    %v4021 = vunpack.c.l.b16 %v3502
    %v4022 = vunpack.c.l.b16 %v3503
    %v4023 = vunpack.c.l.b16 %v3504
    %v4024 = vunpack.c.l.b16 %v3505
    %v4025 = vunpack.c.l.b16 %v3506
    %v4026 = vunpack.c.l.b16 %v3507
    %v4027 = vunpack.c.l.b16 %v3508
    %v4028 = vunpack.c.l.b16 %v3509
    %v4029 = vunpack.c.l.b16 %v3510
    %v4030 = vunpack.c.l.b16 %v3511
    %v4031 = vunpack.c.l.b16 %v3512
    %v4032 = vunpack.c.l.b16 %v3513
    %v4033 = vunpack.c.l.b16 %v3514
    %v4034 = vunpack.c.l.b16 %v3515
    %v4035 = vunpack.c.l.b16 %v3516
    %v4036 = vunpack.c.l.b16 %v3517
    %v4037 = vunpack.c.l.b16 %v3518
    %v4038 = vunpack.c.l.b16 %v3519
    %v4039 = vunpack.c.l.b16 %v3520
    %v4040 = vunpack.c.l.b16 %v3521
    %v4041 = vunpack.c.l.b16 %v3522
    %v4042 = vunpack.c.l.b16 %v3523
    %v4043 = vunpack.c.l.b16 %v3524
    %v4044 = vunpack.c.l.b16 %v3525
    %v4045 = vunpack.c.l.b16 %v3526
    %v4046 = vunpack.c.l.b16 %v3527
    %v4047 = vunpack.c.l.b16 %v3528
    %v4048 = vunpack.c.l.b16 %v3529
    %v4049 = vunpack.c.l.b16 %v3530
    %v4050 = vunpack.c.l.b16 %v3531
    %v4051 = vunpack.c.l.b16 %v3532
    %v4052 = vunpack.c.l.b16 %v3533
    %v4053 = vunpack.c.l.b16 %v3534
    %v4054 = vunpack.c.l.b16 %v3535
    %v4055 = vunpack.c.l.b16 %v3536
    %v4056 = vunpack.c.l.b16 %v3537
    %v4057 = vunpack.c.l.b16 %v3538
    %v4058 = vunpack.c.l.b16 %v3539
    %v4059 = vunpack.c.l.b16 %v3540
    %v4060 = vunpack.c.l.b16 %v3541
    %v4061 = vunpack.c.l.b16 %v3542
    %v4062 = vunpack.c.l.b16 %v3543
    %v4063 = vunpack.c.l.b16 %v3544
    %v4064 = vunpack.c.l.b16 %v3545
    %v4065 = vunpack.c.l.b16 %v3546
    %v4066 = vunpack.c.l.b16 %v3547
    %v4067 = vunpack.c.l.b16 %v3548
    %v4068 = vunpack.c.l.b16 %v3549
    %v4069 = vunpack.c.l.b16 %v3550
    %v4070 = vunpack.c.l.b16 %v3551
    %v4071 = vunpack.c.l.b16 %v3552
    %v4072 = vunpack.c.l.b16 %v3553
    %v4073 = vunpack.c.l.b16 %v3554
    %v4074 = vunpack.c.l.b16 %v3555
    %v4075 = vunpack.c.l.b16 %v3556
    %v4076 = vunpack.c.l.b16 %v3557
    %v4077 = vunpack.c.l.b16 %v3558
    %v4078 = vunpack.c.l.b16 %v3559
    %v4079 = vunpack.c.l.b16 %v3560
    %v4080 = vunpack.c.l.b16 %v3561
    %v4081 = vunpack.c.l.b16 %v3562
    %v4082 = vunpack.c.l.b16 %v3563
    %v4083 = vunpack.c.l.b16 %v3564
    %v4084 = vunpack.c.l.b16 %v3565
    %v4085 = vunpack.c.l.b16 %v3566
    %v4086 = vunpack.c.l.b16 %v3567
    %v4087 = vunpack.c.l.b16 %v3568
    %v4088 = vunpack.c.l.b16 %v3569
    %v4089 = vunpack.c.l.b16 %v3570
    %v4090 = vunpack.c.l.b16 %v3571
    %v4091 = vunpack.c.l.b16 %v3572
    %v4092 = vunpack.c.l.b16 %v3573
    %v4093 = vunpack.c.l.b16 %v3574
    %v4094 = vunpack.c.l.b16 %v3575
    %v4095 = vunpack.c.l.b16 %v3576
    %v4096 = vunpack.c.l.b16 %v3577
    %v4097 = vunpack.c.l.b16 %v3578
    %v4098 = vunpack.c.l.b16 %v3579
    %v4099 = vunpack.c.l.b16 %v3580
    %v4100 = vunpack.c.l.b16 %v3581
    %v4101 = vunpack.c.l.b16 %v3582
    %v4102 = vunpack.c.l.b16 %v3583
    %v4103 = vpack.c.b16 %v3848, %v3847
    %v4104 = vpack.c.b16 %v3850, %v3849
    %v4105 = vpack.c.b16 %v3852, %v3851
    %v4106 = vpack.c.b16 %v3854, %v3853
    %v4107 = vpack.c.b16 %v3856, %v3855
    %v4108 = vpack.c.b16 %v3858, %v3857
    %v4109 = vpack.c.b16 %v3860, %v3859
    %v4110 = vpack.c.b16 %v3862, %v3861
    %v4111 = vpack.c.b16 %v3864, %v3863
    %v4112 = vpack.c.b16 %v3866, %v3865
    %v4113 = vpack.c.b16 %v3868, %v3867
    %v4114 = vpack.c.b16 %v3870, %v3869
    %v4115 = vpack.c.b16 %v3872, %v3871
    %v4116 = vpack.c.b16 %v3874, %v3873
    %v4117 = vpack.c.b16 %v3876, %v3875
    %v4118 = vpack.c.b16 %v3878, %v3877
    %v4119 = vpack.c.b16 %v3880, %v3879
    %v4120 = vpack.c.b16 %v3882, %v3881
    %v4121 = vpack.c.b16 %v3884, %v3883
    %v4122 = vpack.c.b16 %v3886, %v3885
    %v4123 = vpack.c.b16 %v3888, %v3887
    %v4124 = vpack.c.b16 %v3890, %v3889
    %v4125 = vpack.c.b16 %v3892, %v3891
    %v4126 = vpack.c.b16 %v3894, %v3893
    %v4127 = vpack.c.b16 %v3896, %v3895
    %v4128 = vpack.c.b16 %v3898, %v3897
    %v4129 = vpack.c.b16 %v3900, %v3899
    %v4130 = vpack.c.b16 %v3902, %v3901
    %v4131 = vpack.c.b16 %v3904, %v3903
    %v4132 = vpack.c.b16 %v3906, %v3905
    %v4133 = vpack.c.b16 %v3908, %v3907
    %v4134 = vpack.c.b16 %v3910, %v3909
    %v4135 = vpack.c.b16 %v3912, %v3911
    %v4136 = vpack.c.b16 %v3914, %v3913
    %v4137 = vpack.c.b16 %v3916, %v3915
    %v4138 = vpack.c.b16 %v3918, %v3917
    %v4139 = vpack.c.b16 %v3920, %v3919
    %v4140 = vpack.c.b16 %v3922, %v3921
    %v4141 = vpack.c.b16 %v3924, %v3923
    %v4142 = vpack.c.b16 %v3926, %v3925
    %v4143 = vpack.c.b16 %v3928, %v3927
    %v4144 = vpack.c.b16 %v3930, %v3929
    %v4145 = vpack.c.b16 %v3932, %v3931
    %v4146 = vpack.c.b16 %v3934, %v3933
    %v4147 = vpack.c.b16 %v3936, %v3935
    %v4148 = vpack.c.b16 %v3938, %v3937
    %v4149 = vpack.c.b16 %v3940, %v3939
    %v4150 = vpack.c.b16 %v3942, %v3941
    %v4151 = vpack.c.b16 %v3944, %v3943
    %v4152 = vpack.c.b16 %v3946, %v3945
    %v4153 = vpack.c.b16 %v3948, %v3947
    %v4154 = vpack.c.b16 %v3950, %v3949
    %v4155 = vpack.c.b16 %v3952, %v3951
    %v4156 = vpack.c.b16 %v3954, %v3953
    %v4157 = vpack.c.b16 %v3956, %v3955
    %v4158 = vpack.c.b16 %v3958, %v3957
    %v4159 = vpack.c.b16 %v3960, %v3959
    %v4160 = vpack.c.b16 %v3962, %v3961
    %v4161 = vpack.c.b16 %v3964, %v3963
    %v4162 = vpack.c.b16 %v3966, %v3965
    %v4163 = vpack.c.b16 %v3968, %v3967
    %v4164 = vpack.c.b16 %v3970, %v3969
    %v4165 = vpack.c.b16 %v3972, %v3971
    %v4166 = vpack.c.b16 %v3974, %v3973
    %v4167 = vpack.c.b16 %v3976, %v3975
    %v4168 = vpack.c.b16 %v3978, %v3977
    %v4169 = vpack.c.b16 %v3980, %v3979
    %v4170 = vpack.c.b16 %v3982, %v3981
    %v4171 = vpack.c.b16 %v3984, %v3983
    %v4172 = vpack.c.b16 %v3986, %v3985
    %v4173 = vpack.c.b16 %v3988, %v3987
    %v4174 = vpack.c.b16 %v3990, %v3989
    %v4175 = vpack.c.b16 %v3992, %v3991
    %v4176 = vpack.c.b16 %v3994, %v3993
    %v4177 = vpack.c.b16 %v3996, %v3995
    %v4178 = vpack.c.b16 %v3998, %v3997
    %v4179 = vpack.c.b16 %v4000, %v3999
    %v4180 = vpack.c.b16 %v4002, %v4001
    %v4181 = vpack.c.b16 %v4004, %v4003
    %v4182 = vpack.c.b16 %v4006, %v4005
    %v4183 = vpack.c.b16 %v4008, %v4007
    %v4184 = vpack.c.b16 %v4010, %v4009
    %v4185 = vpack.c.b16 %v4012, %v4011
    %v4186 = vpack.c.b16 %v4014, %v4013
    %v4187 = vpack.c.b16 %v4016, %v4015
    %v4188 = vpack.c.b16 %v4018, %v4017
    %v4189 = vpack.c.b16 %v4020, %v4019
    %v4190 = vpack.c.b16 %v4022, %v4021
    %v4191 = vpack.c.b16 %v4024, %v4023
    %v4192 = vpack.c.b16 %v4026, %v4025
    %v4193 = vpack.c.b16 %v4028, %v4027
    %v4194 = vpack.c.b16 %v4030, %v4029
    %v4195 = vpack.c.b16 %v4032, %v4031
    %v4196 = vpack.c.b16 %v4034, %v4033
    %v4197 = vpack.c.b16 %v4036, %v4035
    %v4198 = vpack.c.b16 %v4038, %v4037
    %v4199 = vpack.c.b16 %v4040, %v4039
    %v4200 = vpack.c.b16 %v4042, %v4041
    %v4201 = vpack.c.b16 %v4044, %v4043
    %v4202 = vpack.c.b16 %v4046, %v4045
    %v4203 = vpack.c.b16 %v4048, %v4047
    %v4204 = vpack.c.b16 %v4050, %v4049
    %v4205 = vpack.c.b16 %v4052, %v4051
    %v4206 = vpack.c.b16 %v4054, %v4053
    %v4207 = vpack.c.b16 %v4056, %v4055
    %v4208 = vpack.c.b16 %v4058, %v4057
    %v4209 = vpack.c.b16 %v4060, %v4059
    %v4210 = vpack.c.b16 %v4062, %v4061
    %v4211 = vpack.c.b16 %v4064, %v4063
    %v4212 = vpack.c.b16 %v4066, %v4065
    %v4213 = vpack.c.b16 %v4068, %v4067
    %v4214 = vpack.c.b16 %v4070, %v4069
    %v4215 = vpack.c.b16 %v4072, %v4071
    %v4216 = vpack.c.b16 %v4074, %v4073
    %v4217 = vpack.c.b16 %v4076, %v4075
    %v4218 = vpack.c.b16 %v4078, %v4077
    %v4219 = vpack.c.b16 %v4080, %v4079
    %v4220 = vpack.c.b16 %v4082, %v4081
    %v4221 = vpack.c.b16 %v4084, %v4083
    %v4222 = vpack.c.b16 %v4086, %v4085
    %v4223 = vpack.c.b16 %v4088, %v4087
    %v4224 = vpack.c.b16 %v4090, %v4089
    %v4225 = vpack.c.b16 %v4092, %v4091
    %v4226 = vpack.c.b16 %v4094, %v4093
    %v4227 = vpack.c.b16 %v4096, %v4095
    %v4228 = vpack.c.b16 %v4098, %v4097
    %v4229 = vpack.c.b16 %v4100, %v4099
    %v4230 = vpack.c.b16 %v4102, %v4101
    %4359 = vmatprep.subr.bf16.mxu0 0
    %4360 = vmatpush1.bf16.msra.mxu0 %v4103
    %4361 = vmatprep.subr.bf16.mxu0 0
    %4362 = vmatpush1.bf16.msra.mxu0 %v4104
    %4363 = vmatprep.subr.bf16.mxu0 0
    %4364 = vmatpush1.bf16.msra.mxu0 %v4105
    %4365 = vmatprep.subr.bf16.mxu0 0
    %4366 = vmatpush1.bf16.msra.mxu0 %v4106
    %4367 = vmatprep.subr.bf16.mxu0 0
    %4368 = vmatpush1.bf16.msra.mxu0 %v4107
    %4369 = vmatprep.subr.bf16.mxu0 0
    %4370 = vmatpush1.bf16.msra.mxu0 %v4108
    %4371 = vmatprep.subr.bf16.mxu0 0
    %4372 = vmatpush1.bf16.msra.mxu0 %v4109
    %4373 = vmatprep.subr.bf16.mxu0 0
    %4374 = vmatpush1.bf16.msra.mxu0 %v4110
    %4375 = vmatprep.subr.bf16.mxu0 0
    %4376 = vmatpush1.bf16.msra.mxu0 %v4111
    %4377 = vmatprep.subr.bf16.mxu0 0
    %4378 = vmatpush1.bf16.msra.mxu0 %v4112
    %4379 = vmatprep.subr.bf16.mxu0 0
    %4380 = vmatpush1.bf16.msra.mxu0 %v4113
    %4381 = vmatprep.subr.bf16.mxu0 0
    %4382 = vmatpush1.bf16.msra.mxu0 %v4114
    %4383 = vmatprep.subr.bf16.mxu0 0
    %4384 = vmatpush1.bf16.msra.mxu0 %v4115
    %4385 = vmatprep.subr.bf16.mxu0 0
    %4386 = vmatpush1.bf16.msra.mxu0 %v4116
    %4387 = vmatprep.subr.bf16.mxu0 0
    %4388 = vmatpush1.bf16.msra.mxu0 %v4117
    %4389 = vmatprep.subr.bf16.mxu0 0
    %4390 = vmatpush1.bf16.msra.mxu0 %v4118
    %4391 = vmatprep.mubr.bf16.mxu0 %v3313
    %4392 = vmatmul.mubr.bf16.gmra.mrb[0].mxu0 %v3312
    %v4393 = vpop.f32.mrb[0].mxu0
    %v4394 = vadd.f32 %v3589, %v4393
    %v4395 = vpop.f32.mrb[0].mxu0
    %v4396 = vpop.f32.mrb[0].mxu0
    %v4397 = vadd.f32 %v3589, %v4396
    %v4398 = vpop.f32.mrb[0].mxu0
    %4399 = vdwg.mxu0
    %4400 = vmatprep.subr.bf16.mxu0 0
    %4401 = vmatpush1.bf16.msra.mxu0 %v4119
    %4402 = vmatprep.subr.bf16.mxu0 0
    %4403 = vmatpush1.bf16.msra.mxu0 %v4120
    %4404 = vmatprep.subr.bf16.mxu0 0
    %4405 = vmatpush1.bf16.msra.mxu0 %v4121
    %4406 = vmatprep.subr.bf16.mxu0 0
    %4407 = vmatpush1.bf16.msra.mxu0 %v4122
    %4408 = vmatprep.subr.bf16.mxu0 0
    %4409 = vmatpush1.bf16.msra.mxu0 %v4123
    %4410 = vmatprep.subr.bf16.mxu0 0
    %4411 = vmatpush1.bf16.msra.mxu0 %v4124
    %4412 = vmatprep.subr.bf16.mxu0 0
    %4413 = vmatpush1.bf16.msra.mxu0 %v4125
    %4414 = vmatprep.subr.bf16.mxu0 0
    %4415 = vmatpush1.bf16.msra.mxu0 %v4126
    %4416 = vmatprep.subr.bf16.mxu0 0
    %4417 = vmatpush1.bf16.msra.mxu0 %v4127
    %4418 = vmatprep.subr.bf16.mxu0 0
    %4419 = vmatpush1.bf16.msra.mxu0 %v4128
    %4420 = vmatprep.subr.bf16.mxu0 0
    %4421 = vmatpush1.bf16.msra.mxu0 %v4129
    %4422 = vmatprep.subr.bf16.mxu0 0
    %4423 = vmatpush1.bf16.msra.mxu0 %v4130
    %4424 = vmatprep.subr.bf16.mxu0 0
    %4425 = vmatpush1.bf16.msra.mxu0 %v4131
    %4426 = vmatprep.subr.bf16.mxu0 0
    %4427 = vmatpush1.bf16.msra.mxu0 %v4132
    %4428 = vmatprep.subr.bf16.mxu0 0
    %4429 = vmatpush1.bf16.msra.mxu0 %v4133
    %4430 = vmatprep.subr.bf16.mxu0 0
    %4431 = vmatpush1.bf16.msra.mxu0 %v4134
    %4432 = vmatprep.mubr.bf16.mxu0 %v3315
    %4433 = vmatmul.mubr.bf16.gmra.mrb[0].mxu0 %v3314
    %v4434 = vpop.f32.mrb[0].mxu0
    %v4435 = vadd.f32 %v4394, %v4434
    %v4436 = vpop.f32.mrb[0].mxu0
    %v4437 = vpop.f32.mrb[0].mxu0
    %v4438 = vadd.f32 %v4397, %v4437
    %v4439 = vpop.f32.mrb[0].mxu0
    %4440 = vdwg.mxu0
    %4441 = vmatprep.subr.bf16.mxu0 0
    %4442 = vmatpush1.bf16.msra.mxu0 %v4135
    %4443 = vmatprep.subr.bf16.mxu0 0
    %4444 = vmatpush1.bf16.msra.mxu0 %v4136
    %4445 = vmatprep.subr.bf16.mxu0 0
    %4446 = vmatpush1.bf16.msra.mxu0 %v4137
    %4447 = vmatprep.subr.bf16.mxu0 0
    %4448 = vmatpush1.bf16.msra.mxu0 %v4138
    %4449 = vmatprep.subr.bf16.mxu0 0
    %4450 = vmatpush1.bf16.msra.mxu0 %v4139
    %4451 = vmatprep.subr.bf16.mxu0 0
    %4452 = vmatpush1.bf16.msra.mxu0 %v4140
    %4453 = vmatprep.subr.bf16.mxu0 0
    %4454 = vmatpush1.bf16.msra.mxu0 %v4141
    %4455 = vmatprep.subr.bf16.mxu0 0
    %4456 = vmatpush1.bf16.msra.mxu0 %v4142
    %4457 = vmatprep.subr.bf16.mxu0 0
    %4458 = vmatpush1.bf16.msra.mxu0 %v4143
    %4459 = vmatprep.subr.bf16.mxu0 0
    %4460 = vmatpush1.bf16.msra.mxu0 %v4144
    %4461 = vmatprep.subr.bf16.mxu0 0
    %4462 = vmatpush1.bf16.msra.mxu0 %v4145
    %4463 = vmatprep.subr.bf16.mxu0 0
    %4464 = vmatpush1.bf16.msra.mxu0 %v4146
    %4465 = vmatprep.subr.bf16.mxu0 0
    %4466 = vmatpush1.bf16.msra.mxu0 %v4147
    %4467 = vmatprep.subr.bf16.mxu0 0
    %4468 = vmatpush1.bf16.msra.mxu0 %v4148
    %4469 = vmatprep.subr.bf16.mxu0 0
    %4470 = vmatpush1.bf16.msra.mxu0 %v4149
    %4471 = vmatprep.subr.bf16.mxu0 0
    %4472 = vmatpush1.bf16.msra.mxu0 %v4150
    %4473 = vmatprep.mubr.bf16.mxu0 %v3317
    %4474 = vmatmul.mubr.bf16.gmra.mrb[0].mxu0 %v3316
    %v4475 = vpop.f32.mrb[0].mxu0
    %v4476 = vadd.f32 %v4435, %v4475
    %v4477 = vpop.f32.mrb[0].mxu0
    %v4478 = vpop.f32.mrb[0].mxu0
    %v4479 = vadd.f32 %v4438, %v4478
    %v4480 = vpop.f32.mrb[0].mxu0
    %4481 = vdwg.mxu0
    %4482 = vmatprep.subr.bf16.mxu0 0
    %4483 = vmatpush1.bf16.msra.mxu0 %v4151
    %4484 = vmatprep.subr.bf16.mxu0 0
    %4485 = vmatpush1.bf16.msra.mxu0 %v4152
    %4486 = vmatprep.subr.bf16.mxu0 0
    %4487 = vmatpush1.bf16.msra.mxu0 %v4153
    %4488 = vmatprep.subr.bf16.mxu0 0
    %4489 = vmatpush1.bf16.msra.mxu0 %v4154
    %4490 = vmatprep.subr.bf16.mxu0 0
    %4491 = vmatpush1.bf16.msra.mxu0 %v4155
    %4492 = vmatprep.subr.bf16.mxu0 0
    %4493 = vmatpush1.bf16.msra.mxu0 %v4156
    %4494 = vmatprep.subr.bf16.mxu0 0
    %4495 = vmatpush1.bf16.msra.mxu0 %v4157
    %4496 = vmatprep.subr.bf16.mxu0 0
    %4497 = vmatpush1.bf16.msra.mxu0 %v4158
    %4498 = vmatprep.subr.bf16.mxu0 0
    %4499 = vmatpush1.bf16.msra.mxu0 %v4159
    %4500 = vmatprep.subr.bf16.mxu0 0
    %4501 = vmatpush1.bf16.msra.mxu0 %v4160
    %4502 = vmatprep.subr.bf16.mxu0 0
    %4503 = vmatpush1.bf16.msra.mxu0 %v4161
    %4504 = vmatprep.subr.bf16.mxu0 0
    %4505 = vmatpush1.bf16.msra.mxu0 %v4162
    %4506 = vmatprep.subr.bf16.mxu0 0
    %4507 = vmatpush1.bf16.msra.mxu0 %v4163
    %4508 = vmatprep.subr.bf16.mxu0 0
    %4509 = vmatpush1.bf16.msra.mxu0 %v4164
    %4510 = vmatprep.subr.bf16.mxu0 0
    %4511 = vmatpush1.bf16.msra.mxu0 %v4165
    %4512 = vmatprep.subr.bf16.mxu0 0
    %4513 = vmatpush1.bf16.msra.mxu0 %v4166
    %4514 = vmatprep.mubr.bf16.mxu0 %v3319
    %4515 = vmatmul.mubr.bf16.gmra.mrb[0].mxu0 %v3318
    %v4516 = vpop.f32.mrb[0].mxu0
    %v4517 = vadd.f32 %v4476, %v4516
    %v4518 = vpop.f32.mrb[0].mxu0
    %v4519 = vpop.f32.mrb[0].mxu0
    %v4520 = vadd.f32 %v4479, %v4519
    %v4521 = vpop.f32.mrb[0].mxu0
    %4522 = vdwg.mxu0
    %4523 = vmatprep.subr.bf16.mxu0 0
    %4524 = vmatpush1.bf16.msra.mxu0 %v4167
    %4525 = vmatprep.subr.bf16.mxu0 0
    %4526 = vmatpush1.bf16.msra.mxu0 %v4168
    %4527 = vmatprep.subr.bf16.mxu0 0
    %4528 = vmatpush1.bf16.msra.mxu0 %v4169
    %4529 = vmatprep.subr.bf16.mxu0 0
    %4530 = vmatpush1.bf16.msra.mxu0 %v4170
    %4531 = vmatprep.subr.bf16.mxu0 0
    %4532 = vmatpush1.bf16.msra.mxu0 %v4171
    %4533 = vmatprep.subr.bf16.mxu0 0
    %4534 = vmatpush1.bf16.msra.mxu0 %v4172
    %4535 = vmatprep.subr.bf16.mxu0 0
    %4536 = vmatpush1.bf16.msra.mxu0 %v4173
    %4537 = vmatprep.subr.bf16.mxu0 0
    %4538 = vmatpush1.bf16.msra.mxu0 %v4174
    %4539 = vmatprep.subr.bf16.mxu0 0
    %4540 = vmatpush1.bf16.msra.mxu0 %v4175
    %4541 = vmatprep.subr.bf16.mxu0 0
    %4542 = vmatpush1.bf16.msra.mxu0 %v4176
    %4543 = vmatprep.subr.bf16.mxu0 0
    %4544 = vmatpush1.bf16.msra.mxu0 %v4177
    %4545 = vmatprep.subr.bf16.mxu0 0
    %4546 = vmatpush1.bf16.msra.mxu0 %v4178
    %4547 = vmatprep.subr.bf16.mxu0 0
    %4548 = vmatpush1.bf16.msra.mxu0 %v4179
    %4549 = vmatprep.subr.bf16.mxu0 0
    %4550 = vmatpush1.bf16.msra.mxu0 %v4180
    %4551 = vmatprep.subr.bf16.mxu0 0
    %4552 = vmatpush1.bf16.msra.mxu0 %v4181
    %4553 = vmatprep.subr.bf16.mxu0 0
    %4554 = vmatpush1.bf16.msra.mxu0 %v4182
    %4555 = vmatprep.mubr.bf16.mxu0 %v3321
    %4556 = vmatmul.mubr.bf16.gmra.mrb[0].mxu0 %v3320
    %v4557 = vpop.f32.mrb[0].mxu0
    %v4558 = vadd.f32 %v4517, %v4557
    %v4559 = vpop.f32.mrb[0].mxu0
    %v4560 = vpop.f32.mrb[0].mxu0
    %v4561 = vadd.f32 %v4520, %v4560
    %v4562 = vpop.f32.mrb[0].mxu0
    %4563 = vdwg.mxu0
    %4564 = vmatprep.subr.bf16.mxu0 0
    %4565 = vmatpush1.bf16.msra.mxu0 %v4183
    %4566 = vmatprep.subr.bf16.mxu0 0
    %4567 = vmatpush1.bf16.msra.mxu0 %v4184
    %4568 = vmatprep.subr.bf16.mxu0 0
    %4569 = vmatpush1.bf16.msra.mxu0 %v4185
    %4570 = vmatprep.subr.bf16.mxu0 0
    %4571 = vmatpush1.bf16.msra.mxu0 %v4186
    %4572 = vmatprep.subr.bf16.mxu0 0
    %4573 = vmatpush1.bf16.msra.mxu0 %v4187
    %4574 = vmatprep.subr.bf16.mxu0 0
    %4575 = vmatpush1.bf16.msra.mxu0 %v4188
    %4576 = vmatprep.subr.bf16.mxu0 0
    %4577 = vmatpush1.bf16.msra.mxu0 %v4189
    %4578 = vmatprep.subr.bf16.mxu0 0
    %4579 = vmatpush1.bf16.msra.mxu0 %v4190
    %4580 = vmatprep.subr.bf16.mxu0 0
    %4581 = vmatpush1.bf16.msra.mxu0 %v4191
    %4582 = vmatprep.subr.bf16.mxu0 0
    %4583 = vmatpush1.bf16.msra.mxu0 %v4192
    %4584 = vmatprep.subr.bf16.mxu0 0
    %4585 = vmatpush1.bf16.msra.mxu0 %v4193
    %4586 = vmatprep.subr.bf16.mxu0 0
    %4587 = vmatpush1.bf16.msra.mxu0 %v4194
    %4588 = vmatprep.subr.bf16.mxu0 0
    %4589 = vmatpush1.bf16.msra.mxu0 %v4195
    %4590 = vmatprep.subr.bf16.mxu0 0
    %4591 = vmatpush1.bf16.msra.mxu0 %v4196
    %4592 = vmatprep.subr.bf16.mxu0 0
    %4593 = vmatpush1.bf16.msra.mxu0 %v4197
    %4594 = vmatprep.subr.bf16.mxu0 0
    %4595 = vmatpush1.bf16.msra.mxu0 %v4198
    %4596 = vmatprep.mubr.bf16.mxu0 %v3323
    %4597 = vmatmul.mubr.bf16.gmra.mrb[0].mxu0 %v3322
    %v4598 = vpop.f32.mrb[0].mxu0
    %v4599 = vadd.f32 %v4558, %v4598
    %v4600 = vpop.f32.mrb[0].mxu0
    %v4601 = vpop.f32.mrb[0].mxu0
    %v4602 = vadd.f32 %v4561, %v4601
    %v4603 = vpop.f32.mrb[0].mxu0
    %4604 = vdwg.mxu0
    %4605 = vmatprep.subr.bf16.mxu0 0
    %4606 = vmatpush1.bf16.msra.mxu0 %v4199
    %4607 = vmatprep.subr.bf16.mxu0 0
    %4608 = vmatpush1.bf16.msra.mxu0 %v4200
    %4609 = vmatprep.subr.bf16.mxu0 0
    %4610 = vmatpush1.bf16.msra.mxu0 %v4201
    %4611 = vmatprep.subr.bf16.mxu0 0
    %4612 = vmatpush1.bf16.msra.mxu0 %v4202
    %4613 = vmatprep.subr.bf16.mxu0 0
    %4614 = vmatpush1.bf16.msra.mxu0 %v4203
    %4615 = vmatprep.subr.bf16.mxu0 0
    %4616 = vmatpush1.bf16.msra.mxu0 %v4204
    %4617 = vmatprep.subr.bf16.mxu0 0
    %4618 = vmatpush1.bf16.msra.mxu0 %v4205
    %4619 = vmatprep.subr.bf16.mxu0 0
    %4620 = vmatpush1.bf16.msra.mxu0 %v4206
    %4621 = vmatprep.subr.bf16.mxu0 0
    %4622 = vmatpush1.bf16.msra.mxu0 %v4207
    %4623 = vmatprep.subr.bf16.mxu0 0
    %4624 = vmatpush1.bf16.msra.mxu0 %v4208
    %4625 = vmatprep.subr.bf16.mxu0 0
    %4626 = vmatpush1.bf16.msra.mxu0 %v4209
    %4627 = vmatprep.subr.bf16.mxu0 0
    %4628 = vmatpush1.bf16.msra.mxu0 %v4210
    %4629 = vmatprep.subr.bf16.mxu0 0
    %4630 = vmatpush1.bf16.msra.mxu0 %v4211
    %4631 = vmatprep.subr.bf16.mxu0 0
    %4632 = vmatpush1.bf16.msra.mxu0 %v4212
    %4633 = vmatprep.subr.bf16.mxu0 0
    %4634 = vmatpush1.bf16.msra.mxu0 %v4213
    %4635 = vmatprep.subr.bf16.mxu0 0
    %4636 = vmatpush1.bf16.msra.mxu0 %v4214
    %4637 = vmatprep.mubr.bf16.mxu0 %v3325
    %4638 = vmatmul.mubr.bf16.gmra.mrb[0].mxu0 %v3324
    %v4639 = vpop.f32.mrb[0].mxu0
    %v4640 = vadd.f32 %v4599, %v4639
    %v4641 = vpop.f32.mrb[0].mxu0
    %v4642 = vpop.f32.mrb[0].mxu0
    %v4643 = vadd.f32 %v4602, %v4642
    %v4644 = vpop.f32.mrb[0].mxu0
    %4645 = vdwg.mxu0
    %4646 = vmatprep.subr.bf16.mxu0 0
    %4647 = vmatpush1.bf16.msra.mxu0 %v4215
    %4648 = vmatprep.subr.bf16.mxu0 0
    %4649 = vmatpush1.bf16.msra.mxu0 %v4216
    %4650 = vmatprep.subr.bf16.mxu0 0
    %4651 = vmatpush1.bf16.msra.mxu0 %v4217
    %4652 = vmatprep.subr.bf16.mxu0 0
    %4653 = vmatpush1.bf16.msra.mxu0 %v4218
    %4654 = vmatprep.subr.bf16.mxu0 0
    %4655 = vmatpush1.bf16.msra.mxu0 %v4219
    %4656 = vmatprep.subr.bf16.mxu0 0
    %4657 = vmatpush1.bf16.msra.mxu0 %v4220
    %4658 = vmatprep.subr.bf16.mxu0 0
    %4659 = vmatpush1.bf16.msra.mxu0 %v4221
    %4660 = vmatprep.subr.bf16.mxu0 0
    %4661 = vmatpush1.bf16.msra.mxu0 %v4222
    %4662 = vmatprep.subr.bf16.mxu0 0
    %4663 = vmatpush1.bf16.msra.mxu0 %v4223
    %4664 = vmatprep.subr.bf16.mxu0 0
    %4665 = vmatpush1.bf16.msra.mxu0 %v4224
    %4666 = vmatprep.subr.bf16.mxu0 0
    %4667 = vmatpush1.bf16.msra.mxu0 %v4225
    %4668 = vmatprep.subr.bf16.mxu0 0
    %4669 = vmatpush1.bf16.msra.mxu0 %v4226
    %4670 = vmatprep.subr.bf16.mxu0 0
    %4671 = vmatpush1.bf16.msra.mxu0 %v4227
    %4672 = vmatprep.subr.bf16.mxu0 0
    %4673 = vmatpush1.bf16.msra.mxu0 %v4228
    %4674 = vmatprep.subr.bf16.mxu0 0
    %4675 = vmatpush1.bf16.msra.mxu0 %v4229
    %4676 = vmatprep.subr.bf16.mxu0 0
    %4677 = vmatpush1.bf16.msra.mxu0 %v4230
    %4678 = vmatprep.mubr.bf16.mxu0 %v3327
    %4679 = vmatmul.mubr.bf16.gmra.mrb[0].mxu0 %v3326
    %v4680 = vpop.f32.mrb[0].mxu0
    %v4681 = vadd.f32 %v4640, %v4680
    %v4682 = vpop.f32.mrb[0].mxu0
    %v4683 = vpop.f32.mrb[0].mxu0
    %v4684 = vadd.f32 %v4643, %v4683
    %v4685 = vpop.f32.mrb[0].mxu0
    %4686 = vdwg.mxu0
    %v4687 = vadd.f32 %v2081, %v4681
    %v4688 = vadd.f32 %v2082, %v4684
    %v4689 = vld [vmem:[%s18] sm:$0x1]
    %v4690 = vld [vmem:[%s19] sm:$0x1]
    %4691 = vadd.xlane.f32.xlu0 %v4687
    %v4692 = vpop.xlane.xlu0 %4691
    %4693 = vadd.xlane.f32.xlu0 %v4688
    %v4694 = vpop.xlane.xlu0 %4693
    %v4695 = vmul.f32 %v4692, 0.03125
    %v4696 = vmul.f32 %v4694, 0.03125
    %v4697 = vsub.f32 %v4687, %v4695
    %v4698 = vsub.f32 %v4688, %v4696
    %v4699 = vmul.f32 %v4697, %v199
    %v4700 = vmul.f32 %v4698, %v199
    %v4701 = vmul.f32 %v4699, %v4699
    %v4702 = vmul.f32 %v4700, %v4700
    %4703 = vadd.xlane.f32.xlu0 %v4701
    %v4704 = vpop.xlane.xlu0 %4703
    %4705 = vadd.xlane.f32.xlu0 %v4702
    %v4706 = vpop.xlane.xlu0 %4705
    %v4707 = vmul.f32 %v4704, 0.03125
    %v4708 = vmul.f32 %v4706, 0.03125
    %v4709 = vadd.f32 %v4707, 1e-05
    %v4710 = vadd.f32 %v4708, 1e-05
    %v4711 = vrsqrt.pop %v4709
    %v4712 = vrsqrt.pop %v4710
    %v4713 = vmul.f32 %v4699, %v4711
    %v4714 = vmul.f32 %v4700, %v4712
    %v4716 = vlaneseq
    %v4717 = vshrl.u32 %v4716, 7
    %v4718 = vsub.s32 0, %v4717
    %v4719 = vrot.slane %v4689, %v4718
    %v4721 = vmul.f32 %v4713, %v4719
    %v4722 = vmul.f32 %v4714, %v4719
    %v4724 = vlaneseq
    %v4725 = vshrl.u32 %v4724, 7
    %v4726 = vsub.s32 0, %v4725
    %v4727 = vrot.slane %v4690, %v4726
    %v4729 = vadd.f32 %v4721, %v4727
    %v4730 = vadd.f32 %v4722, %v4727
    %v4731 = vpack.c.bf16 %v4730, %v4729
    %s4732 = scalar_lea.vmem [#allocation7], 64
    %v4733 = vld [vmem:[%s4732] sm:$0xf]
    %v4734 = vld [vmem:[%s4732 + $0x4] sm:$0xf]
    %v4735 = vld [vmem:[%s4732 + $0x8] sm:$0xf]
    %v4736 = vld [vmem:[%s4732 + $0xc] sm:$0xf]
    %v4737 = vld [vmem:[%s4732 + $0x10] sm:$0xf]
    %v4738 = vld [vmem:[%s4732 + $0x14] sm:$0xf]
    %v4739 = vld [vmem:[%s4732 + $0x18] sm:$0xf]
    %v4740 = vld [vmem:[%s4732 + $0x1c] sm:$0xf]
    %v4741 = vld [vmem:[%s4732 + $0x20] sm:$0xf]
    %v4742 = vld [vmem:[%s4732 + $0x24] sm:$0xf]
    %v4743 = vld [vmem:[%s4732 + $0x28] sm:$0xf]
    %v4744 = vld [vmem:[%s4732 + $0x2c] sm:$0xf]
    %v4745 = vld [vmem:[%s4732 + $0x30] sm:$0xf]
    %v4746 = vld [vmem:[%s4732 + $0x34] sm:$0xf]
    %v4747 = vld [vmem:[%s4732 + $0x38] sm:$0xf]
    %v4748 = vld [vmem:[%s4732 + $0x3c] sm:$0xf]
    %s4749 = scalar_lea.vmem %s5, 1
    %v4750 = vld [vmem:[%s4749] sm:$0x1]
    %v4752 = vlaneseq
    %v4753 = vshrl.u32 %v4752, 7
    %v4754 = vsub.s32 0, %v4753
    %v4755 = vrot.slane %v4750, %v4754
    %v4773 = vunpack.c.l.b16 %v4733
    %v4774 = vunpack.c.l.b16 %v4734
    %v4775 = vunpack.c.l.b16 %v4735
    %v4776 = vunpack.c.l.b16 %v4736
    %v4777 = vunpack.c.l.b16 %v4737
    %v4778 = vunpack.c.l.b16 %v4738
    %v4779 = vunpack.c.l.b16 %v4739
    %v4780 = vunpack.c.l.b16 %v4740
    %v4781 = vunpack.c.l.b16 %v4741
    %v4782 = vunpack.c.l.b16 %v4742
    %v4783 = vunpack.c.l.b16 %v4743
    %v4784 = vunpack.c.l.b16 %v4744
    %v4785 = vunpack.c.l.b16 %v4745
    %v4786 = vunpack.c.l.b16 %v4746
    %v4787 = vunpack.c.l.b16 %v4747
    %v4788 = vunpack.c.l.b16 %v4748
    %v4789 = vpack.c.b16 %v4774, %v4773
    %v4790 = vpack.c.b16 %v4776, %v4775
    %v4791 = vpack.c.b16 %v4778, %v4777
    %v4792 = vpack.c.b16 %v4780, %v4779
    %v4793 = vpack.c.b16 %v4782, %v4781
    %v4794 = vpack.c.b16 %v4784, %v4783
    %v4795 = vpack.c.b16 %v4786, %v4785
    %v4796 = vpack.c.b16 %v4788, %v4787
    %4805 = vmatprep.subr.bf16.mxu0 0
    %4806 = vmatpush1.bf16.msra.mxu0 %v4789
    %4807 = vmatprep.subr.bf16.mxu0 0
    %4808 = vmatpush1.bf16.msra.mxu0 %v4790
    %4809 = vmatprep.subr.bf16.mxu0 0
    %4810 = vmatpush1.bf16.msra.mxu0 %v4791
    %4811 = vmatprep.subr.bf16.mxu0 0
    %4812 = vmatpush1.bf16.msra.mxu0 %v4792
    %4813 = vmatprep.subr.bf16.mxu0 0
    %4814 = vmatpush1.bf16.msra.mxu0 %v4793
    %4815 = vmatprep.subr.bf16.mxu0 0
    %4816 = vmatpush1.bf16.msra.mxu0 %v4794
    %4817 = vmatprep.subr.bf16.mxu0 0
    %4818 = vmatpush1.bf16.msra.mxu0 %v4795
    %4819 = vmatprep.subr.bf16.mxu0 0
    %4820 = vmatpush1.bf16.msra.mxu0 %v4796
    %4821 = vmatprep.subr.bf16.mxu0 0
    %4822 = vmatpush1.bf16.msra.mxu0 0
    %4823 = vmatprep.subr.bf16.mxu0 0
    %4824 = vmatpush1.bf16.msra.mxu0 0
    %4825 = vmatprep.subr.bf16.mxu0 0
    %4826 = vmatpush1.bf16.msra.mxu0 0
    %4827 = vmatprep.subr.bf16.mxu0 0
    %4828 = vmatpush1.bf16.msra.mxu0 0
    %4829 = vmatprep.subr.bf16.mxu0 0
    %4830 = vmatpush1.bf16.msra.mxu0 0
    %4831 = vmatprep.subr.bf16.mxu0 0
    %4832 = vmatpush1.bf16.msra.mxu0 0
    %4833 = vmatprep.subr.bf16.mxu0 0
    %4834 = vmatpush1.bf16.msra.mxu0 0
    %4835 = vmatprep.subr.bf16.mxu0 0
    %4836 = vmatpush1.bf16.msra.mxu0 0
    %4837 = vmatprep.mubr.bf16.mxu0 0
    %4838 = vmatmul.mubr.bf16.gmra.mrb[0].mxu0 %v4731
    %v4839 = vpop.f32.mrb[0].mxu0
    %v4840 = vadd.f32 %v4755, %v4839
    %v4841 = vpop.f32.mrb[0].mxu0
    %v4842 = vpop.f32.mrb[0].mxu0
    %v4843 = vadd.f32 %v4755, %v4842
    %v4844 = vpop.f32.mrb[0].mxu0
    %4845 = vdwg.mxu0
    %s4846 = scalar_lea.vmem [#allocation8], 64
    %v4847 = vld [vmem:[%s4846] sm:$0xf]
    %v4848 = vld [vmem:[%s4846 + $0x4] sm:$0xf]
    %v4849 = vld [vmem:[%s4846 + $0x8] sm:$0xf]
    %v4850 = vld [vmem:[%s4846 + $0xc] sm:$0xf]
    %v4851 = vld [vmem:[%s4846 + $0x10] sm:$0xf]
    %v4852 = vld [vmem:[%s4846 + $0x14] sm:$0xf]
    %v4853 = vld [vmem:[%s4846 + $0x18] sm:$0xf]
    %v4854 = vld [vmem:[%s4846 + $0x1c] sm:$0xf]
    %v4855 = vld [vmem:[%s4846 + $0x20] sm:$0xf]
    %v4856 = vld [vmem:[%s4846 + $0x24] sm:$0xf]
    %v4857 = vld [vmem:[%s4846 + $0x28] sm:$0xf]
    %v4858 = vld [vmem:[%s4846 + $0x2c] sm:$0xf]
    %v4859 = vld [vmem:[%s4846 + $0x30] sm:$0xf]
    %v4860 = vld [vmem:[%s4846 + $0x34] sm:$0xf]
    %v4861 = vld [vmem:[%s4846 + $0x38] sm:$0xf]
    %v4862 = vld [vmem:[%s4846 + $0x3c] sm:$0xf]
    %s4863 = scalar_lea.vmem %s7, 1
    %v4864 = vld [vmem:[%s4863] sm:$0x1]
    %v4866 = vlaneseq
    %v4867 = vshrl.u32 %v4866, 7
    %v4868 = vsub.s32 0, %v4867
    %v4869 = vrot.slane %v4864, %v4868
    %v4887 = vunpack.c.l.b16 %v4847
    %v4888 = vunpack.c.l.b16 %v4848
    %v4889 = vunpack.c.l.b16 %v4849
    %v4890 = vunpack.c.l.b16 %v4850
    %v4891 = vunpack.c.l.b16 %v4851
    %v4892 = vunpack.c.l.b16 %v4852
    %v4893 = vunpack.c.l.b16 %v4853
    %v4894 = vunpack.c.l.b16 %v4854
    %v4895 = vunpack.c.l.b16 %v4855
    %v4896 = vunpack.c.l.b16 %v4856
    %v4897 = vunpack.c.l.b16 %v4857
    %v4898 = vunpack.c.l.b16 %v4858
    %v4899 = vunpack.c.l.b16 %v4859
    %v4900 = vunpack.c.l.b16 %v4860
    %v4901 = vunpack.c.l.b16 %v4861
    %v4902 = vunpack.c.l.b16 %v4862
    %v4903 = vpack.c.b16 %v4888, %v4887
    %v4904 = vpack.c.b16 %v4890, %v4889
    %v4905 = vpack.c.b16 %v4892, %v4891
    %v4906 = vpack.c.b16 %v4894, %v4893
    %v4907 = vpack.c.b16 %v4896, %v4895
    %v4908 = vpack.c.b16 %v4898, %v4897
    %v4909 = vpack.c.b16 %v4900, %v4899
    %v4910 = vpack.c.b16 %v4902, %v4901
    %4919 = vmatprep.subr.bf16.mxu0 0
    %4920 = vmatpush1.bf16.msra.mxu0 %v4903
    %4921 = vmatprep.subr.bf16.mxu0 0
    %4922 = vmatpush1.bf16.msra.mxu0 %v4904
    %4923 = vmatprep.subr.bf16.mxu0 0
    %4924 = vmatpush1.bf16.msra.mxu0 %v4905
    %4925 = vmatprep.subr.bf16.mxu0 0
    %4926 = vmatpush1.bf16.msra.mxu0 %v4906
    %4927 = vmatprep.subr.bf16.mxu0 0
    %4928 = vmatpush1.bf16.msra.mxu0 %v4907
    %4929 = vmatprep.subr.bf16.mxu0 0
    %4930 = vmatpush1.bf16.msra.mxu0 %v4908
    %4931 = vmatprep.subr.bf16.mxu0 0
    %4932 = vmatpush1.bf16.msra.mxu0 %v4909
    %4933 = vmatprep.subr.bf16.mxu0 0
    %4934 = vmatpush1.bf16.msra.mxu0 %v4910
    %4935 = vmatprep.subr.bf16.mxu0 0
    %4936 = vmatpush1.bf16.msra.mxu0 0
    %4937 = vmatprep.subr.bf16.mxu0 0
    %4938 = vmatpush1.bf16.msra.mxu0 0
    %4939 = vmatprep.subr.bf16.mxu0 0
    %4940 = vmatpush1.bf16.msra.mxu0 0
    %4941 = vmatprep.subr.bf16.mxu0 0
    %4942 = vmatpush1.bf16.msra.mxu0 0
    %4943 = vmatprep.subr.bf16.mxu0 0
    %4944 = vmatpush1.bf16.msra.mxu0 0
    %4945 = vmatprep.subr.bf16.mxu0 0
    %4946 = vmatpush1.bf16.msra.mxu0 0
    %4947 = vmatprep.subr.bf16.mxu0 0
    %4948 = vmatpush1.bf16.msra.mxu0 0
    %4949 = vmatprep.subr.bf16.mxu0 0
    %4950 = vmatpush1.bf16.msra.mxu0 0
    %4951 = vmatprep.mubr.bf16.mxu0 0
    %4952 = vmatmul.mubr.bf16.gmra.mrb[0].mxu0 %v4731
    %v4953 = vpop.f32.mrb[0].mxu0
    %v4954 = vadd.f32 %v4869, %v4953
    %v4955 = vpop.f32.mrb[0].mxu0
    %v4956 = vpop.f32.mrb[0].mxu0
    %v4957 = vadd.f32 %v4869, %v4956
    %v4958 = vpop.f32.mrb[0].mxu0
    %4959 = vdwg.mxu0
    %s4960 = scalar_lea.vmem [#allocation10], 64
    %v4961 = vld [vmem:[%s4960] sm:$0xf]
    %v4962 = vld [vmem:[%s4960 + $0x4] sm:$0xf]
    %v4963 = vld [vmem:[%s4960 + $0x8] sm:$0xf]
    %v4964 = vld [vmem:[%s4960 + $0xc] sm:$0xf]
    %v4965 = vld [vmem:[%s4960 + $0x10] sm:$0xf]
    %v4966 = vld [vmem:[%s4960 + $0x14] sm:$0xf]
    %v4967 = vld [vmem:[%s4960 + $0x18] sm:$0xf]
    %v4968 = vld [vmem:[%s4960 + $0x1c] sm:$0xf]
    %v4969 = vld [vmem:[%s4960 + $0x20] sm:$0xf]
    %v4970 = vld [vmem:[%s4960 + $0x24] sm:$0xf]
    %v4971 = vld [vmem:[%s4960 + $0x28] sm:$0xf]
    %v4972 = vld [vmem:[%s4960 + $0x2c] sm:$0xf]
    %v4973 = vld [vmem:[%s4960 + $0x30] sm:$0xf]
    %v4974 = vld [vmem:[%s4960 + $0x34] sm:$0xf]
    %v4975 = vld [vmem:[%s4960 + $0x38] sm:$0xf]
    %v4976 = vld [vmem:[%s4960 + $0x3c] sm:$0xf]
    %s4977 = scalar_lea.vmem %s9, 1
    %v4978 = vld [vmem:[%s4977] sm:$0x1]
    %v4980 = vlaneseq
    %v4981 = vshrl.u32 %v4980, 7
    %v4982 = vsub.s32 0, %v4981
    %v4983 = vrot.slane %v4978, %v4982
    %v5001 = vunpack.c.l.b16 %v4961
    %v5002 = vunpack.c.l.b16 %v4962
    %v5003 = vunpack.c.l.b16 %v4963
    %v5004 = vunpack.c.l.b16 %v4964
    %v5005 = vunpack.c.l.b16 %v4965
    %v5006 = vunpack.c.l.b16 %v4966
    %v5007 = vunpack.c.l.b16 %v4967
    %v5008 = vunpack.c.l.b16 %v4968
    %v5009 = vunpack.c.l.b16 %v4969
    %v5010 = vunpack.c.l.b16 %v4970
    %v5011 = vunpack.c.l.b16 %v4971
    %v5012 = vunpack.c.l.b16 %v4972
    %v5013 = vunpack.c.l.b16 %v4973
    %v5014 = vunpack.c.l.b16 %v4974
    %v5015 = vunpack.c.l.b16 %v4975
    %v5016 = vunpack.c.l.b16 %v4976
    %v5017 = vpack.c.b16 %v5002, %v5001
    %v5018 = vpack.c.b16 %v5004, %v5003
    %v5019 = vpack.c.b16 %v5006, %v5005
    %v5020 = vpack.c.b16 %v5008, %v5007
    %v5021 = vpack.c.b16 %v5010, %v5009
    %v5022 = vpack.c.b16 %v5012, %v5011
    %v5023 = vpack.c.b16 %v5014, %v5013
    %v5024 = vpack.c.b16 %v5016, %v5015
    %5033 = vmatprep.subr.bf16.mxu0 0
    %5034 = vmatpush1.bf16.msra.mxu0 %v5017
    %5035 = vmatprep.subr.bf16.mxu0 0
    %5036 = vmatpush1.bf16.msra.mxu0 %v5018
    %5037 = vmatprep.subr.bf16.mxu0 0
    %5038 = vmatpush1.bf16.msra.mxu0 %v5019
    %5039 = vmatprep.subr.bf16.mxu0 0
    %5040 = vmatpush1.bf16.msra.mxu0 %v5020
    %5041 = vmatprep.subr.bf16.mxu0 0
    %5042 = vmatpush1.bf16.msra.mxu0 %v5021
    %5043 = vmatprep.subr.bf16.mxu0 0
    %5044 = vmatpush1.bf16.msra.mxu0 %v5022
    %5045 = vmatprep.subr.bf16.mxu0 0
    %5046 = vmatpush1.bf16.msra.mxu0 %v5023
    %5047 = vmatprep.subr.bf16.mxu0 0
    %5048 = vmatpush1.bf16.msra.mxu0 %v5024
    %5049 = vmatprep.subr.bf16.mxu0 0
    %5050 = vmatpush1.bf16.msra.mxu0 0
    %5051 = vmatprep.subr.bf16.mxu0 0
    %5052 = vmatpush1.bf16.msra.mxu0 0
    %5053 = vmatprep.subr.bf16.mxu0 0
    %5054 = vmatpush1.bf16.msra.mxu0 0
    %5055 = vmatprep.subr.bf16.mxu0 0
    %5056 = vmatpush1.bf16.msra.mxu0 0
    %5057 = vmatprep.subr.bf16.mxu0 0
    %5058 = vmatpush1.bf16.msra.mxu0 0
    %5059 = vmatprep.subr.bf16.mxu0 0
    %5060 = vmatpush1.bf16.msra.mxu0 0
    %5061 = vmatprep.subr.bf16.mxu0 0
    %5062 = vmatpush1.bf16.msra.mxu0 0
    %5063 = vmatprep.subr.bf16.mxu0 0
    %5064 = vmatpush1.bf16.msra.mxu0 0
    %5065 = vmatprep.mubr.bf16.mxu0 0
    %5066 = vmatmul.mubr.bf16.gmra.mrb[0].mxu0 %v4731
    %v5067 = vpop.f32.mrb[0].mxu0
    %v5068 = vadd.f32 %v4983, %v5067
    %v5069 = vpop.f32.mrb[0].mxu0
    %v5070 = vpop.f32.mrb[0].mxu0
    %v5071 = vadd.f32 %v4983, %v5070
    %v5072 = vpop.f32.mrb[0].mxu0
    %5073 = vdwg.mxu0
    %v5074 = vmul.f32 %v4954, %v654
    %v5075 = vmul.f32 %v4954, %v658
    %v5076 = vmul.f32 %v4954, %v662
    %v5077 = vmul.f32 %v4954, %v666
    %v5078 = vmul.f32 %v4957, %v654
    %v5079 = vmul.f32 %v4957, %v658
    %v5080 = vmul.f32 %v4957, %v662
    %v5081 = vmul.f32 %v4957, %v666
    %v5082 = vmul.f32 %v5068, %v654
    %v5083 = vmul.f32 %v5068, %v658
    %v5084 = vmul.f32 %v5068, %v662
    %v5085 = vmul.f32 %v5068, %v666
    %v5086 = vmul.f32 %v5071, %v654
    %v5087 = vmul.f32 %v5071, %v658
    %v5088 = vmul.f32 %v5071, %v662
    %v5089 = vmul.f32 %v5071, %v666
    %5090 = vmatprep.subr.mxu0 0.0
    %5091 = vmatpush1.xpose.msra.mxu0 %v5074
    %5092 = vmatprep.subr.mxu0 0.0
    %5093 = vmatpush1.xpose.msra.mxu0 0.0
    %5094 = vmatprep.subr.mxu0 0.0
    %5095 = vmatpush1.xpose.msra.mxu0 0.0
    %5096 = vmatprep.subr.mxu0 0.0
    %5097 = vmatpush1.xpose.msra.mxu0 0.0
    %5098 = vmatprep.subr.mxu0 0.0
    %5099 = vmatpush1.xpose.msra.mxu0 0.0
    %5100 = vmatprep.subr.mxu0 0.0
    %5101 = vmatpush1.xpose.msra.mxu0 0.0
    %5102 = vmatprep.subr.mxu0 0.0
    %5103 = vmatpush1.xpose.msra.mxu0 0.0
    %5104 = vmatprep.subr.mxu0 0.0
    %5105 = vmatpush1.xpose.msra.mxu0 0.0
    %5106 = vmatprep.subr.mxu0 0.0
    %5107 = vmatpush1.xpose.msra.mxu0 0.0
    %5108 = vmatprep.subr.mxu0 0.0
    %5109 = vmatpush1.xpose.msra.mxu0 0.0
    %5110 = vmatprep.subr.mxu0 0.0
    %5111 = vmatpush1.xpose.msra.mxu0 0.0
    %5112 = vmatprep.subr.mxu0 0.0
    %5113 = vmatpush1.xpose.msra.mxu0 0.0
    %5114 = vmatprep.subr.mxu0 0.0
    %5115 = vmatpush1.xpose.msra.mxu0 0.0
    %5116 = vmatprep.subr.mxu0 0.0
    %5117 = vmatpush1.xpose.msra.mxu0 0.0
    %5118 = vmatprep.subr.mxu0 0.0
    %5119 = vmatpush1.xpose.msra.mxu0 0.0
    %5120 = vmatprep.subr.mxu0 0.0
    %5121 = vmatpush1.xpose.msra.mxu0 0.0
    %5122 = vmatprep.subr.mxu0 0.0
    %5123 = vmatpush1.xpose.msra.mxu0 0.0
    %5124 = vmatprep.subr.mxu0 0.0
    %5125 = vmatpush1.xpose.msra.mxu0 0.0
    %5126 = vmatprep.subr.mxu0 0.0
    %5127 = vmatpush1.xpose.msra.mxu0 0.0
    %5128 = vmatprep.subr.mxu0 0.0
    %5129 = vmatpush1.xpose.msra.mxu0 0.0
    %5130 = vmatprep.subr.mxu0 0.0
    %5131 = vmatpush1.xpose.msra.mxu0 0.0
    %5132 = vmatprep.subr.mxu0 0.0
    %5133 = vmatpush1.xpose.msra.mxu0 0.0
    %5134 = vmatprep.subr.mxu0 0.0
    %5135 = vmatpush1.xpose.msra.mxu0 0.0
    %5136 = vmatprep.subr.mxu0 0.0
    %5137 = vmatpush1.xpose.msra.mxu0 0.0
    %5138 = vmatprep.subr.mxu0 0.0
    %5139 = vmatpush1.xpose.msra.mxu0 0.0
    %5140 = vmatprep.subr.mxu0 0.0
    %5141 = vmatpush1.xpose.msra.mxu0 0.0
    %5142 = vmatprep.subr.mxu0 0.0
    %5143 = vmatpush1.xpose.msra.mxu0 0.0
    %5144 = vmatprep.subr.mxu0 0.0
    %5145 = vmatpush1.xpose.msra.mxu0 0.0
    %5146 = vmatprep.subr.mxu0 0.0
    %5147 = vmatpush1.xpose.msra.mxu0 0.0
    %5148 = vmatprep.subr.mxu0 0.0
    %5149 = vmatpush1.xpose.msra.mxu0 0.0
    %5150 = vmatprep.subr.mxu0 0.0
    %5151 = vmatpush1.xpose.msra.mxu0 0.0
    %5152 = vmatprep.subr.mxu0 0.0
    %5153 = vmatpush1.xpose.msra.mxu0 0.0
    %5154 = vmatprep.mubr.f32.mxu0 0.0
    %5155 = vmatmul.mubr.f32.gmra.mrb[0].mxu0 %v4840
    %v5156 = vpop.f32.mrb[0].mxu0
    %v5157 = vadd.f32 0.0, %v5156
    %v5158 = vpop.f32.mrb[0].mxu0
    %5159 = vdwg.mxu0
    %5160 = vmatprep.subr.mxu0 0.0
    %5161 = vmatpush1.xpose.msra.mxu0 %v5075
    %5162 = vmatprep.subr.mxu0 0.0
    %5163 = vmatpush1.xpose.msra.mxu0 0.0
    %5164 = vmatprep.subr.mxu0 0.0
    %5165 = vmatpush1.xpose.msra.mxu0 0.0
    %5166 = vmatprep.subr.mxu0 0.0
    %5167 = vmatpush1.xpose.msra.mxu0 0.0
    %5168 = vmatprep.subr.mxu0 0.0
    %5169 = vmatpush1.xpose.msra.mxu0 0.0
    %5170 = vmatprep.subr.mxu0 0.0
    %5171 = vmatpush1.xpose.msra.mxu0 0.0
    %5172 = vmatprep.subr.mxu0 0.0
    %5173 = vmatpush1.xpose.msra.mxu0 0.0
    %5174 = vmatprep.subr.mxu0 0.0
    %5175 = vmatpush1.xpose.msra.mxu0 0.0
    %5176 = vmatprep.subr.mxu0 0.0
    %5177 = vmatpush1.xpose.msra.mxu0 0.0
    %5178 = vmatprep.subr.mxu0 0.0
    %5179 = vmatpush1.xpose.msra.mxu0 0.0
    %5180 = vmatprep.subr.mxu0 0.0
    %5181 = vmatpush1.xpose.msra.mxu0 0.0
    %5182 = vmatprep.subr.mxu0 0.0
    %5183 = vmatpush1.xpose.msra.mxu0 0.0
    %5184 = vmatprep.subr.mxu0 0.0
    %5185 = vmatpush1.xpose.msra.mxu0 0.0
    %5186 = vmatprep.subr.mxu0 0.0
    %5187 = vmatpush1.xpose.msra.mxu0 0.0
    %5188 = vmatprep.subr.mxu0 0.0
    %5189 = vmatpush1.xpose.msra.mxu0 0.0
    %5190 = vmatprep.subr.mxu0 0.0
    %5191 = vmatpush1.xpose.msra.mxu0 0.0
    %5192 = vmatprep.subr.mxu0 0.0
    %5193 = vmatpush1.xpose.msra.mxu0 0.0
    %5194 = vmatprep.subr.mxu0 0.0
    %5195 = vmatpush1.xpose.msra.mxu0 0.0
    %5196 = vmatprep.subr.mxu0 0.0
    %5197 = vmatpush1.xpose.msra.mxu0 0.0
    %5198 = vmatprep.subr.mxu0 0.0
    %5199 = vmatpush1.xpose.msra.mxu0 0.0
    %5200 = vmatprep.subr.mxu0 0.0
    %5201 = vmatpush1.xpose.msra.mxu0 0.0
    %5202 = vmatprep.subr.mxu0 0.0
    %5203 = vmatpush1.xpose.msra.mxu0 0.0
    %5204 = vmatprep.subr.mxu0 0.0
    %5205 = vmatpush1.xpose.msra.mxu0 0.0
    %5206 = vmatprep.subr.mxu0 0.0
    %5207 = vmatpush1.xpose.msra.mxu0 0.0
    %5208 = vmatprep.subr.mxu0 0.0
    %5209 = vmatpush1.xpose.msra.mxu0 0.0
    %5210 = vmatprep.subr.mxu0 0.0
    %5211 = vmatpush1.xpose.msra.mxu0 0.0
    %5212 = vmatprep.subr.mxu0 0.0
    %5213 = vmatpush1.xpose.msra.mxu0 0.0
    %5214 = vmatprep.subr.mxu0 0.0
    %5215 = vmatpush1.xpose.msra.mxu0 0.0
    %5216 = vmatprep.subr.mxu0 0.0
    %5217 = vmatpush1.xpose.msra.mxu0 0.0
    %5218 = vmatprep.subr.mxu0 0.0
    %5219 = vmatpush1.xpose.msra.mxu0 0.0
    %5220 = vmatprep.subr.mxu0 0.0
    %5221 = vmatpush1.xpose.msra.mxu0 0.0
    %5222 = vmatprep.subr.mxu0 0.0
    %5223 = vmatpush1.xpose.msra.mxu0 0.0
    %5224 = vmatprep.mubr.f32.mxu0 0.0
    %5225 = vmatmul.mubr.f32.gmra.mrb[0].mxu0 %v4840
    %v5226 = vpop.f32.mrb[0].mxu0
    %v5227 = vadd.f32 0.0, %v5226
    %v5228 = vpop.f32.mrb[0].mxu0
    %5229 = vdwg.mxu0
    %5230 = vmatprep.subr.mxu0 0.0
    %5231 = vmatpush1.xpose.msra.mxu0 %v5076
    %5232 = vmatprep.subr.mxu0 0.0
    %5233 = vmatpush1.xpose.msra.mxu0 0.0
    %5234 = vmatprep.subr.mxu0 0.0
    %5235 = vmatpush1.xpose.msra.mxu0 0.0
    %5236 = vmatprep.subr.mxu0 0.0
    %5237 = vmatpush1.xpose.msra.mxu0 0.0
    %5238 = vmatprep.subr.mxu0 0.0
    %5239 = vmatpush1.xpose.msra.mxu0 0.0
    %5240 = vmatprep.subr.mxu0 0.0
    %5241 = vmatpush1.xpose.msra.mxu0 0.0
    %5242 = vmatprep.subr.mxu0 0.0
    %5243 = vmatpush1.xpose.msra.mxu0 0.0
    %5244 = vmatprep.subr.mxu0 0.0
    %5245 = vmatpush1.xpose.msra.mxu0 0.0
    %5246 = vmatprep.subr.mxu0 0.0
    %5247 = vmatpush1.xpose.msra.mxu0 0.0
    %5248 = vmatprep.subr.mxu0 0.0
    %5249 = vmatpush1.xpose.msra.mxu0 0.0
    %5250 = vmatprep.subr.mxu0 0.0
    %5251 = vmatpush1.xpose.msra.mxu0 0.0
    %5252 = vmatprep.subr.mxu0 0.0
    %5253 = vmatpush1.xpose.msra.mxu0 0.0
    %5254 = vmatprep.subr.mxu0 0.0
    %5255 = vmatpush1.xpose.msra.mxu0 0.0
    %5256 = vmatprep.subr.mxu0 0.0
    %5257 = vmatpush1.xpose.msra.mxu0 0.0
    %5258 = vmatprep.subr.mxu0 0.0
    %5259 = vmatpush1.xpose.msra.mxu0 0.0
    %5260 = vmatprep.subr.mxu0 0.0
    %5261 = vmatpush1.xpose.msra.mxu0 0.0
    %5262 = vmatprep.subr.mxu0 0.0
    %5263 = vmatpush1.xpose.msra.mxu0 0.0
    %5264 = vmatprep.subr.mxu0 0.0
    %5265 = vmatpush1.xpose.msra.mxu0 0.0
    %5266 = vmatprep.subr.mxu0 0.0
    %5267 = vmatpush1.xpose.msra.mxu0 0.0
    %5268 = vmatprep.subr.mxu0 0.0
    %5269 = vmatpush1.xpose.msra.mxu0 0.0
    %5270 = vmatprep.subr.mxu0 0.0
    %5271 = vmatpush1.xpose.msra.mxu0 0.0
    %5272 = vmatprep.subr.mxu0 0.0
    %5273 = vmatpush1.xpose.msra.mxu0 0.0
    %5274 = vmatprep.subr.mxu0 0.0
    %5275 = vmatpush1.xpose.msra.mxu0 0.0
    %5276 = vmatprep.subr.mxu0 0.0
    %5277 = vmatpush1.xpose.msra.mxu0 0.0
    %5278 = vmatprep.subr.mxu0 0.0
    %5279 = vmatpush1.xpose.msra.mxu0 0.0
    %5280 = vmatprep.subr.mxu0 0.0
    %5281 = vmatpush1.xpose.msra.mxu0 0.0
    %5282 = vmatprep.subr.mxu0 0.0
    %5283 = vmatpush1.xpose.msra.mxu0 0.0
    %5284 = vmatprep.subr.mxu0 0.0
    %5285 = vmatpush1.xpose.msra.mxu0 0.0
    %5286 = vmatprep.subr.mxu0 0.0
    %5287 = vmatpush1.xpose.msra.mxu0 0.0
    %5288 = vmatprep.subr.mxu0 0.0
    %5289 = vmatpush1.xpose.msra.mxu0 0.0
    %5290 = vmatprep.subr.mxu0 0.0
    %5291 = vmatpush1.xpose.msra.mxu0 0.0
    %5292 = vmatprep.subr.mxu0 0.0
    %5293 = vmatpush1.xpose.msra.mxu0 0.0
    %5294 = vmatprep.mubr.f32.mxu0 0.0
    %5295 = vmatmul.mubr.f32.gmra.mrb[0].mxu0 %v4840
    %v5296 = vpop.f32.mrb[0].mxu0
    %v5297 = vadd.f32 0.0, %v5296
    %v5298 = vpop.f32.mrb[0].mxu0
    %5299 = vdwg.mxu0
    %5300 = vmatprep.subr.mxu0 0.0
    %5301 = vmatpush1.xpose.msra.mxu0 %v5077
    %5302 = vmatprep.subr.mxu0 0.0
    %5303 = vmatpush1.xpose.msra.mxu0 0.0
    %5304 = vmatprep.subr.mxu0 0.0
    %5305 = vmatpush1.xpose.msra.mxu0 0.0
    %5306 = vmatprep.subr.mxu0 0.0
    %5307 = vmatpush1.xpose.msra.mxu0 0.0
    %5308 = vmatprep.subr.mxu0 0.0
    %5309 = vmatpush1.xpose.msra.mxu0 0.0
    %5310 = vmatprep.subr.mxu0 0.0
    %5311 = vmatpush1.xpose.msra.mxu0 0.0
    %5312 = vmatprep.subr.mxu0 0.0
    %5313 = vmatpush1.xpose.msra.mxu0 0.0
    %5314 = vmatprep.subr.mxu0 0.0
    %5315 = vmatpush1.xpose.msra.mxu0 0.0
    %5316 = vmatprep.subr.mxu0 0.0
    %5317 = vmatpush1.xpose.msra.mxu0 0.0
    %5318 = vmatprep.subr.mxu0 0.0
    %5319 = vmatpush1.xpose.msra.mxu0 0.0
    %5320 = vmatprep.subr.mxu0 0.0
    %5321 = vmatpush1.xpose.msra.mxu0 0.0
    %5322 = vmatprep.subr.mxu0 0.0
    %5323 = vmatpush1.xpose.msra.mxu0 0.0
    %5324 = vmatprep.subr.mxu0 0.0
    %5325 = vmatpush1.xpose.msra.mxu0 0.0
    %5326 = vmatprep.subr.mxu0 0.0
    %5327 = vmatpush1.xpose.msra.mxu0 0.0
    %5328 = vmatprep.subr.mxu0 0.0
    %5329 = vmatpush1.xpose.msra.mxu0 0.0
    %5330 = vmatprep.subr.mxu0 0.0
    %5331 = vmatpush1.xpose.msra.mxu0 0.0
    %5332 = vmatprep.subr.mxu0 0.0
    %5333 = vmatpush1.xpose.msra.mxu0 0.0
    %5334 = vmatprep.subr.mxu0 0.0
    %5335 = vmatpush1.xpose.msra.mxu0 0.0
    %5336 = vmatprep.subr.mxu0 0.0
    %5337 = vmatpush1.xpose.msra.mxu0 0.0
    %5338 = vmatprep.subr.mxu0 0.0
    %5339 = vmatpush1.xpose.msra.mxu0 0.0
    %5340 = vmatprep.subr.mxu0 0.0
    %5341 = vmatpush1.xpose.msra.mxu0 0.0
    %5342 = vmatprep.subr.mxu0 0.0
    %5343 = vmatpush1.xpose.msra.mxu0 0.0
    %5344 = vmatprep.subr.mxu0 0.0
    %5345 = vmatpush1.xpose.msra.mxu0 0.0
    %5346 = vmatprep.subr.mxu0 0.0
    %5347 = vmatpush1.xpose.msra.mxu0 0.0
    %5348 = vmatprep.subr.mxu0 0.0
    %5349 = vmatpush1.xpose.msra.mxu0 0.0
    %5350 = vmatprep.subr.mxu0 0.0
    %5351 = vmatpush1.xpose.msra.mxu0 0.0
    %5352 = vmatprep.subr.mxu0 0.0
    %5353 = vmatpush1.xpose.msra.mxu0 0.0
    %5354 = vmatprep.subr.mxu0 0.0
    %5355 = vmatpush1.xpose.msra.mxu0 0.0
    %5356 = vmatprep.subr.mxu0 0.0
    %5357 = vmatpush1.xpose.msra.mxu0 0.0
    %5358 = vmatprep.subr.mxu0 0.0
    %5359 = vmatpush1.xpose.msra.mxu0 0.0
    %5360 = vmatprep.subr.mxu0 0.0
    %5361 = vmatpush1.xpose.msra.mxu0 0.0
    %5362 = vmatprep.subr.mxu0 0.0
    %5363 = vmatpush1.xpose.msra.mxu0 0.0
    %5364 = vmatprep.mubr.f32.mxu0 0.0
    %5365 = vmatmul.mubr.f32.gmra.mrb[0].mxu0 %v4840
    %v5366 = vpop.f32.mrb[0].mxu0
    %v5367 = vadd.f32 0.0, %v5366
    %v5368 = vpop.f32.mrb[0].mxu0
    %5369 = vdwg.mxu0
    %5370 = vmatprep.subr.mxu0 0.0
    %5371 = vmatpush1.xpose.msra.mxu0 %v5078
    %5372 = vmatprep.subr.mxu0 0.0
    %5373 = vmatpush1.xpose.msra.mxu0 0.0
    %5374 = vmatprep.subr.mxu0 0.0
    %5375 = vmatpush1.xpose.msra.mxu0 0.0
    %5376 = vmatprep.subr.mxu0 0.0
    %5377 = vmatpush1.xpose.msra.mxu0 0.0
    %5378 = vmatprep.subr.mxu0 0.0
    %5379 = vmatpush1.xpose.msra.mxu0 0.0
    %5380 = vmatprep.subr.mxu0 0.0
    %5381 = vmatpush1.xpose.msra.mxu0 0.0
    %5382 = vmatprep.subr.mxu0 0.0
    %5383 = vmatpush1.xpose.msra.mxu0 0.0
    %5384 = vmatprep.subr.mxu0 0.0
    %5385 = vmatpush1.xpose.msra.mxu0 0.0
    %5386 = vmatprep.subr.mxu0 0.0
    %5387 = vmatpush1.xpose.msra.mxu0 0.0
    %5388 = vmatprep.subr.mxu0 0.0
    %5389 = vmatpush1.xpose.msra.mxu0 0.0
    %5390 = vmatprep.subr.mxu0 0.0
    %5391 = vmatpush1.xpose.msra.mxu0 0.0
    %5392 = vmatprep.subr.mxu0 0.0
    %5393 = vmatpush1.xpose.msra.mxu0 0.0
    %5394 = vmatprep.subr.mxu0 0.0
    %5395 = vmatpush1.xpose.msra.mxu0 0.0
    %5396 = vmatprep.subr.mxu0 0.0
    %5397 = vmatpush1.xpose.msra.mxu0 0.0
    %5398 = vmatprep.subr.mxu0 0.0
    %5399 = vmatpush1.xpose.msra.mxu0 0.0
    %5400 = vmatprep.subr.mxu0 0.0
    %5401 = vmatpush1.xpose.msra.mxu0 0.0
    %5402 = vmatprep.subr.mxu0 0.0
    %5403 = vmatpush1.xpose.msra.mxu0 0.0
    %5404 = vmatprep.subr.mxu0 0.0
    %5405 = vmatpush1.xpose.msra.mxu0 0.0
    %5406 = vmatprep.subr.mxu0 0.0
    %5407 = vmatpush1.xpose.msra.mxu0 0.0
    %5408 = vmatprep.subr.mxu0 0.0
    %5409 = vmatpush1.xpose.msra.mxu0 0.0
    %5410 = vmatprep.subr.mxu0 0.0
    %5411 = vmatpush1.xpose.msra.mxu0 0.0
    %5412 = vmatprep.subr.mxu0 0.0
    %5413 = vmatpush1.xpose.msra.mxu0 0.0
    %5414 = vmatprep.subr.mxu0 0.0
    %5415 = vmatpush1.xpose.msra.mxu0 0.0
    %5416 = vmatprep.subr.mxu0 0.0
    %5417 = vmatpush1.xpose.msra.mxu0 0.0
    %5418 = vmatprep.subr.mxu0 0.0
    %5419 = vmatpush1.xpose.msra.mxu0 0.0
    %5420 = vmatprep.subr.mxu0 0.0
    %5421 = vmatpush1.xpose.msra.mxu0 0.0
    %5422 = vmatprep.subr.mxu0 0.0
    %5423 = vmatpush1.xpose.msra.mxu0 0.0
    %5424 = vmatprep.subr.mxu0 0.0
    %5425 = vmatpush1.xpose.msra.mxu0 0.0
    %5426 = vmatprep.subr.mxu0 0.0
    %5427 = vmatpush1.xpose.msra.mxu0 0.0
    %5428 = vmatprep.subr.mxu0 0.0
    %5429 = vmatpush1.xpose.msra.mxu0 0.0
    %5430 = vmatprep.subr.mxu0 0.0
    %5431 = vmatpush1.xpose.msra.mxu0 0.0
    %5432 = vmatprep.subr.mxu0 0.0
    %5433 = vmatpush1.xpose.msra.mxu0 0.0
    %5434 = vmatprep.mubr.f32.mxu0 0.0
    %5435 = vmatmul.mubr.f32.gmra.mrb[0].mxu0 %v4843
    %v5436 = vpop.f32.mrb[0].mxu0
    %v5437 = vadd.f32 0.0, %v5436
    %v5438 = vpop.f32.mrb[0].mxu0
    %5439 = vdwg.mxu0
    %5440 = vmatprep.subr.mxu0 0.0
    %5441 = vmatpush1.xpose.msra.mxu0 %v5079
    %5442 = vmatprep.subr.mxu0 0.0
    %5443 = vmatpush1.xpose.msra.mxu0 0.0
    %5444 = vmatprep.subr.mxu0 0.0
    %5445 = vmatpush1.xpose.msra.mxu0 0.0
    %5446 = vmatprep.subr.mxu0 0.0
    %5447 = vmatpush1.xpose.msra.mxu0 0.0
    %5448 = vmatprep.subr.mxu0 0.0
    %5449 = vmatpush1.xpose.msra.mxu0 0.0
    %5450 = vmatprep.subr.mxu0 0.0
    %5451 = vmatpush1.xpose.msra.mxu0 0.0
    %5452 = vmatprep.subr.mxu0 0.0
    %5453 = vmatpush1.xpose.msra.mxu0 0.0
    %5454 = vmatprep.subr.mxu0 0.0
    %5455 = vmatpush1.xpose.msra.mxu0 0.0
    %5456 = vmatprep.subr.mxu0 0.0
    %5457 = vmatpush1.xpose.msra.mxu0 0.0
    %5458 = vmatprep.subr.mxu0 0.0
    %5459 = vmatpush1.xpose.msra.mxu0 0.0
    %5460 = vmatprep.subr.mxu0 0.0
    %5461 = vmatpush1.xpose.msra.mxu0 0.0
    %5462 = vmatprep.subr.mxu0 0.0
    %5463 = vmatpush1.xpose.msra.mxu0 0.0
    %5464 = vmatprep.subr.mxu0 0.0
    %5465 = vmatpush1.xpose.msra.mxu0 0.0
    %5466 = vmatprep.subr.mxu0 0.0
    %5467 = vmatpush1.xpose.msra.mxu0 0.0
    %5468 = vmatprep.subr.mxu0 0.0
    %5469 = vmatpush1.xpose.msra.mxu0 0.0
    %5470 = vmatprep.subr.mxu0 0.0
    %5471 = vmatpush1.xpose.msra.mxu0 0.0
    %5472 = vmatprep.subr.mxu0 0.0
    %5473 = vmatpush1.xpose.msra.mxu0 0.0
    %5474 = vmatprep.subr.mxu0 0.0
    %5475 = vmatpush1.xpose.msra.mxu0 0.0
    %5476 = vmatprep.subr.mxu0 0.0
    %5477 = vmatpush1.xpose.msra.mxu0 0.0
    %5478 = vmatprep.subr.mxu0 0.0
    %5479 = vmatpush1.xpose.msra.mxu0 0.0
    %5480 = vmatprep.subr.mxu0 0.0
    %5481 = vmatpush1.xpose.msra.mxu0 0.0
    %5482 = vmatprep.subr.mxu0 0.0
    %5483 = vmatpush1.xpose.msra.mxu0 0.0
    %5484 = vmatprep.subr.mxu0 0.0
    %5485 = vmatpush1.xpose.msra.mxu0 0.0
    %5486 = vmatprep.subr.mxu0 0.0
    %5487 = vmatpush1.xpose.msra.mxu0 0.0
    %5488 = vmatprep.subr.mxu0 0.0
    %5489 = vmatpush1.xpose.msra.mxu0 0.0
    %5490 = vmatprep.subr.mxu0 0.0
    %5491 = vmatpush1.xpose.msra.mxu0 0.0
    %5492 = vmatprep.subr.mxu0 0.0
    %5493 = vmatpush1.xpose.msra.mxu0 0.0
    %5494 = vmatprep.subr.mxu0 0.0
    %5495 = vmatpush1.xpose.msra.mxu0 0.0
    %5496 = vmatprep.subr.mxu0 0.0
    %5497 = vmatpush1.xpose.msra.mxu0 0.0
    %5498 = vmatprep.subr.mxu0 0.0
    %5499 = vmatpush1.xpose.msra.mxu0 0.0
    %5500 = vmatprep.subr.mxu0 0.0
    %5501 = vmatpush1.xpose.msra.mxu0 0.0
    %5502 = vmatprep.subr.mxu0 0.0
    %5503 = vmatpush1.xpose.msra.mxu0 0.0
    %5504 = vmatprep.mubr.f32.mxu0 0.0
    %5505 = vmatmul.mubr.f32.gmra.mrb[0].mxu0 %v4843
    %v5506 = vpop.f32.mrb[0].mxu0
    %v5507 = vadd.f32 0.0, %v5506
    %v5508 = vpop.f32.mrb[0].mxu0
    %5509 = vdwg.mxu0
    %5510 = vmatprep.subr.mxu0 0.0
    %5511 = vmatpush1.xpose.msra.mxu0 %v5080
    %5512 = vmatprep.subr.mxu0 0.0
    %5513 = vmatpush1.xpose.msra.mxu0 0.0
    %5514 = vmatprep.subr.mxu0 0.0
    %5515 = vmatpush1.xpose.msra.mxu0 0.0
    %5516 = vmatprep.subr.mxu0 0.0
    %5517 = vmatpush1.xpose.msra.mxu0 0.0
    %5518 = vmatprep.subr.mxu0 0.0
    %5519 = vmatpush1.xpose.msra.mxu0 0.0
    %5520 = vmatprep.subr.mxu0 0.0
    %5521 = vmatpush1.xpose.msra.mxu0 0.0
    %5522 = vmatprep.subr.mxu0 0.0
    %5523 = vmatpush1.xpose.msra.mxu0 0.0
    %5524 = vmatprep.subr.mxu0 0.0
    %5525 = vmatpush1.xpose.msra.mxu0 0.0
    %5526 = vmatprep.subr.mxu0 0.0
    %5527 = vmatpush1.xpose.msra.mxu0 0.0
    %5528 = vmatprep.subr.mxu0 0.0
    %5529 = vmatpush1.xpose.msra.mxu0 0.0
    %5530 = vmatprep.subr.mxu0 0.0
    %5531 = vmatpush1.xpose.msra.mxu0 0.0
    %5532 = vmatprep.subr.mxu0 0.0
    %5533 = vmatpush1.xpose.msra.mxu0 0.0
    %5534 = vmatprep.subr.mxu0 0.0
    %5535 = vmatpush1.xpose.msra.mxu0 0.0
    %5536 = vmatprep.subr.mxu0 0.0
    %5537 = vmatpush1.xpose.msra.mxu0 0.0
    %5538 = vmatprep.subr.mxu0 0.0
    %5539 = vmatpush1.xpose.msra.mxu0 0.0
    %5540 = vmatprep.subr.mxu0 0.0
    %5541 = vmatpush1.xpose.msra.mxu0 0.0
    %5542 = vmatprep.subr.mxu0 0.0
    %5543 = vmatpush1.xpose.msra.mxu0 0.0
    %5544 = vmatprep.subr.mxu0 0.0
    %5545 = vmatpush1.xpose.msra.mxu0 0.0
    %5546 = vmatprep.subr.mxu0 0.0
    %5547 = vmatpush1.xpose.msra.mxu0 0.0
    %5548 = vmatprep.subr.mxu0 0.0
    %5549 = vmatpush1.xpose.msra.mxu0 0.0
    %5550 = vmatprep.subr.mxu0 0.0
    %5551 = vmatpush1.xpose.msra.mxu0 0.0
    %5552 = vmatprep.subr.mxu0 0.0
    %5553 = vmatpush1.xpose.msra.mxu0 0.0
    %5554 = vmatprep.subr.mxu0 0.0
    %5555 = vmatpush1.xpose.msra.mxu0 0.0
    %5556 = vmatprep.subr.mxu0 0.0
    %5557 = vmatpush1.xpose.msra.mxu0 0.0
    %5558 = vmatprep.subr.mxu0 0.0
    %5559 = vmatpush1.xpose.msra.mxu0 0.0
    %5560 = vmatprep.subr.mxu0 0.0
    %5561 = vmatpush1.xpose.msra.mxu0 0.0
    %5562 = vmatprep.subr.mxu0 0.0
    %5563 = vmatpush1.xpose.msra.mxu0 0.0
    %5564 = vmatprep.subr.mxu0 0.0
    %5565 = vmatpush1.xpose.msra.mxu0 0.0
    %5566 = vmatprep.subr.mxu0 0.0
    %5567 = vmatpush1.xpose.msra.mxu0 0.0
    %5568 = vmatprep.subr.mxu0 0.0
    %5569 = vmatpush1.xpose.msra.mxu0 0.0
    %5570 = vmatprep.subr.mxu0 0.0
    %5571 = vmatpush1.xpose.msra.mxu0 0.0
    %5572 = vmatprep.subr.mxu0 0.0
    %5573 = vmatpush1.xpose.msra.mxu0 0.0
    %5574 = vmatprep.mubr.f32.mxu0 0.0
    %5575 = vmatmul.mubr.f32.gmra.mrb[0].mxu0 %v4843
    %v5576 = vpop.f32.mrb[0].mxu0
    %v5577 = vadd.f32 0.0, %v5576
    %v5578 = vpop.f32.mrb[0].mxu0
    %5579 = vdwg.mxu0
    %5580 = vmatprep.subr.mxu0 0.0
    %5581 = vmatpush1.xpose.msra.mxu0 %v5081
    %5582 = vmatprep.subr.mxu0 0.0
    %5583 = vmatpush1.xpose.msra.mxu0 0.0
    %5584 = vmatprep.subr.mxu0 0.0
    %5585 = vmatpush1.xpose.msra.mxu0 0.0
    %5586 = vmatprep.subr.mxu0 0.0
    %5587 = vmatpush1.xpose.msra.mxu0 0.0
    %5588 = vmatprep.subr.mxu0 0.0
    %5589 = vmatpush1.xpose.msra.mxu0 0.0
    %5590 = vmatprep.subr.mxu0 0.0
    %5591 = vmatpush1.xpose.msra.mxu0 0.0
    %5592 = vmatprep.subr.mxu0 0.0
    %5593 = vmatpush1.xpose.msra.mxu0 0.0
    %5594 = vmatprep.subr.mxu0 0.0
    %5595 = vmatpush1.xpose.msra.mxu0 0.0
    %5596 = vmatprep.subr.mxu0 0.0
    %5597 = vmatpush1.xpose.msra.mxu0 0.0
    %5598 = vmatprep.subr.mxu0 0.0
    %5599 = vmatpush1.xpose.msra.mxu0 0.0
    %5600 = vmatprep.subr.mxu0 0.0
    %5601 = vmatpush1.xpose.msra.mxu0 0.0
    %5602 = vmatprep.subr.mxu0 0.0
    %5603 = vmatpush1.xpose.msra.mxu0 0.0
    %5604 = vmatprep.subr.mxu0 0.0
    %5605 = vmatpush1.xpose.msra.mxu0 0.0
    %5606 = vmatprep.subr.mxu0 0.0
    %5607 = vmatpush1.xpose.msra.mxu0 0.0
    %5608 = vmatprep.subr.mxu0 0.0
    %5609 = vmatpush1.xpose.msra.mxu0 0.0
    %5610 = vmatprep.subr.mxu0 0.0
    %5611 = vmatpush1.xpose.msra.mxu0 0.0
    %5612 = vmatprep.subr.mxu0 0.0
    %5613 = vmatpush1.xpose.msra.mxu0 0.0
    %5614 = vmatprep.subr.mxu0 0.0
    %5615 = vmatpush1.xpose.msra.mxu0 0.0
    %5616 = vmatprep.subr.mxu0 0.0
    %5617 = vmatpush1.xpose.msra.mxu0 0.0
    %5618 = vmatprep.subr.mxu0 0.0
    %5619 = vmatpush1.xpose.msra.mxu0 0.0
    %5620 = vmatprep.subr.mxu0 0.0
    %5621 = vmatpush1.xpose.msra.mxu0 0.0
    %5622 = vmatprep.subr.mxu0 0.0
    %5623 = vmatpush1.xpose.msra.mxu0 0.0
    %5624 = vmatprep.subr.mxu0 0.0
    %5625 = vmatpush1.xpose.msra.mxu0 0.0
    %5626 = vmatprep.subr.mxu0 0.0
    %5627 = vmatpush1.xpose.msra.mxu0 0.0
    %5628 = vmatprep.subr.mxu0 0.0
    %5629 = vmatpush1.xpose.msra.mxu0 0.0
    %5630 = vmatprep.subr.mxu0 0.0
    %5631 = vmatpush1.xpose.msra.mxu0 0.0
    %5632 = vmatprep.subr.mxu0 0.0
    %5633 = vmatpush1.xpose.msra.mxu0 0.0
    %5634 = vmatprep.subr.mxu0 0.0
    %5635 = vmatpush1.xpose.msra.mxu0 0.0
    %5636 = vmatprep.subr.mxu0 0.0
    %5637 = vmatpush1.xpose.msra.mxu0 0.0
    %5638 = vmatprep.subr.mxu0 0.0
    %5639 = vmatpush1.xpose.msra.mxu0 0.0
    %5640 = vmatprep.subr.mxu0 0.0
    %5641 = vmatpush1.xpose.msra.mxu0 0.0
    %5642 = vmatprep.subr.mxu0 0.0
    %5643 = vmatpush1.xpose.msra.mxu0 0.0
    %5644 = vmatprep.mubr.f32.mxu0 0.0
    %5645 = vmatmul.mubr.f32.gmra.mrb[0].mxu0 %v4843
    %v5646 = vpop.f32.mrb[0].mxu0
    %v5647 = vadd.f32 0.0, %v5646
    %v5648 = vpop.f32.mrb[0].mxu0
    %5649 = vdwg.mxu0
    %v5650 = vsel %vm1247, %v5157, -inf
    %5651 = vmax.xlane.f32.xlu0 %v5650
    %v5652 = vpop.xlane.xlu0 %5651
    %v5653 = vsel %vm1247, %v5227, -inf
    %5654 = vmax.xlane.f32.xlu0 %v5653
    %v5655 = vpop.xlane.xlu0 %5654
    %v5656 = vsel %vm1247, %v5297, -inf
    %5657 = vmax.xlane.f32.xlu0 %v5656
    %v5658 = vpop.xlane.xlu0 %5657
    %v5659 = vsel %vm1247, %v5367, -inf
    %5660 = vmax.xlane.f32.xlu0 %v5659
    %v5661 = vpop.xlane.xlu0 %5660
    %v5662 = vsel %vm1247, %v5437, -inf
    %5663 = vmax.xlane.f32.xlu0 %v5662
    %v5664 = vpop.xlane.xlu0 %5663
    %v5665 = vsel %vm1247, %v5507, -inf
    %5666 = vmax.xlane.f32.xlu0 %v5665
    %v5667 = vpop.xlane.xlu0 %5666
    %v5668 = vsel %vm1247, %v5577, -inf
    %5669 = vmax.xlane.f32.xlu0 %v5668
    %v5670 = vpop.xlane.xlu0 %5669
    %v5671 = vsel %vm1247, %v5647, -inf
    %5672 = vmax.xlane.f32.xlu0 %v5671
    %v5673 = vpop.xlane.xlu0 %5672
    %v5674 = vsub.f32 %v5157, %v5652
    %v5675 = vsub.f32 %v5227, %v5655
    %v5676 = vsub.f32 %v5297, %v5658
    %v5677 = vsub.f32 %v5367, %v5661
    %v5678 = vsub.f32 %v5437, %v5664
    %v5679 = vsub.f32 %v5507, %v5667
    %v5680 = vsub.f32 %v5577, %v5670
    %v5681 = vsub.f32 %v5647, %v5673
    %v5682 = vmul.f32 %v5674, 1.442695
    %v5683 = vpow.pop %v5682
    %v5684 = vmul.f32 %v5675, 1.442695
    %v5685 = vpow.pop %v5684
    %v5686 = vmul.f32 %v5676, 1.442695
    %v5687 = vpow.pop %v5686
    %v5688 = vmul.f32 %v5677, 1.442695
    %v5689 = vpow.pop %v5688
    %v5690 = vmul.f32 %v5678, 1.442695
    %v5691 = vpow.pop %v5690
    %v5692 = vmul.f32 %v5679, 1.442695
    %v5693 = vpow.pop %v5692
    %v5694 = vmul.f32 %v5680, 1.442695
    %v5695 = vpow.pop %v5694
    %v5696 = vmul.f32 %v5681, 1.442695
    %v5697 = vpow.pop %v5696
    %v5698 = vsel %vm1247, %v5683, 0.0
    %5699 = vadd.xlane.f32.xlu0 %v5698
    %v5700 = vpop.xlane.xlu0 %5699
    %v5701 = vsel %vm1247, %v5685, 0.0
    %5702 = vadd.xlane.f32.xlu0 %v5701
    %v5703 = vpop.xlane.xlu0 %5702
    %v5704 = vsel %vm1247, %v5687, 0.0
    %5705 = vadd.xlane.f32.xlu0 %v5704
    %v5706 = vpop.xlane.xlu0 %5705
    %v5707 = vsel %vm1247, %v5689, 0.0
    %5708 = vadd.xlane.f32.xlu0 %v5707
    %v5709 = vpop.xlane.xlu0 %5708
    %v5710 = vsel %vm1247, %v5691, 0.0
    %5711 = vadd.xlane.f32.xlu0 %v5710
    %v5712 = vpop.xlane.xlu0 %5711
    %v5713 = vsel %vm1247, %v5693, 0.0
    %5714 = vadd.xlane.f32.xlu0 %v5713
    %v5715 = vpop.xlane.xlu0 %5714
    %v5716 = vsel %vm1247, %v5695, 0.0
    %5717 = vadd.xlane.f32.xlu0 %v5716
    %v5718 = vpop.xlane.xlu0 %5717
    %v5719 = vsel %vm1247, %v5697, 0.0
    %5720 = vadd.xlane.f32.xlu0 %v5719
    %v5721 = vpop.xlane.xlu0 %5720
    %v5722 = vrcp.pop %v5700
    %v5723 = vrcp.pop %v5703
    %v5724 = vrcp.pop %v5706
    %v5725 = vrcp.pop %v5709
    %v5726 = vrcp.pop %v5712
    %v5727 = vrcp.pop %v5715
    %v5728 = vrcp.pop %v5718
    %v5729 = vrcp.pop %v5721
    %v5730 = vmul.f32 %v5683, %v5722
    %v5731 = vmul.f32 %v5685, %v5723
    %v5732 = vmul.f32 %v5687, %v5724
    %v5733 = vmul.f32 %v5689, %v5725
    %v5734 = vmul.f32 %v5691, %v5726
    %v5735 = vmul.f32 %v5693, %v5727
    %v5736 = vmul.f32 %v5695, %v5728
    %v5737 = vmul.f32 %v5697, %v5729
    %v5739 = vsel %vm1247, %v5730, 0
    %5741 = vmatprep.subr.mxu0 0.0
    %5742 = vmatpush1.msra.mxu0 %v5082
    %5743 = vmatprep.subr.mxu0 0.0
    %5744 = vmatpush1.msra.mxu0 0.0
    %5745 = vmatprep.subr.mxu0 0.0
    %5746 = vmatpush1.msra.mxu0 0.0
    %5747 = vmatprep.subr.mxu0 0.0
    %5748 = vmatpush1.msra.mxu0 0.0
    %5749 = vmatprep.subr.mxu0 0.0
    %5750 = vmatpush1.msra.mxu0 0.0
    %5751 = vmatprep.subr.mxu0 0.0
    %5752 = vmatpush1.msra.mxu0 0.0
    %5753 = vmatprep.subr.mxu0 0.0
    %5754 = vmatpush1.msra.mxu0 0.0
    %5755 = vmatprep.subr.mxu0 0.0
    %5756 = vmatpush1.msra.mxu0 0.0
    %5757 = vmatprep.subr.mxu0 0.0
    %5758 = vmatpush1.msra.mxu0 0.0
    %5759 = vmatprep.subr.mxu0 0.0
    %5760 = vmatpush1.msra.mxu0 0.0
    %5761 = vmatprep.subr.mxu0 0.0
    %5762 = vmatpush1.msra.mxu0 0.0
    %5763 = vmatprep.subr.mxu0 0.0
    %5764 = vmatpush1.msra.mxu0 0.0
    %5765 = vmatprep.subr.mxu0 0.0
    %5766 = vmatpush1.msra.mxu0 0.0
    %5767 = vmatprep.subr.mxu0 0.0
    %5768 = vmatpush1.msra.mxu0 0.0
    %5769 = vmatprep.subr.mxu0 0.0
    %5770 = vmatpush1.msra.mxu0 0.0
    %5771 = vmatprep.subr.mxu0 0.0
    %5772 = vmatpush1.msra.mxu0 0.0
    %5773 = vmatprep.subr.mxu0 0.0
    %5774 = vmatpush1.msra.mxu0 0.0
    %5775 = vmatprep.subr.mxu0 0.0
    %5776 = vmatpush1.msra.mxu0 0.0
    %5777 = vmatprep.subr.mxu0 0.0
    %5778 = vmatpush1.msra.mxu0 0.0
    %5779 = vmatprep.subr.mxu0 0.0
    %5780 = vmatpush1.msra.mxu0 0.0
    %5781 = vmatprep.subr.mxu0 0.0
    %5782 = vmatpush1.msra.mxu0 0.0
    %5783 = vmatprep.subr.mxu0 0.0
    %5784 = vmatpush1.msra.mxu0 0.0
    %5785 = vmatprep.subr.mxu0 0.0
    %5786 = vmatpush1.msra.mxu0 0.0
    %5787 = vmatprep.subr.mxu0 0.0
    %5788 = vmatpush1.msra.mxu0 0.0
    %5789 = vmatprep.subr.mxu0 0.0
    %5790 = vmatpush1.msra.mxu0 0.0
    %5791 = vmatprep.subr.mxu0 0.0
    %5792 = vmatpush1.msra.mxu0 0.0
    %5793 = vmatprep.subr.mxu0 0.0
    %5794 = vmatpush1.msra.mxu0 0.0
    %5795 = vmatprep.subr.mxu0 0.0
    %5796 = vmatpush1.msra.mxu0 0.0
    %5797 = vmatprep.subr.mxu0 0.0
    %5798 = vmatpush1.msra.mxu0 0.0
    %5799 = vmatprep.subr.mxu0 0.0
    %5800 = vmatpush1.msra.mxu0 0.0
    %5801 = vmatprep.subr.mxu0 0.0
    %5802 = vmatpush1.msra.mxu0 0.0
    %5803 = vmatprep.subr.mxu0 0.0
    %5804 = vmatpush1.msra.mxu0 0.0
    %5805 = vmatprep.mubr.f32.mxu0 0.0
    %5806 = vmatmul.mubr.f32.gmra.mrb[0].mxu0 %v5739
    %v5807 = vpop.f32.mrb[0].mxu0
    %v5808 = vadd.f32 0.0, %v5807
    %v5809 = vpop.f32.mrb[0].mxu0
    %5810 = vdwg.mxu0
    %v5812 = vsel %vm1247, %v5731, 0
    %5814 = vmatprep.subr.mxu0 0.0
    %5815 = vmatpush1.msra.mxu0 %v5083
    %5816 = vmatprep.subr.mxu0 0.0
    %5817 = vmatpush1.msra.mxu0 0.0
    %5818 = vmatprep.subr.mxu0 0.0
    %5819 = vmatpush1.msra.mxu0 0.0
    %5820 = vmatprep.subr.mxu0 0.0
    %5821 = vmatpush1.msra.mxu0 0.0
    %5822 = vmatprep.subr.mxu0 0.0
    %5823 = vmatpush1.msra.mxu0 0.0
    %5824 = vmatprep.subr.mxu0 0.0
    %5825 = vmatpush1.msra.mxu0 0.0
    %5826 = vmatprep.subr.mxu0 0.0
    %5827 = vmatpush1.msra.mxu0 0.0
    %5828 = vmatprep.subr.mxu0 0.0
    %5829 = vmatpush1.msra.mxu0 0.0
    %5830 = vmatprep.subr.mxu0 0.0
    %5831 = vmatpush1.msra.mxu0 0.0
    %5832 = vmatprep.subr.mxu0 0.0
    %5833 = vmatpush1.msra.mxu0 0.0
    %5834 = vmatprep.subr.mxu0 0.0
    %5835 = vmatpush1.msra.mxu0 0.0
    %5836 = vmatprep.subr.mxu0 0.0
    %5837 = vmatpush1.msra.mxu0 0.0
    %5838 = vmatprep.subr.mxu0 0.0
    %5839 = vmatpush1.msra.mxu0 0.0
    %5840 = vmatprep.subr.mxu0 0.0
    %5841 = vmatpush1.msra.mxu0 0.0
    %5842 = vmatprep.subr.mxu0 0.0
    %5843 = vmatpush1.msra.mxu0 0.0
    %5844 = vmatprep.subr.mxu0 0.0
    %5845 = vmatpush1.msra.mxu0 0.0
    %5846 = vmatprep.subr.mxu0 0.0
    %5847 = vmatpush1.msra.mxu0 0.0
    %5848 = vmatprep.subr.mxu0 0.0
    %5849 = vmatpush1.msra.mxu0 0.0
    %5850 = vmatprep.subr.mxu0 0.0
    %5851 = vmatpush1.msra.mxu0 0.0
    %5852 = vmatprep.subr.mxu0 0.0
    %5853 = vmatpush1.msra.mxu0 0.0
    %5854 = vmatprep.subr.mxu0 0.0
    %5855 = vmatpush1.msra.mxu0 0.0
    %5856 = vmatprep.subr.mxu0 0.0
    %5857 = vmatpush1.msra.mxu0 0.0
    %5858 = vmatprep.subr.mxu0 0.0
    %5859 = vmatpush1.msra.mxu0 0.0
    %5860 = vmatprep.subr.mxu0 0.0
    %5861 = vmatpush1.msra.mxu0 0.0
    %5862 = vmatprep.subr.mxu0 0.0
    %5863 = vmatpush1.msra.mxu0 0.0
    %5864 = vmatprep.subr.mxu0 0.0
    %5865 = vmatpush1.msra.mxu0 0.0
    %5866 = vmatprep.subr.mxu0 0.0
    %5867 = vmatpush1.msra.mxu0 0.0
    %5868 = vmatprep.subr.mxu0 0.0
    %5869 = vmatpush1.msra.mxu0 0.0
    %5870 = vmatprep.subr.mxu0 0.0
    %5871 = vmatpush1.msra.mxu0 0.0
    %5872 = vmatprep.subr.mxu0 0.0
    %5873 = vmatpush1.msra.mxu0 0.0
    %5874 = vmatprep.subr.mxu0 0.0
    %5875 = vmatpush1.msra.mxu0 0.0
    %5876 = vmatprep.subr.mxu0 0.0
    %5877 = vmatpush1.msra.mxu0 0.0
    %5878 = vmatprep.mubr.f32.mxu0 0.0
    %5879 = vmatmul.mubr.f32.gmra.mrb[0].mxu0 %v5812
    %v5880 = vpop.f32.mrb[0].mxu0
    %v5881 = vadd.f32 0.0, %v5880
    %v5882 = vpop.f32.mrb[0].mxu0
    %5883 = vdwg.mxu0
    %v5885 = vsel %vm1247, %v5732, 0
    %5887 = vmatprep.subr.mxu0 0.0
    %5888 = vmatpush1.msra.mxu0 %v5084
    %5889 = vmatprep.subr.mxu0 0.0
    %5890 = vmatpush1.msra.mxu0 0.0
    %5891 = vmatprep.subr.mxu0 0.0
    %5892 = vmatpush1.msra.mxu0 0.0
    %5893 = vmatprep.subr.mxu0 0.0
    %5894 = vmatpush1.msra.mxu0 0.0
    %5895 = vmatprep.subr.mxu0 0.0
    %5896 = vmatpush1.msra.mxu0 0.0
    %5897 = vmatprep.subr.mxu0 0.0
    %5898 = vmatpush1.msra.mxu0 0.0
    %5899 = vmatprep.subr.mxu0 0.0
    %5900 = vmatpush1.msra.mxu0 0.0
    %5901 = vmatprep.subr.mxu0 0.0
    %5902 = vmatpush1.msra.mxu0 0.0
    %5903 = vmatprep.subr.mxu0 0.0
    %5904 = vmatpush1.msra.mxu0 0.0
    %5905 = vmatprep.subr.mxu0 0.0
    %5906 = vmatpush1.msra.mxu0 0.0
    %5907 = vmatprep.subr.mxu0 0.0
    %5908 = vmatpush1.msra.mxu0 0.0
    %5909 = vmatprep.subr.mxu0 0.0
    %5910 = vmatpush1.msra.mxu0 0.0
    %5911 = vmatprep.subr.mxu0 0.0
    %5912 = vmatpush1.msra.mxu0 0.0
    %5913 = vmatprep.subr.mxu0 0.0
    %5914 = vmatpush1.msra.mxu0 0.0
    %5915 = vmatprep.subr.mxu0 0.0
    %5916 = vmatpush1.msra.mxu0 0.0
    %5917 = vmatprep.subr.mxu0 0.0
    %5918 = vmatpush1.msra.mxu0 0.0
    %5919 = vmatprep.subr.mxu0 0.0
    %5920 = vmatpush1.msra.mxu0 0.0
    %5921 = vmatprep.subr.mxu0 0.0
    %5922 = vmatpush1.msra.mxu0 0.0
    %5923 = vmatprep.subr.mxu0 0.0
    %5924 = vmatpush1.msra.mxu0 0.0
    %5925 = vmatprep.subr.mxu0 0.0
    %5926 = vmatpush1.msra.mxu0 0.0
    %5927 = vmatprep.subr.mxu0 0.0
    %5928 = vmatpush1.msra.mxu0 0.0
    %5929 = vmatprep.subr.mxu0 0.0
    %5930 = vmatpush1.msra.mxu0 0.0
    %5931 = vmatprep.subr.mxu0 0.0
    %5932 = vmatpush1.msra.mxu0 0.0
    %5933 = vmatprep.subr.mxu0 0.0
    %5934 = vmatpush1.msra.mxu0 0.0
    %5935 = vmatprep.subr.mxu0 0.0
    %5936 = vmatpush1.msra.mxu0 0.0
    %5937 = vmatprep.subr.mxu0 0.0
    %5938 = vmatpush1.msra.mxu0 0.0
    %5939 = vmatprep.subr.mxu0 0.0
    %5940 = vmatpush1.msra.mxu0 0.0
    %5941 = vmatprep.subr.mxu0 0.0
    %5942 = vmatpush1.msra.mxu0 0.0
    %5943 = vmatprep.subr.mxu0 0.0
    %5944 = vmatpush1.msra.mxu0 0.0
    %5945 = vmatprep.subr.mxu0 0.0
    %5946 = vmatpush1.msra.mxu0 0.0
    %5947 = vmatprep.subr.mxu0 0.0
    %5948 = vmatpush1.msra.mxu0 0.0
    %5949 = vmatprep.subr.mxu0 0.0
    %5950 = vmatpush1.msra.mxu0 0.0
    %5951 = vmatprep.mubr.f32.mxu0 0.0
    %5952 = vmatmul.mubr.f32.gmra.mrb[0].mxu0 %v5885
    %v5953 = vpop.f32.mrb[0].mxu0
    %v5954 = vadd.f32 0.0, %v5953
    %v5955 = vpop.f32.mrb[0].mxu0
    %5956 = vdwg.mxu0
    %v5958 = vsel %vm1247, %v5733, 0
    %5960 = vmatprep.subr.mxu0 0.0
    %5961 = vmatpush1.msra.mxu0 %v5085
    %5962 = vmatprep.subr.mxu0 0.0
    %5963 = vmatpush1.msra.mxu0 0.0
    %5964 = vmatprep.subr.mxu0 0.0
    %5965 = vmatpush1.msra.mxu0 0.0
    %5966 = vmatprep.subr.mxu0 0.0
    %5967 = vmatpush1.msra.mxu0 0.0
    %5968 = vmatprep.subr.mxu0 0.0
    %5969 = vmatpush1.msra.mxu0 0.0
    %5970 = vmatprep.subr.mxu0 0.0
    %5971 = vmatpush1.msra.mxu0 0.0
    %5972 = vmatprep.subr.mxu0 0.0
    %5973 = vmatpush1.msra.mxu0 0.0
    %5974 = vmatprep.subr.mxu0 0.0
    %5975 = vmatpush1.msra.mxu0 0.0
    %5976 = vmatprep.subr.mxu0 0.0
    %5977 = vmatpush1.msra.mxu0 0.0
    %5978 = vmatprep.subr.mxu0 0.0
    %5979 = vmatpush1.msra.mxu0 0.0
    %5980 = vmatprep.subr.mxu0 0.0
    %5981 = vmatpush1.msra.mxu0 0.0
    %5982 = vmatprep.subr.mxu0 0.0
    %5983 = vmatpush1.msra.mxu0 0.0
    %5984 = vmatprep.subr.mxu0 0.0
    %5985 = vmatpush1.msra.mxu0 0.0
    %5986 = vmatprep.subr.mxu0 0.0
    %5987 = vmatpush1.msra.mxu0 0.0
    %5988 = vmatprep.subr.mxu0 0.0
    %5989 = vmatpush1.msra.mxu0 0.0
    %5990 = vmatprep.subr.mxu0 0.0
    %5991 = vmatpush1.msra.mxu0 0.0
    %5992 = vmatprep.subr.mxu0 0.0
    %5993 = vmatpush1.msra.mxu0 0.0
    %5994 = vmatprep.subr.mxu0 0.0
    %5995 = vmatpush1.msra.mxu0 0.0
    %5996 = vmatprep.subr.mxu0 0.0
    %5997 = vmatpush1.msra.mxu0 0.0
    %5998 = vmatprep.subr.mxu0 0.0
    %5999 = vmatpush1.msra.mxu0 0.0
    %6000 = vmatprep.subr.mxu0 0.0
    %6001 = vmatpush1.msra.mxu0 0.0
    %6002 = vmatprep.subr.mxu0 0.0
    %6003 = vmatpush1.msra.mxu0 0.0
    %6004 = vmatprep.subr.mxu0 0.0
    %6005 = vmatpush1.msra.mxu0 0.0
    %6006 = vmatprep.subr.mxu0 0.0
    %6007 = vmatpush1.msra.mxu0 0.0
    %6008 = vmatprep.subr.mxu0 0.0
    %6009 = vmatpush1.msra.mxu0 0.0
    %6010 = vmatprep.subr.mxu0 0.0
    %6011 = vmatpush1.msra.mxu0 0.0
    %6012 = vmatprep.subr.mxu0 0.0
    %6013 = vmatpush1.msra.mxu0 0.0
    %6014 = vmatprep.subr.mxu0 0.0
    %6015 = vmatpush1.msra.mxu0 0.0
    %6016 = vmatprep.subr.mxu0 0.0
    %6017 = vmatpush1.msra.mxu0 0.0
    %6018 = vmatprep.subr.mxu0 0.0
    %6019 = vmatpush1.msra.mxu0 0.0
    %6020 = vmatprep.subr.mxu0 0.0
    %6021 = vmatpush1.msra.mxu0 0.0
    %6022 = vmatprep.subr.mxu0 0.0
    %6023 = vmatpush1.msra.mxu0 0.0
    %6024 = vmatprep.mubr.f32.mxu0 0.0
    %6025 = vmatmul.mubr.f32.gmra.mrb[0].mxu0 %v5958
    %v6026 = vpop.f32.mrb[0].mxu0
    %v6027 = vadd.f32 0.0, %v6026
    %v6028 = vpop.f32.mrb[0].mxu0
    %6029 = vdwg.mxu0
    %v6031 = vsel %vm1247, %v5734, 0
    %6033 = vmatprep.subr.mxu0 0.0
    %6034 = vmatpush1.msra.mxu0 %v5086
    %6035 = vmatprep.subr.mxu0 0.0
    %6036 = vmatpush1.msra.mxu0 0.0
    %6037 = vmatprep.subr.mxu0 0.0
    %6038 = vmatpush1.msra.mxu0 0.0
    %6039 = vmatprep.subr.mxu0 0.0
    %6040 = vmatpush1.msra.mxu0 0.0
    %6041 = vmatprep.subr.mxu0 0.0
    %6042 = vmatpush1.msra.mxu0 0.0
    %6043 = vmatprep.subr.mxu0 0.0
    %6044 = vmatpush1.msra.mxu0 0.0
    %6045 = vmatprep.subr.mxu0 0.0
    %6046 = vmatpush1.msra.mxu0 0.0
    %6047 = vmatprep.subr.mxu0 0.0
    %6048 = vmatpush1.msra.mxu0 0.0
    %6049 = vmatprep.subr.mxu0 0.0
    %6050 = vmatpush1.msra.mxu0 0.0
    %6051 = vmatprep.subr.mxu0 0.0
    %6052 = vmatpush1.msra.mxu0 0.0
    %6053 = vmatprep.subr.mxu0 0.0
    %6054 = vmatpush1.msra.mxu0 0.0
    %6055 = vmatprep.subr.mxu0 0.0
    %6056 = vmatpush1.msra.mxu0 0.0
    %6057 = vmatprep.subr.mxu0 0.0
    %6058 = vmatpush1.msra.mxu0 0.0
    %6059 = vmatprep.subr.mxu0 0.0
    %6060 = vmatpush1.msra.mxu0 0.0
    %6061 = vmatprep.subr.mxu0 0.0
    %6062 = vmatpush1.msra.mxu0 0.0
    %6063 = vmatprep.subr.mxu0 0.0
    %6064 = vmatpush1.msra.mxu0 0.0
    %6065 = vmatprep.subr.mxu0 0.0
    %6066 = vmatpush1.msra.mxu0 0.0
    %6067 = vmatprep.subr.mxu0 0.0
    %6068 = vmatpush1.msra.mxu0 0.0
    %6069 = vmatprep.subr.mxu0 0.0
    %6070 = vmatpush1.msra.mxu0 0.0
    %6071 = vmatprep.subr.mxu0 0.0
    %6072 = vmatpush1.msra.mxu0 0.0
    %6073 = vmatprep.subr.mxu0 0.0
    %6074 = vmatpush1.msra.mxu0 0.0
    %6075 = vmatprep.subr.mxu0 0.0
    %6076 = vmatpush1.msra.mxu0 0.0
    %6077 = vmatprep.subr.mxu0 0.0
    %6078 = vmatpush1.msra.mxu0 0.0
    %6079 = vmatprep.subr.mxu0 0.0
    %6080 = vmatpush1.msra.mxu0 0.0
    %6081 = vmatprep.subr.mxu0 0.0
    %6082 = vmatpush1.msra.mxu0 0.0
    %6083 = vmatprep.subr.mxu0 0.0
    %6084 = vmatpush1.msra.mxu0 0.0
    %6085 = vmatprep.subr.mxu0 0.0
    %6086 = vmatpush1.msra.mxu0 0.0
    %6087 = vmatprep.subr.mxu0 0.0
    %6088 = vmatpush1.msra.mxu0 0.0
    %6089 = vmatprep.subr.mxu0 0.0
    %6090 = vmatpush1.msra.mxu0 0.0
    %6091 = vmatprep.subr.mxu0 0.0
    %6092 = vmatpush1.msra.mxu0 0.0
    %6093 = vmatprep.subr.mxu0 0.0
    %6094 = vmatpush1.msra.mxu0 0.0
    %6095 = vmatprep.subr.mxu0 0.0
    %6096 = vmatpush1.msra.mxu0 0.0
    %6097 = vmatprep.mubr.f32.mxu0 0.0
    %6098 = vmatmul.mubr.f32.gmra.mrb[0].mxu0 %v6031
    %v6099 = vpop.f32.mrb[0].mxu0
    %v6100 = vadd.f32 0.0, %v6099
    %v6101 = vpop.f32.mrb[0].mxu0
    %6102 = vdwg.mxu0
    %v6104 = vsel %vm1247, %v5735, 0
    %6106 = vmatprep.subr.mxu0 0.0
    %6107 = vmatpush1.msra.mxu0 %v5087
    %6108 = vmatprep.subr.mxu0 0.0
    %6109 = vmatpush1.msra.mxu0 0.0
    %6110 = vmatprep.subr.mxu0 0.0
    %6111 = vmatpush1.msra.mxu0 0.0
    %6112 = vmatprep.subr.mxu0 0.0
    %6113 = vmatpush1.msra.mxu0 0.0
    %6114 = vmatprep.subr.mxu0 0.0
    %6115 = vmatpush1.msra.mxu0 0.0
    %6116 = vmatprep.subr.mxu0 0.0
    %6117 = vmatpush1.msra.mxu0 0.0
    %6118 = vmatprep.subr.mxu0 0.0
    %6119 = vmatpush1.msra.mxu0 0.0
    %6120 = vmatprep.subr.mxu0 0.0
    %6121 = vmatpush1.msra.mxu0 0.0
    %6122 = vmatprep.subr.mxu0 0.0
    %6123 = vmatpush1.msra.mxu0 0.0
    %6124 = vmatprep.subr.mxu0 0.0
    %6125 = vmatpush1.msra.mxu0 0.0
    %6126 = vmatprep.subr.mxu0 0.0
    %6127 = vmatpush1.msra.mxu0 0.0
    %6128 = vmatprep.subr.mxu0 0.0
    %6129 = vmatpush1.msra.mxu0 0.0
    %6130 = vmatprep.subr.mxu0 0.0
    %6131 = vmatpush1.msra.mxu0 0.0
    %6132 = vmatprep.subr.mxu0 0.0
    %6133 = vmatpush1.msra.mxu0 0.0
    %6134 = vmatprep.subr.mxu0 0.0
    %6135 = vmatpush1.msra.mxu0 0.0
    %6136 = vmatprep.subr.mxu0 0.0
    %6137 = vmatpush1.msra.mxu0 0.0
    %6138 = vmatprep.subr.mxu0 0.0
    %6139 = vmatpush1.msra.mxu0 0.0
    %6140 = vmatprep.subr.mxu0 0.0
    %6141 = vmatpush1.msra.mxu0 0.0
    %6142 = vmatprep.subr.mxu0 0.0
    %6143 = vmatpush1.msra.mxu0 0.0
    %6144 = vmatprep.subr.mxu0 0.0
    %6145 = vmatpush1.msra.mxu0 0.0
    %6146 = vmatprep.subr.mxu0 0.0
    %6147 = vmatpush1.msra.mxu0 0.0
    %6148 = vmatprep.subr.mxu0 0.0
    %6149 = vmatpush1.msra.mxu0 0.0
    %6150 = vmatprep.subr.mxu0 0.0
    %6151 = vmatpush1.msra.mxu0 0.0
    %6152 = vmatprep.subr.mxu0 0.0
    %6153 = vmatpush1.msra.mxu0 0.0
    %6154 = vmatprep.subr.mxu0 0.0
    %6155 = vmatpush1.msra.mxu0 0.0
    %6156 = vmatprep.subr.mxu0 0.0
    %6157 = vmatpush1.msra.mxu0 0.0
    %6158 = vmatprep.subr.mxu0 0.0
    %6159 = vmatpush1.msra.mxu0 0.0
    %6160 = vmatprep.subr.mxu0 0.0
    %6161 = vmatpush1.msra.mxu0 0.0
    %6162 = vmatprep.subr.mxu0 0.0
    %6163 = vmatpush1.msra.mxu0 0.0
    %6164 = vmatprep.subr.mxu0 0.0
    %6165 = vmatpush1.msra.mxu0 0.0
    %6166 = vmatprep.subr.mxu0 0.0
    %6167 = vmatpush1.msra.mxu0 0.0
    %6168 = vmatprep.subr.mxu0 0.0
    %6169 = vmatpush1.msra.mxu0 0.0
    %6170 = vmatprep.mubr.f32.mxu0 0.0
    %6171 = vmatmul.mubr.f32.gmra.mrb[0].mxu0 %v6104
    %v6172 = vpop.f32.mrb[0].mxu0
    %v6173 = vadd.f32 0.0, %v6172
    %v6174 = vpop.f32.mrb[0].mxu0
    %6175 = vdwg.mxu0
    %v6177 = vsel %vm1247, %v5736, 0
    %6179 = vmatprep.subr.mxu0 0.0
    %6180 = vmatpush1.msra.mxu0 %v5088
    %6181 = vmatprep.subr.mxu0 0.0
    %6182 = vmatpush1.msra.mxu0 0.0
    %6183 = vmatprep.subr.mxu0 0.0
    %6184 = vmatpush1.msra.mxu0 0.0
    %6185 = vmatprep.subr.mxu0 0.0
    %6186 = vmatpush1.msra.mxu0 0.0
    %6187 = vmatprep.subr.mxu0 0.0
    %6188 = vmatpush1.msra.mxu0 0.0
    %6189 = vmatprep.subr.mxu0 0.0
    %6190 = vmatpush1.msra.mxu0 0.0
    %6191 = vmatprep.subr.mxu0 0.0
    %6192 = vmatpush1.msra.mxu0 0.0
    %6193 = vmatprep.subr.mxu0 0.0
    %6194 = vmatpush1.msra.mxu0 0.0
    %6195 = vmatprep.subr.mxu0 0.0
    %6196 = vmatpush1.msra.mxu0 0.0
    %6197 = vmatprep.subr.mxu0 0.0
    %6198 = vmatpush1.msra.mxu0 0.0
    %6199 = vmatprep.subr.mxu0 0.0
    %6200 = vmatpush1.msra.mxu0 0.0
    %6201 = vmatprep.subr.mxu0 0.0
    %6202 = vmatpush1.msra.mxu0 0.0
    %6203 = vmatprep.subr.mxu0 0.0
    %6204 = vmatpush1.msra.mxu0 0.0
    %6205 = vmatprep.subr.mxu0 0.0
    %6206 = vmatpush1.msra.mxu0 0.0
    %6207 = vmatprep.subr.mxu0 0.0
    %6208 = vmatpush1.msra.mxu0 0.0
    %6209 = vmatprep.subr.mxu0 0.0
    %6210 = vmatpush1.msra.mxu0 0.0
    %6211 = vmatprep.subr.mxu0 0.0
    %6212 = vmatpush1.msra.mxu0 0.0
    %6213 = vmatprep.subr.mxu0 0.0
    %6214 = vmatpush1.msra.mxu0 0.0
    %6215 = vmatprep.subr.mxu0 0.0
    %6216 = vmatpush1.msra.mxu0 0.0
    %6217 = vmatprep.subr.mxu0 0.0
    %6218 = vmatpush1.msra.mxu0 0.0
    %6219 = vmatprep.subr.mxu0 0.0
    %6220 = vmatpush1.msra.mxu0 0.0
    %6221 = vmatprep.subr.mxu0 0.0
    %6222 = vmatpush1.msra.mxu0 0.0
    %6223 = vmatprep.subr.mxu0 0.0
    %6224 = vmatpush1.msra.mxu0 0.0
    %6225 = vmatprep.subr.mxu0 0.0
    %6226 = vmatpush1.msra.mxu0 0.0
    %6227 = vmatprep.subr.mxu0 0.0
    %6228 = vmatpush1.msra.mxu0 0.0
    %6229 = vmatprep.subr.mxu0 0.0
    %6230 = vmatpush1.msra.mxu0 0.0
    %6231 = vmatprep.subr.mxu0 0.0
    %6232 = vmatpush1.msra.mxu0 0.0
    %6233 = vmatprep.subr.mxu0 0.0
    %6234 = vmatpush1.msra.mxu0 0.0
    %6235 = vmatprep.subr.mxu0 0.0
    %6236 = vmatpush1.msra.mxu0 0.0
    %6237 = vmatprep.subr.mxu0 0.0
    %6238 = vmatpush1.msra.mxu0 0.0
    %6239 = vmatprep.subr.mxu0 0.0
    %6240 = vmatpush1.msra.mxu0 0.0
    %6241 = vmatprep.subr.mxu0 0.0
    %6242 = vmatpush1.msra.mxu0 0.0
    %6243 = vmatprep.mubr.f32.mxu0 0.0
    %6244 = vmatmul.mubr.f32.gmra.mrb[0].mxu0 %v6177
    %v6245 = vpop.f32.mrb[0].mxu0
    %v6246 = vadd.f32 0.0, %v6245
    %v6247 = vpop.f32.mrb[0].mxu0
    %6248 = vdwg.mxu0
    %v6250 = vsel %vm1247, %v5737, 0
    %6252 = vmatprep.subr.mxu0 0.0
    %6253 = vmatpush1.msra.mxu0 %v5089
    %6254 = vmatprep.subr.mxu0 0.0
    %6255 = vmatpush1.msra.mxu0 0.0
    %6256 = vmatprep.subr.mxu0 0.0
    %6257 = vmatpush1.msra.mxu0 0.0
    %6258 = vmatprep.subr.mxu0 0.0
    %6259 = vmatpush1.msra.mxu0 0.0
    %6260 = vmatprep.subr.mxu0 0.0
    %6261 = vmatpush1.msra.mxu0 0.0
    %6262 = vmatprep.subr.mxu0 0.0
    %6263 = vmatpush1.msra.mxu0 0.0
    %6264 = vmatprep.subr.mxu0 0.0
    %6265 = vmatpush1.msra.mxu0 0.0
    %6266 = vmatprep.subr.mxu0 0.0
    %6267 = vmatpush1.msra.mxu0 0.0
    %6268 = vmatprep.subr.mxu0 0.0
    %6269 = vmatpush1.msra.mxu0 0.0
    %6270 = vmatprep.subr.mxu0 0.0
    %6271 = vmatpush1.msra.mxu0 0.0
    %6272 = vmatprep.subr.mxu0 0.0
    %6273 = vmatpush1.msra.mxu0 0.0
    %6274 = vmatprep.subr.mxu0 0.0
    %6275 = vmatpush1.msra.mxu0 0.0
    %6276 = vmatprep.subr.mxu0 0.0
    %6277 = vmatpush1.msra.mxu0 0.0
    %6278 = vmatprep.subr.mxu0 0.0
    %6279 = vmatpush1.msra.mxu0 0.0
    %6280 = vmatprep.subr.mxu0 0.0
    %6281 = vmatpush1.msra.mxu0 0.0
    %6282 = vmatprep.subr.mxu0 0.0
    %6283 = vmatpush1.msra.mxu0 0.0
    %6284 = vmatprep.subr.mxu0 0.0
    %6285 = vmatpush1.msra.mxu0 0.0
    %6286 = vmatprep.subr.mxu0 0.0
    %6287 = vmatpush1.msra.mxu0 0.0
    %6288 = vmatprep.subr.mxu0 0.0
    %6289 = vmatpush1.msra.mxu0 0.0
    %6290 = vmatprep.subr.mxu0 0.0
    %6291 = vmatpush1.msra.mxu0 0.0
    %6292 = vmatprep.subr.mxu0 0.0
    %6293 = vmatpush1.msra.mxu0 0.0
    %6294 = vmatprep.subr.mxu0 0.0
    %6295 = vmatpush1.msra.mxu0 0.0
    %6296 = vmatprep.subr.mxu0 0.0
    %6297 = vmatpush1.msra.mxu0 0.0
    %6298 = vmatprep.subr.mxu0 0.0
    %6299 = vmatpush1.msra.mxu0 0.0
    %6300 = vmatprep.subr.mxu0 0.0
    %6301 = vmatpush1.msra.mxu0 0.0
    %6302 = vmatprep.subr.mxu0 0.0
    %6303 = vmatpush1.msra.mxu0 0.0
    %6304 = vmatprep.subr.mxu0 0.0
    %6305 = vmatpush1.msra.mxu0 0.0
    %6306 = vmatprep.subr.mxu0 0.0
    %6307 = vmatpush1.msra.mxu0 0.0
    %6308 = vmatprep.subr.mxu0 0.0
    %6309 = vmatpush1.msra.mxu0 0.0
    %6310 = vmatprep.subr.mxu0 0.0
    %6311 = vmatpush1.msra.mxu0 0.0
    %6312 = vmatprep.subr.mxu0 0.0
    %6313 = vmatpush1.msra.mxu0 0.0
    %6314 = vmatprep.subr.mxu0 0.0
    %6315 = vmatpush1.msra.mxu0 0.0
    %6316 = vmatprep.mubr.f32.mxu0 0.0
    %6317 = vmatmul.mubr.f32.gmra.mrb[0].mxu0 %v6250
    %v6318 = vpop.f32.mrb[0].mxu0
    %v6319 = vadd.f32 0.0, %v6318
    %v6320 = vpop.f32.mrb[0].mxu0
    %6321 = vdwg.mxu0
    %v6322 = vadd.f32 %v5808, %v5881
    %v6323 = vadd.f32 %v6322, %v5954
    %v6324 = vadd.f32 %v6323, %v6027
    %v6325 = vadd.f32 %v6100, %v6173
    %v6326 = vadd.f32 %v6325, %v6246
    %v6327 = vadd.f32 %v6326, %v6319
    %v6328 = vpack.c.bf16 %v6327, %v6324
    %s6329 = scalar_lea.vmem [#allocation11], 64
    %v6330 = vld [vmem:[%s6329] sm:$0xf]
    %v6331 = vld [vmem:[%s6329 + $0x4] sm:$0xf]
    %v6332 = vld [vmem:[%s6329 + $0x8] sm:$0xf]
    %v6333 = vld [vmem:[%s6329 + $0xc] sm:$0xf]
    %v6334 = vld [vmem:[%s6329 + $0x10] sm:$0xf]
    %v6335 = vld [vmem:[%s6329 + $0x14] sm:$0xf]
    %v6336 = vld [vmem:[%s6329 + $0x18] sm:$0xf]
    %v6337 = vld [vmem:[%s6329 + $0x1c] sm:$0xf]
    %v6338 = vld [vmem:[%s6329 + $0x20] sm:$0xf]
    %v6339 = vld [vmem:[%s6329 + $0x24] sm:$0xf]
    %v6340 = vld [vmem:[%s6329 + $0x28] sm:$0xf]
    %v6341 = vld [vmem:[%s6329 + $0x2c] sm:$0xf]
    %v6342 = vld [vmem:[%s6329 + $0x30] sm:$0xf]
    %v6343 = vld [vmem:[%s6329 + $0x34] sm:$0xf]
    %v6344 = vld [vmem:[%s6329 + $0x38] sm:$0xf]
    %v6345 = vld [vmem:[%s6329 + $0x3c] sm:$0xf]
    %s6346 = scalar_lea.vmem %s11, 1
    %v6347 = vld [vmem:[%s6346] sm:$0x1]
    %v6349 = vlaneseq
    %v6350 = vshrl.u32 %v6349, 7
    %v6351 = vsub.s32 0, %v6350
    %v6352 = vrot.slane %v6347, %v6351
    %v6370 = vunpack.c.l.b16 %v6330
    %v6371 = vunpack.c.l.b16 %v6331
    %v6372 = vunpack.c.l.b16 %v6332
    %v6373 = vunpack.c.l.b16 %v6333
    %v6374 = vunpack.c.l.b16 %v6334
    %v6375 = vunpack.c.l.b16 %v6335
    %v6376 = vunpack.c.l.b16 %v6336
    %v6377 = vunpack.c.l.b16 %v6337
    %v6378 = vunpack.c.l.b16 %v6338
    %v6379 = vunpack.c.l.b16 %v6339
    %v6380 = vunpack.c.l.b16 %v6340
    %v6381 = vunpack.c.l.b16 %v6341
    %v6382 = vunpack.c.l.b16 %v6342
    %v6383 = vunpack.c.l.b16 %v6343
    %v6384 = vunpack.c.l.b16 %v6344
    %v6385 = vunpack.c.l.b16 %v6345
    %v6386 = vpack.c.b16 %v6371, %v6370
    %v6387 = vpack.c.b16 %v6373, %v6372
    %v6388 = vpack.c.b16 %v6375, %v6374
    %v6389 = vpack.c.b16 %v6377, %v6376
    %v6390 = vpack.c.b16 %v6379, %v6378
    %v6391 = vpack.c.b16 %v6381, %v6380
    %v6392 = vpack.c.b16 %v6383, %v6382
    %v6393 = vpack.c.b16 %v6385, %v6384
    %6402 = vmatprep.subr.bf16.mxu0 0
    %6403 = vmatpush1.bf16.msra.mxu0 %v6386
    %6404 = vmatprep.subr.bf16.mxu0 0
    %6405 = vmatpush1.bf16.msra.mxu0 %v6387
    %6406 = vmatprep.subr.bf16.mxu0 0
    %6407 = vmatpush1.bf16.msra.mxu0 %v6388
    %6408 = vmatprep.subr.bf16.mxu0 0
    %6409 = vmatpush1.bf16.msra.mxu0 %v6389
    %6410 = vmatprep.subr.bf16.mxu0 0
    %6411 = vmatpush1.bf16.msra.mxu0 %v6390
    %6412 = vmatprep.subr.bf16.mxu0 0
    %6413 = vmatpush1.bf16.msra.mxu0 %v6391
    %6414 = vmatprep.subr.bf16.mxu0 0
    %6415 = vmatpush1.bf16.msra.mxu0 %v6392
    %6416 = vmatprep.subr.bf16.mxu0 0
    %6417 = vmatpush1.bf16.msra.mxu0 %v6393
    %6418 = vmatprep.subr.bf16.mxu0 0
    %6419 = vmatpush1.bf16.msra.mxu0 0
    %6420 = vmatprep.subr.bf16.mxu0 0
    %6421 = vmatpush1.bf16.msra.mxu0 0
    %6422 = vmatprep.subr.bf16.mxu0 0
    %6423 = vmatpush1.bf16.msra.mxu0 0
    %6424 = vmatprep.subr.bf16.mxu0 0
    %6425 = vmatpush1.bf16.msra.mxu0 0
    %6426 = vmatprep.subr.bf16.mxu0 0
    %6427 = vmatpush1.bf16.msra.mxu0 0
    %6428 = vmatprep.subr.bf16.mxu0 0
    %6429 = vmatpush1.bf16.msra.mxu0 0
    %6430 = vmatprep.subr.bf16.mxu0 0
    %6431 = vmatpush1.bf16.msra.mxu0 0
    %6432 = vmatprep.subr.bf16.mxu0 0
    %6433 = vmatpush1.bf16.msra.mxu0 0
    %6434 = vmatprep.mubr.bf16.mxu0 0
    %6435 = vmatmul.mubr.bf16.gmra.mrb[0].mxu0 %v6328
    %v6436 = vpop.f32.mrb[0].mxu0
    %v6437 = vadd.f32 %v6352, %v6436
    %v6438 = vpop.f32.mrb[0].mxu0
    %v6439 = vpop.f32.mrb[0].mxu0
    %v6440 = vadd.f32 %v6352, %v6439
    %v6441 = vpop.f32.mrb[0].mxu0
    %6442 = vdwg.mxu0
    %v6443 = vadd.f32 %v4729, %v6437
    %v6444 = vadd.f32 %v4730, %v6440
    %s6445 = scalar_lea.vmem %s16, 1
    %v6446 = vld [vmem:[%s6445] sm:$0x1]
    %s6447 = scalar_lea.vmem %s17, 1
    %v6448 = vld [vmem:[%s6447] sm:$0x1]
    %6449 = vadd.xlane.f32.xlu0 %v6443
    %v6450 = vpop.xlane.xlu0 %6449
    %6451 = vadd.xlane.f32.xlu0 %v6444
    %v6452 = vpop.xlane.xlu0 %6451
    %v6453 = vmul.f32 %v6450, 0.03125
    %v6454 = vmul.f32 %v6452, 0.03125
    %v6455 = vsub.f32 %v6443, %v6453
    %v6456 = vsub.f32 %v6444, %v6454
    %v6457 = vmul.f32 %v6455, %v199
    %v6458 = vmul.f32 %v6456, %v199
    %v6459 = vmul.f32 %v6457, %v6457
    %v6460 = vmul.f32 %v6458, %v6458
    %6461 = vadd.xlane.f32.xlu0 %v6459
    %v6462 = vpop.xlane.xlu0 %6461
    %6463 = vadd.xlane.f32.xlu0 %v6460
    %v6464 = vpop.xlane.xlu0 %6463
    %v6465 = vmul.f32 %v6462, 0.03125
    %v6466 = vmul.f32 %v6464, 0.03125
    %v6467 = vadd.f32 %v6465, 1e-05
    %v6468 = vadd.f32 %v6466, 1e-05
    %v6469 = vrsqrt.pop %v6467
    %v6470 = vrsqrt.pop %v6468
    %v6471 = vmul.f32 %v6457, %v6469
    %v6472 = vmul.f32 %v6458, %v6470
    %v6474 = vlaneseq
    %v6475 = vshrl.u32 %v6474, 7
    %v6476 = vsub.s32 0, %v6475
    %v6477 = vrot.slane %v6446, %v6476
    %v6479 = vmul.f32 %v6471, %v6477
    %v6480 = vmul.f32 %v6472, %v6477
    %v6482 = vlaneseq
    %v6483 = vshrl.u32 %v6482, 7
    %v6484 = vsub.s32 0, %v6483
    %v6485 = vrot.slane %v6448, %v6484
    %v6487 = vadd.f32 %v6479, %v6485
    %v6488 = vadd.f32 %v6480, %v6485
    %v6489 = vpack.c.bf16 %v6488, %v6487
    %s6490 = scalar_lea.vmem [#allocation13], 1024
    %v6491 = vld [vmem:[%s6490] sm:$0xff]
    %v6492 = vld [vmem:[%s6490 + $0x8] sm:$0xff]
    %v6493 = vld [vmem:[%s6490 + $0x10] sm:$0xff]
    %v6494 = vld [vmem:[%s6490 + $0x18] sm:$0xff]
    %v6495 = vld [vmem:[%s6490 + $0x20] sm:$0xff]
    %v6496 = vld [vmem:[%s6490 + $0x28] sm:$0xff]
    %v6497 = vld [vmem:[%s6490 + $0x30] sm:$0xff]
    %v6498 = vld [vmem:[%s6490 + $0x38] sm:$0xff]
    %v6499 = vld [vmem:[%s6490 + $0x40] sm:$0xff]
    %v6500 = vld [vmem:[%s6490 + $0x48] sm:$0xff]
    %v6501 = vld [vmem:[%s6490 + $0x50] sm:$0xff]
    %v6502 = vld [vmem:[%s6490 + $0x58] sm:$0xff]
    %v6503 = vld [vmem:[%s6490 + $0x60] sm:$0xff]
    %v6504 = vld [vmem:[%s6490 + $0x68] sm:$0xff]
    %v6505 = vld [vmem:[%s6490 + $0x70] sm:$0xff]
    %v6506 = vld [vmem:[%s6490 + $0x78] sm:$0xff]
    %v6507 = vld [vmem:[%s6490 + $0x80] sm:$0xff]
    %v6508 = vld [vmem:[%s6490 + $0x88] sm:$0xff]
    %v6509 = vld [vmem:[%s6490 + $0x90] sm:$0xff]
    %v6510 = vld [vmem:[%s6490 + $0x98] sm:$0xff]
    %v6511 = vld [vmem:[%s6490 + $0xa0] sm:$0xff]
    %v6512 = vld [vmem:[%s6490 + $0xa8] sm:$0xff]
    %v6513 = vld [vmem:[%s6490 + $0xb0] sm:$0xff]
    %v6514 = vld [vmem:[%s6490 + $0xb8] sm:$0xff]
    %v6515 = vld [vmem:[%s6490 + $0xc0] sm:$0xff]
    %v6516 = vld [vmem:[%s6490 + $0xc8] sm:$0xff]
    %v6517 = vld [vmem:[%s6490 + $0xd0] sm:$0xff]
    %v6518 = vld [vmem:[%s6490 + $0xd8] sm:$0xff]
    %v6519 = vld [vmem:[%s6490 + $0xe0] sm:$0xff]
    %v6520 = vld [vmem:[%s6490 + $0xe8] sm:$0xff]
    %v6521 = vld [vmem:[%s6490 + $0xf0] sm:$0xff]
    %v6522 = vld [vmem:[%s6490 + $0xf8] sm:$0xff]
    %v6523 = vld [vmem:[%s6490 + $0x100] sm:$0xff]
    %v6524 = vld [vmem:[%s6490 + $0x108] sm:$0xff]
    %v6525 = vld [vmem:[%s6490 + $0x110] sm:$0xff]
    %v6526 = vld [vmem:[%s6490 + $0x118] sm:$0xff]
    %v6527 = vld [vmem:[%s6490 + $0x120] sm:$0xff]
    %v6528 = vld [vmem:[%s6490 + $0x128] sm:$0xff]
    %v6529 = vld [vmem:[%s6490 + $0x130] sm:$0xff]
    %v6530 = vld [vmem:[%s6490 + $0x138] sm:$0xff]
    %v6531 = vld [vmem:[%s6490 + $0x140] sm:$0xff]
    %v6532 = vld [vmem:[%s6490 + $0x148] sm:$0xff]
    %v6533 = vld [vmem:[%s6490 + $0x150] sm:$0xff]
    %v6534 = vld [vmem:[%s6490 + $0x158] sm:$0xff]
    %v6535 = vld [vmem:[%s6490 + $0x160] sm:$0xff]
    %v6536 = vld [vmem:[%s6490 + $0x168] sm:$0xff]
    %v6537 = vld [vmem:[%s6490 + $0x170] sm:$0xff]
    %v6538 = vld [vmem:[%s6490 + $0x178] sm:$0xff]
    %v6539 = vld [vmem:[%s6490 + $0x180] sm:$0xff]
    %v6540 = vld [vmem:[%s6490 + $0x188] sm:$0xff]
    %v6541 = vld [vmem:[%s6490 + $0x190] sm:$0xff]
    %v6542 = vld [vmem:[%s6490 + $0x198] sm:$0xff]
    %v6543 = vld [vmem:[%s6490 + $0x1a0] sm:$0xff]
    %v6544 = vld [vmem:[%s6490 + $0x1a8] sm:$0xff]
    %v6545 = vld [vmem:[%s6490 + $0x1b0] sm:$0xff]
    %v6546 = vld [vmem:[%s6490 + $0x1b8] sm:$0xff]
    %v6547 = vld [vmem:[%s6490 + $0x1c0] sm:$0xff]
    %v6548 = vld [vmem:[%s6490 + $0x1c8] sm:$0xff]
    %v6549 = vld [vmem:[%s6490 + $0x1d0] sm:$0xff]
    %v6550 = vld [vmem:[%s6490 + $0x1d8] sm:$0xff]
    %v6551 = vld [vmem:[%s6490 + $0x1e0] sm:$0xff]
    %v6552 = vld [vmem:[%s6490 + $0x1e8] sm:$0xff]
    %v6553 = vld [vmem:[%s6490 + $0x1f0] sm:$0xff]
    %v6554 = vld [vmem:[%s6490 + $0x1f8] sm:$0xff]
    %v6555 = vld [vmem:[%s6490 + $0x200] sm:$0xff]
    %v6556 = vld [vmem:[%s6490 + $0x208] sm:$0xff]
    %v6557 = vld [vmem:[%s6490 + $0x210] sm:$0xff]
    %v6558 = vld [vmem:[%s6490 + $0x218] sm:$0xff]
    %v6559 = vld [vmem:[%s6490 + $0x220] sm:$0xff]
    %v6560 = vld [vmem:[%s6490 + $0x228] sm:$0xff]
    %v6561 = vld [vmem:[%s6490 + $0x230] sm:$0xff]
    %v6562 = vld [vmem:[%s6490 + $0x238] sm:$0xff]
    %v6563 = vld [vmem:[%s6490 + $0x240] sm:$0xff]
    %v6564 = vld [vmem:[%s6490 + $0x248] sm:$0xff]
    %v6565 = vld [vmem:[%s6490 + $0x250] sm:$0xff]
    %v6566 = vld [vmem:[%s6490 + $0x258] sm:$0xff]
    %v6567 = vld [vmem:[%s6490 + $0x260] sm:$0xff]
    %v6568 = vld [vmem:[%s6490 + $0x268] sm:$0xff]
    %v6569 = vld [vmem:[%s6490 + $0x270] sm:$0xff]
    %v6570 = vld [vmem:[%s6490 + $0x278] sm:$0xff]
    %v6571 = vld [vmem:[%s6490 + $0x280] sm:$0xff]
    %v6572 = vld [vmem:[%s6490 + $0x288] sm:$0xff]
    %v6573 = vld [vmem:[%s6490 + $0x290] sm:$0xff]
    %v6574 = vld [vmem:[%s6490 + $0x298] sm:$0xff]
    %v6575 = vld [vmem:[%s6490 + $0x2a0] sm:$0xff]
    %v6576 = vld [vmem:[%s6490 + $0x2a8] sm:$0xff]
    %v6577 = vld [vmem:[%s6490 + $0x2b0] sm:$0xff]
    %v6578 = vld [vmem:[%s6490 + $0x2b8] sm:$0xff]
    %v6579 = vld [vmem:[%s6490 + $0x2c0] sm:$0xff]
    %v6580 = vld [vmem:[%s6490 + $0x2c8] sm:$0xff]
    %v6581 = vld [vmem:[%s6490 + $0x2d0] sm:$0xff]
    %v6582 = vld [vmem:[%s6490 + $0x2d8] sm:$0xff]
    %v6583 = vld [vmem:[%s6490 + $0x2e0] sm:$0xff]
    %v6584 = vld [vmem:[%s6490 + $0x2e8] sm:$0xff]
    %v6585 = vld [vmem:[%s6490 + $0x2f0] sm:$0xff]
    %v6586 = vld [vmem:[%s6490 + $0x2f8] sm:$0xff]
    %v6587 = vld [vmem:[%s6490 + $0x300] sm:$0xff]
    %v6588 = vld [vmem:[%s6490 + $0x308] sm:$0xff]
    %v6589 = vld [vmem:[%s6490 + $0x310] sm:$0xff]
    %v6590 = vld [vmem:[%s6490 + $0x318] sm:$0xff]
    %v6591 = vld [vmem:[%s6490 + $0x320] sm:$0xff]
    %v6592 = vld [vmem:[%s6490 + $0x328] sm:$0xff]
    %v6593 = vld [vmem:[%s6490 + $0x330] sm:$0xff]
    %v6594 = vld [vmem:[%s6490 + $0x338] sm:$0xff]
    %v6595 = vld [vmem:[%s6490 + $0x340] sm:$0xff]
    %v6596 = vld [vmem:[%s6490 + $0x348] sm:$0xff]
    %v6597 = vld [vmem:[%s6490 + $0x350] sm:$0xff]
    %v6598 = vld [vmem:[%s6490 + $0x358] sm:$0xff]
    %v6599 = vld [vmem:[%s6490 + $0x360] sm:$0xff]
    %v6600 = vld [vmem:[%s6490 + $0x368] sm:$0xff]
    %v6601 = vld [vmem:[%s6490 + $0x370] sm:$0xff]
    %v6602 = vld [vmem:[%s6490 + $0x378] sm:$0xff]
    %v6603 = vld [vmem:[%s6490 + $0x380] sm:$0xff]
    %v6604 = vld [vmem:[%s6490 + $0x388] sm:$0xff]
    %v6605 = vld [vmem:[%s6490 + $0x390] sm:$0xff]
    %v6606 = vld [vmem:[%s6490 + $0x398] sm:$0xff]
    %v6607 = vld [vmem:[%s6490 + $0x3a0] sm:$0xff]
    %v6608 = vld [vmem:[%s6490 + $0x3a8] sm:$0xff]
    %v6609 = vld [vmem:[%s6490 + $0x3b0] sm:$0xff]
    %v6610 = vld [vmem:[%s6490 + $0x3b8] sm:$0xff]
    %v6611 = vld [vmem:[%s6490 + $0x3c0] sm:$0xff]
    %v6612 = vld [vmem:[%s6490 + $0x3c8] sm:$0xff]
    %v6613 = vld [vmem:[%s6490 + $0x3d0] sm:$0xff]
    %v6614 = vld [vmem:[%s6490 + $0x3d8] sm:$0xff]
    %v6615 = vld [vmem:[%s6490 + $0x3e0] sm:$0xff]
    %v6616 = vld [vmem:[%s6490 + $0x3e8] sm:$0xff]
    %v6617 = vld [vmem:[%s6490 + $0x3f0] sm:$0xff]
    %v6618 = vld [vmem:[%s6490 + $0x3f8] sm:$0xff]
    %s6619 = scalar_lea.vmem %s13, 16
    %v6620 = vld [vmem:[%s6619] sm:$0xff]
    %v6621 = vld [vmem:[%s6619 + $0x8] sm:$0xff]
    %v6624 = vlaneseq
    %v6625 = vshrl.u32 %v6624, 7
    %v6626 = vsub.s32 0, %v6625
    %v6627 = vrot.slane %v6620, %v6626
    %v6628 = vlaneseq
    %v6629 = vshrl.u32 %v6628, 7
    %v6630 = vsub.s32 1, %v6629
    %v6631 = vrot.slane %v6620, %v6630
    %v6632 = vlaneseq
    %v6633 = vshrl.u32 %v6632, 7
    %v6634 = vsub.s32 2, %v6633
    %v6635 = vrot.slane %v6620, %v6634
    %v6636 = vlaneseq
    %v6637 = vshrl.u32 %v6636, 7
    %v6638 = vsub.s32 3, %v6637
    %v6639 = vrot.slane %v6620, %v6638
    %v6640 = vlaneseq
    %v6641 = vshrl.u32 %v6640, 7
    %v6642 = vsub.s32 4, %v6641
    %v6643 = vrot.slane %v6620, %v6642
    %v6644 = vlaneseq
    %v6645 = vshrl.u32 %v6644, 7
    %v6646 = vsub.s32 5, %v6645
    %v6647 = vrot.slane %v6620, %v6646
    %v6648 = vlaneseq
    %v6649 = vshrl.u32 %v6648, 7
    %v6650 = vsub.s32 6, %v6649
    %v6651 = vrot.slane %v6620, %v6650
    %v6652 = vlaneseq
    %v6653 = vshrl.u32 %v6652, 7
    %v6654 = vsub.s32 7, %v6653
    %v6655 = vrot.slane %v6620, %v6654
    %v6656 = vlaneseq
    %v6657 = vshrl.u32 %v6656, 7
    %v6658 = vsub.s32 0, %v6657
    %v6659 = vrot.slane %v6621, %v6658
    %v6660 = vlaneseq
    %v6661 = vshrl.u32 %v6660, 7
    %v6662 = vsub.s32 1, %v6661
    %v6663 = vrot.slane %v6621, %v6662
    %v6664 = vlaneseq
    %v6665 = vshrl.u32 %v6664, 7
    %v6666 = vsub.s32 2, %v6665
    %v6667 = vrot.slane %v6621, %v6666
    %v6668 = vlaneseq
    %v6669 = vshrl.u32 %v6668, 7
    %v6670 = vsub.s32 3, %v6669
    %v6671 = vrot.slane %v6621, %v6670
    %v6672 = vlaneseq
    %v6673 = vshrl.u32 %v6672, 7
    %v6674 = vsub.s32 4, %v6673
    %v6675 = vrot.slane %v6621, %v6674
    %v6676 = vlaneseq
    %v6677 = vshrl.u32 %v6676, 7
    %v6678 = vsub.s32 5, %v6677
    %v6679 = vrot.slane %v6621, %v6678
    %v6680 = vlaneseq
    %v6681 = vshrl.u32 %v6680, 7
    %v6682 = vsub.s32 6, %v6681
    %v6683 = vrot.slane %v6621, %v6682
    %v6684 = vlaneseq
    %v6685 = vshrl.u32 %v6684, 7
    %v6686 = vsub.s32 7, %v6685
    %v6687 = vrot.slane %v6621, %v6686
    %v6832 = vunpack.c.l.b16 %v6491
    %v6833 = vunpack.c.h.b16 %v6491
    %v6834 = vunpack.c.l.b16 %v6492
    %v6835 = vunpack.c.h.b16 %v6492
    %v6836 = vunpack.c.l.b16 %v6493
    %v6837 = vunpack.c.h.b16 %v6493
    %v6838 = vunpack.c.l.b16 %v6494
    %v6839 = vunpack.c.h.b16 %v6494
    %v6840 = vunpack.c.l.b16 %v6495
    %v6841 = vunpack.c.h.b16 %v6495
    %v6842 = vunpack.c.l.b16 %v6496
    %v6843 = vunpack.c.h.b16 %v6496
    %v6844 = vunpack.c.l.b16 %v6497
    %v6845 = vunpack.c.h.b16 %v6497
    %v6846 = vunpack.c.l.b16 %v6498
    %v6847 = vunpack.c.h.b16 %v6498
    %v6848 = vunpack.c.l.b16 %v6499
    %v6849 = vunpack.c.h.b16 %v6499
    %v6850 = vunpack.c.l.b16 %v6500
    %v6851 = vunpack.c.h.b16 %v6500
    %v6852 = vunpack.c.l.b16 %v6501
    %v6853 = vunpack.c.h.b16 %v6501
    %v6854 = vunpack.c.l.b16 %v6502
    %v6855 = vunpack.c.h.b16 %v6502
    %v6856 = vunpack.c.l.b16 %v6503
    %v6857 = vunpack.c.h.b16 %v6503
    %v6858 = vunpack.c.l.b16 %v6504
    %v6859 = vunpack.c.h.b16 %v6504
    %v6860 = vunpack.c.l.b16 %v6505
    %v6861 = vunpack.c.h.b16 %v6505
    %v6862 = vunpack.c.l.b16 %v6506
    %v6863 = vunpack.c.h.b16 %v6506
    %v6864 = vunpack.c.l.b16 %v6507
    %v6865 = vunpack.c.h.b16 %v6507
    %v6866 = vunpack.c.l.b16 %v6508
    %v6867 = vunpack.c.h.b16 %v6508
    %v6868 = vunpack.c.l.b16 %v6509
    %v6869 = vunpack.c.h.b16 %v6509
    %v6870 = vunpack.c.l.b16 %v6510
    %v6871 = vunpack.c.h.b16 %v6510
    %v6872 = vunpack.c.l.b16 %v6511
    %v6873 = vunpack.c.h.b16 %v6511
    %v6874 = vunpack.c.l.b16 %v6512
    %v6875 = vunpack.c.h.b16 %v6512
    %v6876 = vunpack.c.l.b16 %v6513
    %v6877 = vunpack.c.h.b16 %v6513
    %v6878 = vunpack.c.l.b16 %v6514
    %v6879 = vunpack.c.h.b16 %v6514
    %v6880 = vunpack.c.l.b16 %v6515
    %v6881 = vunpack.c.h.b16 %v6515
    %v6882 = vunpack.c.l.b16 %v6516
    %v6883 = vunpack.c.h.b16 %v6516
    %v6884 = vunpack.c.l.b16 %v6517
    %v6885 = vunpack.c.h.b16 %v6517
    %v6886 = vunpack.c.l.b16 %v6518
    %v6887 = vunpack.c.h.b16 %v6518
    %v6888 = vunpack.c.l.b16 %v6519
    %v6889 = vunpack.c.h.b16 %v6519
    %v6890 = vunpack.c.l.b16 %v6520
    %v6891 = vunpack.c.h.b16 %v6520
    %v6892 = vunpack.c.l.b16 %v6521
    %v6893 = vunpack.c.h.b16 %v6521
    %v6894 = vunpack.c.l.b16 %v6522
    %v6895 = vunpack.c.h.b16 %v6522
    %v6896 = vunpack.c.l.b16 %v6523
    %v6897 = vunpack.c.h.b16 %v6523
    %v6898 = vunpack.c.l.b16 %v6524
    %v6899 = vunpack.c.h.b16 %v6524
    %v6900 = vunpack.c.l.b16 %v6525
    %v6901 = vunpack.c.h.b16 %v6525
    %v6902 = vunpack.c.l.b16 %v6526
    %v6903 = vunpack.c.h.b16 %v6526
    %v6904 = vunpack.c.l.b16 %v6527
    %v6905 = vunpack.c.h.b16 %v6527
    %v6906 = vunpack.c.l.b16 %v6528
    %v6907 = vunpack.c.h.b16 %v6528
    %v6908 = vunpack.c.l.b16 %v6529
    %v6909 = vunpack.c.h.b16 %v6529
    %v6910 = vunpack.c.l.b16 %v6530
    %v6911 = vunpack.c.h.b16 %v6530
    %v6912 = vunpack.c.l.b16 %v6531
    %v6913 = vunpack.c.h.b16 %v6531
    %v6914 = vunpack.c.l.b16 %v6532
    %v6915 = vunpack.c.h.b16 %v6532
    %v6916 = vunpack.c.l.b16 %v6533
    %v6917 = vunpack.c.h.b16 %v6533
    %v6918 = vunpack.c.l.b16 %v6534
    %v6919 = vunpack.c.h.b16 %v6534
    %v6920 = vunpack.c.l.b16 %v6535
    %v6921 = vunpack.c.h.b16 %v6535
    %v6922 = vunpack.c.l.b16 %v6536
    %v6923 = vunpack.c.h.b16 %v6536
    %v6924 = vunpack.c.l.b16 %v6537
    %v6925 = vunpack.c.h.b16 %v6537
    %v6926 = vunpack.c.l.b16 %v6538
    %v6927 = vunpack.c.h.b16 %v6538
    %v6928 = vunpack.c.l.b16 %v6539
    %v6929 = vunpack.c.h.b16 %v6539
    %v6930 = vunpack.c.l.b16 %v6540
    %v6931 = vunpack.c.h.b16 %v6540
    %v6932 = vunpack.c.l.b16 %v6541
    %v6933 = vunpack.c.h.b16 %v6541
    %v6934 = vunpack.c.l.b16 %v6542
    %v6935 = vunpack.c.h.b16 %v6542
    %v6936 = vunpack.c.l.b16 %v6543
    %v6937 = vunpack.c.h.b16 %v6543
    %v6938 = vunpack.c.l.b16 %v6544
    %v6939 = vunpack.c.h.b16 %v6544
    %v6940 = vunpack.c.l.b16 %v6545
    %v6941 = vunpack.c.h.b16 %v6545
    %v6942 = vunpack.c.l.b16 %v6546
    %v6943 = vunpack.c.h.b16 %v6546
    %v6944 = vunpack.c.l.b16 %v6547
    %v6945 = vunpack.c.h.b16 %v6547
    %v6946 = vunpack.c.l.b16 %v6548
    %v6947 = vunpack.c.h.b16 %v6548
    %v6948 = vunpack.c.l.b16 %v6549
    %v6949 = vunpack.c.h.b16 %v6549
    %v6950 = vunpack.c.l.b16 %v6550
    %v6951 = vunpack.c.h.b16 %v6550
    %v6952 = vunpack.c.l.b16 %v6551
    %v6953 = vunpack.c.h.b16 %v6551
    %v6954 = vunpack.c.l.b16 %v6552
    %v6955 = vunpack.c.h.b16 %v6552
    %v6956 = vunpack.c.l.b16 %v6553
    %v6957 = vunpack.c.h.b16 %v6553
    %v6958 = vunpack.c.l.b16 %v6554
    %v6959 = vunpack.c.h.b16 %v6554
    %v6960 = vunpack.c.l.b16 %v6555
    %v6961 = vunpack.c.h.b16 %v6555
    %v6962 = vunpack.c.l.b16 %v6556
    %v6963 = vunpack.c.h.b16 %v6556
    %v6964 = vunpack.c.l.b16 %v6557
    %v6965 = vunpack.c.h.b16 %v6557
    %v6966 = vunpack.c.l.b16 %v6558
    %v6967 = vunpack.c.h.b16 %v6558
    %v6968 = vunpack.c.l.b16 %v6559
    %v6969 = vunpack.c.h.b16 %v6559
    %v6970 = vunpack.c.l.b16 %v6560
    %v6971 = vunpack.c.h.b16 %v6560
    %v6972 = vunpack.c.l.b16 %v6561
    %v6973 = vunpack.c.h.b16 %v6561
    %v6974 = vunpack.c.l.b16 %v6562
    %v6975 = vunpack.c.h.b16 %v6562
    %v6976 = vunpack.c.l.b16 %v6563
    %v6977 = vunpack.c.h.b16 %v6563
    %v6978 = vunpack.c.l.b16 %v6564
    %v6979 = vunpack.c.h.b16 %v6564
    %v6980 = vunpack.c.l.b16 %v6565
    %v6981 = vunpack.c.h.b16 %v6565
    %v6982 = vunpack.c.l.b16 %v6566
    %v6983 = vunpack.c.h.b16 %v6566
    %v6984 = vunpack.c.l.b16 %v6567
    %v6985 = vunpack.c.h.b16 %v6567
    %v6986 = vunpack.c.l.b16 %v6568
    %v6987 = vunpack.c.h.b16 %v6568
    %v6988 = vunpack.c.l.b16 %v6569
    %v6989 = vunpack.c.h.b16 %v6569
    %v6990 = vunpack.c.l.b16 %v6570
    %v6991 = vunpack.c.h.b16 %v6570
    %v6992 = vunpack.c.l.b16 %v6571
    %v6993 = vunpack.c.h.b16 %v6571
    %v6994 = vunpack.c.l.b16 %v6572
    %v6995 = vunpack.c.h.b16 %v6572
    %v6996 = vunpack.c.l.b16 %v6573
    %v6997 = vunpack.c.h.b16 %v6573
    %v6998 = vunpack.c.l.b16 %v6574
    %v6999 = vunpack.c.h.b16 %v6574
    %v7000 = vunpack.c.l.b16 %v6575
    %v7001 = vunpack.c.h.b16 %v6575
    %v7002 = vunpack.c.l.b16 %v6576
    %v7003 = vunpack.c.h.b16 %v6576
    %v7004 = vunpack.c.l.b16 %v6577
    %v7005 = vunpack.c.h.b16 %v6577
    %v7006 = vunpack.c.l.b16 %v6578
    %v7007 = vunpack.c.h.b16 %v6578
    %v7008 = vunpack.c.l.b16 %v6579
    %v7009 = vunpack.c.h.b16 %v6579
    %v7010 = vunpack.c.l.b16 %v6580
    %v7011 = vunpack.c.h.b16 %v6580
    %v7012 = vunpack.c.l.b16 %v6581
    %v7013 = vunpack.c.h.b16 %v6581
    %v7014 = vunpack.c.l.b16 %v6582
    %v7015 = vunpack.c.h.b16 %v6582
    %v7016 = vunpack.c.l.b16 %v6583
    %v7017 = vunpack.c.h.b16 %v6583
    %v7018 = vunpack.c.l.b16 %v6584
    %v7019 = vunpack.c.h.b16 %v6584
    %v7020 = vunpack.c.l.b16 %v6585
    %v7021 = vunpack.c.h.b16 %v6585
    %v7022 = vunpack.c.l.b16 %v6586
    %v7023 = vunpack.c.h.b16 %v6586
    %v7024 = vunpack.c.l.b16 %v6587
    %v7025 = vunpack.c.h.b16 %v6587
    %v7026 = vunpack.c.l.b16 %v6588
    %v7027 = vunpack.c.h.b16 %v6588
    %v7028 = vunpack.c.l.b16 %v6589
    %v7029 = vunpack.c.h.b16 %v6589
    %v7030 = vunpack.c.l.b16 %v6590
    %v7031 = vunpack.c.h.b16 %v6590
    %v7032 = vunpack.c.l.b16 %v6591
    %v7033 = vunpack.c.h.b16 %v6591
    %v7034 = vunpack.c.l.b16 %v6592
    %v7035 = vunpack.c.h.b16 %v6592
    %v7036 = vunpack.c.l.b16 %v6593
    %v7037 = vunpack.c.h.b16 %v6593
    %v7038 = vunpack.c.l.b16 %v6594
    %v7039 = vunpack.c.h.b16 %v6594
    %v7040 = vunpack.c.l.b16 %v6595
    %v7041 = vunpack.c.h.b16 %v6595
    %v7042 = vunpack.c.l.b16 %v6596
    %v7043 = vunpack.c.h.b16 %v6596
    %v7044 = vunpack.c.l.b16 %v6597
    %v7045 = vunpack.c.h.b16 %v6597
    %v7046 = vunpack.c.l.b16 %v6598
    %v7047 = vunpack.c.h.b16 %v6598
    %v7048 = vunpack.c.l.b16 %v6599
    %v7049 = vunpack.c.h.b16 %v6599
    %v7050 = vunpack.c.l.b16 %v6600
    %v7051 = vunpack.c.h.b16 %v6600
    %v7052 = vunpack.c.l.b16 %v6601
    %v7053 = vunpack.c.h.b16 %v6601
    %v7054 = vunpack.c.l.b16 %v6602
    %v7055 = vunpack.c.h.b16 %v6602
    %v7056 = vunpack.c.l.b16 %v6603
    %v7057 = vunpack.c.h.b16 %v6603
    %v7058 = vunpack.c.l.b16 %v6604
    %v7059 = vunpack.c.h.b16 %v6604
    %v7060 = vunpack.c.l.b16 %v6605
    %v7061 = vunpack.c.h.b16 %v6605
    %v7062 = vunpack.c.l.b16 %v6606
    %v7063 = vunpack.c.h.b16 %v6606
    %v7064 = vunpack.c.l.b16 %v6607
    %v7065 = vunpack.c.h.b16 %v6607
    %v7066 = vunpack.c.l.b16 %v6608
    %v7067 = vunpack.c.h.b16 %v6608
    %v7068 = vunpack.c.l.b16 %v6609
    %v7069 = vunpack.c.h.b16 %v6609
    %v7070 = vunpack.c.l.b16 %v6610
    %v7071 = vunpack.c.h.b16 %v6610
    %v7072 = vunpack.c.l.b16 %v6611
    %v7073 = vunpack.c.h.b16 %v6611
    %v7074 = vunpack.c.l.b16 %v6612
    %v7075 = vunpack.c.h.b16 %v6612
    %v7076 = vunpack.c.l.b16 %v6613
    %v7077 = vunpack.c.h.b16 %v6613
    %v7078 = vunpack.c.l.b16 %v6614
    %v7079 = vunpack.c.h.b16 %v6614
    %v7080 = vunpack.c.l.b16 %v6615
    %v7081 = vunpack.c.h.b16 %v6615
    %v7082 = vunpack.c.l.b16 %v6616
    %v7083 = vunpack.c.h.b16 %v6616
    %v7084 = vunpack.c.l.b16 %v6617
    %v7085 = vunpack.c.h.b16 %v6617
    %v7086 = vunpack.c.l.b16 %v6618
    %v7087 = vunpack.c.h.b16 %v6618
    %v7088 = vpack.c.b16 %v6848, %v6832
    %v7089 = vpack.c.b16 %v6849, %v6833
    %v7090 = vpack.c.b16 %v6850, %v6834
    %v7091 = vpack.c.b16 %v6851, %v6835
    %v7092 = vpack.c.b16 %v6852, %v6836
    %v7093 = vpack.c.b16 %v6853, %v6837
    %v7094 = vpack.c.b16 %v6854, %v6838
    %v7095 = vpack.c.b16 %v6855, %v6839
    %v7096 = vpack.c.b16 %v6856, %v6840
    %v7097 = vpack.c.b16 %v6857, %v6841
    %v7098 = vpack.c.b16 %v6858, %v6842
    %v7099 = vpack.c.b16 %v6859, %v6843
    %v7100 = vpack.c.b16 %v6860, %v6844
    %v7101 = vpack.c.b16 %v6861, %v6845
    %v7102 = vpack.c.b16 %v6862, %v6846
    %v7103 = vpack.c.b16 %v6863, %v6847
    %v7104 = vpack.c.b16 %v6880, %v6864
    %v7105 = vpack.c.b16 %v6881, %v6865
    %v7106 = vpack.c.b16 %v6882, %v6866
    %v7107 = vpack.c.b16 %v6883, %v6867
    %v7108 = vpack.c.b16 %v6884, %v6868
    %v7109 = vpack.c.b16 %v6885, %v6869
    %v7110 = vpack.c.b16 %v6886, %v6870
    %v7111 = vpack.c.b16 %v6887, %v6871
    %v7112 = vpack.c.b16 %v6888, %v6872
    %v7113 = vpack.c.b16 %v6889, %v6873
    %v7114 = vpack.c.b16 %v6890, %v6874
    %v7115 = vpack.c.b16 %v6891, %v6875
    %v7116 = vpack.c.b16 %v6892, %v6876
    %v7117 = vpack.c.b16 %v6893, %v6877
    %v7118 = vpack.c.b16 %v6894, %v6878
    %v7119 = vpack.c.b16 %v6895, %v6879
    %v7120 = vpack.c.b16 %v6912, %v6896
    %v7121 = vpack.c.b16 %v6913, %v6897
    %v7122 = vpack.c.b16 %v6914, %v6898
    %v7123 = vpack.c.b16 %v6915, %v6899
    %v7124 = vpack.c.b16 %v6916, %v6900
    %v7125 = vpack.c.b16 %v6917, %v6901
    %v7126 = vpack.c.b16 %v6918, %v6902
    %v7127 = vpack.c.b16 %v6919, %v6903
    %v7128 = vpack.c.b16 %v6920, %v6904
    %v7129 = vpack.c.b16 %v6921, %v6905
    %v7130 = vpack.c.b16 %v6922, %v6906
    %v7131 = vpack.c.b16 %v6923, %v6907
    %v7132 = vpack.c.b16 %v6924, %v6908
    %v7133 = vpack.c.b16 %v6925, %v6909
    %v7134 = vpack.c.b16 %v6926, %v6910
    %v7135 = vpack.c.b16 %v6927, %v6911
    %v7136 = vpack.c.b16 %v6944, %v6928
    %v7137 = vpack.c.b16 %v6945, %v6929
    %v7138 = vpack.c.b16 %v6946, %v6930
    %v7139 = vpack.c.b16 %v6947, %v6931
    %v7140 = vpack.c.b16 %v6948, %v6932
    %v7141 = vpack.c.b16 %v6949, %v6933
    %v7142 = vpack.c.b16 %v6950, %v6934
    %v7143 = vpack.c.b16 %v6951, %v6935
    %v7144 = vpack.c.b16 %v6952, %v6936
    %v7145 = vpack.c.b16 %v6953, %v6937
    %v7146 = vpack.c.b16 %v6954, %v6938
    %v7147 = vpack.c.b16 %v6955, %v6939
    %v7148 = vpack.c.b16 %v6956, %v6940
    %v7149 = vpack.c.b16 %v6957, %v6941
    %v7150 = vpack.c.b16 %v6958, %v6942
    %v7151 = vpack.c.b16 %v6959, %v6943
    %v7152 = vpack.c.b16 %v6976, %v6960
    %v7153 = vpack.c.b16 %v6977, %v6961
    %v7154 = vpack.c.b16 %v6978, %v6962
    %v7155 = vpack.c.b16 %v6979, %v6963
    %v7156 = vpack.c.b16 %v6980, %v6964
    %v7157 = vpack.c.b16 %v6981, %v6965
    %v7158 = vpack.c.b16 %v6982, %v6966
    %v7159 = vpack.c.b16 %v6983, %v6967
    %v7160 = vpack.c.b16 %v6984, %v6968
    %v7161 = vpack.c.b16 %v6985, %v6969
    %v7162 = vpack.c.b16 %v6986, %v6970
    %v7163 = vpack.c.b16 %v6987, %v6971
    %v7164 = vpack.c.b16 %v6988, %v6972
    %v7165 = vpack.c.b16 %v6989, %v6973
    %v7166 = vpack.c.b16 %v6990, %v6974
    %v7167 = vpack.c.b16 %v6991, %v6975
    %v7168 = vpack.c.b16 %v7008, %v6992
    %v7169 = vpack.c.b16 %v7009, %v6993
    %v7170 = vpack.c.b16 %v7010, %v6994
    %v7171 = vpack.c.b16 %v7011, %v6995
    %v7172 = vpack.c.b16 %v7012, %v6996
    %v7173 = vpack.c.b16 %v7013, %v6997
    %v7174 = vpack.c.b16 %v7014, %v6998
    %v7175 = vpack.c.b16 %v7015, %v6999
    %v7176 = vpack.c.b16 %v7016, %v7000
    %v7177 = vpack.c.b16 %v7017, %v7001
    %v7178 = vpack.c.b16 %v7018, %v7002
    %v7179 = vpack.c.b16 %v7019, %v7003
    %v7180 = vpack.c.b16 %v7020, %v7004
    %v7181 = vpack.c.b16 %v7021, %v7005
    %v7182 = vpack.c.b16 %v7022, %v7006
    %v7183 = vpack.c.b16 %v7023, %v7007
    %v7184 = vpack.c.b16 %v7040, %v7024
    %v7185 = vpack.c.b16 %v7041, %v7025
    %v7186 = vpack.c.b16 %v7042, %v7026
    %v7187 = vpack.c.b16 %v7043, %v7027
    %v7188 = vpack.c.b16 %v7044, %v7028
    %v7189 = vpack.c.b16 %v7045, %v7029
    %v7190 = vpack.c.b16 %v7046, %v7030
    %v7191 = vpack.c.b16 %v7047, %v7031
    %v7192 = vpack.c.b16 %v7048, %v7032
    %v7193 = vpack.c.b16 %v7049, %v7033
    %v7194 = vpack.c.b16 %v7050, %v7034
    %v7195 = vpack.c.b16 %v7051, %v7035
    %v7196 = vpack.c.b16 %v7052, %v7036
    %v7197 = vpack.c.b16 %v7053, %v7037
    %v7198 = vpack.c.b16 %v7054, %v7038
    %v7199 = vpack.c.b16 %v7055, %v7039
    %v7200 = vpack.c.b16 %v7072, %v7056
    %v7201 = vpack.c.b16 %v7073, %v7057
    %v7202 = vpack.c.b16 %v7074, %v7058
    %v7203 = vpack.c.b16 %v7075, %v7059
    %v7204 = vpack.c.b16 %v7076, %v7060
    %v7205 = vpack.c.b16 %v7077, %v7061
    %v7206 = vpack.c.b16 %v7078, %v7062
    %v7207 = vpack.c.b16 %v7079, %v7063
    %v7208 = vpack.c.b16 %v7080, %v7064
    %v7209 = vpack.c.b16 %v7081, %v7065
    %v7210 = vpack.c.b16 %v7082, %v7066
    %v7211 = vpack.c.b16 %v7083, %v7067
    %v7212 = vpack.c.b16 %v7084, %v7068
    %v7213 = vpack.c.b16 %v7085, %v7069
    %v7214 = vpack.c.b16 %v7086, %v7070
    %v7215 = vpack.c.b16 %v7087, %v7071
    %7344 = vmatprep.subr.bf16.mxu0 %v7089
    %7345 = vmatpush1.bf16.msra.mxu0 %v7088
    %7346 = vmatprep.subr.bf16.mxu0 %v7105
    %7347 = vmatpush1.bf16.msra.mxu0 %v7104
    %7348 = vmatprep.subr.bf16.mxu0 %v7121
    %7349 = vmatpush1.bf16.msra.mxu0 %v7120
    %7350 = vmatprep.subr.bf16.mxu0 %v7137
    %7351 = vmatpush1.bf16.msra.mxu0 %v7136
    %7352 = vmatprep.subr.bf16.mxu0 %v7153
    %7353 = vmatpush1.bf16.msra.mxu0 %v7152
    %7354 = vmatprep.subr.bf16.mxu0 %v7169
    %7355 = vmatpush1.bf16.msra.mxu0 %v7168
    %7356 = vmatprep.subr.bf16.mxu0 %v7185
    %7357 = vmatpush1.bf16.msra.mxu0 %v7184
    %7358 = vmatprep.subr.bf16.mxu0 %v7201
    %7359 = vmatpush1.bf16.msra.mxu0 %v7200
    %7360 = vmatprep.subr.bf16.mxu0 0
    %7361 = vmatpush1.bf16.msra.mxu0 0
    %7362 = vmatprep.subr.bf16.mxu0 0
    %7363 = vmatpush1.bf16.msra.mxu0 0
    %7364 = vmatprep.subr.bf16.mxu0 0
    %7365 = vmatpush1.bf16.msra.mxu0 0
    %7366 = vmatprep.subr.bf16.mxu0 0
    %7367 = vmatpush1.bf16.msra.mxu0 0
    %7368 = vmatprep.subr.bf16.mxu0 0
    %7369 = vmatpush1.bf16.msra.mxu0 0
    %7370 = vmatprep.subr.bf16.mxu0 0
    %7371 = vmatpush1.bf16.msra.mxu0 0
    %7372 = vmatprep.subr.bf16.mxu0 0
    %7373 = vmatpush1.bf16.msra.mxu0 0
    %7374 = vmatprep.subr.bf16.mxu0 0
    %7375 = vmatpush1.bf16.msra.mxu0 0
    %7376 = vmatprep.mubr.bf16.mxu0 0
    %7377 = vmatmul.mubr.bf16.gmra.mrb[0].mxu0 %v6489
    %v7378 = vpop.f32.mrb[0].mxu0
    %v7379 = vadd.f32 %v6627, %v7378
    %v7380 = vpop.f32.mrb[0].mxu0
    %v7381 = vadd.f32 %v6631, %v7380
    %v7382 = vpop.f32.mrb[0].mxu0
    %v7383 = vadd.f32 %v6627, %v7382
    %v7384 = vpop.f32.mrb[0].mxu0
    %v7385 = vadd.f32 %v6631, %v7384
    %7386 = vdwg.mxu0
    %7387 = vmatprep.subr.bf16.mxu0 %v7091
    %7388 = vmatpush1.bf16.msra.mxu0 %v7090
    %7389 = vmatprep.subr.bf16.mxu0 %v7107
    %7390 = vmatpush1.bf16.msra.mxu0 %v7106
    %7391 = vmatprep.subr.bf16.mxu0 %v7123
    %7392 = vmatpush1.bf16.msra.mxu0 %v7122
    %7393 = vmatprep.subr.bf16.mxu0 %v7139
    %7394 = vmatpush1.bf16.msra.mxu0 %v7138
    %7395 = vmatprep.subr.bf16.mxu0 %v7155
    %7396 = vmatpush1.bf16.msra.mxu0 %v7154
    %7397 = vmatprep.subr.bf16.mxu0 %v7171
    %7398 = vmatpush1.bf16.msra.mxu0 %v7170
    %7399 = vmatprep.subr.bf16.mxu0 %v7187
    %7400 = vmatpush1.bf16.msra.mxu0 %v7186
    %7401 = vmatprep.subr.bf16.mxu0 %v7203
    %7402 = vmatpush1.bf16.msra.mxu0 %v7202
    %7403 = vmatprep.subr.bf16.mxu0 0
    %7404 = vmatpush1.bf16.msra.mxu0 0
    %7405 = vmatprep.subr.bf16.mxu0 0
    %7406 = vmatpush1.bf16.msra.mxu0 0
    %7407 = vmatprep.subr.bf16.mxu0 0
    %7408 = vmatpush1.bf16.msra.mxu0 0
    %7409 = vmatprep.subr.bf16.mxu0 0
    %7410 = vmatpush1.bf16.msra.mxu0 0
    %7411 = vmatprep.subr.bf16.mxu0 0
    %7412 = vmatpush1.bf16.msra.mxu0 0
    %7413 = vmatprep.subr.bf16.mxu0 0
    %7414 = vmatpush1.bf16.msra.mxu0 0
    %7415 = vmatprep.subr.bf16.mxu0 0
    %7416 = vmatpush1.bf16.msra.mxu0 0
    %7417 = vmatprep.subr.bf16.mxu0 0
    %7418 = vmatpush1.bf16.msra.mxu0 0
    %7419 = vmatprep.mubr.bf16.mxu0 0
    %7420 = vmatmul.mubr.bf16.gmra.mrb[0].mxu0 %v6489
    %v7421 = vpop.f32.mrb[0].mxu0
    %v7422 = vadd.f32 %v6635, %v7421
    %v7423 = vpop.f32.mrb[0].mxu0
    %v7424 = vadd.f32 %v6639, %v7423
    %v7425 = vpop.f32.mrb[0].mxu0
    %v7426 = vadd.f32 %v6635, %v7425
    %v7427 = vpop.f32.mrb[0].mxu0
    %v7428 = vadd.f32 %v6639, %v7427
    %7429 = vdwg.mxu0
    %7430 = vmatprep.subr.bf16.mxu0 %v7093
    %7431 = vmatpush1.bf16.msra.mxu0 %v7092
    %7432 = vmatprep.subr.bf16.mxu0 %v7109
    %7433 = vmatpush1.bf16.msra.mxu0 %v7108
    %7434 = vmatprep.subr.bf16.mxu0 %v7125
    %7435 = vmatpush1.bf16.msra.mxu0 %v7124
    %7436 = vmatprep.subr.bf16.mxu0 %v7141
    %7437 = vmatpush1.bf16.msra.mxu0 %v7140
    %7438 = vmatprep.subr.bf16.mxu0 %v7157
    %7439 = vmatpush1.bf16.msra.mxu0 %v7156
    %7440 = vmatprep.subr.bf16.mxu0 %v7173
    %7441 = vmatpush1.bf16.msra.mxu0 %v7172
    %7442 = vmatprep.subr.bf16.mxu0 %v7189
    %7443 = vmatpush1.bf16.msra.mxu0 %v7188
    %7444 = vmatprep.subr.bf16.mxu0 %v7205
    %7445 = vmatpush1.bf16.msra.mxu0 %v7204
    %7446 = vmatprep.subr.bf16.mxu0 0
    %7447 = vmatpush1.bf16.msra.mxu0 0
    %7448 = vmatprep.subr.bf16.mxu0 0
    %7449 = vmatpush1.bf16.msra.mxu0 0
    %7450 = vmatprep.subr.bf16.mxu0 0
    %7451 = vmatpush1.bf16.msra.mxu0 0
    %7452 = vmatprep.subr.bf16.mxu0 0
    %7453 = vmatpush1.bf16.msra.mxu0 0
    %7454 = vmatprep.subr.bf16.mxu0 0
    %7455 = vmatpush1.bf16.msra.mxu0 0
    %7456 = vmatprep.subr.bf16.mxu0 0
    %7457 = vmatpush1.bf16.msra.mxu0 0
    %7458 = vmatprep.subr.bf16.mxu0 0
    %7459 = vmatpush1.bf16.msra.mxu0 0
    %7460 = vmatprep.subr.bf16.mxu0 0
    %7461 = vmatpush1.bf16.msra.mxu0 0
    %7462 = vmatprep.mubr.bf16.mxu0 0
    %7463 = vmatmul.mubr.bf16.gmra.mrb[0].mxu0 %v6489
    %v7464 = vpop.f32.mrb[0].mxu0
    %v7465 = vadd.f32 %v6643, %v7464
    %v7466 = vpop.f32.mrb[0].mxu0
    %v7467 = vadd.f32 %v6647, %v7466
    %v7468 = vpop.f32.mrb[0].mxu0
    %v7469 = vadd.f32 %v6643, %v7468
    %v7470 = vpop.f32.mrb[0].mxu0
    %v7471 = vadd.f32 %v6647, %v7470
    %7472 = vdwg.mxu0
    %7473 = vmatprep.subr.bf16.mxu0 %v7095
    %7474 = vmatpush1.bf16.msra.mxu0 %v7094
    %7475 = vmatprep.subr.bf16.mxu0 %v7111
    %7476 = vmatpush1.bf16.msra.mxu0 %v7110
    %7477 = vmatprep.subr.bf16.mxu0 %v7127
    %7478 = vmatpush1.bf16.msra.mxu0 %v7126
    %7479 = vmatprep.subr.bf16.mxu0 %v7143
    %7480 = vmatpush1.bf16.msra.mxu0 %v7142
    %7481 = vmatprep.subr.bf16.mxu0 %v7159
    %7482 = vmatpush1.bf16.msra.mxu0 %v7158
    %7483 = vmatprep.subr.bf16.mxu0 %v7175
    %7484 = vmatpush1.bf16.msra.mxu0 %v7174
    %7485 = vmatprep.subr.bf16.mxu0 %v7191
    %7486 = vmatpush1.bf16.msra.mxu0 %v7190
    %7487 = vmatprep.subr.bf16.mxu0 %v7207
    %7488 = vmatpush1.bf16.msra.mxu0 %v7206
    %7489 = vmatprep.subr.bf16.mxu0 0
    %7490 = vmatpush1.bf16.msra.mxu0 0
    %7491 = vmatprep.subr.bf16.mxu0 0
    %7492 = vmatpush1.bf16.msra.mxu0 0
    %7493 = vmatprep.subr.bf16.mxu0 0
    %7494 = vmatpush1.bf16.msra.mxu0 0
    %7495 = vmatprep.subr.bf16.mxu0 0
    %7496 = vmatpush1.bf16.msra.mxu0 0
    %7497 = vmatprep.subr.bf16.mxu0 0
    %7498 = vmatpush1.bf16.msra.mxu0 0
    %7499 = vmatprep.subr.bf16.mxu0 0
    %7500 = vmatpush1.bf16.msra.mxu0 0
    %7501 = vmatprep.subr.bf16.mxu0 0
    %7502 = vmatpush1.bf16.msra.mxu0 0
    %7503 = vmatprep.subr.bf16.mxu0 0
    %7504 = vmatpush1.bf16.msra.mxu0 0
    %7505 = vmatprep.mubr.bf16.mxu0 0
    %7506 = vmatmul.mubr.bf16.gmra.mrb[0].mxu0 %v6489
    %v7507 = vpop.f32.mrb[0].mxu0
    %v7508 = vadd.f32 %v6651, %v7507
    %v7509 = vpop.f32.mrb[0].mxu0
    %v7510 = vadd.f32 %v6655, %v7509
    %v7511 = vpop.f32.mrb[0].mxu0
    %v7512 = vadd.f32 %v6651, %v7511
    %v7513 = vpop.f32.mrb[0].mxu0
    %v7514 = vadd.f32 %v6655, %v7513
    %7515 = vdwg.mxu0
    %7516 = vmatprep.subr.bf16.mxu0 %v7097
    %7517 = vmatpush1.bf16.msra.mxu0 %v7096
    %7518 = vmatprep.subr.bf16.mxu0 %v7113
    %7519 = vmatpush1.bf16.msra.mxu0 %v7112
    %7520 = vmatprep.subr.bf16.mxu0 %v7129
    %7521 = vmatpush1.bf16.msra.mxu0 %v7128
    %7522 = vmatprep.subr.bf16.mxu0 %v7145
    %7523 = vmatpush1.bf16.msra.mxu0 %v7144
    %7524 = vmatprep.subr.bf16.mxu0 %v7161
    %7525 = vmatpush1.bf16.msra.mxu0 %v7160
    %7526 = vmatprep.subr.bf16.mxu0 %v7177
    %7527 = vmatpush1.bf16.msra.mxu0 %v7176
    %7528 = vmatprep.subr.bf16.mxu0 %v7193
    %7529 = vmatpush1.bf16.msra.mxu0 %v7192
    %7530 = vmatprep.subr.bf16.mxu0 %v7209
    %7531 = vmatpush1.bf16.msra.mxu0 %v7208
    %7532 = vmatprep.subr.bf16.mxu0 0
    %7533 = vmatpush1.bf16.msra.mxu0 0
    %7534 = vmatprep.subr.bf16.mxu0 0
    %7535 = vmatpush1.bf16.msra.mxu0 0
    %7536 = vmatprep.subr.bf16.mxu0 0
    %7537 = vmatpush1.bf16.msra.mxu0 0
    %7538 = vmatprep.subr.bf16.mxu0 0
    %7539 = vmatpush1.bf16.msra.mxu0 0
    %7540 = vmatprep.subr.bf16.mxu0 0
    %7541 = vmatpush1.bf16.msra.mxu0 0
    %7542 = vmatprep.subr.bf16.mxu0 0
    %7543 = vmatpush1.bf16.msra.mxu0 0
    %7544 = vmatprep.subr.bf16.mxu0 0
    %7545 = vmatpush1.bf16.msra.mxu0 0
    %7546 = vmatprep.subr.bf16.mxu0 0
    %7547 = vmatpush1.bf16.msra.mxu0 0
    %7548 = vmatprep.mubr.bf16.mxu0 0
    %7549 = vmatmul.mubr.bf16.gmra.mrb[0].mxu0 %v6489
    %v7550 = vpop.f32.mrb[0].mxu0
    %v7551 = vadd.f32 %v6659, %v7550
    %v7552 = vpop.f32.mrb[0].mxu0
    %v7553 = vadd.f32 %v6663, %v7552
    %v7554 = vpop.f32.mrb[0].mxu0
    %v7555 = vadd.f32 %v6659, %v7554
    %v7556 = vpop.f32.mrb[0].mxu0
    %v7557 = vadd.f32 %v6663, %v7556
    %7558 = vdwg.mxu0
    %7559 = vmatprep.subr.bf16.mxu0 %v7099
    %7560 = vmatpush1.bf16.msra.mxu0 %v7098
    %7561 = vmatprep.subr.bf16.mxu0 %v7115
    %7562 = vmatpush1.bf16.msra.mxu0 %v7114
    %7563 = vmatprep.subr.bf16.mxu0 %v7131
    %7564 = vmatpush1.bf16.msra.mxu0 %v7130
    %7565 = vmatprep.subr.bf16.mxu0 %v7147
    %7566 = vmatpush1.bf16.msra.mxu0 %v7146
    %7567 = vmatprep.subr.bf16.mxu0 %v7163
    %7568 = vmatpush1.bf16.msra.mxu0 %v7162
    %7569 = vmatprep.subr.bf16.mxu0 %v7179
    %7570 = vmatpush1.bf16.msra.mxu0 %v7178
    %7571 = vmatprep.subr.bf16.mxu0 %v7195
    %7572 = vmatpush1.bf16.msra.mxu0 %v7194
    %7573 = vmatprep.subr.bf16.mxu0 %v7211
    %7574 = vmatpush1.bf16.msra.mxu0 %v7210
    %7575 = vmatprep.subr.bf16.mxu0 0
    %7576 = vmatpush1.bf16.msra.mxu0 0
    %7577 = vmatprep.subr.bf16.mxu0 0
    %7578 = vmatpush1.bf16.msra.mxu0 0
    %7579 = vmatprep.subr.bf16.mxu0 0
    %7580 = vmatpush1.bf16.msra.mxu0 0
    %7581 = vmatprep.subr.bf16.mxu0 0
    %7582 = vmatpush1.bf16.msra.mxu0 0
    %7583 = vmatprep.subr.bf16.mxu0 0
    %7584 = vmatpush1.bf16.msra.mxu0 0
    %7585 = vmatprep.subr.bf16.mxu0 0
    %7586 = vmatpush1.bf16.msra.mxu0 0
    %7587 = vmatprep.subr.bf16.mxu0 0
    %7588 = vmatpush1.bf16.msra.mxu0 0
    %7589 = vmatprep.subr.bf16.mxu0 0
    %7590 = vmatpush1.bf16.msra.mxu0 0
    %7591 = vmatprep.mubr.bf16.mxu0 0
    %7592 = vmatmul.mubr.bf16.gmra.mrb[0].mxu0 %v6489
    %v7593 = vpop.f32.mrb[0].mxu0
    %v7594 = vadd.f32 %v6667, %v7593
    %v7595 = vpop.f32.mrb[0].mxu0
    %v7596 = vadd.f32 %v6671, %v7595
    %v7597 = vpop.f32.mrb[0].mxu0
    %v7598 = vadd.f32 %v6667, %v7597
    %v7599 = vpop.f32.mrb[0].mxu0
    %v7600 = vadd.f32 %v6671, %v7599
    %7601 = vdwg.mxu0
    %7602 = vmatprep.subr.bf16.mxu0 %v7101
    %7603 = vmatpush1.bf16.msra.mxu0 %v7100
    %7604 = vmatprep.subr.bf16.mxu0 %v7117
    %7605 = vmatpush1.bf16.msra.mxu0 %v7116
    %7606 = vmatprep.subr.bf16.mxu0 %v7133
    %7607 = vmatpush1.bf16.msra.mxu0 %v7132
    %7608 = vmatprep.subr.bf16.mxu0 %v7149
    %7609 = vmatpush1.bf16.msra.mxu0 %v7148
    %7610 = vmatprep.subr.bf16.mxu0 %v7165
    %7611 = vmatpush1.bf16.msra.mxu0 %v7164
    %7612 = vmatprep.subr.bf16.mxu0 %v7181
    %7613 = vmatpush1.bf16.msra.mxu0 %v7180
    %7614 = vmatprep.subr.bf16.mxu0 %v7197
    %7615 = vmatpush1.bf16.msra.mxu0 %v7196
    %7616 = vmatprep.subr.bf16.mxu0 %v7213
    %7617 = vmatpush1.bf16.msra.mxu0 %v7212
    %7618 = vmatprep.subr.bf16.mxu0 0
    %7619 = vmatpush1.bf16.msra.mxu0 0
    %7620 = vmatprep.subr.bf16.mxu0 0
    %7621 = vmatpush1.bf16.msra.mxu0 0
    %7622 = vmatprep.subr.bf16.mxu0 0
    %7623 = vmatpush1.bf16.msra.mxu0 0
    %7624 = vmatprep.subr.bf16.mxu0 0
    %7625 = vmatpush1.bf16.msra.mxu0 0
    %7626 = vmatprep.subr.bf16.mxu0 0
    %7627 = vmatpush1.bf16.msra.mxu0 0
    %7628 = vmatprep.subr.bf16.mxu0 0
    %7629 = vmatpush1.bf16.msra.mxu0 0
    %7630 = vmatprep.subr.bf16.mxu0 0
    %7631 = vmatpush1.bf16.msra.mxu0 0
    %7632 = vmatprep.subr.bf16.mxu0 0
    %7633 = vmatpush1.bf16.msra.mxu0 0
    %7634 = vmatprep.mubr.bf16.mxu0 0
    %7635 = vmatmul.mubr.bf16.gmra.mrb[0].mxu0 %v6489
    %v7636 = vpop.f32.mrb[0].mxu0
    %v7637 = vadd.f32 %v6675, %v7636
    %v7638 = vpop.f32.mrb[0].mxu0
    %v7639 = vadd.f32 %v6679, %v7638
    %v7640 = vpop.f32.mrb[0].mxu0
    %v7641 = vadd.f32 %v6675, %v7640
    %v7642 = vpop.f32.mrb[0].mxu0
    %v7643 = vadd.f32 %v6679, %v7642
    %7644 = vdwg.mxu0
    %7645 = vmatprep.subr.bf16.mxu0 %v7103
    %7646 = vmatpush1.bf16.msra.mxu0 %v7102
    %7647 = vmatprep.subr.bf16.mxu0 %v7119
    %7648 = vmatpush1.bf16.msra.mxu0 %v7118
    %7649 = vmatprep.subr.bf16.mxu0 %v7135
    %7650 = vmatpush1.bf16.msra.mxu0 %v7134
    %7651 = vmatprep.subr.bf16.mxu0 %v7151
    %7652 = vmatpush1.bf16.msra.mxu0 %v7150
    %7653 = vmatprep.subr.bf16.mxu0 %v7167
    %7654 = vmatpush1.bf16.msra.mxu0 %v7166
    %7655 = vmatprep.subr.bf16.mxu0 %v7183
    %7656 = vmatpush1.bf16.msra.mxu0 %v7182
    %7657 = vmatprep.subr.bf16.mxu0 %v7199
    %7658 = vmatpush1.bf16.msra.mxu0 %v7198
    %7659 = vmatprep.subr.bf16.mxu0 %v7215
    %7660 = vmatpush1.bf16.msra.mxu0 %v7214
    %7661 = vmatprep.subr.bf16.mxu0 0
    %7662 = vmatpush1.bf16.msra.mxu0 0
    %7663 = vmatprep.subr.bf16.mxu0 0
    %7664 = vmatpush1.bf16.msra.mxu0 0
    %7665 = vmatprep.subr.bf16.mxu0 0
    %7666 = vmatpush1.bf16.msra.mxu0 0
    %7667 = vmatprep.subr.bf16.mxu0 0
    %7668 = vmatpush1.bf16.msra.mxu0 0
    %7669 = vmatprep.subr.bf16.mxu0 0
    %7670 = vmatpush1.bf16.msra.mxu0 0
    %7671 = vmatprep.subr.bf16.mxu0 0
    %7672 = vmatpush1.bf16.msra.mxu0 0
    %7673 = vmatprep.subr.bf16.mxu0 0
    %7674 = vmatpush1.bf16.msra.mxu0 0
    %7675 = vmatprep.subr.bf16.mxu0 0
    %7676 = vmatpush1.bf16.msra.mxu0 0
    %7677 = vmatprep.mubr.bf16.mxu0 0
    %7678 = vmatmul.mubr.bf16.gmra.mrb[0].mxu0 %v6489
    %v7679 = vpop.f32.mrb[0].mxu0
    %v7680 = vadd.f32 %v6683, %v7679
    %v7681 = vpop.f32.mrb[0].mxu0
    %v7682 = vadd.f32 %v6687, %v7681
    %v7683 = vpop.f32.mrb[0].mxu0
    %v7684 = vadd.f32 %v6683, %v7683
    %v7685 = vpop.f32.mrb[0].mxu0
    %v7686 = vadd.f32 %v6687, %v7685
    %7687 = vdwg.mxu0
    %v7688 = vmax.f32 %v7379, 0.0
    %v7689 = vmax.f32 %v7381, 0.0
    %v7690 = vmax.f32 %v7422, 0.0
    %v7691 = vmax.f32 %v7424, 0.0
    %v7692 = vmax.f32 %v7465, 0.0
    %v7693 = vmax.f32 %v7467, 0.0
    %v7694 = vmax.f32 %v7508, 0.0
    %v7695 = vmax.f32 %v7510, 0.0
    %v7696 = vmax.f32 %v7551, 0.0
    %v7697 = vmax.f32 %v7553, 0.0
    %v7698 = vmax.f32 %v7594, 0.0
    %v7699 = vmax.f32 %v7596, 0.0
    %v7700 = vmax.f32 %v7637, 0.0
    %v7701 = vmax.f32 %v7639, 0.0
    %v7702 = vmax.f32 %v7680, 0.0
    %v7703 = vmax.f32 %v7682, 0.0
    %v7704 = vmax.f32 %v7383, 0.0
    %v7705 = vmax.f32 %v7385, 0.0
    %v7706 = vmax.f32 %v7426, 0.0
    %v7707 = vmax.f32 %v7428, 0.0
    %v7708 = vmax.f32 %v7469, 0.0
    %v7709 = vmax.f32 %v7471, 0.0
    %v7710 = vmax.f32 %v7512, 0.0
    %v7711 = vmax.f32 %v7514, 0.0
    %v7712 = vmax.f32 %v7555, 0.0
    %v7713 = vmax.f32 %v7557, 0.0
    %v7714 = vmax.f32 %v7598, 0.0
    %v7715 = vmax.f32 %v7600, 0.0
    %v7716 = vmax.f32 %v7641, 0.0
    %v7717 = vmax.f32 %v7643, 0.0
    %v7718 = vmax.f32 %v7684, 0.0
    %v7719 = vmax.f32 %v7686, 0.0
    %v7720 = vpack.c.bf16 %v7704, %v7688
    %v7721 = vpack.c.bf16 %v7705, %v7689
    %v7722 = vpack.c.bf16 %v7706, %v7690
    %v7723 = vpack.c.bf16 %v7707, %v7691
    %v7724 = vpack.c.bf16 %v7708, %v7692
    %v7725 = vpack.c.bf16 %v7709, %v7693
    %v7726 = vpack.c.bf16 %v7710, %v7694
    %v7727 = vpack.c.bf16 %v7711, %v7695
    %v7728 = vpack.c.bf16 %v7712, %v7696
    %v7729 = vpack.c.bf16 %v7713, %v7697
    %v7730 = vpack.c.bf16 %v7714, %v7698
    %v7731 = vpack.c.bf16 %v7715, %v7699
    %v7732 = vpack.c.bf16 %v7716, %v7700
    %v7733 = vpack.c.bf16 %v7717, %v7701
    %v7734 = vpack.c.bf16 %v7718, %v7702
    %v7735 = vpack.c.bf16 %v7719, %v7703
    %s7736 = scalar_lea.vmem [#allocation14], 1024
    %v7737 = vld [vmem:[%s7736] sm:$0xf]
    %v7738 = vld [vmem:[%s7736 + $0x4] sm:$0xf]
    %v7739 = vld [vmem:[%s7736 + $0x8] sm:$0xf]
    %v7740 = vld [vmem:[%s7736 + $0xc] sm:$0xf]
    %v7741 = vld [vmem:[%s7736 + $0x10] sm:$0xf]
    %v7742 = vld [vmem:[%s7736 + $0x14] sm:$0xf]
    %v7743 = vld [vmem:[%s7736 + $0x18] sm:$0xf]
    %v7744 = vld [vmem:[%s7736 + $0x1c] sm:$0xf]
    %v7745 = vld [vmem:[%s7736 + $0x20] sm:$0xf]
    %v7746 = vld [vmem:[%s7736 + $0x24] sm:$0xf]
    %v7747 = vld [vmem:[%s7736 + $0x28] sm:$0xf]
    %v7748 = vld [vmem:[%s7736 + $0x2c] sm:$0xf]
    %v7749 = vld [vmem:[%s7736 + $0x30] sm:$0xf]
    %v7750 = vld [vmem:[%s7736 + $0x34] sm:$0xf]
    %v7751 = vld [vmem:[%s7736 + $0x38] sm:$0xf]
    %v7752 = vld [vmem:[%s7736 + $0x3c] sm:$0xf]
    %v7753 = vld [vmem:[%s7736 + $0x40] sm:$0xf]
    %v7754 = vld [vmem:[%s7736 + $0x44] sm:$0xf]
    %v7755 = vld [vmem:[%s7736 + $0x48] sm:$0xf]
    %v7756 = vld [vmem:[%s7736 + $0x4c] sm:$0xf]
    %v7757 = vld [vmem:[%s7736 + $0x50] sm:$0xf]
    %v7758 = vld [vmem:[%s7736 + $0x54] sm:$0xf]
    %v7759 = vld [vmem:[%s7736 + $0x58] sm:$0xf]
    %v7760 = vld [vmem:[%s7736 + $0x5c] sm:$0xf]
    %v7761 = vld [vmem:[%s7736 + $0x60] sm:$0xf]
    %v7762 = vld [vmem:[%s7736 + $0x64] sm:$0xf]
    %v7763 = vld [vmem:[%s7736 + $0x68] sm:$0xf]
    %v7764 = vld [vmem:[%s7736 + $0x6c] sm:$0xf]
    %v7765 = vld [vmem:[%s7736 + $0x70] sm:$0xf]
    %v7766 = vld [vmem:[%s7736 + $0x74] sm:$0xf]
    %v7767 = vld [vmem:[%s7736 + $0x78] sm:$0xf]
    %v7768 = vld [vmem:[%s7736 + $0x7c] sm:$0xf]
    %v7769 = vld [vmem:[%s7736 + $0x80] sm:$0xf]
    %v7770 = vld [vmem:[%s7736 + $0x84] sm:$0xf]
    %v7771 = vld [vmem:[%s7736 + $0x88] sm:$0xf]
    %v7772 = vld [vmem:[%s7736 + $0x8c] sm:$0xf]
    %v7773 = vld [vmem:[%s7736 + $0x90] sm:$0xf]
    %v7774 = vld [vmem:[%s7736 + $0x94] sm:$0xf]
    %v7775 = vld [vmem:[%s7736 + $0x98] sm:$0xf]
    %v7776 = vld [vmem:[%s7736 + $0x9c] sm:$0xf]
    %v7777 = vld [vmem:[%s7736 + $0xa0] sm:$0xf]
    %v7778 = vld [vmem:[%s7736 + $0xa4] sm:$0xf]
    %v7779 = vld [vmem:[%s7736 + $0xa8] sm:$0xf]
    %v7780 = vld [vmem:[%s7736 + $0xac] sm:$0xf]
    %v7781 = vld [vmem:[%s7736 + $0xb0] sm:$0xf]
    %v7782 = vld [vmem:[%s7736 + $0xb4] sm:$0xf]
    %v7783 = vld [vmem:[%s7736 + $0xb8] sm:$0xf]
    %v7784 = vld [vmem:[%s7736 + $0xbc] sm:$0xf]
    %v7785 = vld [vmem:[%s7736 + $0xc0] sm:$0xf]
    %v7786 = vld [vmem:[%s7736 + $0xc4] sm:$0xf]
    %v7787 = vld [vmem:[%s7736 + $0xc8] sm:$0xf]
    %v7788 = vld [vmem:[%s7736 + $0xcc] sm:$0xf]
    %v7789 = vld [vmem:[%s7736 + $0xd0] sm:$0xf]
    %v7790 = vld [vmem:[%s7736 + $0xd4] sm:$0xf]
    %v7791 = vld [vmem:[%s7736 + $0xd8] sm:$0xf]
    %v7792 = vld [vmem:[%s7736 + $0xdc] sm:$0xf]
    %v7793 = vld [vmem:[%s7736 + $0xe0] sm:$0xf]
    %v7794 = vld [vmem:[%s7736 + $0xe4] sm:$0xf]
    %v7795 = vld [vmem:[%s7736 + $0xe8] sm:$0xf]
    %v7796 = vld [vmem:[%s7736 + $0xec] sm:$0xf]
    %v7797 = vld [vmem:[%s7736 + $0xf0] sm:$0xf]
    %v7798 = vld [vmem:[%s7736 + $0xf4] sm:$0xf]
    %v7799 = vld [vmem:[%s7736 + $0xf8] sm:$0xf]
    %v7800 = vld [vmem:[%s7736 + $0xfc] sm:$0xf]
    %v7801 = vld [vmem:[%s7736 + $0x100] sm:$0xf]
    %v7802 = vld [vmem:[%s7736 + $0x104] sm:$0xf]
    %v7803 = vld [vmem:[%s7736 + $0x108] sm:$0xf]
    %v7804 = vld [vmem:[%s7736 + $0x10c] sm:$0xf]
    %v7805 = vld [vmem:[%s7736 + $0x110] sm:$0xf]
    %v7806 = vld [vmem:[%s7736 + $0x114] sm:$0xf]
    %v7807 = vld [vmem:[%s7736 + $0x118] sm:$0xf]
    %v7808 = vld [vmem:[%s7736 + $0x11c] sm:$0xf]
    %v7809 = vld [vmem:[%s7736 + $0x120] sm:$0xf]
    %v7810 = vld [vmem:[%s7736 + $0x124] sm:$0xf]
    %v7811 = vld [vmem:[%s7736 + $0x128] sm:$0xf]
    %v7812 = vld [vmem:[%s7736 + $0x12c] sm:$0xf]
    %v7813 = vld [vmem:[%s7736 + $0x130] sm:$0xf]
    %v7814 = vld [vmem:[%s7736 + $0x134] sm:$0xf]
    %v7815 = vld [vmem:[%s7736 + $0x138] sm:$0xf]
    %v7816 = vld [vmem:[%s7736 + $0x13c] sm:$0xf]
    %v7817 = vld [vmem:[%s7736 + $0x140] sm:$0xf]
    %v7818 = vld [vmem:[%s7736 + $0x144] sm:$0xf]
    %v7819 = vld [vmem:[%s7736 + $0x148] sm:$0xf]
    %v7820 = vld [vmem:[%s7736 + $0x14c] sm:$0xf]
    %v7821 = vld [vmem:[%s7736 + $0x150] sm:$0xf]
    %v7822 = vld [vmem:[%s7736 + $0x154] sm:$0xf]
    %v7823 = vld [vmem:[%s7736 + $0x158] sm:$0xf]
    %v7824 = vld [vmem:[%s7736 + $0x15c] sm:$0xf]
    %v7825 = vld [vmem:[%s7736 + $0x160] sm:$0xf]
    %v7826 = vld [vmem:[%s7736 + $0x164] sm:$0xf]
    %v7827 = vld [vmem:[%s7736 + $0x168] sm:$0xf]
    %v7828 = vld [vmem:[%s7736 + $0x16c] sm:$0xf]
    %v7829 = vld [vmem:[%s7736 + $0x170] sm:$0xf]
    %v7830 = vld [vmem:[%s7736 + $0x174] sm:$0xf]
    %v7831 = vld [vmem:[%s7736 + $0x178] sm:$0xf]
    %v7832 = vld [vmem:[%s7736 + $0x17c] sm:$0xf]
    %v7833 = vld [vmem:[%s7736 + $0x180] sm:$0xf]
    %v7834 = vld [vmem:[%s7736 + $0x184] sm:$0xf]
    %v7835 = vld [vmem:[%s7736 + $0x188] sm:$0xf]
    %v7836 = vld [vmem:[%s7736 + $0x18c] sm:$0xf]
    %v7837 = vld [vmem:[%s7736 + $0x190] sm:$0xf]
    %v7838 = vld [vmem:[%s7736 + $0x194] sm:$0xf]
    %v7839 = vld [vmem:[%s7736 + $0x198] sm:$0xf]
    %v7840 = vld [vmem:[%s7736 + $0x19c] sm:$0xf]
    %v7841 = vld [vmem:[%s7736 + $0x1a0] sm:$0xf]
    %v7842 = vld [vmem:[%s7736 + $0x1a4] sm:$0xf]
    %v7843 = vld [vmem:[%s7736 + $0x1a8] sm:$0xf]
    %v7844 = vld [vmem:[%s7736 + $0x1ac] sm:$0xf]
    %v7845 = vld [vmem:[%s7736 + $0x1b0] sm:$0xf]
    %v7846 = vld [vmem:[%s7736 + $0x1b4] sm:$0xf]
    %v7847 = vld [vmem:[%s7736 + $0x1b8] sm:$0xf]
    %v7848 = vld [vmem:[%s7736 + $0x1bc] sm:$0xf]
    %v7849 = vld [vmem:[%s7736 + $0x1c0] sm:$0xf]
    %v7850 = vld [vmem:[%s7736 + $0x1c4] sm:$0xf]
    %v7851 = vld [vmem:[%s7736 + $0x1c8] sm:$0xf]
    %v7852 = vld [vmem:[%s7736 + $0x1cc] sm:$0xf]
    %v7853 = vld [vmem:[%s7736 + $0x1d0] sm:$0xf]
    %v7854 = vld [vmem:[%s7736 + $0x1d4] sm:$0xf]
    %v7855 = vld [vmem:[%s7736 + $0x1d8] sm:$0xf]
    %v7856 = vld [vmem:[%s7736 + $0x1dc] sm:$0xf]
    %v7857 = vld [vmem:[%s7736 + $0x1e0] sm:$0xf]
    %v7858 = vld [vmem:[%s7736 + $0x1e4] sm:$0xf]
    %v7859 = vld [vmem:[%s7736 + $0x1e8] sm:$0xf]
    %v7860 = vld [vmem:[%s7736 + $0x1ec] sm:$0xf]
    %v7861 = vld [vmem:[%s7736 + $0x1f0] sm:$0xf]
    %v7862 = vld [vmem:[%s7736 + $0x1f4] sm:$0xf]
    %v7863 = vld [vmem:[%s7736 + $0x1f8] sm:$0xf]
    %v7864 = vld [vmem:[%s7736 + $0x1fc] sm:$0xf]
    %v7865 = vld [vmem:[%s7736 + $0x200] sm:$0xf]
    %v7866 = vld [vmem:[%s7736 + $0x204] sm:$0xf]
    %v7867 = vld [vmem:[%s7736 + $0x208] sm:$0xf]
    %v7868 = vld [vmem:[%s7736 + $0x20c] sm:$0xf]
    %v7869 = vld [vmem:[%s7736 + $0x210] sm:$0xf]
    %v7870 = vld [vmem:[%s7736 + $0x214] sm:$0xf]
    %v7871 = vld [vmem:[%s7736 + $0x218] sm:$0xf]
    %v7872 = vld [vmem:[%s7736 + $0x21c] sm:$0xf]
    %v7873 = vld [vmem:[%s7736 + $0x220] sm:$0xf]
    %v7874 = vld [vmem:[%s7736 + $0x224] sm:$0xf]
    %v7875 = vld [vmem:[%s7736 + $0x228] sm:$0xf]
    %v7876 = vld [vmem:[%s7736 + $0x22c] sm:$0xf]
    %v7877 = vld [vmem:[%s7736 + $0x230] sm:$0xf]
    %v7878 = vld [vmem:[%s7736 + $0x234] sm:$0xf]
    %v7879 = vld [vmem:[%s7736 + $0x238] sm:$0xf]
    %v7880 = vld [vmem:[%s7736 + $0x23c] sm:$0xf]
    %v7881 = vld [vmem:[%s7736 + $0x240] sm:$0xf]
    %v7882 = vld [vmem:[%s7736 + $0x244] sm:$0xf]
    %v7883 = vld [vmem:[%s7736 + $0x248] sm:$0xf]
    %v7884 = vld [vmem:[%s7736 + $0x24c] sm:$0xf]
    %v7885 = vld [vmem:[%s7736 + $0x250] sm:$0xf]
    %v7886 = vld [vmem:[%s7736 + $0x254] sm:$0xf]
    %v7887 = vld [vmem:[%s7736 + $0x258] sm:$0xf]
    %v7888 = vld [vmem:[%s7736 + $0x25c] sm:$0xf]
    %v7889 = vld [vmem:[%s7736 + $0x260] sm:$0xf]
    %v7890 = vld [vmem:[%s7736 + $0x264] sm:$0xf]
    %v7891 = vld [vmem:[%s7736 + $0x268] sm:$0xf]
    %v7892 = vld [vmem:[%s7736 + $0x26c] sm:$0xf]
    %v7893 = vld [vmem:[%s7736 + $0x270] sm:$0xf]
    %v7894 = vld [vmem:[%s7736 + $0x274] sm:$0xf]
    %v7895 = vld [vmem:[%s7736 + $0x278] sm:$0xf]
    %v7896 = vld [vmem:[%s7736 + $0x27c] sm:$0xf]
    %v7897 = vld [vmem:[%s7736 + $0x280] sm:$0xf]
    %v7898 = vld [vmem:[%s7736 + $0x284] sm:$0xf]
    %v7899 = vld [vmem:[%s7736 + $0x288] sm:$0xf]
    %v7900 = vld [vmem:[%s7736 + $0x28c] sm:$0xf]
    %v7901 = vld [vmem:[%s7736 + $0x290] sm:$0xf]
    %v7902 = vld [vmem:[%s7736 + $0x294] sm:$0xf]
    %v7903 = vld [vmem:[%s7736 + $0x298] sm:$0xf]
    %v7904 = vld [vmem:[%s7736 + $0x29c] sm:$0xf]
    %v7905 = vld [vmem:[%s7736 + $0x2a0] sm:$0xf]
    %v7906 = vld [vmem:[%s7736 + $0x2a4] sm:$0xf]
    %v7907 = vld [vmem:[%s7736 + $0x2a8] sm:$0xf]
    %v7908 = vld [vmem:[%s7736 + $0x2ac] sm:$0xf]
    %v7909 = vld [vmem:[%s7736 + $0x2b0] sm:$0xf]
    %v7910 = vld [vmem:[%s7736 + $0x2b4] sm:$0xf]
    %v7911 = vld [vmem:[%s7736 + $0x2b8] sm:$0xf]
    %v7912 = vld [vmem:[%s7736 + $0x2bc] sm:$0xf]
    %v7913 = vld [vmem:[%s7736 + $0x2c0] sm:$0xf]
    %v7914 = vld [vmem:[%s7736 + $0x2c4] sm:$0xf]
    %v7915 = vld [vmem:[%s7736 + $0x2c8] sm:$0xf]
    %v7916 = vld [vmem:[%s7736 + $0x2cc] sm:$0xf]
    %v7917 = vld [vmem:[%s7736 + $0x2d0] sm:$0xf]
    %v7918 = vld [vmem:[%s7736 + $0x2d4] sm:$0xf]
    %v7919 = vld [vmem:[%s7736 + $0x2d8] sm:$0xf]
    %v7920 = vld [vmem:[%s7736 + $0x2dc] sm:$0xf]
    %v7921 = vld [vmem:[%s7736 + $0x2e0] sm:$0xf]
    %v7922 = vld [vmem:[%s7736 + $0x2e4] sm:$0xf]
    %v7923 = vld [vmem:[%s7736 + $0x2e8] sm:$0xf]
    %v7924 = vld [vmem:[%s7736 + $0x2ec] sm:$0xf]
    %v7925 = vld [vmem:[%s7736 + $0x2f0] sm:$0xf]
    %v7926 = vld [vmem:[%s7736 + $0x2f4] sm:$0xf]
    %v7927 = vld [vmem:[%s7736 + $0x2f8] sm:$0xf]
    %v7928 = vld [vmem:[%s7736 + $0x2fc] sm:$0xf]
    %v7929 = vld [vmem:[%s7736 + $0x300] sm:$0xf]
    %v7930 = vld [vmem:[%s7736 + $0x304] sm:$0xf]
    %v7931 = vld [vmem:[%s7736 + $0x308] sm:$0xf]
    %v7932 = vld [vmem:[%s7736 + $0x30c] sm:$0xf]
    %v7933 = vld [vmem:[%s7736 + $0x310] sm:$0xf]
    %v7934 = vld [vmem:[%s7736 + $0x314] sm:$0xf]
    %v7935 = vld [vmem:[%s7736 + $0x318] sm:$0xf]
    %v7936 = vld [vmem:[%s7736 + $0x31c] sm:$0xf]
    %v7937 = vld [vmem:[%s7736 + $0x320] sm:$0xf]
    %v7938 = vld [vmem:[%s7736 + $0x324] sm:$0xf]
    %v7939 = vld [vmem:[%s7736 + $0x328] sm:$0xf]
    %v7940 = vld [vmem:[%s7736 + $0x32c] sm:$0xf]
    %v7941 = vld [vmem:[%s7736 + $0x330] sm:$0xf]
    %v7942 = vld [vmem:[%s7736 + $0x334] sm:$0xf]
    %v7943 = vld [vmem:[%s7736 + $0x338] sm:$0xf]
    %v7944 = vld [vmem:[%s7736 + $0x33c] sm:$0xf]
    %v7945 = vld [vmem:[%s7736 + $0x340] sm:$0xf]
    %v7946 = vld [vmem:[%s7736 + $0x344] sm:$0xf]
    %v7947 = vld [vmem:[%s7736 + $0x348] sm:$0xf]
    %v7948 = vld [vmem:[%s7736 + $0x34c] sm:$0xf]
    %v7949 = vld [vmem:[%s7736 + $0x350] sm:$0xf]
    %v7950 = vld [vmem:[%s7736 + $0x354] sm:$0xf]
    %v7951 = vld [vmem:[%s7736 + $0x358] sm:$0xf]
    %v7952 = vld [vmem:[%s7736 + $0x35c] sm:$0xf]
    %v7953 = vld [vmem:[%s7736 + $0x360] sm:$0xf]
    %v7954 = vld [vmem:[%s7736 + $0x364] sm:$0xf]
    %v7955 = vld [vmem:[%s7736 + $0x368] sm:$0xf]
    %v7956 = vld [vmem:[%s7736 + $0x36c] sm:$0xf]
    %v7957 = vld [vmem:[%s7736 + $0x370] sm:$0xf]
    %v7958 = vld [vmem:[%s7736 + $0x374] sm:$0xf]
    %v7959 = vld [vmem:[%s7736 + $0x378] sm:$0xf]
    %v7960 = vld [vmem:[%s7736 + $0x37c] sm:$0xf]
    %v7961 = vld [vmem:[%s7736 + $0x380] sm:$0xf]
    %v7962 = vld [vmem:[%s7736 + $0x384] sm:$0xf]
    %v7963 = vld [vmem:[%s7736 + $0x388] sm:$0xf]
    %v7964 = vld [vmem:[%s7736 + $0x38c] sm:$0xf]
    %v7965 = vld [vmem:[%s7736 + $0x390] sm:$0xf]
    %v7966 = vld [vmem:[%s7736 + $0x394] sm:$0xf]
    %v7967 = vld [vmem:[%s7736 + $0x398] sm:$0xf]
    %v7968 = vld [vmem:[%s7736 + $0x39c] sm:$0xf]
    %v7969 = vld [vmem:[%s7736 + $0x3a0] sm:$0xf]
    %v7970 = vld [vmem:[%s7736 + $0x3a4] sm:$0xf]
    %v7971 = vld [vmem:[%s7736 + $0x3a8] sm:$0xf]
    %v7972 = vld [vmem:[%s7736 + $0x3ac] sm:$0xf]
    %v7973 = vld [vmem:[%s7736 + $0x3b0] sm:$0xf]
    %v7974 = vld [vmem:[%s7736 + $0x3b4] sm:$0xf]
    %v7975 = vld [vmem:[%s7736 + $0x3b8] sm:$0xf]
    %v7976 = vld [vmem:[%s7736 + $0x3bc] sm:$0xf]
    %v7977 = vld [vmem:[%s7736 + $0x3c0] sm:$0xf]
    %v7978 = vld [vmem:[%s7736 + $0x3c4] sm:$0xf]
    %v7979 = vld [vmem:[%s7736 + $0x3c8] sm:$0xf]
    %v7980 = vld [vmem:[%s7736 + $0x3cc] sm:$0xf]
    %v7981 = vld [vmem:[%s7736 + $0x3d0] sm:$0xf]
    %v7982 = vld [vmem:[%s7736 + $0x3d4] sm:$0xf]
    %v7983 = vld [vmem:[%s7736 + $0x3d8] sm:$0xf]
    %v7984 = vld [vmem:[%s7736 + $0x3dc] sm:$0xf]
    %v7985 = vld [vmem:[%s7736 + $0x3e0] sm:$0xf]
    %v7986 = vld [vmem:[%s7736 + $0x3e4] sm:$0xf]
    %v7987 = vld [vmem:[%s7736 + $0x3e8] sm:$0xf]
    %v7988 = vld [vmem:[%s7736 + $0x3ec] sm:$0xf]
    %v7989 = vld [vmem:[%s7736 + $0x3f0] sm:$0xf]
    %v7990 = vld [vmem:[%s7736 + $0x3f4] sm:$0xf]
    %v7991 = vld [vmem:[%s7736 + $0x3f8] sm:$0xf]
    %v7992 = vld [vmem:[%s7736 + $0x3fc] sm:$0xf]
    %s7993 = scalar_lea.vmem %s15, 1
    %v7994 = vld [vmem:[%s7993] sm:$0x1]
    %v7996 = vlaneseq
    %v7997 = vshrl.u32 %v7996, 7
    %v7998 = vsub.s32 0, %v7997
    %v7999 = vrot.slane %v7994, %v7998
    %v8257 = vunpack.c.l.b16 %v7737
    %v8258 = vunpack.c.l.b16 %v7738
    %v8259 = vunpack.c.l.b16 %v7739
    %v8260 = vunpack.c.l.b16 %v7740
    %v8261 = vunpack.c.l.b16 %v7741
    %v8262 = vunpack.c.l.b16 %v7742
    %v8263 = vunpack.c.l.b16 %v7743
    %v8264 = vunpack.c.l.b16 %v7744
    %v8265 = vunpack.c.l.b16 %v7745
    %v8266 = vunpack.c.l.b16 %v7746
    %v8267 = vunpack.c.l.b16 %v7747
    %v8268 = vunpack.c.l.b16 %v7748
    %v8269 = vunpack.c.l.b16 %v7749
    %v8270 = vunpack.c.l.b16 %v7750
    %v8271 = vunpack.c.l.b16 %v7751
    %v8272 = vunpack.c.l.b16 %v7752
    %v8273 = vunpack.c.l.b16 %v7753
    %v8274 = vunpack.c.l.b16 %v7754
    %v8275 = vunpack.c.l.b16 %v7755
    %v8276 = vunpack.c.l.b16 %v7756
    %v8277 = vunpack.c.l.b16 %v7757
    %v8278 = vunpack.c.l.b16 %v7758
    %v8279 = vunpack.c.l.b16 %v7759
    %v8280 = vunpack.c.l.b16 %v7760
    %v8281 = vunpack.c.l.b16 %v7761
    %v8282 = vunpack.c.l.b16 %v7762
    %v8283 = vunpack.c.l.b16 %v7763
    %v8284 = vunpack.c.l.b16 %v7764
    %v8285 = vunpack.c.l.b16 %v7765
    %v8286 = vunpack.c.l.b16 %v7766
    %v8287 = vunpack.c.l.b16 %v7767
    %v8288 = vunpack.c.l.b16 %v7768
    %v8289 = vunpack.c.l.b16 %v7769
    %v8290 = vunpack.c.l.b16 %v7770
    %v8291 = vunpack.c.l.b16 %v7771
    %v8292 = vunpack.c.l.b16 %v7772
    %v8293 = vunpack.c.l.b16 %v7773
    %v8294 = vunpack.c.l.b16 %v7774
    %v8295 = vunpack.c.l.b16 %v7775
    %v8296 = vunpack.c.l.b16 %v7776
    %v8297 = vunpack.c.l.b16 %v7777
    %v8298 = vunpack.c.l.b16 %v7778
    %v8299 = vunpack.c.l.b16 %v7779
    %v8300 = vunpack.c.l.b16 %v7780
    %v8301 = vunpack.c.l.b16 %v7781
    %v8302 = vunpack.c.l.b16 %v7782
    %v8303 = vunpack.c.l.b16 %v7783
    %v8304 = vunpack.c.l.b16 %v7784
    %v8305 = vunpack.c.l.b16 %v7785
    %v8306 = vunpack.c.l.b16 %v7786
    %v8307 = vunpack.c.l.b16 %v7787
    %v8308 = vunpack.c.l.b16 %v7788
    %v8309 = vunpack.c.l.b16 %v7789
    %v8310 = vunpack.c.l.b16 %v7790
    %v8311 = vunpack.c.l.b16 %v7791
    %v8312 = vunpack.c.l.b16 %v7792
    %v8313 = vunpack.c.l.b16 %v7793
    %v8314 = vunpack.c.l.b16 %v7794
    %v8315 = vunpack.c.l.b16 %v7795
    %v8316 = vunpack.c.l.b16 %v7796
    %v8317 = vunpack.c.l.b16 %v7797
    %v8318 = vunpack.c.l.b16 %v7798
    %v8319 = vunpack.c.l.b16 %v7799
    %v8320 = vunpack.c.l.b16 %v7800
    %v8321 = vunpack.c.l.b16 %v7801
    %v8322 = vunpack.c.l.b16 %v7802
    %v8323 = vunpack.c.l.b16 %v7803
    %v8324 = vunpack.c.l.b16 %v7804
    %v8325 = vunpack.c.l.b16 %v7805
    %v8326 = vunpack.c.l.b16 %v7806
    %v8327 = vunpack.c.l.b16 %v7807
    %v8328 = vunpack.c.l.b16 %v7808
    %v8329 = vunpack.c.l.b16 %v7809
    %v8330 = vunpack.c.l.b16 %v7810
    %v8331 = vunpack.c.l.b16 %v7811
    %v8332 = vunpack.c.l.b16 %v7812
    %v8333 = vunpack.c.l.b16 %v7813
    %v8334 = vunpack.c.l.b16 %v7814
    %v8335 = vunpack.c.l.b16 %v7815
    %v8336 = vunpack.c.l.b16 %v7816
    %v8337 = vunpack.c.l.b16 %v7817
    %v8338 = vunpack.c.l.b16 %v7818
    %v8339 = vunpack.c.l.b16 %v7819
    %v8340 = vunpack.c.l.b16 %v7820
    %v8341 = vunpack.c.l.b16 %v7821
    %v8342 = vunpack.c.l.b16 %v7822
    %v8343 = vunpack.c.l.b16 %v7823
    %v8344 = vunpack.c.l.b16 %v7824
    %v8345 = vunpack.c.l.b16 %v7825
    %v8346 = vunpack.c.l.b16 %v7826
    %v8347 = vunpack.c.l.b16 %v7827
    %v8348 = vunpack.c.l.b16 %v7828
    %v8349 = vunpack.c.l.b16 %v7829
    %v8350 = vunpack.c.l.b16 %v7830
    %v8351 = vunpack.c.l.b16 %v7831
    %v8352 = vunpack.c.l.b16 %v7832
    %v8353 = vunpack.c.l.b16 %v7833
    %v8354 = vunpack.c.l.b16 %v7834
    %v8355 = vunpack.c.l.b16 %v7835
    %v8356 = vunpack.c.l.b16 %v7836
    %v8357 = vunpack.c.l.b16 %v7837
    %v8358 = vunpack.c.l.b16 %v7838
    %v8359 = vunpack.c.l.b16 %v7839
    %v8360 = vunpack.c.l.b16 %v7840
    %v8361 = vunpack.c.l.b16 %v7841
    %v8362 = vunpack.c.l.b16 %v7842
    %v8363 = vunpack.c.l.b16 %v7843
    %v8364 = vunpack.c.l.b16 %v7844
    %v8365 = vunpack.c.l.b16 %v7845
    %v8366 = vunpack.c.l.b16 %v7846
    %v8367 = vunpack.c.l.b16 %v7847
    %v8368 = vunpack.c.l.b16 %v7848
    %v8369 = vunpack.c.l.b16 %v7849
    %v8370 = vunpack.c.l.b16 %v7850
    %v8371 = vunpack.c.l.b16 %v7851
    %v8372 = vunpack.c.l.b16 %v7852
    %v8373 = vunpack.c.l.b16 %v7853
    %v8374 = vunpack.c.l.b16 %v7854
    %v8375 = vunpack.c.l.b16 %v7855
    %v8376 = vunpack.c.l.b16 %v7856
    %v8377 = vunpack.c.l.b16 %v7857
    %v8378 = vunpack.c.l.b16 %v7858
    %v8379 = vunpack.c.l.b16 %v7859
    %v8380 = vunpack.c.l.b16 %v7860
    %v8381 = vunpack.c.l.b16 %v7861
    %v8382 = vunpack.c.l.b16 %v7862
    %v8383 = vunpack.c.l.b16 %v7863
    %v8384 = vunpack.c.l.b16 %v7864
    %v8385 = vunpack.c.l.b16 %v7865
    %v8386 = vunpack.c.l.b16 %v7866
    %v8387 = vunpack.c.l.b16 %v7867
    %v8388 = vunpack.c.l.b16 %v7868
    %v8389 = vunpack.c.l.b16 %v7869
    %v8390 = vunpack.c.l.b16 %v7870
    %v8391 = vunpack.c.l.b16 %v7871
    %v8392 = vunpack.c.l.b16 %v7872
    %v8393 = vunpack.c.l.b16 %v7873
    %v8394 = vunpack.c.l.b16 %v7874
    %v8395 = vunpack.c.l.b16 %v7875
    %v8396 = vunpack.c.l.b16 %v7876
    %v8397 = vunpack.c.l.b16 %v7877
    %v8398 = vunpack.c.l.b16 %v7878
    %v8399 = vunpack.c.l.b16 %v7879
    %v8400 = vunpack.c.l.b16 %v7880
    %v8401 = vunpack.c.l.b16 %v7881
    %v8402 = vunpack.c.l.b16 %v7882
    %v8403 = vunpack.c.l.b16 %v7883
    %v8404 = vunpack.c.l.b16 %v7884
    %v8405 = vunpack.c.l.b16 %v7885
    %v8406 = vunpack.c.l.b16 %v7886
    %v8407 = vunpack.c.l.b16 %v7887
    %v8408 = vunpack.c.l.b16 %v7888
    %v8409 = vunpack.c.l.b16 %v7889
    %v8410 = vunpack.c.l.b16 %v7890
    %v8411 = vunpack.c.l.b16 %v7891
    %v8412 = vunpack.c.l.b16 %v7892
    %v8413 = vunpack.c.l.b16 %v7893
    %v8414 = vunpack.c.l.b16 %v7894
    %v8415 = vunpack.c.l.b16 %v7895
    %v8416 = vunpack.c.l.b16 %v7896
    %v8417 = vunpack.c.l.b16 %v7897
    %v8418 = vunpack.c.l.b16 %v7898
    %v8419 = vunpack.c.l.b16 %v7899
    %v8420 = vunpack.c.l.b16 %v7900
    %v8421 = vunpack.c.l.b16 %v7901
    %v8422 = vunpack.c.l.b16 %v7902
    %v8423 = vunpack.c.l.b16 %v7903
    %v8424 = vunpack.c.l.b16 %v7904
    %v8425 = vunpack.c.l.b16 %v7905
    %v8426 = vunpack.c.l.b16 %v7906
    %v8427 = vunpack.c.l.b16 %v7907
    %v8428 = vunpack.c.l.b16 %v7908
    %v8429 = vunpack.c.l.b16 %v7909
    %v8430 = vunpack.c.l.b16 %v7910
    %v8431 = vunpack.c.l.b16 %v7911
    %v8432 = vunpack.c.l.b16 %v7912
    %v8433 = vunpack.c.l.b16 %v7913
    %v8434 = vunpack.c.l.b16 %v7914
    %v8435 = vunpack.c.l.b16 %v7915
    %v8436 = vunpack.c.l.b16 %v7916
    %v8437 = vunpack.c.l.b16 %v7917
    %v8438 = vunpack.c.l.b16 %v7918
    %v8439 = vunpack.c.l.b16 %v7919
    %v8440 = vunpack.c.l.b16 %v7920
    %v8441 = vunpack.c.l.b16 %v7921
    %v8442 = vunpack.c.l.b16 %v7922
    %v8443 = vunpack.c.l.b16 %v7923
    %v8444 = vunpack.c.l.b16 %v7924
    %v8445 = vunpack.c.l.b16 %v7925
    %v8446 = vunpack.c.l.b16 %v7926
    %v8447 = vunpack.c.l.b16 %v7927
    %v8448 = vunpack.c.l.b16 %v7928
    %v8449 = vunpack.c.l.b16 %v7929
    %v8450 = vunpack.c.l.b16 %v7930
    %v8451 = vunpack.c.l.b16 %v7931
    %v8452 = vunpack.c.l.b16 %v7932
    %v8453 = vunpack.c.l.b16 %v7933
    %v8454 = vunpack.c.l.b16 %v7934
    %v8455 = vunpack.c.l.b16 %v7935
    %v8456 = vunpack.c.l.b16 %v7936
    %v8457 = vunpack.c.l.b16 %v7937
    %v8458 = vunpack.c.l.b16 %v7938
    %v8459 = vunpack.c.l.b16 %v7939
    %v8460 = vunpack.c.l.b16 %v7940
    %v8461 = vunpack.c.l.b16 %v7941
    %v8462 = vunpack.c.l.b16 %v7942
    %v8463 = vunpack.c.l.b16 %v7943
    %v8464 = vunpack.c.l.b16 %v7944
    %v8465 = vunpack.c.l.b16 %v7945
    %v8466 = vunpack.c.l.b16 %v7946
    %v8467 = vunpack.c.l.b16 %v7947
    %v8468 = vunpack.c.l.b16 %v7948
    %v8469 = vunpack.c.l.b16 %v7949
    %v8470 = vunpack.c.l.b16 %v7950
    %v8471 = vunpack.c.l.b16 %v7951
    %v8472 = vunpack.c.l.b16 %v7952
    %v8473 = vunpack.c.l.b16 %v7953
    %v8474 = vunpack.c.l.b16 %v7954
    %v8475 = vunpack.c.l.b16 %v7955
    %v8476 = vunpack.c.l.b16 %v7956
    %v8477 = vunpack.c.l.b16 %v7957
    %v8478 = vunpack.c.l.b16 %v7958
    %v8479 = vunpack.c.l.b16 %v7959
    %v8480 = vunpack.c.l.b16 %v7960
    %v8481 = vunpack.c.l.b16 %v7961
    %v8482 = vunpack.c.l.b16 %v7962
    %v8483 = vunpack.c.l.b16 %v7963
    %v8484 = vunpack.c.l.b16 %v7964
    %v8485 = vunpack.c.l.b16 %v7965
    %v8486 = vunpack.c.l.b16 %v7966
    %v8487 = vunpack.c.l.b16 %v7967
    %v8488 = vunpack.c.l.b16 %v7968
    %v8489 = vunpack.c.l.b16 %v7969
    %v8490 = vunpack.c.l.b16 %v7970
    %v8491 = vunpack.c.l.b16 %v7971
    %v8492 = vunpack.c.l.b16 %v7972
    %v8493 = vunpack.c.l.b16 %v7973
    %v8494 = vunpack.c.l.b16 %v7974
    %v8495 = vunpack.c.l.b16 %v7975
    %v8496 = vunpack.c.l.b16 %v7976
    %v8497 = vunpack.c.l.b16 %v7977
    %v8498 = vunpack.c.l.b16 %v7978
    %v8499 = vunpack.c.l.b16 %v7979
    %v8500 = vunpack.c.l.b16 %v7980
    %v8501 = vunpack.c.l.b16 %v7981
    %v8502 = vunpack.c.l.b16 %v7982
    %v8503 = vunpack.c.l.b16 %v7983
    %v8504 = vunpack.c.l.b16 %v7984
    %v8505 = vunpack.c.l.b16 %v7985
    %v8506 = vunpack.c.l.b16 %v7986
    %v8507 = vunpack.c.l.b16 %v7987
    %v8508 = vunpack.c.l.b16 %v7988
    %v8509 = vunpack.c.l.b16 %v7989
    %v8510 = vunpack.c.l.b16 %v7990
    %v8511 = vunpack.c.l.b16 %v7991
    %v8512 = vunpack.c.l.b16 %v7992
    %v8513 = vpack.c.b16 %v8258, %v8257
    %v8514 = vpack.c.b16 %v8260, %v8259
    %v8515 = vpack.c.b16 %v8262, %v8261
    %v8516 = vpack.c.b16 %v8264, %v8263
    %v8517 = vpack.c.b16 %v8266, %v8265
    %v8518 = vpack.c.b16 %v8268, %v8267
    %v8519 = vpack.c.b16 %v8270, %v8269
    %v8520 = vpack.c.b16 %v8272, %v8271
    %v8521 = vpack.c.b16 %v8274, %v8273
    %v8522 = vpack.c.b16 %v8276, %v8275
    %v8523 = vpack.c.b16 %v8278, %v8277
    %v8524 = vpack.c.b16 %v8280, %v8279
    %v8525 = vpack.c.b16 %v8282, %v8281
    %v8526 = vpack.c.b16 %v8284, %v8283
    %v8527 = vpack.c.b16 %v8286, %v8285
    %v8528 = vpack.c.b16 %v8288, %v8287
    %v8529 = vpack.c.b16 %v8290, %v8289
    %v8530 = vpack.c.b16 %v8292, %v8291
    %v8531 = vpack.c.b16 %v8294, %v8293
    %v8532 = vpack.c.b16 %v8296, %v8295
    %v8533 = vpack.c.b16 %v8298, %v8297
    %v8534 = vpack.c.b16 %v8300, %v8299
    %v8535 = vpack.c.b16 %v8302, %v8301
    %v8536 = vpack.c.b16 %v8304, %v8303
    %v8537 = vpack.c.b16 %v8306, %v8305
    %v8538 = vpack.c.b16 %v8308, %v8307
    %v8539 = vpack.c.b16 %v8310, %v8309
    %v8540 = vpack.c.b16 %v8312, %v8311
    %v8541 = vpack.c.b16 %v8314, %v8313
    %v8542 = vpack.c.b16 %v8316, %v8315
    %v8543 = vpack.c.b16 %v8318, %v8317
    %v8544 = vpack.c.b16 %v8320, %v8319
    %v8545 = vpack.c.b16 %v8322, %v8321
    %v8546 = vpack.c.b16 %v8324, %v8323
    %v8547 = vpack.c.b16 %v8326, %v8325
    %v8548 = vpack.c.b16 %v8328, %v8327
    %v8549 = vpack.c.b16 %v8330, %v8329
    %v8550 = vpack.c.b16 %v8332, %v8331
    %v8551 = vpack.c.b16 %v8334, %v8333
    %v8552 = vpack.c.b16 %v8336, %v8335
    %v8553 = vpack.c.b16 %v8338, %v8337
    %v8554 = vpack.c.b16 %v8340, %v8339
    %v8555 = vpack.c.b16 %v8342, %v8341
    %v8556 = vpack.c.b16 %v8344, %v8343
    %v8557 = vpack.c.b16 %v8346, %v8345
    %v8558 = vpack.c.b16 %v8348, %v8347
    %v8559 = vpack.c.b16 %v8350, %v8349
    %v8560 = vpack.c.b16 %v8352, %v8351
    %v8561 = vpack.c.b16 %v8354, %v8353
    %v8562 = vpack.c.b16 %v8356, %v8355
    %v8563 = vpack.c.b16 %v8358, %v8357
    %v8564 = vpack.c.b16 %v8360, %v8359
    %v8565 = vpack.c.b16 %v8362, %v8361
    %v8566 = vpack.c.b16 %v8364, %v8363
    %v8567 = vpack.c.b16 %v8366, %v8365
    %v8568 = vpack.c.b16 %v8368, %v8367
    %v8569 = vpack.c.b16 %v8370, %v8369
    %v8570 = vpack.c.b16 %v8372, %v8371
    %v8571 = vpack.c.b16 %v8374, %v8373
    %v8572 = vpack.c.b16 %v8376, %v8375
    %v8573 = vpack.c.b16 %v8378, %v8377
    %v8574 = vpack.c.b16 %v8380, %v8379
    %v8575 = vpack.c.b16 %v8382, %v8381
    %v8576 = vpack.c.b16 %v8384, %v8383
    %v8577 = vpack.c.b16 %v8386, %v8385
    %v8578 = vpack.c.b16 %v8388, %v8387
    %v8579 = vpack.c.b16 %v8390, %v8389
    %v8580 = vpack.c.b16 %v8392, %v8391
    %v8581 = vpack.c.b16 %v8394, %v8393
    %v8582 = vpack.c.b16 %v8396, %v8395
    %v8583 = vpack.c.b16 %v8398, %v8397
    %v8584 = vpack.c.b16 %v8400, %v8399
    %v8585 = vpack.c.b16 %v8402, %v8401
    %v8586 = vpack.c.b16 %v8404, %v8403
    %v8587 = vpack.c.b16 %v8406, %v8405
    %v8588 = vpack.c.b16 %v8408, %v8407
    %v8589 = vpack.c.b16 %v8410, %v8409
    %v8590 = vpack.c.b16 %v8412, %v8411
    %v8591 = vpack.c.b16 %v8414, %v8413
    %v8592 = vpack.c.b16 %v8416, %v8415
    %v8593 = vpack.c.b16 %v8418, %v8417
    %v8594 = vpack.c.b16 %v8420, %v8419
    %v8595 = vpack.c.b16 %v8422, %v8421
    %v8596 = vpack.c.b16 %v8424, %v8423
    %v8597 = vpack.c.b16 %v8426, %v8425
    %v8598 = vpack.c.b16 %v8428, %v8427
    %v8599 = vpack.c.b16 %v8430, %v8429
    %v8600 = vpack.c.b16 %v8432, %v8431
    %v8601 = vpack.c.b16 %v8434, %v8433
    %v8602 = vpack.c.b16 %v8436, %v8435
    %v8603 = vpack.c.b16 %v8438, %v8437
    %v8604 = vpack.c.b16 %v8440, %v8439
    %v8605 = vpack.c.b16 %v8442, %v8441
    %v8606 = vpack.c.b16 %v8444, %v8443
    %v8607 = vpack.c.b16 %v8446, %v8445
    %v8608 = vpack.c.b16 %v8448, %v8447
    %v8609 = vpack.c.b16 %v8450, %v8449
    %v8610 = vpack.c.b16 %v8452, %v8451
    %v8611 = vpack.c.b16 %v8454, %v8453
    %v8612 = vpack.c.b16 %v8456, %v8455
    %v8613 = vpack.c.b16 %v8458, %v8457
    %v8614 = vpack.c.b16 %v8460, %v8459
    %v8615 = vpack.c.b16 %v8462, %v8461
    %v8616 = vpack.c.b16 %v8464, %v8463
    %v8617 = vpack.c.b16 %v8466, %v8465
    %v8618 = vpack.c.b16 %v8468, %v8467
    %v8619 = vpack.c.b16 %v8470, %v8469
    %v8620 = vpack.c.b16 %v8472, %v8471
    %v8621 = vpack.c.b16 %v8474, %v8473
    %v8622 = vpack.c.b16 %v8476, %v8475
    %v8623 = vpack.c.b16 %v8478, %v8477
    %v8624 = vpack.c.b16 %v8480, %v8479
    %v8625 = vpack.c.b16 %v8482, %v8481
    %v8626 = vpack.c.b16 %v8484, %v8483
    %v8627 = vpack.c.b16 %v8486, %v8485
    %v8628 = vpack.c.b16 %v8488, %v8487
    %v8629 = vpack.c.b16 %v8490, %v8489
    %v8630 = vpack.c.b16 %v8492, %v8491
    %v8631 = vpack.c.b16 %v8494, %v8493
    %v8632 = vpack.c.b16 %v8496, %v8495
    %v8633 = vpack.c.b16 %v8498, %v8497
    %v8634 = vpack.c.b16 %v8500, %v8499
    %v8635 = vpack.c.b16 %v8502, %v8501
    %v8636 = vpack.c.b16 %v8504, %v8503
    %v8637 = vpack.c.b16 %v8506, %v8505
    %v8638 = vpack.c.b16 %v8508, %v8507
    %v8639 = vpack.c.b16 %v8510, %v8509
    %v8640 = vpack.c.b16 %v8512, %v8511
    %8769 = vmatprep.subr.bf16.mxu0 0
    %8770 = vmatpush1.bf16.msra.mxu0 %v8513
    %8771 = vmatprep.subr.bf16.mxu0 0
    %8772 = vmatpush1.bf16.msra.mxu0 %v8514
    %8773 = vmatprep.subr.bf16.mxu0 0
    %8774 = vmatpush1.bf16.msra.mxu0 %v8515
    %8775 = vmatprep.subr.bf16.mxu0 0
    %8776 = vmatpush1.bf16.msra.mxu0 %v8516
    %8777 = vmatprep.subr.bf16.mxu0 0
    %8778 = vmatpush1.bf16.msra.mxu0 %v8517
    %8779 = vmatprep.subr.bf16.mxu0 0
    %8780 = vmatpush1.bf16.msra.mxu0 %v8518
    %8781 = vmatprep.subr.bf16.mxu0 0
    %8782 = vmatpush1.bf16.msra.mxu0 %v8519
    %8783 = vmatprep.subr.bf16.mxu0 0
    %8784 = vmatpush1.bf16.msra.mxu0 %v8520
    %8785 = vmatprep.subr.bf16.mxu0 0
    %8786 = vmatpush1.bf16.msra.mxu0 %v8521
    %8787 = vmatprep.subr.bf16.mxu0 0
    %8788 = vmatpush1.bf16.msra.mxu0 %v8522
    %8789 = vmatprep.subr.bf16.mxu0 0
    %8790 = vmatpush1.bf16.msra.mxu0 %v8523
    %8791 = vmatprep.subr.bf16.mxu0 0
    %8792 = vmatpush1.bf16.msra.mxu0 %v8524
    %8793 = vmatprep.subr.bf16.mxu0 0
    %8794 = vmatpush1.bf16.msra.mxu0 %v8525
    %8795 = vmatprep.subr.bf16.mxu0 0
    %8796 = vmatpush1.bf16.msra.mxu0 %v8526
    %8797 = vmatprep.subr.bf16.mxu0 0
    %8798 = vmatpush1.bf16.msra.mxu0 %v8527
    %8799 = vmatprep.subr.bf16.mxu0 0
    %8800 = vmatpush1.bf16.msra.mxu0 %v8528
    %8801 = vmatprep.mubr.bf16.mxu0 %v7721
    %8802 = vmatmul.mubr.bf16.gmra.mrb[0].mxu0 %v7720
    %v8803 = vpop.f32.mrb[0].mxu0
    %v8804 = vadd.f32 %v7999, %v8803
    %v8805 = vpop.f32.mrb[0].mxu0
    %v8806 = vpop.f32.mrb[0].mxu0
    %v8807 = vadd.f32 %v7999, %v8806
    %v8808 = vpop.f32.mrb[0].mxu0
    %8809 = vdwg.mxu0
    %8810 = vmatprep.subr.bf16.mxu0 0
    %8811 = vmatpush1.bf16.msra.mxu0 %v8529
    %8812 = vmatprep.subr.bf16.mxu0 0
    %8813 = vmatpush1.bf16.msra.mxu0 %v8530
    %8814 = vmatprep.subr.bf16.mxu0 0
    %8815 = vmatpush1.bf16.msra.mxu0 %v8531
    %8816 = vmatprep.subr.bf16.mxu0 0
    %8817 = vmatpush1.bf16.msra.mxu0 %v8532
    %8818 = vmatprep.subr.bf16.mxu0 0
    %8819 = vmatpush1.bf16.msra.mxu0 %v8533
    %8820 = vmatprep.subr.bf16.mxu0 0
    %8821 = vmatpush1.bf16.msra.mxu0 %v8534
    %8822 = vmatprep.subr.bf16.mxu0 0
    %8823 = vmatpush1.bf16.msra.mxu0 %v8535
    %8824 = vmatprep.subr.bf16.mxu0 0
    %8825 = vmatpush1.bf16.msra.mxu0 %v8536
    %8826 = vmatprep.subr.bf16.mxu0 0
    %8827 = vmatpush1.bf16.msra.mxu0 %v8537
    %8828 = vmatprep.subr.bf16.mxu0 0
    %8829 = vmatpush1.bf16.msra.mxu0 %v8538
    %8830 = vmatprep.subr.bf16.mxu0 0
    %8831 = vmatpush1.bf16.msra.mxu0 %v8539
    %8832 = vmatprep.subr.bf16.mxu0 0
    %8833 = vmatpush1.bf16.msra.mxu0 %v8540
    %8834 = vmatprep.subr.bf16.mxu0 0
    %8835 = vmatpush1.bf16.msra.mxu0 %v8541
    %8836 = vmatprep.subr.bf16.mxu0 0
    %8837 = vmatpush1.bf16.msra.mxu0 %v8542
    %8838 = vmatprep.subr.bf16.mxu0 0
    %8839 = vmatpush1.bf16.msra.mxu0 %v8543
    %8840 = vmatprep.subr.bf16.mxu0 0
    %8841 = vmatpush1.bf16.msra.mxu0 %v8544
    %8842 = vmatprep.mubr.bf16.mxu0 %v7723
    %8843 = vmatmul.mubr.bf16.gmra.mrb[0].mxu0 %v7722
    %v8844 = vpop.f32.mrb[0].mxu0
    %v8845 = vadd.f32 %v8804, %v8844
    %v8846 = vpop.f32.mrb[0].mxu0
    %v8847 = vpop.f32.mrb[0].mxu0
    %v8848 = vadd.f32 %v8807, %v8847
    %v8849 = vpop.f32.mrb[0].mxu0
    %8850 = vdwg.mxu0
    %8851 = vmatprep.subr.bf16.mxu0 0
    %8852 = vmatpush1.bf16.msra.mxu0 %v8545
    %8853 = vmatprep.subr.bf16.mxu0 0
    %8854 = vmatpush1.bf16.msra.mxu0 %v8546
    %8855 = vmatprep.subr.bf16.mxu0 0
    %8856 = vmatpush1.bf16.msra.mxu0 %v8547
    %8857 = vmatprep.subr.bf16.mxu0 0
    %8858 = vmatpush1.bf16.msra.mxu0 %v8548
    %8859 = vmatprep.subr.bf16.mxu0 0
    %8860 = vmatpush1.bf16.msra.mxu0 %v8549
    %8861 = vmatprep.subr.bf16.mxu0 0
    %8862 = vmatpush1.bf16.msra.mxu0 %v8550
    %8863 = vmatprep.subr.bf16.mxu0 0
    %8864 = vmatpush1.bf16.msra.mxu0 %v8551
    %8865 = vmatprep.subr.bf16.mxu0 0
    %8866 = vmatpush1.bf16.msra.mxu0 %v8552
    %8867 = vmatprep.subr.bf16.mxu0 0
    %8868 = vmatpush1.bf16.msra.mxu0 %v8553
    %8869 = vmatprep.subr.bf16.mxu0 0
    %8870 = vmatpush1.bf16.msra.mxu0 %v8554
    %8871 = vmatprep.subr.bf16.mxu0 0
    %8872 = vmatpush1.bf16.msra.mxu0 %v8555
    %8873 = vmatprep.subr.bf16.mxu0 0
    %8874 = vmatpush1.bf16.msra.mxu0 %v8556
    %8875 = vmatprep.subr.bf16.mxu0 0
    %8876 = vmatpush1.bf16.msra.mxu0 %v8557
    %8877 = vmatprep.subr.bf16.mxu0 0
    %8878 = vmatpush1.bf16.msra.mxu0 %v8558
    %8879 = vmatprep.subr.bf16.mxu0 0
    %8880 = vmatpush1.bf16.msra.mxu0 %v8559
    %8881 = vmatprep.subr.bf16.mxu0 0
    %8882 = vmatpush1.bf16.msra.mxu0 %v8560
    %8883 = vmatprep.mubr.bf16.mxu0 %v7725
    %8884 = vmatmul.mubr.bf16.gmra.mrb[0].mxu0 %v7724
    %v8885 = vpop.f32.mrb[0].mxu0
    %v8886 = vadd.f32 %v8845, %v8885
    %v8887 = vpop.f32.mrb[0].mxu0
    %v8888 = vpop.f32.mrb[0].mxu0
    %v8889 = vadd.f32 %v8848, %v8888
    %v8890 = vpop.f32.mrb[0].mxu0
    %8891 = vdwg.mxu0
    %8892 = vmatprep.subr.bf16.mxu0 0
    %8893 = vmatpush1.bf16.msra.mxu0 %v8561
    %8894 = vmatprep.subr.bf16.mxu0 0
    %8895 = vmatpush1.bf16.msra.mxu0 %v8562
    %8896 = vmatprep.subr.bf16.mxu0 0
    %8897 = vmatpush1.bf16.msra.mxu0 %v8563
    %8898 = vmatprep.subr.bf16.mxu0 0
    %8899 = vmatpush1.bf16.msra.mxu0 %v8564
    %8900 = vmatprep.subr.bf16.mxu0 0
    %8901 = vmatpush1.bf16.msra.mxu0 %v8565
    %8902 = vmatprep.subr.bf16.mxu0 0
    %8903 = vmatpush1.bf16.msra.mxu0 %v8566
    %8904 = vmatprep.subr.bf16.mxu0 0
    %8905 = vmatpush1.bf16.msra.mxu0 %v8567
    %8906 = vmatprep.subr.bf16.mxu0 0
    %8907 = vmatpush1.bf16.msra.mxu0 %v8568
    %8908 = vmatprep.subr.bf16.mxu0 0
    %8909 = vmatpush1.bf16.msra.mxu0 %v8569
    %8910 = vmatprep.subr.bf16.mxu0 0
    %8911 = vmatpush1.bf16.msra.mxu0 %v8570
    %8912 = vmatprep.subr.bf16.mxu0 0
    %8913 = vmatpush1.bf16.msra.mxu0 %v8571
    %8914 = vmatprep.subr.bf16.mxu0 0
    %8915 = vmatpush1.bf16.msra.mxu0 %v8572
    %8916 = vmatprep.subr.bf16.mxu0 0
    %8917 = vmatpush1.bf16.msra.mxu0 %v8573
    %8918 = vmatprep.subr.bf16.mxu0 0
    %8919 = vmatpush1.bf16.msra.mxu0 %v8574
    %8920 = vmatprep.subr.bf16.mxu0 0
    %8921 = vmatpush1.bf16.msra.mxu0 %v8575
    %8922 = vmatprep.subr.bf16.mxu0 0
    %8923 = vmatpush1.bf16.msra.mxu0 %v8576
    %8924 = vmatprep.mubr.bf16.mxu0 %v7727
    %8925 = vmatmul.mubr.bf16.gmra.mrb[0].mxu0 %v7726
    %v8926 = vpop.f32.mrb[0].mxu0
    %v8927 = vadd.f32 %v8886, %v8926
    %v8928 = vpop.f32.mrb[0].mxu0
    %v8929 = vpop.f32.mrb[0].mxu0
    %v8930 = vadd.f32 %v8889, %v8929
    %v8931 = vpop.f32.mrb[0].mxu0
    %8932 = vdwg.mxu0
    %8933 = vmatprep.subr.bf16.mxu0 0
    %8934 = vmatpush1.bf16.msra.mxu0 %v8577
    %8935 = vmatprep.subr.bf16.mxu0 0
    %8936 = vmatpush1.bf16.msra.mxu0 %v8578
    %8937 = vmatprep.subr.bf16.mxu0 0
    %8938 = vmatpush1.bf16.msra.mxu0 %v8579
    %8939 = vmatprep.subr.bf16.mxu0 0
    %8940 = vmatpush1.bf16.msra.mxu0 %v8580
    %8941 = vmatprep.subr.bf16.mxu0 0
    %8942 = vmatpush1.bf16.msra.mxu0 %v8581
    %8943 = vmatprep.subr.bf16.mxu0 0
    %8944 = vmatpush1.bf16.msra.mxu0 %v8582
    %8945 = vmatprep.subr.bf16.mxu0 0
    %8946 = vmatpush1.bf16.msra.mxu0 %v8583
    %8947 = vmatprep.subr.bf16.mxu0 0
    %8948 = vmatpush1.bf16.msra.mxu0 %v8584
    %8949 = vmatprep.subr.bf16.mxu0 0
    %8950 = vmatpush1.bf16.msra.mxu0 %v8585
    %8951 = vmatprep.subr.bf16.mxu0 0
    %8952 = vmatpush1.bf16.msra.mxu0 %v8586
    %8953 = vmatprep.subr.bf16.mxu0 0
    %8954 = vmatpush1.bf16.msra.mxu0 %v8587
    %8955 = vmatprep.subr.bf16.mxu0 0
    %8956 = vmatpush1.bf16.msra.mxu0 %v8588
    %8957 = vmatprep.subr.bf16.mxu0 0
    %8958 = vmatpush1.bf16.msra.mxu0 %v8589
    %8959 = vmatprep.subr.bf16.mxu0 0
    %8960 = vmatpush1.bf16.msra.mxu0 %v8590
    %8961 = vmatprep.subr.bf16.mxu0 0
    %8962 = vmatpush1.bf16.msra.mxu0 %v8591
    %8963 = vmatprep.subr.bf16.mxu0 0
    %8964 = vmatpush1.bf16.msra.mxu0 %v8592
    %8965 = vmatprep.mubr.bf16.mxu0 %v7729
    %8966 = vmatmul.mubr.bf16.gmra.mrb[0].mxu0 %v7728
    %v8967 = vpop.f32.mrb[0].mxu0
    %v8968 = vadd.f32 %v8927, %v8967
    %v8969 = vpop.f32.mrb[0].mxu0
    %v8970 = vpop.f32.mrb[0].mxu0
    %v8971 = vadd.f32 %v8930, %v8970
    %v8972 = vpop.f32.mrb[0].mxu0
    %8973 = vdwg.mxu0
    %8974 = vmatprep.subr.bf16.mxu0 0
    %8975 = vmatpush1.bf16.msra.mxu0 %v8593
    %8976 = vmatprep.subr.bf16.mxu0 0
    %8977 = vmatpush1.bf16.msra.mxu0 %v8594
    %8978 = vmatprep.subr.bf16.mxu0 0
    %8979 = vmatpush1.bf16.msra.mxu0 %v8595
    %8980 = vmatprep.subr.bf16.mxu0 0
    %8981 = vmatpush1.bf16.msra.mxu0 %v8596
    %8982 = vmatprep.subr.bf16.mxu0 0
    %8983 = vmatpush1.bf16.msra.mxu0 %v8597
    %8984 = vmatprep.subr.bf16.mxu0 0
    %8985 = vmatpush1.bf16.msra.mxu0 %v8598
    %8986 = vmatprep.subr.bf16.mxu0 0
    %8987 = vmatpush1.bf16.msra.mxu0 %v8599
    %8988 = vmatprep.subr.bf16.mxu0 0
    %8989 = vmatpush1.bf16.msra.mxu0 %v8600
    %8990 = vmatprep.subr.bf16.mxu0 0
    %8991 = vmatpush1.bf16.msra.mxu0 %v8601
    %8992 = vmatprep.subr.bf16.mxu0 0
    %8993 = vmatpush1.bf16.msra.mxu0 %v8602
    %8994 = vmatprep.subr.bf16.mxu0 0
    %8995 = vmatpush1.bf16.msra.mxu0 %v8603
    %8996 = vmatprep.subr.bf16.mxu0 0
    %8997 = vmatpush1.bf16.msra.mxu0 %v8604
    %8998 = vmatprep.subr.bf16.mxu0 0
    %8999 = vmatpush1.bf16.msra.mxu0 %v8605
    %9000 = vmatprep.subr.bf16.mxu0 0
    %9001 = vmatpush1.bf16.msra.mxu0 %v8606
    %9002 = vmatprep.subr.bf16.mxu0 0
    %9003 = vmatpush1.bf16.msra.mxu0 %v8607
    %9004 = vmatprep.subr.bf16.mxu0 0
    %9005 = vmatpush1.bf16.msra.mxu0 %v8608
    %9006 = vmatprep.mubr.bf16.mxu0 %v7731
    %9007 = vmatmul.mubr.bf16.gmra.mrb[0].mxu0 %v7730
    %v9008 = vpop.f32.mrb[0].mxu0
    %v9009 = vadd.f32 %v8968, %v9008
    %v9010 = vpop.f32.mrb[0].mxu0
    %v9011 = vpop.f32.mrb[0].mxu0
    %v9012 = vadd.f32 %v8971, %v9011
    %v9013 = vpop.f32.mrb[0].mxu0
    %9014 = vdwg.mxu0
    %9015 = vmatprep.subr.bf16.mxu0 0
    %9016 = vmatpush1.bf16.msra.mxu0 %v8609
    %9017 = vmatprep.subr.bf16.mxu0 0
    %9018 = vmatpush1.bf16.msra.mxu0 %v8610
    %9019 = vmatprep.subr.bf16.mxu0 0
    %9020 = vmatpush1.bf16.msra.mxu0 %v8611
    %9021 = vmatprep.subr.bf16.mxu0 0
    %9022 = vmatpush1.bf16.msra.mxu0 %v8612
    %9023 = vmatprep.subr.bf16.mxu0 0
    %9024 = vmatpush1.bf16.msra.mxu0 %v8613
    %9025 = vmatprep.subr.bf16.mxu0 0
    %9026 = vmatpush1.bf16.msra.mxu0 %v8614
    %9027 = vmatprep.subr.bf16.mxu0 0
    %9028 = vmatpush1.bf16.msra.mxu0 %v8615
    %9029 = vmatprep.subr.bf16.mxu0 0
    %9030 = vmatpush1.bf16.msra.mxu0 %v8616
    %9031 = vmatprep.subr.bf16.mxu0 0
    %9032 = vmatpush1.bf16.msra.mxu0 %v8617
    %9033 = vmatprep.subr.bf16.mxu0 0
    %9034 = vmatpush1.bf16.msra.mxu0 %v8618
    %9035 = vmatprep.subr.bf16.mxu0 0
    %9036 = vmatpush1.bf16.msra.mxu0 %v8619
    %9037 = vmatprep.subr.bf16.mxu0 0
    %9038 = vmatpush1.bf16.msra.mxu0 %v8620
    %9039 = vmatprep.subr.bf16.mxu0 0
    %9040 = vmatpush1.bf16.msra.mxu0 %v8621
    %9041 = vmatprep.subr.bf16.mxu0 0
    %9042 = vmatpush1.bf16.msra.mxu0 %v8622
    %9043 = vmatprep.subr.bf16.mxu0 0
    %9044 = vmatpush1.bf16.msra.mxu0 %v8623
    %9045 = vmatprep.subr.bf16.mxu0 0
    %9046 = vmatpush1.bf16.msra.mxu0 %v8624
    %9047 = vmatprep.mubr.bf16.mxu0 %v7733
    %9048 = vmatmul.mubr.bf16.gmra.mrb[0].mxu0 %v7732
    %v9049 = vpop.f32.mrb[0].mxu0
    %v9050 = vadd.f32 %v9009, %v9049
    %v9051 = vpop.f32.mrb[0].mxu0
    %v9052 = vpop.f32.mrb[0].mxu0
    %v9053 = vadd.f32 %v9012, %v9052
    %v9054 = vpop.f32.mrb[0].mxu0
    %9055 = vdwg.mxu0
    %9056 = vmatprep.subr.bf16.mxu0 0
    %9057 = vmatpush1.bf16.msra.mxu0 %v8625
    %9058 = vmatprep.subr.bf16.mxu0 0
    %9059 = vmatpush1.bf16.msra.mxu0 %v8626
    %9060 = vmatprep.subr.bf16.mxu0 0
    %9061 = vmatpush1.bf16.msra.mxu0 %v8627
    %9062 = vmatprep.subr.bf16.mxu0 0
    %9063 = vmatpush1.bf16.msra.mxu0 %v8628
    %9064 = vmatprep.subr.bf16.mxu0 0
    %9065 = vmatpush1.bf16.msra.mxu0 %v8629
    %9066 = vmatprep.subr.bf16.mxu0 0
    %9067 = vmatpush1.bf16.msra.mxu0 %v8630
    %9068 = vmatprep.subr.bf16.mxu0 0
    %9069 = vmatpush1.bf16.msra.mxu0 %v8631
    %9070 = vmatprep.subr.bf16.mxu0 0
    %9071 = vmatpush1.bf16.msra.mxu0 %v8632
    %9072 = vmatprep.subr.bf16.mxu0 0
    %9073 = vmatpush1.bf16.msra.mxu0 %v8633
    %9074 = vmatprep.subr.bf16.mxu0 0
    %9075 = vmatpush1.bf16.msra.mxu0 %v8634
    %9076 = vmatprep.subr.bf16.mxu0 0
    %9077 = vmatpush1.bf16.msra.mxu0 %v8635
    %9078 = vmatprep.subr.bf16.mxu0 0
    %9079 = vmatpush1.bf16.msra.mxu0 %v8636
    %9080 = vmatprep.subr.bf16.mxu0 0
    %9081 = vmatpush1.bf16.msra.mxu0 %v8637
    %9082 = vmatprep.subr.bf16.mxu0 0
    %9083 = vmatpush1.bf16.msra.mxu0 %v8638
    %9084 = vmatprep.subr.bf16.mxu0 0
    %9085 = vmatpush1.bf16.msra.mxu0 %v8639
    %9086 = vmatprep.subr.bf16.mxu0 0
    %9087 = vmatpush1.bf16.msra.mxu0 %v8640
    %9088 = vmatprep.mubr.bf16.mxu0 %v7735
    %9089 = vmatmul.mubr.bf16.gmra.mrb[0].mxu0 %v7734
    %v9090 = vpop.f32.mrb[0].mxu0
    %v9091 = vadd.f32 %v9050, %v9090
    %v9092 = vpop.f32.mrb[0].mxu0
    %v9093 = vpop.f32.mrb[0].mxu0
    %v9094 = vadd.f32 %v9053, %v9093
    %v9095 = vpop.f32.mrb[0].mxu0
    %9096 = vdwg.mxu0
    %v9097 = vadd.f32 %v6487, %v9091
    %v9098 = vadd.f32 %v6488, %v9094
    %s9099 = scalar_lea.vmem %s18, 1
    %v9100 = vld [vmem:[%s9099] sm:$0x1]
    %s9101 = scalar_lea.vmem %s19, 1
    %v9102 = vld [vmem:[%s9101] sm:$0x1]
    %9103 = vadd.xlane.f32.xlu0 %v9097
    %v9104 = vpop.xlane.xlu0 %9103
    %9105 = vadd.xlane.f32.xlu0 %v9098
    %v9106 = vpop.xlane.xlu0 %9105
    %v9107 = vmul.f32 %v9104, 0.03125
    %v9108 = vmul.f32 %v9106, 0.03125
    %v9109 = vsub.f32 %v9097, %v9107
    %v9110 = vsub.f32 %v9098, %v9108
    %v9111 = vmul.f32 %v9109, %v199
    %v9112 = vmul.f32 %v9110, %v199
    %v9113 = vmul.f32 %v9111, %v9111
    %v9114 = vmul.f32 %v9112, %v9112
    %9115 = vadd.xlane.f32.xlu0 %v9113
    %v9116 = vpop.xlane.xlu0 %9115
    %9117 = vadd.xlane.f32.xlu0 %v9114
    %v9118 = vpop.xlane.xlu0 %9117
    %v9119 = vmul.f32 %v9116, 0.03125
    %v9120 = vmul.f32 %v9118, 0.03125
    %v9121 = vadd.f32 %v9119, 1e-05
    %v9122 = vadd.f32 %v9120, 1e-05
    %v9123 = vrsqrt.pop %v9121
    %v9124 = vrsqrt.pop %v9122
    %v9125 = vmul.f32 %v9111, %v9123
    %v9126 = vmul.f32 %v9112, %v9124
    %v9128 = vlaneseq
    %v9129 = vshrl.u32 %v9128, 7
    %v9130 = vsub.s32 0, %v9129
    %v9131 = vrot.slane %v9100, %v9130
    %v9133 = vmul.f32 %v9125, %v9131
    %v9134 = vmul.f32 %v9126, %v9131
    %v9136 = vlaneseq
    %v9137 = vshrl.u32 %v9136, 7
    %v9138 = vsub.s32 0, %v9137
    %v9139 = vrot.slane %v9102, %v9138
    %v9141 = vadd.f32 %v9133, %v9139
    %v9142 = vadd.f32 %v9134, %v9139
    %v9143 = vrot.slane %v9141, 4
    %v9144 = vadd.f32 %v9141, %v9143
    %v9145 = vrot.slane %v9144, 2
    %v9146 = vadd.f32 %v9144, %v9145
    %v9147 = vrot.slane %v9146, 1
    %v9148 = vadd.f32 %v9146, %v9147
    %v9149 = vrot.slane %v9142, 4
    %v9150 = vadd.f32 %v9142, %v9149
    %v9151 = vrot.slane %v9150, 2
    %v9152 = vadd.f32 %v9150, %v9151
    %v9153 = vrot.slane %v9152, 1
    %v9154 = vadd.f32 %v9152, %v9153
    %v9155 = vrcp.pop 8.0
    %v9156 = vmul.f32 %v9148, %v9155
    %v9157 = vmul.f32 %v9154, %v9155
    %v9158 = vld [vmem:[#allocation16] sm:$0xff]
    %v9159 = vld [vmem:[#allocation16 + $0x8] sm:$0xff]
    %v9160 = vld [vmem:[#allocation16 + $0x10] sm:$0xff]
    %v9161 = vld [vmem:[#allocation16 + $0x18] sm:$0xff]
    %v9162 = vld [vmem:[#allocation16 + $0x20] sm:$0xff]
    %v9163 = vld [vmem:[#allocation16 + $0x28] sm:$0xff]
    %v9164 = vld [vmem:[#allocation16 + $0x30] sm:$0xff]
    %v9165 = vld [vmem:[#allocation16 + $0x38] sm:$0xff]
    %v9166 = vld [vmem:[#allocation16 + $0x40] sm:$0xff]
    %v9167 = vld [vmem:[#allocation16 + $0x48] sm:$0xff]
    %v9168 = vld [vmem:[#allocation16 + $0x50] sm:$0xff]
    %v9169 = vld [vmem:[#allocation16 + $0x58] sm:$0xff]
    %v9170 = vld [vmem:[#allocation16 + $0x60] sm:$0xff]
    %v9171 = vld [vmem:[#allocation16 + $0x68] sm:$0xff]
    %v9172 = vld [vmem:[#allocation16 + $0x70] sm:$0xff]
    %v9173 = vld [vmem:[#allocation16 + $0x78] sm:$0xff]
    %v9174 = vld [vmem:[%s21] sm:$0x1]
    %v9176 = vlaneseq
    %v9177 = vshrl.u32 %v9176, 7
    %v9178 = vsub.s32 0, %v9177
    %v9179 = vrot.slane %v9174, %v9178
    %vm9183 = vcmask 1041409
    %v9184 = vsel %vm9183, %v9157, %v9156
    %9186 = vmatprep.subr.mxu0 0.0
    %9187 = vmatpush1.msra.mxu0 %v9158
    %9188 = vmatprep.subr.mxu0 0.0
    %9189 = vmatpush1.msra.mxu0 %v9159
    %9190 = vmatprep.subr.mxu0 0.0
    %9191 = vmatpush1.msra.mxu0 %v9160
    %9192 = vmatprep.subr.mxu0 0.0
    %9193 = vmatpush1.msra.mxu0 %v9161
    %9194 = vmatprep.subr.mxu0 0.0
    %9195 = vmatpush1.msra.mxu0 %v9162
    %9196 = vmatprep.subr.mxu0 0.0
    %9197 = vmatpush1.msra.mxu0 %v9163
    %9198 = vmatprep.subr.mxu0 0.0
    %9199 = vmatpush1.msra.mxu0 %v9164
    %9200 = vmatprep.subr.mxu0 0.0
    %9201 = vmatpush1.msra.mxu0 %v9165
    %9202 = vmatprep.subr.mxu0 0.0
    %9203 = vmatpush1.msra.mxu0 %v9166
    %9204 = vmatprep.subr.mxu0 0.0
    %9205 = vmatpush1.msra.mxu0 %v9167
    %9206 = vmatprep.subr.mxu0 0.0
    %9207 = vmatpush1.msra.mxu0 %v9168
    %9208 = vmatprep.subr.mxu0 0.0
    %9209 = vmatpush1.msra.mxu0 %v9169
    %9210 = vmatprep.subr.mxu0 0.0
    %9211 = vmatpush1.msra.mxu0 %v9170
    %9212 = vmatprep.subr.mxu0 0.0
    %9213 = vmatpush1.msra.mxu0 %v9171
    %9214 = vmatprep.subr.mxu0 0.0
    %9215 = vmatpush1.msra.mxu0 %v9172
    %9216 = vmatprep.subr.mxu0 0.0
    %9217 = vmatpush1.msra.mxu0 %v9173
    %9218 = vmatprep.subr.mxu0 0.0
    %9219 = vmatpush1.msra.mxu0 0.0
    %9220 = vmatprep.subr.mxu0 0.0
    %9221 = vmatpush1.msra.mxu0 0.0
    %9222 = vmatprep.subr.mxu0 0.0
    %9223 = vmatpush1.msra.mxu0 0.0
    %9224 = vmatprep.subr.mxu0 0.0
    %9225 = vmatpush1.msra.mxu0 0.0
    %9226 = vmatprep.subr.mxu0 0.0
    %9227 = vmatpush1.msra.mxu0 0.0
    %9228 = vmatprep.subr.mxu0 0.0
    %9229 = vmatpush1.msra.mxu0 0.0
    %9230 = vmatprep.subr.mxu0 0.0
    %9231 = vmatpush1.msra.mxu0 0.0
    %9232 = vmatprep.subr.mxu0 0.0
    %9233 = vmatpush1.msra.mxu0 0.0
    %9234 = vmatprep.subr.mxu0 0.0
    %9235 = vmatpush1.msra.mxu0 0.0
    %9236 = vmatprep.subr.mxu0 0.0
    %9237 = vmatpush1.msra.mxu0 0.0
    %9238 = vmatprep.subr.mxu0 0.0
    %9239 = vmatpush1.msra.mxu0 0.0
    %9240 = vmatprep.subr.mxu0 0.0
    %9241 = vmatpush1.msra.mxu0 0.0
    %9242 = vmatprep.subr.mxu0 0.0
    %9243 = vmatpush1.msra.mxu0 0.0
    %9244 = vmatprep.subr.mxu0 0.0
    %9245 = vmatpush1.msra.mxu0 0.0
    %9246 = vmatprep.subr.mxu0 0.0
    %9247 = vmatpush1.msra.mxu0 0.0
    %9248 = vmatprep.subr.mxu0 0.0
    %9249 = vmatpush1.msra.mxu0 0.0
    %9250 = vmatprep.mubr.f32.mxu0 0.0
    %9251 = vmatmul.mubr.f32.gmra.mrb[0].mxu0 %v9184
    %v9252 = vpop.f32.mrb[0].mxu0
    %v9253 = vadd.f32 %v9179, %v9252
    %v9254 = vpop.f32.mrb[0].mxu0
    %9255 = vdwg.mxu0
    %9256 = vst [vmem:[#allocation17] sm:$0x3] %v9253
    // Predicated region
    $region126: #{tpu_custom_call.1} parent=1 // pred_check
      _
    $region127: #{tpu_custom_call.1} parent=1 // pred_check_branch
      %9258 = sbr.rel (0) target = $region129
    $region128: #{tpu_custom_call.1} parent=1 // pred_region
      %s9260 = ssub.s32 32, 32
      %9261 = vsyncadd [#allocation4], %s9260
      %s9263 = sshll.u32 [#allocation17], 4
      %s9264 = int_to_ptr.vmem [resolvable:$true] %s9263
      %9266 = dma.vmem_to_hbm [thread:$0]  %s9264, 32, %s22, [#allocation4]
    $region129: #{tpu_custom_call.1} parent=1 // pred_fallthru
      _
    // Predicated region
    $region130: #{tpu_custom_call.1} parent=1 // pred_check
      _
    $region131: #{tpu_custom_call.1} parent=1 // pred_check_branch
      %9268 = sbr.rel (0) target = $region133
    $region132: #{tpu_custom_call.1} parent=1 // pred_region
      %9269 = dma.done [#allocation4], 32
    $region133: #{tpu_custom_call.1} parent=1 // pred_fallthru
      _
    %9270 = vsyncpa [#allocation3], 1
    %9271 = vsyncpa [#allocation6], 1
    %9272 = vsyncpa [#allocation9], 1
    %9273 = vsyncpa [#allocation12], 1
    %9274 = vsyncpa [#allocation15], 1
    %9275 = vsyncpa [#allocation4], 1

</llo_original>
